<compile_context>
chip_gen: v6e
topology: v6e:2x2x1
jax: 0.10.0
libtpu: 0.0.40
codegen_flags: <defaults>
</compile_context>

<pallas_src>
import jax
import jax.numpy as jnp
from jax.experimental import pallas as pl
from jax.experimental.pallas import tpu as pltpu

# ----------------------------- configuration --------------------------------
BATCH = 2
IN_CHANNELS = 2
IMG_SIZE = (16, 16)
PATCH_SIZE = (4, 4)
HIDDEN = 32
MLP_DIM = 64
NUM_LAYERS = 2
NUM_HEADS = 4
MASKING_RATIO = 0.75
DEC_HIDDEN = 32
DEC_MLP_DIM = 64
DEC_NUM_LAYERS = 2
DEC_NUM_HEADS = 4

GRID = (IMG_SIZE[0] // PATCH_SIZE[0], IMG_SIZE[1] // PATCH_SIZE[1])
N_PATCHES = GRID[0] * GRID[1]
PATCH_DIM = IN_CHANNELS * PATCH_SIZE[0] * PATCH_SIZE[1]     # decoder_pred out dim
N_KEEP = int((1.0 - MASKING_RATIO) * N_PATCHES)

N_ENC = 1 + N_KEEP                                          # cls + kept tokens (5)
N_DEC = 1 + N_PATCHES                                       # cls + all patches (17)
NEP = ((N_ENC + 7) // 8) * 8                                # padded to sublanes (8)
NDP = ((N_DEC + 7) // 8) * 8                                # padded to sublanes (24)
OUT_LANES = 128                                             # lane-dense output slab
TOTAL_LAYERS = NUM_LAYERS + DEC_NUM_LAYERS
NEG_INF = -1e30

# Weight stacking of encoder+decoder blocks relies on identical block dims.
assert HIDDEN == DEC_HIDDEN and MLP_DIM == DEC_MLP_DIM
assert HIDDEN % NUM_HEADS == 0 and DEC_HIDDEN % DEC_NUM_HEADS == 0


# ----------------------------- in-kernel helpers -----------------------------
def _erf(x):
    # Abramowitz & Stegun 7.1.26 rational approximation (|err| < 1.5e-7).
    a1, a2, a3, a4, a5 = 0.254829592, -0.284496736, 1.421413741, -1.453152027, 1.061405429
    p = 0.3275911
    sign = jnp.where(x >= 0.0, 1.0, -1.0)
    ax = jnp.abs(x)
    t = 1.0 / (1.0 + p * ax)
    poly = ((((a5 * t + a4) * t + a3) * t + a2) * t + a1) * t
    return sign * (1.0 - poly * jnp.exp(-ax * ax))


def _gelu_exact(x):
    # PyTorch nn.GELU() default (erf-based).
    return 0.5 * x * (1.0 + _erf(x * 0.7071067811865476))


def _layernorm(x, g, b, eps=1e-5):
    mu = jnp.mean(x, axis=-1, keepdims=True)
    var = jnp.mean((x - mu) * (x - mu), axis=-1, keepdims=True)
    return (x - mu) * jax.lax.rsqrt(var + eps) * g + b


def _attn_bias(batch, block, valid):
    # Block-diagonal attention bias over a (batch*block, batch*block) score
    # matrix: 0 inside a batch's first `valid` rows/cols, -1e30 elsewhere
    # (cross-batch and pad tokens).  Built once per stack, hoisted out of the
    # layer loop.
    t = batch * block
    r = jax.lax.broadcasted_iota(jnp.int32, (t, t), 0)
    c = jax.lax.broadcasted_iota(jnp.int32, (t, t), 1)
    ok = None
    for b in range(batch):
        lo, hi = b * block, b * block + valid
        inside = (r >= lo) & (r < hi) & (c >= lo) & (c < hi)
        ok = inside if ok is None else (ok | inside)
    return jnp.where(ok, 0.0, NEG_INF)


def _attention(xn, wqkv, wo, bo, bias, num_heads):
    # xn: (T, D) with all batch rows stacked; `bias` masks cross-batch/pad keys.
    d = xn.shape[-1]
    hd = d // num_heads
    scale = float(hd) ** -0.5
    qkv = jnp.dot(xn, wqkv, preferred_element_type=jnp.float32)       # (T, 3D)
    heads = []
    for h in range(num_heads):
        q = qkv[:, h * hd:(h + 1) * hd]
        k = qkv[:, d + h * hd:d + (h + 1) * hd]
        v = qkv[:, 2 * d + h * hd:2 * d + (h + 1) * hd]
        s = jax.lax.dot_general(q, k, (((1,), (1,)), ((), ())),
                                preferred_element_type=jnp.float32) * scale + bias
        s = s - jnp.max(s, axis=-1, keepdims=True)
        e = jnp.exp(s)                                                 # masked -> exactly 0
        p = e * pl.reciprocal(jnp.sum(e, axis=-1, keepdims=True), approx=True)
        heads.append(jnp.dot(p, v, preferred_element_type=jnp.float32))
    attn = jnp.concatenate(heads, axis=-1)                             # (T, D)
    return jnp.dot(attn, wo, preferred_element_type=jnp.float32) + bo


def _transformer_block(x, vecs, wqkv, wo, w1, w2, bias, num_heads):
    # vecs: (7, MLP) slab; rows 0..5 are D-wide [ln1_g, ln1_b, bo, ln2_g, ln2_b, b2],
    # row 6 is b1 (MLP-wide).
    d = x.shape[-1]
    ln1_g, ln1_b = vecs[0:1, :d], vecs[1:2, :d]
    bo = vecs[2:3, :d]
    ln2_g, ln2_b = vecs[3:4, :d], vecs[4:5, :d]
    b2 = vecs[5:6, :d]
    b1 = vecs[6:7, :]
    x = x + _attention(_layernorm(x, ln1_g, ln1_b), wqkv, wo, bo, bias, num_heads)
    h = _gelu_exact(jnp.dot(_layernorm(x, ln2_g, ln2_b), w1,
                            preferred_element_type=jnp.float32) + b1)
    return x + jnp.dot(h, w2, preferred_element_type=jnp.float32) + b2


# ----------------------------- fused Pallas kernel ---------------------------
def _mae_kernel(sel_ref,                       # SMEM (B, N_KEEP) int32 (scalar prefetch)
                tokadd_ref,                    # (B*NEP, PATCH_DIM + HIDDEN)
                patch_w_ref,                   # (PATCH_DIM, HIDDEN)
                wqkv_ref,                      # (TOTAL_LAYERS, D, 3D)
                wo_ref,                        # (TOTAL_LAYERS, D, D)
                w1_ref,                        # (TOTAL_LAYERS, D, MLP)
                w2_ref,                        # (TOTAL_LAYERS, MLP, D)
                vecs_ref,                      # (TOTAL_LAYERS, 7, MLP)
                head_w_ref,                    # (2, D, 128): dec_embed_w | pred_w (lane-padded)
                head_vecs_ref,                 # (6, 128): encLNg, encLNb, dec_embed_b, decLNg, decLNb, pred_b
                dposmt_ref,                    # (N_PATCHES+1, Ddec): dec_pos rows, last row = mask token
                o_ref):                        # (B*NDP, 128)
    hv = head_vecs_ref[...]

    # ---------------- encoder (patch-embed + blocks + LN + decoder_embed) ----
    tokadd = tokadd_ref[...]
    x = jnp.dot(tokadd[:, :PATCH_DIM], patch_w_ref[...],
                preferred_element_type=jnp.float32) + tokadd[:, PATCH_DIM:]

    enc_bias = _attn_bias(BATCH, NEP, N_ENC)
    for l in range(NUM_LAYERS):
        x = _transformer_block(x, vecs_ref[l], wqkv_ref[l], wo_ref[l],
                               w1_ref[l], w2_ref[l], enc_bias, NUM_HEADS)

    xn = _layernorm(x, hv[0:1, :HIDDEN], hv[1:2, :HIDDEN])
    h = jnp.dot(xn, head_w_ref[0][:, :DEC_HIDDEN],
                preferred_element_type=jnp.float32) + hv[2:3, :DEC_HIDDEN]

    # -------- in-kernel decoder-sequence assembly (scatter via iota==sel) ----
    dposmt = dposmt_ref[...]
    dec_pos = dposmt[:N_PATCHES]                       # (n_patches, Ddec)
    mask_tok = dposmt[N_PATCHES:N_PATCHES + 1]         # (1, Ddec)
    default_block = dec_pos + mask_tok                 # masked rows: mask token + pos
    rowid = jax.lax.broadcasted_iota(jnp.int32, (N_PATCHES, 1), 0)
    zpad = jnp.zeros((NDP - N_DEC, DEC_HIDDEN), jnp.float32)

    parts = []
    for b in range(BATCH):
        block = default_block
        for i in range(N_KEEP):
            r = sel_ref[b, i]
            upd = h[b * NEP + 1 + i:b * NEP + 2 + i, :] - mask_tok
            # row r: (mask_tok + dec_pos[r]) + (h_kept - mask_tok) = h_kept + dec_pos[r]
            block = jnp.where(rowid == r, block + upd, block)
        parts += [h[b * NEP:b * NEP + 1, :], block, zpad]
    xd = jnp.concatenate(parts, axis=0)                # (B*NDP, Ddec)

    # ---------------- decoder (blocks + LN + decoder_pred) -------------------
    dec_bias = _attn_bias(BATCH, NDP, N_DEC)
    for l in range(DEC_NUM_LAYERS):
        ll = NUM_LAYERS + l
        xd = _transformer_block(xd, vecs_ref[ll], wqkv_ref[ll], wo_ref[ll],
                                w1_ref[ll], w2_ref[ll], dec_bias, DEC_NUM_HEADS)

    xdn = _layernorm(xd, hv[3:4, :DEC_HIDDEN], hv[4:5, :DEC_HIDDEN])
    o_ref[...] = jnp.dot(xdn, head_w_ref[1],
                         preferred_element_type=jnp.float32) + hv[5:6, :]


# ----------------------------- kernel wrapper ---------------------------------
def _vspec():
    # Whole (tiny) array resident in VMEM; total weights + activations << 1 MiB.
    return pl.BlockSpec(memory_space=pltpu.MemorySpace.VMEM)


def mae_fused_call(sel, tokadd, params):
    n_in = 10
    grid_spec = pltpu.PrefetchScalarGridSpec(
        num_scalar_prefetch=1,                 # `sel` lands in SMEM
        grid=(1,),
        in_specs=[_vspec() for _ in range(n_in)],
        out_specs=_vspec(),
    )
    return pl.pallas_call(
        _mae_kernel,
        out_shape=jax.ShapeDtypeStruct((BATCH * NDP, OUT_LANES), jnp.float32),
        grid_spec=grid_spec,
        compiler_params=pltpu.CompilerParams(dimension_semantics=("arbitrary",)),
    )(sel, tokadd, params["patch_w"], params["wqkv"], params["wo"],
      params["w1"], params["w2"], params["vecs"], params["head_w"],
      params["head_vecs"], params["dposmt"])


# ----------------------------- glue (plain JAX) --------------------------------
def extract_patches_nchw(x, patch_size):
    # Equivalent to Conv2d(kernel=stride=patch) followed by flatten(2).transpose(1,2):
    # patch vector ordered (C, ph, pw); patch index ordered (gh, gw) row-major.
    B, C, H, W = x.shape
    ph, pw = patch_size
    gh, gw = H // ph, W // pw
    x = x.reshape(B, C, gh, ph, gw, pw)
    x = x.transpose(0, 2, 4, 1, 3, 5)            # (B, gh, gw, C, ph, pw)
    return x.reshape(B, gh * gw, C * ph * pw)


def build_sincos_pos_embed_2d(grid_size, dim):
    gh, gw = grid_size
    hh, ww = jnp.meshgrid(jnp.arange(gh, dtype=jnp.float32),
                          jnp.arange(gw, dtype=jnp.float32), indexing="ij")
    pos_dim = dim // 4
    omega = 1.0 / (10000.0 ** (jnp.arange(pos_dim, dtype=jnp.float32) / pos_dim))
    out_h = hh.reshape(-1)[:, None] * omega[None, :]
    out_w = ww.reshape(-1)[:, None] * omega[None, :]
    return jnp.concatenate(
        [jnp.sin(out_h), jnp.cos(out_h), jnp.sin(out_w), jnp.cos(out_w)], axis=1
    ).astype(jnp.float32)                         # (n_patches, dim)


def random_mask_indices(key, batch, n_tokens, masking_ratio):
    # Semantics of torch.multinomial(ones, n_keep, replacement=False): a uniform
    # random subset (per batch row) of token indices is kept.
    # TODO(synk): torch.multinomial RNG stream itself cannot be reproduced bit-exact in JAX.
    n_keep = int((1.0 - masking_ratio) * n_tokens)
    keys = jax.random.split(key, batch)
    sel = jnp.stack([jax.random.permutation(k, n_tokens)[:n_keep] for k in keys])
    batch_idx = jnp.arange(batch)[:, None]
    mask = jnp.ones((batch, n_tokens), dtype=jnp.int32).at[batch_idx, sel].set(0)
    return sel, mask


# ----------------------------- parameters --------------------------------------
def _w(key, shape, std=0.02):
    return jax.random.normal(key, shape, dtype=jnp.float32) * std


def init_params(key):
    ks = jax.random.split(key, 10)
    L = TOTAL_LAYERS

    # Per-block weights: encoder layers 0..NUM_LAYERS-1, decoder layers after.
    # Fused QKV (no bias, qkv_bias=False): columns [0:D]=Q, [D:2D]=K, [2D:3D]=V,
    # each split per head in head_dim-wide chunks; fused out-proj rows head-concat.
    wqkv = _w(ks[0], (L, HIDDEN, 3 * HIDDEN))
    wo = _w(ks[1], (L, HIDDEN, HIDDEN))
    w1 = _w(ks[2], (L, HIDDEN, MLP_DIM))
    w2 = _w(ks[3], (L, MLP_DIM, HIDDEN))

    # Packed per-block vectors: rows [ln1_g, ln1_b, bo, ln2_g, ln2_b, b2] (D-wide,
    # lane-padded) and row 6 = b1 (MLP-wide).
    vecs = jnp.zeros((L, 7, MLP_DIM), jnp.float32)
    vecs = vecs.at[:, 0, :HIDDEN].set(1.0)   # ln1 gamma
    vecs = vecs.at[:, 3, :HIDDEN].set(1.0)   # ln2 gamma

    # Head matrices / vectors, lane-padded to 128 (lane-dense output slab).
    dec_embed_w = _w(ks[4], (HIDDEN, DEC_HIDDEN))
    pred_w = _w(ks[5], (DEC_HIDDEN, PATCH_DIM))
    head_w = jnp.zeros((2, HIDDEN, OUT_LANES), jnp.float32)
    head_w = head_w.at[0, :, :DEC_HIDDEN].set(dec_embed_w)
    head_w = head_w.at[1, :, :PATCH_DIM].set(pred_w)

    head_vecs = jnp.zeros((6, OUT_LANES), jnp.float32)
    head_vecs = head_vecs.at[0, :HIDDEN].set(1.0)       # encoder final LN gamma
    head_vecs = head_vecs.at[3, :DEC_HIDDEN].set(1.0)   # decoder final LN gamma
    # rows 1 (enc LN beta), 2 (dec_embed bias), 4 (dec LN beta), 5 (pred bias): zero.

    dec_pos = build_sincos_pos_embed_2d(GRID, DEC_HIDDEN)
    mask_token = _w(ks[6], (1, DEC_HIDDEN))
    dposmt = jnp.concatenate([dec_pos, mask_token], axis=0)   # (n_patches+1, Ddec)

    return {
        "patch_w": _w(ks[7], (PATCH_DIM, HIDDEN)),          # conv-proj as a linear
        "patch_b": jnp.zeros((1, HIDDEN), jnp.float32),
        "enc_pos": build_sincos_pos_embed_2d(GRID, HIDDEN),
        "cls_token": _w(ks[8], (1, HIDDEN)),
        "wqkv": wqkv, "wo": wo, "w1": w1, "w2": w2, "vecs": vecs,
        "head_w": head_w, "head_vecs": head_vecs, "dposmt": dposmt,
    }


# ----------------------------- full forward ------------------------------------
def mae_vit_forward(params, x, mask_key):
    B = x.shape[0]

    # Patch extraction + random masking (index plumbing in plain JAX).
    patches = extract_patches_nchw(x, PATCH_SIZE)                       # (B, n, K)
    sel, mask = random_mask_indices(mask_key, B, N_PATCHES, MASKING_RATIO)
    batch_idx = jnp.arange(B)[:, None]
    patches_kept = patches[batch_idx, sel]                              # (B, keep, K)
    pos_kept = params["enc_pos"][sel]                                   # (B, keep, D)

    # Encoder kernel input, padded to NEP rows per batch: row 0 = cls (zero
    # patch row, additive = cls token), rows 1..keep = kept patches with
    # additive = patch_b + pos, remaining rows = zero pad.  Patch tokens and
    # additive terms are packed into one (B*NEP, PATCH_DIM+HIDDEN) slab.
    tok = jnp.zeros((B, NEP, PATCH_DIM), jnp.float32)
    tok = tok.at[:, 1:1 + N_KEEP, :].set(patches_kept)
    add = jnp.zeros((B, NEP, HIDDEN), jnp.float32)
    add = add.at[:, 0, :].set(jnp.broadcast_to(params["cls_token"], (B, HIDDEN)))
    add = add.at[:, 1:1 + N_KEEP, :].set(params["patch_b"][None] + pos_kept)
    tokadd = jnp.concatenate([tok, add], axis=-1).reshape(B * NEP, PATCH_DIM + HIDDEN)

    # One fused kernel: encoder + in-kernel mask-token re-insertion + decoder.
    out_full = mae_fused_call(sel.astype(jnp.int32), tokadd, params)    # (B*NDP, 128)
    out = out_full.reshape(B, NDP, OUT_LANES)[:, 1:1 + N_PATCHES, :PATCH_DIM]
    return out, mask


# ----------------------------- main ---------------------------------------------
if __name__ == "__main__":
    key = jax.random.PRNGKey(0)
    pkey, xkey, mkey = jax.random.split(key, 3)

    params = init_params(pkey)
    x = jax.random.normal(xkey, (BATCH, IN_CHANNELS, IMG_SIZE[0], IMG_SIZE[1]),
                          dtype=jnp.float32)

    fwd = jax.jit(mae_vit_forward)
    out, mask = fwd(params, x, mkey)
    jax.block_until_ready((out, mask))

    assert out.shape == (BATCH, N_PATCHES, PATCH_DIM), out.shape
    assert mask.shape == (BATCH, N_PATCHES), mask.shape
    assert int(mask.sum()) == BATCH * (N_PATCHES - N_KEEP)
    assert bool(jnp.all(jnp.isfinite(out)))
    print("KERNEL_OK")
</pallas_src>

<mosaic_0001>
module attributes {stable_mosaic.version = 11 : i64} {
  func.func @_mae_kernel(%arg0: i32, %arg1: memref<2x4xi32, #tpu.memory_space<smem>>, %arg2: memref<16x64xf32, #tpu.memory_space<vmem>>, %arg3: memref<32x32xf32, #tpu.memory_space<vmem>>, %arg4: memref<4x32x96xf32, #tpu.memory_space<vmem>>, %arg5: memref<4x32x32xf32, #tpu.memory_space<vmem>>, %arg6: memref<4x32x64xf32, #tpu.memory_space<vmem>>, %arg7: memref<4x64x32xf32, #tpu.memory_space<vmem>>, %arg8: memref<4x7x64xf32, #tpu.memory_space<vmem>>, %arg9: memref<2x32x128xf32, #tpu.memory_space<vmem>>, %arg10: memref<6x128xf32, #tpu.memory_space<vmem>>, %arg11: memref<17x32xf32, #tpu.memory_space<vmem>>, %arg12: memref<48x128xf32, #tpu.memory_space<vmem>>) attributes {dimension_semantics = [#tpu.dimension_semantics<arbitrary>], iteration_bounds = array<i64: 1>, scalar_prefetch = 1 : i64, scratch_operands = 0 : i64, tpu.core_type = #tpu.core_type<tc>, window_params = [{pipeline_mode = #tpu.pipeline_mode<synchronous>, transform_indices = @transform_0, window_bounds = array<i64: 16, 64>}, {pipeline_mode = #tpu.pipeline_mode<synchronous>, transform_indices = @transform_1, window_bounds = array<i64: 32, 32>}, {pipeline_mode = #tpu.pipeline_mode<synchronous>, transform_indices = @transform_2, window_bounds = array<i64: 4, 32, 96>}, {pipeline_mode = #tpu.pipeline_mode<synchronous>, transform_indices = @transform_3, window_bounds = array<i64: 4, 32, 32>}, {pipeline_mode = #tpu.pipeline_mode<synchronous>, transform_indices = @transform_4, window_bounds = array<i64: 4, 32, 64>}, {pipeline_mode = #tpu.pipeline_mode<synchronous>, transform_indices = @transform_5, window_bounds = array<i64: 4, 64, 32>}, {pipeline_mode = #tpu.pipeline_mode<synchronous>, transform_indices = @transform_6, window_bounds = array<i64: 4, 7, 64>}, {pipeline_mode = #tpu.pipeline_mode<synchronous>, transform_indices = @transform_7, window_bounds = array<i64: 2, 32, 128>}, {pipeline_mode = #tpu.pipeline_mode<synchronous>, transform_indices = @transform_8, window_bounds = array<i64: 6, 128>}, {pipeline_mode = #tpu.pipeline_mode<synchronous>, transform_indices = @transform_9, window_bounds = array<i64: 17, 32>}, {pipeline_mode = #tpu.pipeline_mode<synchronous>, transform_indices = @transform_10, window_bounds = array<i64: 48, 128>}]} {
    %c0 = arith.constant 0 : index
    %c0_0 = arith.constant 0 : index
    %0 = vector.load %arg10[%c0, %c0_0] : memref<6x128xf32, #tpu.memory_space<vmem>>, vector<6x128xf32>
    %c0_1 = arith.constant 0 : index
    %c0_2 = arith.constant 0 : index
    %1 = vector.load %arg2[%c0_1, %c0_2] : memref<16x64xf32, #tpu.memory_space<vmem>>, vector<16x64xf32>
    %2 = vector.extract_strided_slice %1 {offsets = [0, 0], sizes = [16, 32], strides = [1, 1]} : vector<16x64xf32> to vector<16x32xf32>
    %c0_3 = arith.constant 0 : index
    %c0_4 = arith.constant 0 : index
    %3 = vector.load %arg3[%c0_3, %c0_4] : memref<32x32xf32, #tpu.memory_space<vmem>>, vector<32x32xf32>
    %cst = arith.constant dense<0.000000e+00> : vector<16x32xf32>
    %4 = tpu.matmul %2, %3, %cst {dimension_numbers = #tpu.dot_dimension_numbers<[1], [0], [0], [1], [0, 0, 1, 1], [], []>} : vector<16x32xf32>, vector<32x32xf32>, vector<16x32xf32> -> vector<16x32xf32>
    %5 = vector.extract_strided_slice %1 {offsets = [0, 32], sizes = [16, 32], strides = [1, 1]} : vector<16x64xf32> to vector<16x32xf32>
    %6 = arith.addf %4, %5 : vector<16x32xf32>
    %7 = tpu.iota {dimensions = array<i32: 0>} : vector<16x16xi32>
    %8 = tpu.iota {dimensions = array<i32: 1>} : vector<16x16xi32>
    %c0_i32 = arith.constant 0 : i32
    %9 = vector.broadcast %c0_i32 : i32 to vector<16x16xi32>
    %10 = arith.cmpi sge, %7, %9 : vector<16x16xi32>
    %c5_i32 = arith.constant 5 : i32
    %11 = vector.broadcast %c5_i32 : i32 to vector<16x16xi32>
    %12 = arith.cmpi slt, %7, %11 : vector<16x16xi32>
    %13 = arith.andi %10, %12 : vector<16x16xi1>
    %c0_i32_5 = arith.constant 0 : i32
    %14 = vector.broadcast %c0_i32_5 : i32 to vector<16x16xi32>
    %15 = arith.cmpi sge, %8, %14 : vector<16x16xi32>
    %16 = arith.andi %13, %15 : vector<16x16xi1>
    %c5_i32_6 = arith.constant 5 : i32
    %17 = vector.broadcast %c5_i32_6 : i32 to vector<16x16xi32>
    %18 = arith.cmpi slt, %8, %17 : vector<16x16xi32>
    %19 = arith.andi %16, %18 : vector<16x16xi1>
    %c8_i32 = arith.constant 8 : i32
    %20 = vector.broadcast %c8_i32 : i32 to vector<16x16xi32>
    %21 = arith.cmpi sge, %7, %20 : vector<16x16xi32>
    %c13_i32 = arith.constant 13 : i32
    %22 = vector.broadcast %c13_i32 : i32 to vector<16x16xi32>
    %23 = arith.cmpi slt, %7, %22 : vector<16x16xi32>
    %24 = arith.andi %21, %23 : vector<16x16xi1>
    %c8_i32_7 = arith.constant 8 : i32
    %25 = vector.broadcast %c8_i32_7 : i32 to vector<16x16xi32>
    %26 = arith.cmpi sge, %8, %25 : vector<16x16xi32>
    %27 = arith.andi %24, %26 : vector<16x16xi1>
    %c13_i32_8 = arith.constant 13 : i32
    %28 = vector.broadcast %c13_i32_8 : i32 to vector<16x16xi32>
    %29 = arith.cmpi slt, %8, %28 : vector<16x16xi32>
    %30 = arith.andi %27, %29 : vector<16x16xi1>
    %31 = arith.ori %19, %30 : vector<16x16xi1>
    %cst_9 = arith.constant 0.000000e+00 : f32
    %cst_10 = arith.constant -1.000000e+30 : f32
    %32 = vector.broadcast %cst_9 : f32 to vector<16x16xf32>
    %33 = vector.broadcast %cst_10 : f32 to vector<16x16xf32>
    %34 = arith.select %31, %32, %33 : vector<16x16xi1>, vector<16x16xf32>
    %c0_11 = arith.constant 0 : index
    %c0_12 = arith.constant 0 : index
    %c0_13 = arith.constant 0 : index
    %35 = vector.load %arg8[%c0_11, %c0_12, %c0_13] : memref<4x7x64xf32, #tpu.memory_space<vmem>>, vector<1x7x64xf32>
    %36 = vector.shape_cast %35 : vector<1x7x64xf32> to vector<7x64xf32>
    %c0_14 = arith.constant 0 : index
    %c0_15 = arith.constant 0 : index
    %c0_16 = arith.constant 0 : index
    %37 = vector.load %arg4[%c0_14, %c0_15, %c0_16] : memref<4x32x96xf32, #tpu.memory_space<vmem>>, vector<1x32x96xf32>
    %38 = vector.shape_cast %37 : vector<1x32x96xf32> to vector<32x96xf32>
    %c0_17 = arith.constant 0 : index
    %c0_18 = arith.constant 0 : index
    %c0_19 = arith.constant 0 : index
    %39 = vector.load %arg5[%c0_17, %c0_18, %c0_19] : memref<4x32x32xf32, #tpu.memory_space<vmem>>, vector<1x32x32xf32>
    %40 = vector.shape_cast %39 : vector<1x32x32xf32> to vector<32x32xf32>
    %c0_20 = arith.constant 0 : index
    %c0_21 = arith.constant 0 : index
    %c0_22 = arith.constant 0 : index
    %41 = vector.load %arg6[%c0_20, %c0_21, %c0_22] : memref<4x32x64xf32, #tpu.memory_space<vmem>>, vector<1x32x64xf32>
    %42 = vector.shape_cast %41 : vector<1x32x64xf32> to vector<32x64xf32>
    %c0_23 = arith.constant 0 : index
    %c0_24 = arith.constant 0 : index
    %c0_25 = arith.constant 0 : index
    %43 = vector.load %arg7[%c0_23, %c0_24, %c0_25] : memref<4x64x32xf32, #tpu.memory_space<vmem>>, vector<1x64x32xf32>
    %44 = vector.shape_cast %43 : vector<1x64x32xf32> to vector<64x32xf32>
    %45 = vector.extract_strided_slice %36 {offsets = [0, 0], sizes = [1, 32], strides = [1, 1]} : vector<7x64xf32> to vector<1x32xf32>
    %46 = vector.extract_strided_slice %36 {offsets = [1, 0], sizes = [1, 32], strides = [1, 1]} : vector<7x64xf32> to vector<1x32xf32>
    %47 = vector.extract_strided_slice %36 {offsets = [2, 0], sizes = [1, 32], strides = [1, 1]} : vector<7x64xf32> to vector<1x32xf32>
    %48 = vector.extract_strided_slice %36 {offsets = [3, 0], sizes = [1, 32], strides = [1, 1]} : vector<7x64xf32> to vector<1x32xf32>
    %49 = vector.extract_strided_slice %36 {offsets = [4, 0], sizes = [1, 32], strides = [1, 1]} : vector<7x64xf32> to vector<1x32xf32>
    %50 = vector.extract_strided_slice %36 {offsets = [5, 0], sizes = [1, 32], strides = [1, 1]} : vector<7x64xf32> to vector<1x32xf32>
    %51 = vector.extract_strided_slice %36 {offsets = [6, 0], sizes = [1, 64], strides = [1, 1]} : vector<7x64xf32> to vector<1x64xf32>
    %cst_26 = arith.constant dense<0.000000e+00> : vector<16xf32>
    %52 = vector.multi_reduction <add>, %6, %cst_26 [1] : vector<16x32xf32> to vector<16xf32>
    %53 = vector.shape_cast %52 : vector<16xf32> to vector<16x1xf32>
    %cst_27 = arith.constant 3.200000e+01 : f32
    %54 = vector.broadcast %cst_27 : f32 to vector<16x1xf32>
    %55 = arith.divf %53, %54 : vector<16x1xf32>
    %56 = vector.broadcast %55 : vector<16x1xf32> to vector<16x32xf32>
    %57 = arith.subf %6, %56 : vector<16x32xf32>
    %58 = vector.broadcast %55 : vector<16x1xf32> to vector<16x32xf32>
    %59 = arith.subf %6, %58 : vector<16x32xf32>
    %60 = arith.mulf %57, %59 : vector<16x32xf32>
    %cst_28 = arith.constant dense<0.000000e+00> : vector<16xf32>
    %61 = vector.multi_reduction <add>, %60, %cst_28 [1] : vector<16x32xf32> to vector<16xf32>
    %62 = vector.shape_cast %61 : vector<16xf32> to vector<16x1xf32>
    %cst_29 = arith.constant 3.200000e+01 : f32
    %63 = vector.broadcast %cst_29 : f32 to vector<16x1xf32>
    %64 = arith.divf %62, %63 : vector<16x1xf32>
    %65 = vector.broadcast %55 : vector<16x1xf32> to vector<16x32xf32>
    %66 = arith.subf %6, %65 : vector<16x32xf32>
    %cst_30 = arith.constant 9.99999974E-6 : f32
    %67 = vector.broadcast %cst_30 : f32 to vector<16x1xf32>
    %68 = arith.addf %64, %67 : vector<16x1xf32>
    %69 = math.rsqrt %68 : vector<16x1xf32>
    %70 = vector.broadcast %69 : vector<16x1xf32> to vector<16x32xf32>
    %71 = arith.mulf %66, %70 : vector<16x32xf32>
    %72 = vector.broadcast %45 : vector<1x32xf32> to vector<16x32xf32>
    %73 = arith.mulf %71, %72 : vector<16x32xf32>
    %74 = vector.broadcast %46 : vector<1x32xf32> to vector<16x32xf32>
    %75 = arith.addf %73, %74 : vector<16x32xf32>
    %cst_31 = arith.constant dense<0.000000e+00> : vector<16x96xf32>
    %76 = tpu.matmul %75, %38, %cst_31 {dimension_numbers = #tpu.dot_dimension_numbers<[1], [0], [0], [1], [0, 0, 1, 1], [], []>} : vector<16x32xf32>, vector<32x96xf32>, vector<16x96xf32> -> vector<16x96xf32>
    %77 = vector.extract_strided_slice %76 {offsets = [0, 0], sizes = [16, 8], strides = [1, 1]} : vector<16x96xf32> to vector<16x8xf32>
    %78 = vector.extract_strided_slice %76 {offsets = [0, 32], sizes = [16, 8], strides = [1, 1]} : vector<16x96xf32> to vector<16x8xf32>
    %79 = vector.extract_strided_slice %76 {offsets = [0, 64], sizes = [16, 8], strides = [1, 1]} : vector<16x96xf32> to vector<16x8xf32>
    %cst_32 = arith.constant dense<0.000000e+00> : vector<16x16xf32>
    %80 = tpu.matmul %77, %78, %cst_32 {dimension_numbers = #tpu.dot_dimension_numbers<[1], [1], [0], [0], [0, 0, 1, 0], [], []>} : vector<16x8xf32>, vector<16x8xf32>, vector<16x16xf32> -> vector<16x16xf32>
    %cst_33 = arith.constant 0.353553385 : f32
    %81 = vector.broadcast %cst_33 : f32 to vector<16x16xf32>
    %82 = arith.mulf %80, %81 : vector<16x16xf32>
    %83 = arith.addf %82, %34 : vector<16x16xf32>
    %cst_34 = arith.constant dense<0xFF800000> : vector<16xf32>
    %84 = vector.multi_reduction <maximumf>, %83, %cst_34 [1] : vector<16x16xf32> to vector<16xf32>
    %85 = vector.shape_cast %84 : vector<16xf32> to vector<16x1xf32>
    %86 = vector.broadcast %85 : vector<16x1xf32> to vector<16x16xf32>
    %87 = arith.subf %83, %86 : vector<16x16xf32>
    %88 = math.exp %87 : vector<16x16xf32>
    %cst_35 = arith.constant dense<0.000000e+00> : vector<16xf32>
    %89 = vector.multi_reduction <add>, %88, %cst_35 [1] : vector<16x16xf32> to vector<16xf32>
    %90 = vector.shape_cast %89 : vector<16xf32> to vector<16x1xf32>
    %91 = tpu.reciprocal %90 {approx = true} : vector<16x1xf32> -> vector<16x1xf32>
    %92 = vector.broadcast %91 : vector<16x1xf32> to vector<16x16xf32>
    %93 = arith.mulf %88, %92 : vector<16x16xf32>
    %cst_36 = arith.constant dense<0.000000e+00> : vector<16x8xf32>
    %94 = tpu.matmul %93, %79, %cst_36 {dimension_numbers = #tpu.dot_dimension_numbers<[1], [0], [0], [1], [0, 0, 1, 1], [], []>} : vector<16x16xf32>, vector<16x8xf32>, vector<16x8xf32> -> vector<16x8xf32>
    %95 = vector.extract_strided_slice %76 {offsets = [0, 8], sizes = [16, 8], strides = [1, 1]} : vector<16x96xf32> to vector<16x8xf32>
    %96 = vector.extract_strided_slice %76 {offsets = [0, 40], sizes = [16, 8], strides = [1, 1]} : vector<16x96xf32> to vector<16x8xf32>
    %97 = vector.extract_strided_slice %76 {offsets = [0, 72], sizes = [16, 8], strides = [1, 1]} : vector<16x96xf32> to vector<16x8xf32>
    %cst_37 = arith.constant dense<0.000000e+00> : vector<16x16xf32>
    %98 = tpu.matmul %95, %96, %cst_37 {dimension_numbers = #tpu.dot_dimension_numbers<[1], [1], [0], [0], [0, 0, 1, 0], [], []>} : vector<16x8xf32>, vector<16x8xf32>, vector<16x16xf32> -> vector<16x16xf32>
    %cst_38 = arith.constant 0.353553385 : f32
    %99 = vector.broadcast %cst_38 : f32 to vector<16x16xf32>
    %100 = arith.mulf %98, %99 : vector<16x16xf32>
    %101 = arith.addf %100, %34 : vector<16x16xf32>
    %cst_39 = arith.constant dense<0xFF800000> : vector<16xf32>
    %102 = vector.multi_reduction <maximumf>, %101, %cst_39 [1] : vector<16x16xf32> to vector<16xf32>
    %103 = vector.shape_cast %102 : vector<16xf32> to vector<16x1xf32>
    %104 = vector.broadcast %103 : vector<16x1xf32> to vector<16x16xf32>
    %105 = arith.subf %101, %104 : vector<16x16xf32>
    %106 = math.exp %105 : vector<16x16xf32>
    %cst_40 = arith.constant dense<0.000000e+00> : vector<16xf32>
    %107 = vector.multi_reduction <add>, %106, %cst_40 [1] : vector<16x16xf32> to vector<16xf32>
    %108 = vector.shape_cast %107 : vector<16xf32> to vector<16x1xf32>
    %109 = tpu.reciprocal %108 {approx = true} : vector<16x1xf32> -> vector<16x1xf32>
    %110 = vector.broadcast %109 : vector<16x1xf32> to vector<16x16xf32>
    %111 = arith.mulf %106, %110 : vector<16x16xf32>
    %cst_41 = arith.constant dense<0.000000e+00> : vector<16x8xf32>
    %112 = tpu.matmul %111, %97, %cst_41 {dimension_numbers = #tpu.dot_dimension_numbers<[1], [0], [0], [1], [0, 0, 1, 1], [], []>} : vector<16x16xf32>, vector<16x8xf32>, vector<16x8xf32> -> vector<16x8xf32>
    %113 = vector.extract_strided_slice %76 {offsets = [0, 16], sizes = [16, 8], strides = [1, 1]} : vector<16x96xf32> to vector<16x8xf32>
    %114 = vector.extract_strided_slice %76 {offsets = [0, 48], sizes = [16, 8], strides = [1, 1]} : vector<16x96xf32> to vector<16x8xf32>
    %115 = vector.extract_strided_slice %76 {offsets = [0, 80], sizes = [16, 8], strides = [1, 1]} : vector<16x96xf32> to vector<16x8xf32>
    %cst_42 = arith.constant dense<0.000000e+00> : vector<16x16xf32>
    %116 = tpu.matmul %113, %114, %cst_42 {dimension_numbers = #tpu.dot_dimension_numbers<[1], [1], [0], [0], [0, 0, 1, 0], [], []>} : vector<16x8xf32>, vector<16x8xf32>, vector<16x16xf32> -> vector<16x16xf32>
    %cst_43 = arith.constant 0.353553385 : f32
    %117 = vector.broadcast %cst_43 : f32 to vector<16x16xf32>
    %118 = arith.mulf %116, %117 : vector<16x16xf32>
    %119 = arith.addf %118, %34 : vector<16x16xf32>
    %cst_44 = arith.constant dense<0xFF800000> : vector<16xf32>
    %120 = vector.multi_reduction <maximumf>, %119, %cst_44 [1] : vector<16x16xf32> to vector<16xf32>
    %121 = vector.shape_cast %120 : vector<16xf32> to vector<16x1xf32>
    %122 = vector.broadcast %121 : vector<16x1xf32> to vector<16x16xf32>
    %123 = arith.subf %119, %122 : vector<16x16xf32>
    %124 = math.exp %123 : vector<16x16xf32>
    %cst_45 = arith.constant dense<0.000000e+00> : vector<16xf32>
    %125 = vector.multi_reduction <add>, %124, %cst_45 [1] : vector<16x16xf32> to vector<16xf32>
    %126 = vector.shape_cast %125 : vector<16xf32> to vector<16x1xf32>
    %127 = tpu.reciprocal %126 {approx = true} : vector<16x1xf32> -> vector<16x1xf32>
    %128 = vector.broadcast %127 : vector<16x1xf32> to vector<16x16xf32>
    %129 = arith.mulf %124, %128 : vector<16x16xf32>
    %cst_46 = arith.constant dense<0.000000e+00> : vector<16x8xf32>
    %130 = tpu.matmul %129, %115, %cst_46 {dimension_numbers = #tpu.dot_dimension_numbers<[1], [0], [0], [1], [0, 0, 1, 1], [], []>} : vector<16x16xf32>, vector<16x8xf32>, vector<16x8xf32> -> vector<16x8xf32>
    %131 = vector.extract_strided_slice %76 {offsets = [0, 24], sizes = [16, 8], strides = [1, 1]} : vector<16x96xf32> to vector<16x8xf32>
    %132 = vector.extract_strided_slice %76 {offsets = [0, 56], sizes = [16, 8], strides = [1, 1]} : vector<16x96xf32> to vector<16x8xf32>
    %133 = vector.extract_strided_slice %76 {offsets = [0, 88], sizes = [16, 8], strides = [1, 1]} : vector<16x96xf32> to vector<16x8xf32>
    %cst_47 = arith.constant dense<0.000000e+00> : vector<16x16xf32>
    %134 = tpu.matmul %131, %132, %cst_47 {dimension_numbers = #tpu.dot_dimension_numbers<[1], [1], [0], [0], [0, 0, 1, 0], [], []>} : vector<16x8xf32>, vector<16x8xf32>, vector<16x16xf32> -> vector<16x16xf32>
    %cst_48 = arith.constant 0.353553385 : f32
    %135 = vector.broadcast %cst_48 : f32 to vector<16x16xf32>
    %136 = arith.mulf %134, %135 : vector<16x16xf32>
    %137 = arith.addf %136, %34 : vector<16x16xf32>
    %cst_49 = arith.constant dense<0xFF800000> : vector<16xf32>
    %138 = vector.multi_reduction <maximumf>, %137, %cst_49 [1] : vector<16x16xf32> to vector<16xf32>
    %139 = vector.shape_cast %138 : vector<16xf32> to vector<16x1xf32>
    %140 = vector.broadcast %139 : vector<16x1xf32> to vector<16x16xf32>
    %141 = arith.subf %137, %140 : vector<16x16xf32>
    %142 = math.exp %141 : vector<16x16xf32>
    %cst_50 = arith.constant dense<0.000000e+00> : vector<16xf32>
    %143 = vector.multi_reduction <add>, %142, %cst_50 [1] : vector<16x16xf32> to vector<16xf32>
    %144 = vector.shape_cast %143 : vector<16xf32> to vector<16x1xf32>
    %145 = tpu.reciprocal %144 {approx = true} : vector<16x1xf32> -> vector<16x1xf32>
    %146 = vector.broadcast %145 : vector<16x1xf32> to vector<16x16xf32>
    %147 = arith.mulf %142, %146 : vector<16x16xf32>
    %cst_51 = arith.constant dense<0.000000e+00> : vector<16x8xf32>
    %148 = tpu.matmul %147, %133, %cst_51 {dimension_numbers = #tpu.dot_dimension_numbers<[1], [0], [0], [1], [0, 0, 1, 1], [], []>} : vector<16x16xf32>, vector<16x8xf32>, vector<16x8xf32> -> vector<16x8xf32>
    %149 = tpu.concatenate %94, %112, %130, %148 in 1 : vector<16x8xf32>, vector<16x8xf32>, vector<16x8xf32>, vector<16x8xf32> -> vector<16x32xf32>
    %cst_52 = arith.constant dense<0.000000e+00> : vector<16x32xf32>
    %150 = tpu.matmul %149, %40, %cst_52 {dimension_numbers = #tpu.dot_dimension_numbers<[1], [0], [0], [1], [0, 0, 1, 1], [], []>} : vector<16x32xf32>, vector<32x32xf32>, vector<16x32xf32> -> vector<16x32xf32>
    %151 = vector.broadcast %47 : vector<1x32xf32> to vector<16x32xf32>
    %152 = arith.addf %150, %151 : vector<16x32xf32>
    %153 = arith.addf %6, %152 : vector<16x32xf32>
    %cst_53 = arith.constant dense<0.000000e+00> : vector<16xf32>
    %154 = vector.multi_reduction <add>, %153, %cst_53 [1] : vector<16x32xf32> to vector<16xf32>
    %155 = vector.shape_cast %154 : vector<16xf32> to vector<16x1xf32>
    %cst_54 = arith.constant 3.200000e+01 : f32
    %156 = vector.broadcast %cst_54 : f32 to vector<16x1xf32>
    %157 = arith.divf %155, %156 : vector<16x1xf32>
    %158 = vector.broadcast %157 : vector<16x1xf32> to vector<16x32xf32>
    %159 = arith.subf %153, %158 : vector<16x32xf32>
    %160 = vector.broadcast %157 : vector<16x1xf32> to vector<16x32xf32>
    %161 = arith.subf %153, %160 : vector<16x32xf32>
    %162 = arith.mulf %159, %161 : vector<16x32xf32>
    %cst_55 = arith.constant dense<0.000000e+00> : vector<16xf32>
    %163 = vector.multi_reduction <add>, %162, %cst_55 [1] : vector<16x32xf32> to vector<16xf32>
    %164 = vector.shape_cast %163 : vector<16xf32> to vector<16x1xf32>
    %cst_56 = arith.constant 3.200000e+01 : f32
    %165 = vector.broadcast %cst_56 : f32 to vector<16x1xf32>
    %166 = arith.divf %164, %165 : vector<16x1xf32>
    %167 = vector.broadcast %157 : vector<16x1xf32> to vector<16x32xf32>
    %168 = arith.subf %153, %167 : vector<16x32xf32>
    %cst_57 = arith.constant 9.99999974E-6 : f32
    %169 = vector.broadcast %cst_57 : f32 to vector<16x1xf32>
    %170 = arith.addf %166, %169 : vector<16x1xf32>
    %171 = math.rsqrt %170 : vector<16x1xf32>
    %172 = vector.broadcast %171 : vector<16x1xf32> to vector<16x32xf32>
    %173 = arith.mulf %168, %172 : vector<16x32xf32>
    %174 = vector.broadcast %48 : vector<1x32xf32> to vector<16x32xf32>
    %175 = arith.mulf %173, %174 : vector<16x32xf32>
    %176 = vector.broadcast %49 : vector<1x32xf32> to vector<16x32xf32>
    %177 = arith.addf %175, %176 : vector<16x32xf32>
    %cst_58 = arith.constant dense<0.000000e+00> : vector<16x64xf32>
    %178 = tpu.matmul %177, %42, %cst_58 {dimension_numbers = #tpu.dot_dimension_numbers<[1], [0], [0], [1], [0, 0, 1, 1], [], []>} : vector<16x32xf32>, vector<32x64xf32>, vector<16x64xf32> -> vector<16x64xf32>
    %179 = vector.broadcast %51 : vector<1x64xf32> to vector<16x64xf32>
    %180 = arith.addf %178, %179 : vector<16x64xf32>
    %cst_59 = arith.constant 5.000000e-01 : f32
    %181 = vector.broadcast %cst_59 : f32 to vector<16x64xf32>
    %182 = arith.mulf %181, %180 : vector<16x64xf32>
    %cst_60 = arith.constant 0.707106769 : f32
    %183 = vector.broadcast %cst_60 : f32 to vector<16x64xf32>
    %184 = arith.mulf %180, %183 : vector<16x64xf32>
    %cst_61 = arith.constant 0.000000e+00 : f32
    %185 = vector.broadcast %cst_61 : f32 to vector<16x64xf32>
    %186 = arith.cmpf oge, %184, %185 : vector<16x64xf32>
    %cst_62 = arith.constant 1.000000e+00 : f32
    %cst_63 = arith.constant -1.000000e+00 : f32
    %187 = vector.broadcast %cst_62 : f32 to vector<16x64xf32>
    %188 = vector.broadcast %cst_63 : f32 to vector<16x64xf32>
    %189 = arith.select %186, %187, %188 : vector<16x64xi1>, vector<16x64xf32>
    %190 = math.absf %184 : vector<16x64xf32>
    %cst_64 = arith.constant 0.327591091 : f32
    %191 = vector.broadcast %cst_64 : f32 to vector<16x64xf32>
    %192 = arith.mulf %191, %190 : vector<16x64xf32>
    %cst_65 = arith.constant 1.000000e+00 : f32
    %193 = vector.broadcast %cst_65 : f32 to vector<16x64xf32>
    %194 = arith.addf %193, %192 : vector<16x64xf32>
    %cst_66 = arith.constant 1.000000e+00 : f32
    %195 = vector.broadcast %cst_66 : f32 to vector<16x64xf32>
    %196 = arith.divf %195, %194 : vector<16x64xf32>
    %cst_67 = arith.constant 1.06140542 : f32
    %197 = vector.broadcast %cst_67 : f32 to vector<16x64xf32>
    %198 = arith.mulf %197, %196 : vector<16x64xf32>
    %cst_68 = arith.constant -1.45315206 : f32
    %199 = vector.broadcast %cst_68 : f32 to vector<16x64xf32>
    %200 = arith.addf %198, %199 : vector<16x64xf32>
    %201 = arith.mulf %200, %196 : vector<16x64xf32>
    %cst_69 = arith.constant 1.42141378 : f32
    %202 = vector.broadcast %cst_69 : f32 to vector<16x64xf32>
    %203 = arith.addf %201, %202 : vector<16x64xf32>
    %204 = arith.mulf %203, %196 : vector<16x64xf32>
    %cst_70 = arith.constant -0.284496725 : f32
    %205 = vector.broadcast %cst_70 : f32 to vector<16x64xf32>
    %206 = arith.addf %204, %205 : vector<16x64xf32>
    %207 = arith.mulf %206, %196 : vector<16x64xf32>
    %cst_71 = arith.constant 0.254829586 : f32
    %208 = vector.broadcast %cst_71 : f32 to vector<16x64xf32>
    %209 = arith.addf %207, %208 : vector<16x64xf32>
    %210 = arith.mulf %209, %196 : vector<16x64xf32>
    %cst_72 = arith.constant 0.000000e+00 : f32
    %211 = vector.broadcast %cst_72 : f32 to vector<16x64xf32>
    %212 = arith.subf %211, %190 : vector<16x64xf32>
    %213 = arith.mulf %212, %190 : vector<16x64xf32>
    %214 = math.exp %213 : vector<16x64xf32>
    %215 = arith.mulf %210, %214 : vector<16x64xf32>
    %cst_73 = arith.constant 1.000000e+00 : f32
    %216 = vector.broadcast %cst_73 : f32 to vector<16x64xf32>
    %217 = arith.subf %216, %215 : vector<16x64xf32>
    %218 = arith.mulf %189, %217 : vector<16x64xf32>
    %cst_74 = arith.constant 1.000000e+00 : f32
    %219 = vector.broadcast %cst_74 : f32 to vector<16x64xf32>
    %220 = arith.addf %219, %218 : vector<16x64xf32>
    %221 = arith.mulf %182, %220 : vector<16x64xf32>
    %cst_75 = arith.constant dense<0.000000e+00> : vector<16x32xf32>
    %222 = tpu.matmul %221, %44, %cst_75 {dimension_numbers = #tpu.dot_dimension_numbers<[1], [0], [0], [1], [0, 0, 1, 1], [], []>} : vector<16x64xf32>, vector<64x32xf32>, vector<16x32xf32> -> vector<16x32xf32>
    %223 = arith.addf %153, %222 : vector<16x32xf32>
    %224 = vector.broadcast %50 : vector<1x32xf32> to vector<16x32xf32>
    %225 = arith.addf %223, %224 : vector<16x32xf32>
    %c1 = arith.constant 1 : index
    %c0_76 = arith.constant 0 : index
    %c0_77 = arith.constant 0 : index
    %226 = vector.load %arg8[%c1, %c0_76, %c0_77] : memref<4x7x64xf32, #tpu.memory_space<vmem>>, vector<1x7x64xf32>
    %227 = vector.shape_cast %226 : vector<1x7x64xf32> to vector<7x64xf32>
    %c1_78 = arith.constant 1 : index
    %c0_79 = arith.constant 0 : index
    %c0_80 = arith.constant 0 : index
    %228 = vector.load %arg4[%c1_78, %c0_79, %c0_80] : memref<4x32x96xf32, #tpu.memory_space<vmem>>, vector<1x32x96xf32>
    %229 = vector.shape_cast %228 : vector<1x32x96xf32> to vector<32x96xf32>
    %c1_81 = arith.constant 1 : index
    %c0_82 = arith.constant 0 : index
    %c0_83 = arith.constant 0 : index
    %230 = vector.load %arg5[%c1_81, %c0_82, %c0_83] : memref<4x32x32xf32, #tpu.memory_space<vmem>>, vector<1x32x32xf32>
    %231 = vector.shape_cast %230 : vector<1x32x32xf32> to vector<32x32xf32>
    %c1_84 = arith.constant 1 : index
    %c0_85 = arith.constant 0 : index
    %c0_86 = arith.constant 0 : index
    %232 = vector.load %arg6[%c1_84, %c0_85, %c0_86] : memref<4x32x64xf32, #tpu.memory_space<vmem>>, vector<1x32x64xf32>
    %233 = vector.shape_cast %232 : vector<1x32x64xf32> to vector<32x64xf32>
    %c1_87 = arith.constant 1 : index
    %c0_88 = arith.constant 0 : index
    %c0_89 = arith.constant 0 : index
    %234 = vector.load %arg7[%c1_87, %c0_88, %c0_89] : memref<4x64x32xf32, #tpu.memory_space<vmem>>, vector<1x64x32xf32>
    %235 = vector.shape_cast %234 : vector<1x64x32xf32> to vector<64x32xf32>
    %236 = vector.extract_strided_slice %227 {offsets = [0, 0], sizes = [1, 32], strides = [1, 1]} : vector<7x64xf32> to vector<1x32xf32>
    %237 = vector.extract_strided_slice %227 {offsets = [1, 0], sizes = [1, 32], strides = [1, 1]} : vector<7x64xf32> to vector<1x32xf32>
    %238 = vector.extract_strided_slice %227 {offsets = [2, 0], sizes = [1, 32], strides = [1, 1]} : vector<7x64xf32> to vector<1x32xf32>
    %239 = vector.extract_strided_slice %227 {offsets = [3, 0], sizes = [1, 32], strides = [1, 1]} : vector<7x64xf32> to vector<1x32xf32>
    %240 = vector.extract_strided_slice %227 {offsets = [4, 0], sizes = [1, 32], strides = [1, 1]} : vector<7x64xf32> to vector<1x32xf32>
    %241 = vector.extract_strided_slice %227 {offsets = [5, 0], sizes = [1, 32], strides = [1, 1]} : vector<7x64xf32> to vector<1x32xf32>
    %242 = vector.extract_strided_slice %227 {offsets = [6, 0], sizes = [1, 64], strides = [1, 1]} : vector<7x64xf32> to vector<1x64xf32>
    %cst_90 = arith.constant dense<0.000000e+00> : vector<16xf32>
    %243 = vector.multi_reduction <add>, %225, %cst_90 [1] : vector<16x32xf32> to vector<16xf32>
    %244 = vector.shape_cast %243 : vector<16xf32> to vector<16x1xf32>
    %cst_91 = arith.constant 3.200000e+01 : f32
    %245 = vector.broadcast %cst_91 : f32 to vector<16x1xf32>
    %246 = arith.divf %244, %245 : vector<16x1xf32>
    %247 = vector.broadcast %246 : vector<16x1xf32> to vector<16x32xf32>
    %248 = arith.subf %225, %247 : vector<16x32xf32>
    %249 = vector.broadcast %246 : vector<16x1xf32> to vector<16x32xf32>
    %250 = arith.subf %225, %249 : vector<16x32xf32>
    %251 = arith.mulf %248, %250 : vector<16x32xf32>
    %cst_92 = arith.constant dense<0.000000e+00> : vector<16xf32>
    %252 = vector.multi_reduction <add>, %251, %cst_92 [1] : vector<16x32xf32> to vector<16xf32>
    %253 = vector.shape_cast %252 : vector<16xf32> to vector<16x1xf32>
    %cst_93 = arith.constant 3.200000e+01 : f32
    %254 = vector.broadcast %cst_93 : f32 to vector<16x1xf32>
    %255 = arith.divf %253, %254 : vector<16x1xf32>
    %256 = vector.broadcast %246 : vector<16x1xf32> to vector<16x32xf32>
    %257 = arith.subf %225, %256 : vector<16x32xf32>
    %cst_94 = arith.constant 9.99999974E-6 : f32
    %258 = vector.broadcast %cst_94 : f32 to vector<16x1xf32>
    %259 = arith.addf %255, %258 : vector<16x1xf32>
    %260 = math.rsqrt %259 : vector<16x1xf32>
    %261 = vector.broadcast %260 : vector<16x1xf32> to vector<16x32xf32>
    %262 = arith.mulf %257, %261 : vector<16x32xf32>
    %263 = vector.broadcast %236 : vector<1x32xf32> to vector<16x32xf32>
    %264 = arith.mulf %262, %263 : vector<16x32xf32>
    %265 = vector.broadcast %237 : vector<1x32xf32> to vector<16x32xf32>
    %266 = arith.addf %264, %265 : vector<16x32xf32>
    %cst_95 = arith.constant dense<0.000000e+00> : vector<16x96xf32>
    %267 = tpu.matmul %266, %229, %cst_95 {dimension_numbers = #tpu.dot_dimension_numbers<[1], [0], [0], [1], [0, 0, 1, 1], [], []>} : vector<16x32xf32>, vector<32x96xf32>, vector<16x96xf32> -> vector<16x96xf32>
    %268 = vector.extract_strided_slice %267 {offsets = [0, 0], sizes = [16, 8], strides = [1, 1]} : vector<16x96xf32> to vector<16x8xf32>
    %269 = vector.extract_strided_slice %267 {offsets = [0, 32], sizes = [16, 8], strides = [1, 1]} : vector<16x96xf32> to vector<16x8xf32>
    %270 = vector.extract_strided_slice %267 {offsets = [0, 64], sizes = [16, 8], strides = [1, 1]} : vector<16x96xf32> to vector<16x8xf32>
    %cst_96 = arith.constant dense<0.000000e+00> : vector<16x16xf32>
    %271 = tpu.matmul %268, %269, %cst_96 {dimension_numbers = #tpu.dot_dimension_numbers<[1], [1], [0], [0], [0, 0, 1, 0], [], []>} : vector<16x8xf32>, vector<16x8xf32>, vector<16x16xf32> -> vector<16x16xf32>
    %cst_97 = arith.constant 0.353553385 : f32
    %272 = vector.broadcast %cst_97 : f32 to vector<16x16xf32>
    %273 = arith.mulf %271, %272 : vector<16x16xf32>
    %274 = arith.addf %273, %34 : vector<16x16xf32>
    %cst_98 = arith.constant dense<0xFF800000> : vector<16xf32>
    %275 = vector.multi_reduction <maximumf>, %274, %cst_98 [1] : vector<16x16xf32> to vector<16xf32>
    %276 = vector.shape_cast %275 : vector<16xf32> to vector<16x1xf32>
    %277 = vector.broadcast %276 : vector<16x1xf32> to vector<16x16xf32>
    %278 = arith.subf %274, %277 : vector<16x16xf32>
    %279 = math.exp %278 : vector<16x16xf32>
    %cst_99 = arith.constant dense<0.000000e+00> : vector<16xf32>
    %280 = vector.multi_reduction <add>, %279, %cst_99 [1] : vector<16x16xf32> to vector<16xf32>
    %281 = vector.shape_cast %280 : vector<16xf32> to vector<16x1xf32>
    %282 = tpu.reciprocal %281 {approx = true} : vector<16x1xf32> -> vector<16x1xf32>
    %283 = vector.broadcast %282 : vector<16x1xf32> to vector<16x16xf32>
    %284 = arith.mulf %279, %283 : vector<16x16xf32>
    %cst_100 = arith.constant dense<0.000000e+00> : vector<16x8xf32>
    %285 = tpu.matmul %284, %270, %cst_100 {dimension_numbers = #tpu.dot_dimension_numbers<[1], [0], [0], [1], [0, 0, 1, 1], [], []>} : vector<16x16xf32>, vector<16x8xf32>, vector<16x8xf32> -> vector<16x8xf32>
    %286 = vector.extract_strided_slice %267 {offsets = [0, 8], sizes = [16, 8], strides = [1, 1]} : vector<16x96xf32> to vector<16x8xf32>
    %287 = vector.extract_strided_slice %267 {offsets = [0, 40], sizes = [16, 8], strides = [1, 1]} : vector<16x96xf32> to vector<16x8xf32>
    %288 = vector.extract_strided_slice %267 {offsets = [0, 72], sizes = [16, 8], strides = [1, 1]} : vector<16x96xf32> to vector<16x8xf32>
    %cst_101 = arith.constant dense<0.000000e+00> : vector<16x16xf32>
    %289 = tpu.matmul %286, %287, %cst_101 {dimension_numbers = #tpu.dot_dimension_numbers<[1], [1], [0], [0], [0, 0, 1, 0], [], []>} : vector<16x8xf32>, vector<16x8xf32>, vector<16x16xf32> -> vector<16x16xf32>
    %cst_102 = arith.constant 0.353553385 : f32
    %290 = vector.broadcast %cst_102 : f32 to vector<16x16xf32>
    %291 = arith.mulf %289, %290 : vector<16x16xf32>
    %292 = arith.addf %291, %34 : vector<16x16xf32>
    %cst_103 = arith.constant dense<0xFF800000> : vector<16xf32>
    %293 = vector.multi_reduction <maximumf>, %292, %cst_103 [1] : vector<16x16xf32> to vector<16xf32>
    %294 = vector.shape_cast %293 : vector<16xf32> to vector<16x1xf32>
    %295 = vector.broadcast %294 : vector<16x1xf32> to vector<16x16xf32>
    %296 = arith.subf %292, %295 : vector<16x16xf32>
    %297 = math.exp %296 : vector<16x16xf32>
    %cst_104 = arith.constant dense<0.000000e+00> : vector<16xf32>
    %298 = vector.multi_reduction <add>, %297, %cst_104 [1] : vector<16x16xf32> to vector<16xf32>
    %299 = vector.shape_cast %298 : vector<16xf32> to vector<16x1xf32>
    %300 = tpu.reciprocal %299 {approx = true} : vector<16x1xf32> -> vector<16x1xf32>
    %301 = vector.broadcast %300 : vector<16x1xf32> to vector<16x16xf32>
    %302 = arith.mulf %297, %301 : vector<16x16xf32>
    %cst_105 = arith.constant dense<0.000000e+00> : vector<16x8xf32>
    %303 = tpu.matmul %302, %288, %cst_105 {dimension_numbers = #tpu.dot_dimension_numbers<[1], [0], [0], [1], [0, 0, 1, 1], [], []>} : vector<16x16xf32>, vector<16x8xf32>, vector<16x8xf32> -> vector<16x8xf32>
    %304 = vector.extract_strided_slice %267 {offsets = [0, 16], sizes = [16, 8], strides = [1, 1]} : vector<16x96xf32> to vector<16x8xf32>
    %305 = vector.extract_strided_slice %267 {offsets = [0, 48], sizes = [16, 8], strides = [1, 1]} : vector<16x96xf32> to vector<16x8xf32>
    %306 = vector.extract_strided_slice %267 {offsets = [0, 80], sizes = [16, 8], strides = [1, 1]} : vector<16x96xf32> to vector<16x8xf32>
    %cst_106 = arith.constant dense<0.000000e+00> : vector<16x16xf32>
    %307 = tpu.matmul %304, %305, %cst_106 {dimension_numbers = #tpu.dot_dimension_numbers<[1], [1], [0], [0], [0, 0, 1, 0], [], []>} : vector<16x8xf32>, vector<16x8xf32>, vector<16x16xf32> -> vector<16x16xf32>
    %cst_107 = arith.constant 0.353553385 : f32
    %308 = vector.broadcast %cst_107 : f32 to vector<16x16xf32>
    %309 = arith.mulf %307, %308 : vector<16x16xf32>
    %310 = arith.addf %309, %34 : vector<16x16xf32>
    %cst_108 = arith.constant dense<0xFF800000> : vector<16xf32>
    %311 = vector.multi_reduction <maximumf>, %310, %cst_108 [1] : vector<16x16xf32> to vector<16xf32>
    %312 = vector.shape_cast %311 : vector<16xf32> to vector<16x1xf32>
    %313 = vector.broadcast %312 : vector<16x1xf32> to vector<16x16xf32>
    %314 = arith.subf %310, %313 : vector<16x16xf32>
    %315 = math.exp %314 : vector<16x16xf32>
    %cst_109 = arith.constant dense<0.000000e+00> : vector<16xf32>
    %316 = vector.multi_reduction <add>, %315, %cst_109 [1] : vector<16x16xf32> to vector<16xf32>
    %317 = vector.shape_cast %316 : vector<16xf32> to vector<16x1xf32>
    %318 = tpu.reciprocal %317 {approx = true} : vector<16x1xf32> -> vector<16x1xf32>
    %319 = vector.broadcast %318 : vector<16x1xf32> to vector<16x16xf32>
    %320 = arith.mulf %315, %319 : vector<16x16xf32>
    %cst_110 = arith.constant dense<0.000000e+00> : vector<16x8xf32>
    %321 = tpu.matmul %320, %306, %cst_110 {dimension_numbers = #tpu.dot_dimension_numbers<[1], [0], [0], [1], [0, 0, 1, 1], [], []>} : vector<16x16xf32>, vector<16x8xf32>, vector<16x8xf32> -> vector<16x8xf32>
    %322 = vector.extract_strided_slice %267 {offsets = [0, 24], sizes = [16, 8], strides = [1, 1]} : vector<16x96xf32> to vector<16x8xf32>
    %323 = vector.extract_strided_slice %267 {offsets = [0, 56], sizes = [16, 8], strides = [1, 1]} : vector<16x96xf32> to vector<16x8xf32>
    %324 = vector.extract_strided_slice %267 {offsets = [0, 88], sizes = [16, 8], strides = [1, 1]} : vector<16x96xf32> to vector<16x8xf32>
    %cst_111 = arith.constant dense<0.000000e+00> : vector<16x16xf32>
    %325 = tpu.matmul %322, %323, %cst_111 {dimension_numbers = #tpu.dot_dimension_numbers<[1], [1], [0], [0], [0, 0, 1, 0], [], []>} : vector<16x8xf32>, vector<16x8xf32>, vector<16x16xf32> -> vector<16x16xf32>
    %cst_112 = arith.constant 0.353553385 : f32
    %326 = vector.broadcast %cst_112 : f32 to vector<16x16xf32>
    %327 = arith.mulf %325, %326 : vector<16x16xf32>
    %328 = arith.addf %327, %34 : vector<16x16xf32>
    %cst_113 = arith.constant dense<0xFF800000> : vector<16xf32>
    %329 = vector.multi_reduction <maximumf>, %328, %cst_113 [1] : vector<16x16xf32> to vector<16xf32>
    %330 = vector.shape_cast %329 : vector<16xf32> to vector<16x1xf32>
    %331 = vector.broadcast %330 : vector<16x1xf32> to vector<16x16xf32>
    %332 = arith.subf %328, %331 : vector<16x16xf32>
    %333 = math.exp %332 : vector<16x16xf32>
    %cst_114 = arith.constant dense<0.000000e+00> : vector<16xf32>
    %334 = vector.multi_reduction <add>, %333, %cst_114 [1] : vector<16x16xf32> to vector<16xf32>
    %335 = vector.shape_cast %334 : vector<16xf32> to vector<16x1xf32>
    %336 = tpu.reciprocal %335 {approx = true} : vector<16x1xf32> -> vector<16x1xf32>
    %337 = vector.broadcast %336 : vector<16x1xf32> to vector<16x16xf32>
    %338 = arith.mulf %333, %337 : vector<16x16xf32>
    %cst_115 = arith.constant dense<0.000000e+00> : vector<16x8xf32>
    %339 = tpu.matmul %338, %324, %cst_115 {dimension_numbers = #tpu.dot_dimension_numbers<[1], [0], [0], [1], [0, 0, 1, 1], [], []>} : vector<16x16xf32>, vector<16x8xf32>, vector<16x8xf32> -> vector<16x8xf32>
    %340 = tpu.concatenate %285, %303, %321, %339 in 1 : vector<16x8xf32>, vector<16x8xf32>, vector<16x8xf32>, vector<16x8xf32> -> vector<16x32xf32>
    %cst_116 = arith.constant dense<0.000000e+00> : vector<16x32xf32>
    %341 = tpu.matmul %340, %231, %cst_116 {dimension_numbers = #tpu.dot_dimension_numbers<[1], [0], [0], [1], [0, 0, 1, 1], [], []>} : vector<16x32xf32>, vector<32x32xf32>, vector<16x32xf32> -> vector<16x32xf32>
    %342 = vector.broadcast %238 : vector<1x32xf32> to vector<16x32xf32>
    %343 = arith.addf %341, %342 : vector<16x32xf32>
    %344 = arith.addf %225, %343 : vector<16x32xf32>
    %cst_117 = arith.constant dense<0.000000e+00> : vector<16xf32>
    %345 = vector.multi_reduction <add>, %344, %cst_117 [1] : vector<16x32xf32> to vector<16xf32>
    %346 = vector.shape_cast %345 : vector<16xf32> to vector<16x1xf32>
    %cst_118 = arith.constant 3.200000e+01 : f32
    %347 = vector.broadcast %cst_118 : f32 to vector<16x1xf32>
    %348 = arith.divf %346, %347 : vector<16x1xf32>
    %349 = vector.broadcast %348 : vector<16x1xf32> to vector<16x32xf32>
    %350 = arith.subf %344, %349 : vector<16x32xf32>
    %351 = vector.broadcast %348 : vector<16x1xf32> to vector<16x32xf32>
    %352 = arith.subf %344, %351 : vector<16x32xf32>
    %353 = arith.mulf %350, %352 : vector<16x32xf32>
    %cst_119 = arith.constant dense<0.000000e+00> : vector<16xf32>
    %354 = vector.multi_reduction <add>, %353, %cst_119 [1] : vector<16x32xf32> to vector<16xf32>
    %355 = vector.shape_cast %354 : vector<16xf32> to vector<16x1xf32>
    %cst_120 = arith.constant 3.200000e+01 : f32
    %356 = vector.broadcast %cst_120 : f32 to vector<16x1xf32>
    %357 = arith.divf %355, %356 : vector<16x1xf32>
    %358 = vector.broadcast %348 : vector<16x1xf32> to vector<16x32xf32>
    %359 = arith.subf %344, %358 : vector<16x32xf32>
    %cst_121 = arith.constant 9.99999974E-6 : f32
    %360 = vector.broadcast %cst_121 : f32 to vector<16x1xf32>
    %361 = arith.addf %357, %360 : vector<16x1xf32>
    %362 = math.rsqrt %361 : vector<16x1xf32>
    %363 = vector.broadcast %362 : vector<16x1xf32> to vector<16x32xf32>
    %364 = arith.mulf %359, %363 : vector<16x32xf32>
    %365 = vector.broadcast %239 : vector<1x32xf32> to vector<16x32xf32>
    %366 = arith.mulf %364, %365 : vector<16x32xf32>
    %367 = vector.broadcast %240 : vector<1x32xf32> to vector<16x32xf32>
    %368 = arith.addf %366, %367 : vector<16x32xf32>
    %cst_122 = arith.constant dense<0.000000e+00> : vector<16x64xf32>
    %369 = tpu.matmul %368, %233, %cst_122 {dimension_numbers = #tpu.dot_dimension_numbers<[1], [0], [0], [1], [0, 0, 1, 1], [], []>} : vector<16x32xf32>, vector<32x64xf32>, vector<16x64xf32> -> vector<16x64xf32>
    %370 = vector.broadcast %242 : vector<1x64xf32> to vector<16x64xf32>
    %371 = arith.addf %369, %370 : vector<16x64xf32>
    %cst_123 = arith.constant 5.000000e-01 : f32
    %372 = vector.broadcast %cst_123 : f32 to vector<16x64xf32>
    %373 = arith.mulf %372, %371 : vector<16x64xf32>
    %cst_124 = arith.constant 0.707106769 : f32
    %374 = vector.broadcast %cst_124 : f32 to vector<16x64xf32>
    %375 = arith.mulf %371, %374 : vector<16x64xf32>
    %cst_125 = arith.constant 0.000000e+00 : f32
    %376 = vector.broadcast %cst_125 : f32 to vector<16x64xf32>
    %377 = arith.cmpf oge, %375, %376 : vector<16x64xf32>
    %cst_126 = arith.constant 1.000000e+00 : f32
    %cst_127 = arith.constant -1.000000e+00 : f32
    %378 = vector.broadcast %cst_126 : f32 to vector<16x64xf32>
    %379 = vector.broadcast %cst_127 : f32 to vector<16x64xf32>
    %380 = arith.select %377, %378, %379 : vector<16x64xi1>, vector<16x64xf32>
    %381 = math.absf %375 : vector<16x64xf32>
    %cst_128 = arith.constant 0.327591091 : f32
    %382 = vector.broadcast %cst_128 : f32 to vector<16x64xf32>
    %383 = arith.mulf %382, %381 : vector<16x64xf32>
    %cst_129 = arith.constant 1.000000e+00 : f32
    %384 = vector.broadcast %cst_129 : f32 to vector<16x64xf32>
    %385 = arith.addf %384, %383 : vector<16x64xf32>
    %cst_130 = arith.constant 1.000000e+00 : f32
    %386 = vector.broadcast %cst_130 : f32 to vector<16x64xf32>
    %387 = arith.divf %386, %385 : vector<16x64xf32>
    %cst_131 = arith.constant 1.06140542 : f32
    %388 = vector.broadcast %cst_131 : f32 to vector<16x64xf32>
    %389 = arith.mulf %388, %387 : vector<16x64xf32>
    %cst_132 = arith.constant -1.45315206 : f32
    %390 = vector.broadcast %cst_132 : f32 to vector<16x64xf32>
    %391 = arith.addf %389, %390 : vector<16x64xf32>
    %392 = arith.mulf %391, %387 : vector<16x64xf32>
    %cst_133 = arith.constant 1.42141378 : f32
    %393 = vector.broadcast %cst_133 : f32 to vector<16x64xf32>
    %394 = arith.addf %392, %393 : vector<16x64xf32>
    %395 = arith.mulf %394, %387 : vector<16x64xf32>
    %cst_134 = arith.constant -0.284496725 : f32
    %396 = vector.broadcast %cst_134 : f32 to vector<16x64xf32>
    %397 = arith.addf %395, %396 : vector<16x64xf32>
    %398 = arith.mulf %397, %387 : vector<16x64xf32>
    %cst_135 = arith.constant 0.254829586 : f32
    %399 = vector.broadcast %cst_135 : f32 to vector<16x64xf32>
    %400 = arith.addf %398, %399 : vector<16x64xf32>
    %401 = arith.mulf %400, %387 : vector<16x64xf32>
    %cst_136 = arith.constant 0.000000e+00 : f32
    %402 = vector.broadcast %cst_136 : f32 to vector<16x64xf32>
    %403 = arith.subf %402, %381 : vector<16x64xf32>
    %404 = arith.mulf %403, %381 : vector<16x64xf32>
    %405 = math.exp %404 : vector<16x64xf32>
    %406 = arith.mulf %401, %405 : vector<16x64xf32>
    %cst_137 = arith.constant 1.000000e+00 : f32
    %407 = vector.broadcast %cst_137 : f32 to vector<16x64xf32>
    %408 = arith.subf %407, %406 : vector<16x64xf32>
    %409 = arith.mulf %380, %408 : vector<16x64xf32>
    %cst_138 = arith.constant 1.000000e+00 : f32
    %410 = vector.broadcast %cst_138 : f32 to vector<16x64xf32>
    %411 = arith.addf %410, %409 : vector<16x64xf32>
    %412 = arith.mulf %373, %411 : vector<16x64xf32>
    %cst_139 = arith.constant dense<0.000000e+00> : vector<16x32xf32>
    %413 = tpu.matmul %412, %235, %cst_139 {dimension_numbers = #tpu.dot_dimension_numbers<[1], [0], [0], [1], [0, 0, 1, 1], [], []>} : vector<16x64xf32>, vector<64x32xf32>, vector<16x32xf32> -> vector<16x32xf32>
    %414 = arith.addf %344, %413 : vector<16x32xf32>
    %415 = vector.broadcast %241 : vector<1x32xf32> to vector<16x32xf32>
    %416 = arith.addf %414, %415 : vector<16x32xf32>
    %417 = vector.extract_strided_slice %0 {offsets = [0, 0], sizes = [1, 32], strides = [1, 1]} : vector<6x128xf32> to vector<1x32xf32>
    %418 = vector.extract_strided_slice %0 {offsets = [1, 0], sizes = [1, 32], strides = [1, 1]} : vector<6x128xf32> to vector<1x32xf32>
    %cst_140 = arith.constant dense<0.000000e+00> : vector<16xf32>
    %419 = vector.multi_reduction <add>, %416, %cst_140 [1] : vector<16x32xf32> to vector<16xf32>
    %420 = vector.shape_cast %419 : vector<16xf32> to vector<16x1xf32>
    %cst_141 = arith.constant 3.200000e+01 : f32
    %421 = vector.broadcast %cst_141 : f32 to vector<16x1xf32>
    %422 = arith.divf %420, %421 : vector<16x1xf32>
    %423 = vector.broadcast %422 : vector<16x1xf32> to vector<16x32xf32>
    %424 = arith.subf %416, %423 : vector<16x32xf32>
    %425 = vector.broadcast %422 : vector<16x1xf32> to vector<16x32xf32>
    %426 = arith.subf %416, %425 : vector<16x32xf32>
    %427 = arith.mulf %424, %426 : vector<16x32xf32>
    %cst_142 = arith.constant dense<0.000000e+00> : vector<16xf32>
    %428 = vector.multi_reduction <add>, %427, %cst_142 [1] : vector<16x32xf32> to vector<16xf32>
    %429 = vector.shape_cast %428 : vector<16xf32> to vector<16x1xf32>
    %cst_143 = arith.constant 3.200000e+01 : f32
    %430 = vector.broadcast %cst_143 : f32 to vector<16x1xf32>
    %431 = arith.divf %429, %430 : vector<16x1xf32>
    %432 = vector.broadcast %422 : vector<16x1xf32> to vector<16x32xf32>
    %433 = arith.subf %416, %432 : vector<16x32xf32>
    %cst_144 = arith.constant 9.99999974E-6 : f32
    %434 = vector.broadcast %cst_144 : f32 to vector<16x1xf32>
    %435 = arith.addf %431, %434 : vector<16x1xf32>
    %436 = math.rsqrt %435 : vector<16x1xf32>
    %437 = vector.broadcast %436 : vector<16x1xf32> to vector<16x32xf32>
    %438 = arith.mulf %433, %437 : vector<16x32xf32>
    %439 = vector.broadcast %417 : vector<1x32xf32> to vector<16x32xf32>
    %440 = arith.mulf %438, %439 : vector<16x32xf32>
    %441 = vector.broadcast %418 : vector<1x32xf32> to vector<16x32xf32>
    %442 = arith.addf %440, %441 : vector<16x32xf32>
    %c0_145 = arith.constant 0 : index
    %c0_146 = arith.constant 0 : index
    %c0_147 = arith.constant 0 : index
    %443 = vector.load %arg9[%c0_145, %c0_146, %c0_147] : memref<2x32x128xf32, #tpu.memory_space<vmem>>, vector<1x32x128xf32>
    %444 = vector.shape_cast %443 : vector<1x32x128xf32> to vector<32x128xf32>
    %445 = vector.extract_strided_slice %444 {offsets = [0, 0], sizes = [32, 32], strides = [1, 1]} : vector<32x128xf32> to vector<32x32xf32>
    %cst_148 = arith.constant dense<0.000000e+00> : vector<16x32xf32>
    %446 = tpu.matmul %442, %445, %cst_148 {dimension_numbers = #tpu.dot_dimension_numbers<[1], [0], [0], [1], [0, 0, 1, 1], [], []>} : vector<16x32xf32>, vector<32x32xf32>, vector<16x32xf32> -> vector<16x32xf32>
    %447 = vector.extract_strided_slice %0 {offsets = [2, 0], sizes = [1, 32], strides = [1, 1]} : vector<6x128xf32> to vector<1x32xf32>
    %448 = vector.broadcast %447 : vector<1x32xf32> to vector<16x32xf32>
    %449 = arith.addf %446, %448 : vector<16x32xf32>
    %c0_149 = arith.constant 0 : index
    %c0_150 = arith.constant 0 : index
    %450 = vector.load %arg11[%c0_149, %c0_150] : memref<17x32xf32, #tpu.memory_space<vmem>>, vector<17x32xf32>
    %451 = vector.extract_strided_slice %450 {offsets = [0, 0], sizes = [16, 32], strides = [1, 1]} : vector<17x32xf32> to vector<16x32xf32>
    %452 = vector.extract_strided_slice %450 {offsets = [16, 0], sizes = [1, 32], strides = [1, 1]} : vector<17x32xf32> to vector<1x32xf32>
    %453 = vector.broadcast %452 : vector<1x32xf32> to vector<16x32xf32>
    %454 = arith.addf %451, %453 : vector<16x32xf32>
    %455 = tpu.iota {dimensions = array<i32: 0>} : vector<16x1xi32>
    %cst_151 = arith.constant 0.000000e+00 : f32
    %456 = vector.broadcast %cst_151 : f32 to vector<7x32xf32>
    %c0_152 = arith.constant 0 : index
    %c0_153 = arith.constant 0 : index
    %457 = memref.load %arg1[%c0_152, %c0_153] : memref<2x4xi32, #tpu.memory_space<smem>>
    %458 = vector.extract_strided_slice %449 {offsets = [1, 0], sizes = [1, 32], strides = [1, 1]} : vector<16x32xf32> to vector<1x32xf32>
    %459 = arith.subf %458, %452 : vector<1x32xf32>
    %460 = vector.broadcast %457 : i32 to vector<16x1xi32>
    %461 = arith.cmpi eq, %455, %460 : vector<16x1xi32>
    %462 = vector.broadcast %459 : vector<1x32xf32> to vector<16x32xf32>
    %463 = arith.addf %454, %462 : vector<16x32xf32>
    %464 = vector.shape_cast %461 : vector<16x1xi1> to vector<16x1xi1>
    %465 = vector.broadcast %464 : vector<16x1xi1> to vector<16x32xi1>
    %466 = arith.select %465, %463, %454 : vector<16x32xi1>, vector<16x32xf32>
    %c0_154 = arith.constant 0 : index
    %c1_155 = arith.constant 1 : index
    %467 = memref.load %arg1[%c0_154, %c1_155] : memref<2x4xi32, #tpu.memory_space<smem>>
    %468 = vector.extract_strided_slice %449 {offsets = [2, 0], sizes = [1, 32], strides = [1, 1]} : vector<16x32xf32> to vector<1x32xf32>
    %469 = arith.subf %468, %452 : vector<1x32xf32>
    %470 = vector.broadcast %467 : i32 to vector<16x1xi32>
    %471 = arith.cmpi eq, %455, %470 : vector<16x1xi32>
    %472 = vector.broadcast %469 : vector<1x32xf32> to vector<16x32xf32>
    %473 = arith.addf %466, %472 : vector<16x32xf32>
    %474 = vector.shape_cast %471 : vector<16x1xi1> to vector<16x1xi1>
    %475 = vector.broadcast %474 : vector<16x1xi1> to vector<16x32xi1>
    %476 = arith.select %475, %473, %466 : vector<16x32xi1>, vector<16x32xf32>
    %c0_156 = arith.constant 0 : index
    %c2 = arith.constant 2 : index
    %477 = memref.load %arg1[%c0_156, %c2] : memref<2x4xi32, #tpu.memory_space<smem>>
    %478 = vector.extract_strided_slice %449 {offsets = [3, 0], sizes = [1, 32], strides = [1, 1]} : vector<16x32xf32> to vector<1x32xf32>
    %479 = arith.subf %478, %452 : vector<1x32xf32>
    %480 = vector.broadcast %477 : i32 to vector<16x1xi32>
    %481 = arith.cmpi eq, %455, %480 : vector<16x1xi32>
    %482 = vector.broadcast %479 : vector<1x32xf32> to vector<16x32xf32>
    %483 = arith.addf %476, %482 : vector<16x32xf32>
    %484 = vector.shape_cast %481 : vector<16x1xi1> to vector<16x1xi1>
    %485 = vector.broadcast %484 : vector<16x1xi1> to vector<16x32xi1>
    %486 = arith.select %485, %483, %476 : vector<16x32xi1>, vector<16x32xf32>
    %c0_157 = arith.constant 0 : index
    %c3 = arith.constant 3 : index
    %487 = memref.load %arg1[%c0_157, %c3] : memref<2x4xi32, #tpu.memory_space<smem>>
    %488 = vector.extract_strided_slice %449 {offsets = [4, 0], sizes = [1, 32], strides = [1, 1]} : vector<16x32xf32> to vector<1x32xf32>
    %489 = arith.subf %488, %452 : vector<1x32xf32>
    %490 = vector.broadcast %487 : i32 to vector<16x1xi32>
    %491 = arith.cmpi eq, %455, %490 : vector<16x1xi32>
    %492 = vector.broadcast %489 : vector<1x32xf32> to vector<16x32xf32>
    %493 = arith.addf %486, %492 : vector<16x32xf32>
    %494 = vector.shape_cast %491 : vector<16x1xi1> to vector<16x1xi1>
    %495 = vector.broadcast %494 : vector<16x1xi1> to vector<16x32xi1>
    %496 = arith.select %495, %493, %486 : vector<16x32xi1>, vector<16x32xf32>
    %497 = vector.extract_strided_slice %449 {offsets = [0, 0], sizes = [1, 32], strides = [1, 1]} : vector<16x32xf32> to vector<1x32xf32>
    %c1_158 = arith.constant 1 : index
    %c0_159 = arith.constant 0 : index
    %498 = memref.load %arg1[%c1_158, %c0_159] : memref<2x4xi32, #tpu.memory_space<smem>>
    %499 = vector.extract_strided_slice %449 {offsets = [9, 0], sizes = [1, 32], strides = [1, 1]} : vector<16x32xf32> to vector<1x32xf32>
    %500 = arith.subf %499, %452 : vector<1x32xf32>
    %501 = vector.broadcast %498 : i32 to vector<16x1xi32>
    %502 = arith.cmpi eq, %455, %501 : vector<16x1xi32>
    %503 = vector.broadcast %500 : vector<1x32xf32> to vector<16x32xf32>
    %504 = arith.addf %454, %503 : vector<16x32xf32>
    %505 = vector.shape_cast %502 : vector<16x1xi1> to vector<16x1xi1>
    %506 = vector.broadcast %505 : vector<16x1xi1> to vector<16x32xi1>
    %507 = arith.select %506, %504, %454 : vector<16x32xi1>, vector<16x32xf32>
    %c1_160 = arith.constant 1 : index
    %c1_161 = arith.constant 1 : index
    %508 = memref.load %arg1[%c1_160, %c1_161] : memref<2x4xi32, #tpu.memory_space<smem>>
    %509 = vector.extract_strided_slice %449 {offsets = [10, 0], sizes = [1, 32], strides = [1, 1]} : vector<16x32xf32> to vector<1x32xf32>
    %510 = arith.subf %509, %452 : vector<1x32xf32>
    %511 = vector.broadcast %508 : i32 to vector<16x1xi32>
    %512 = arith.cmpi eq, %455, %511 : vector<16x1xi32>
    %513 = vector.broadcast %510 : vector<1x32xf32> to vector<16x32xf32>
    %514 = arith.addf %507, %513 : vector<16x32xf32>
    %515 = vector.shape_cast %512 : vector<16x1xi1> to vector<16x1xi1>
    %516 = vector.broadcast %515 : vector<16x1xi1> to vector<16x32xi1>
    %517 = arith.select %516, %514, %507 : vector<16x32xi1>, vector<16x32xf32>
    %c1_162 = arith.constant 1 : index
    %c2_163 = arith.constant 2 : index
    %518 = memref.load %arg1[%c1_162, %c2_163] : memref<2x4xi32, #tpu.memory_space<smem>>
    %519 = vector.extract_strided_slice %449 {offsets = [11, 0], sizes = [1, 32], strides = [1, 1]} : vector<16x32xf32> to vector<1x32xf32>
    %520 = arith.subf %519, %452 : vector<1x32xf32>
    %521 = vector.broadcast %518 : i32 to vector<16x1xi32>
    %522 = arith.cmpi eq, %455, %521 : vector<16x1xi32>
    %523 = vector.broadcast %520 : vector<1x32xf32> to vector<16x32xf32>
    %524 = arith.addf %517, %523 : vector<16x32xf32>
    %525 = vector.shape_cast %522 : vector<16x1xi1> to vector<16x1xi1>
    %526 = vector.broadcast %525 : vector<16x1xi1> to vector<16x32xi1>
    %527 = arith.select %526, %524, %517 : vector<16x32xi1>, vector<16x32xf32>
    %c1_164 = arith.constant 1 : index
    %c3_165 = arith.constant 3 : index
    %528 = memref.load %arg1[%c1_164, %c3_165] : memref<2x4xi32, #tpu.memory_space<smem>>
    %529 = vector.extract_strided_slice %449 {offsets = [12, 0], sizes = [1, 32], strides = [1, 1]} : vector<16x32xf32> to vector<1x32xf32>
    %530 = arith.subf %529, %452 : vector<1x32xf32>
    %531 = vector.broadcast %528 : i32 to vector<16x1xi32>
    %532 = arith.cmpi eq, %455, %531 : vector<16x1xi32>
    %533 = vector.broadcast %530 : vector<1x32xf32> to vector<16x32xf32>
    %534 = arith.addf %527, %533 : vector<16x32xf32>
    %535 = vector.shape_cast %532 : vector<16x1xi1> to vector<16x1xi1>
    %536 = vector.broadcast %535 : vector<16x1xi1> to vector<16x32xi1>
    %537 = arith.select %536, %534, %527 : vector<16x32xi1>, vector<16x32xf32>
    %538 = vector.extract_strided_slice %449 {offsets = [8, 0], sizes = [1, 32], strides = [1, 1]} : vector<16x32xf32> to vector<1x32xf32>
    %539 = tpu.concatenate %497, %496, %456, %538, %537, %456 in 0 : vector<1x32xf32>, vector<16x32xf32>, vector<7x32xf32>, vector<1x32xf32>, vector<16x32xf32>, vector<7x32xf32> -> vector<48x32xf32>
    %540 = tpu.iota {dimensions = array<i32: 0>} : vector<48x48xi32>
    %541 = tpu.iota {dimensions = array<i32: 1>} : vector<48x48xi32>
    %c0_i32_166 = arith.constant 0 : i32
    %542 = vector.broadcast %c0_i32_166 : i32 to vector<48x48xi32>
    %543 = arith.cmpi sge, %540, %542 : vector<48x48xi32>
    %c17_i32 = arith.constant 17 : i32
    %544 = vector.broadcast %c17_i32 : i32 to vector<48x48xi32>
    %545 = arith.cmpi slt, %540, %544 : vector<48x48xi32>
    %546 = arith.andi %543, %545 : vector<48x48xi1>
    %c0_i32_167 = arith.constant 0 : i32
    %547 = vector.broadcast %c0_i32_167 : i32 to vector<48x48xi32>
    %548 = arith.cmpi sge, %541, %547 : vector<48x48xi32>
    %549 = arith.andi %546, %548 : vector<48x48xi1>
    %c17_i32_168 = arith.constant 17 : i32
    %550 = vector.broadcast %c17_i32_168 : i32 to vector<48x48xi32>
    %551 = arith.cmpi slt, %541, %550 : vector<48x48xi32>
    %552 = arith.andi %549, %551 : vector<48x48xi1>
    %c24_i32 = arith.constant 24 : i32
    %553 = vector.broadcast %c24_i32 : i32 to vector<48x48xi32>
    %554 = arith.cmpi sge, %540, %553 : vector<48x48xi32>
    %c41_i32 = arith.constant 41 : i32
    %555 = vector.broadcast %c41_i32 : i32 to vector<48x48xi32>
    %556 = arith.cmpi slt, %540, %555 : vector<48x48xi32>
    %557 = arith.andi %554, %556 : vector<48x48xi1>
    %c24_i32_169 = arith.constant 24 : i32
    %558 = vector.broadcast %c24_i32_169 : i32 to vector<48x48xi32>
    %559 = arith.cmpi sge, %541, %558 : vector<48x48xi32>
    %560 = arith.andi %557, %559 : vector<48x48xi1>
    %c41_i32_170 = arith.constant 41 : i32
    %561 = vector.broadcast %c41_i32_170 : i32 to vector<48x48xi32>
    %562 = arith.cmpi slt, %541, %561 : vector<48x48xi32>
    %563 = arith.andi %560, %562 : vector<48x48xi1>
    %564 = arith.ori %552, %563 : vector<48x48xi1>
    %cst_171 = arith.constant 0.000000e+00 : f32
    %cst_172 = arith.constant -1.000000e+30 : f32
    %565 = vector.broadcast %cst_171 : f32 to vector<48x48xf32>
    %566 = vector.broadcast %cst_172 : f32 to vector<48x48xf32>
    %567 = arith.select %564, %565, %566 : vector<48x48xi1>, vector<48x48xf32>
    %c2_173 = arith.constant 2 : index
    %c0_174 = arith.constant 0 : index
    %c0_175 = arith.constant 0 : index
    %568 = vector.load %arg8[%c2_173, %c0_174, %c0_175] : memref<4x7x64xf32, #tpu.memory_space<vmem>>, vector<1x7x64xf32>
    %569 = vector.shape_cast %568 : vector<1x7x64xf32> to vector<7x64xf32>
    %c2_176 = arith.constant 2 : index
    %c0_177 = arith.constant 0 : index
    %c0_178 = arith.constant 0 : index
    %570 = vector.load %arg4[%c2_176, %c0_177, %c0_178] : memref<4x32x96xf32, #tpu.memory_space<vmem>>, vector<1x32x96xf32>
    %571 = vector.shape_cast %570 : vector<1x32x96xf32> to vector<32x96xf32>
    %c2_179 = arith.constant 2 : index
    %c0_180 = arith.constant 0 : index
    %c0_181 = arith.constant 0 : index
    %572 = vector.load %arg5[%c2_179, %c0_180, %c0_181] : memref<4x32x32xf32, #tpu.memory_space<vmem>>, vector<1x32x32xf32>
    %573 = vector.shape_cast %572 : vector<1x32x32xf32> to vector<32x32xf32>
    %c2_182 = arith.constant 2 : index
    %c0_183 = arith.constant 0 : index
    %c0_184 = arith.constant 0 : index
    %574 = vector.load %arg6[%c2_182, %c0_183, %c0_184] : memref<4x32x64xf32, #tpu.memory_space<vmem>>, vector<1x32x64xf32>
    %575 = vector.shape_cast %574 : vector<1x32x64xf32> to vector<32x64xf32>
    %c2_185 = arith.constant 2 : index
    %c0_186 = arith.constant 0 : index
    %c0_187 = arith.constant 0 : index
    %576 = vector.load %arg7[%c2_185, %c0_186, %c0_187] : memref<4x64x32xf32, #tpu.memory_space<vmem>>, vector<1x64x32xf32>
    %577 = vector.shape_cast %576 : vector<1x64x32xf32> to vector<64x32xf32>
    %578 = vector.extract_strided_slice %569 {offsets = [0, 0], sizes = [1, 32], strides = [1, 1]} : vector<7x64xf32> to vector<1x32xf32>
    %579 = vector.extract_strided_slice %569 {offsets = [1, 0], sizes = [1, 32], strides = [1, 1]} : vector<7x64xf32> to vector<1x32xf32>
    %580 = vector.extract_strided_slice %569 {offsets = [2, 0], sizes = [1, 32], strides = [1, 1]} : vector<7x64xf32> to vector<1x32xf32>
    %581 = vector.extract_strided_slice %569 {offsets = [3, 0], sizes = [1, 32], strides = [1, 1]} : vector<7x64xf32> to vector<1x32xf32>
    %582 = vector.extract_strided_slice %569 {offsets = [4, 0], sizes = [1, 32], strides = [1, 1]} : vector<7x64xf32> to vector<1x32xf32>
    %583 = vector.extract_strided_slice %569 {offsets = [5, 0], sizes = [1, 32], strides = [1, 1]} : vector<7x64xf32> to vector<1x32xf32>
    %584 = vector.extract_strided_slice %569 {offsets = [6, 0], sizes = [1, 64], strides = [1, 1]} : vector<7x64xf32> to vector<1x64xf32>
    %cst_188 = arith.constant dense<0.000000e+00> : vector<48xf32>
    %585 = vector.multi_reduction <add>, %539, %cst_188 [1] : vector<48x32xf32> to vector<48xf32>
    %586 = vector.shape_cast %585 : vector<48xf32> to vector<48x1xf32>
    %cst_189 = arith.constant 3.200000e+01 : f32
    %587 = vector.broadcast %cst_189 : f32 to vector<48x1xf32>
    %588 = arith.divf %586, %587 : vector<48x1xf32>
    %589 = vector.broadcast %588 : vector<48x1xf32> to vector<48x32xf32>
    %590 = arith.subf %539, %589 : vector<48x32xf32>
    %591 = vector.broadcast %588 : vector<48x1xf32> to vector<48x32xf32>
    %592 = arith.subf %539, %591 : vector<48x32xf32>
    %593 = arith.mulf %590, %592 : vector<48x32xf32>
    %cst_190 = arith.constant dense<0.000000e+00> : vector<48xf32>
    %594 = vector.multi_reduction <add>, %593, %cst_190 [1] : vector<48x32xf32> to vector<48xf32>
    %595 = vector.shape_cast %594 : vector<48xf32> to vector<48x1xf32>
    %cst_191 = arith.constant 3.200000e+01 : f32
    %596 = vector.broadcast %cst_191 : f32 to vector<48x1xf32>
    %597 = arith.divf %595, %596 : vector<48x1xf32>
    %598 = vector.broadcast %588 : vector<48x1xf32> to vector<48x32xf32>
    %599 = arith.subf %539, %598 : vector<48x32xf32>
    %cst_192 = arith.constant 9.99999974E-6 : f32
    %600 = vector.broadcast %cst_192 : f32 to vector<48x1xf32>
    %601 = arith.addf %597, %600 : vector<48x1xf32>
    %602 = math.rsqrt %601 : vector<48x1xf32>
    %603 = vector.broadcast %602 : vector<48x1xf32> to vector<48x32xf32>
    %604 = arith.mulf %599, %603 : vector<48x32xf32>
    %605 = vector.broadcast %578 : vector<1x32xf32> to vector<48x32xf32>
    %606 = arith.mulf %604, %605 : vector<48x32xf32>
    %607 = vector.broadcast %579 : vector<1x32xf32> to vector<48x32xf32>
    %608 = arith.addf %606, %607 : vector<48x32xf32>
    %cst_193 = arith.constant dense<0.000000e+00> : vector<48x96xf32>
    %609 = tpu.matmul %608, %571, %cst_193 {dimension_numbers = #tpu.dot_dimension_numbers<[1], [0], [0], [1], [0, 0, 1, 1], [], []>} : vector<48x32xf32>, vector<32x96xf32>, vector<48x96xf32> -> vector<48x96xf32>
    %610 = vector.extract_strided_slice %609 {offsets = [0, 0], sizes = [48, 8], strides = [1, 1]} : vector<48x96xf32> to vector<48x8xf32>
    %611 = vector.extract_strided_slice %609 {offsets = [0, 32], sizes = [48, 8], strides = [1, 1]} : vector<48x96xf32> to vector<48x8xf32>
    %612 = vector.extract_strided_slice %609 {offsets = [0, 64], sizes = [48, 8], strides = [1, 1]} : vector<48x96xf32> to vector<48x8xf32>
    %cst_194 = arith.constant dense<0.000000e+00> : vector<48x48xf32>
    %613 = tpu.matmul %610, %611, %cst_194 {dimension_numbers = #tpu.dot_dimension_numbers<[1], [1], [0], [0], [0, 0, 1, 0], [], []>} : vector<48x8xf32>, vector<48x8xf32>, vector<48x48xf32> -> vector<48x48xf32>
    %cst_195 = arith.constant 0.353553385 : f32
    %614 = vector.broadcast %cst_195 : f32 to vector<48x48xf32>
    %615 = arith.mulf %613, %614 : vector<48x48xf32>
    %616 = arith.addf %615, %567 : vector<48x48xf32>
    %cst_196 = arith.constant dense<0xFF800000> : vector<48xf32>
    %617 = vector.multi_reduction <maximumf>, %616, %cst_196 [1] : vector<48x48xf32> to vector<48xf32>
    %618 = vector.shape_cast %617 : vector<48xf32> to vector<48x1xf32>
    %619 = vector.broadcast %618 : vector<48x1xf32> to vector<48x48xf32>
    %620 = arith.subf %616, %619 : vector<48x48xf32>
    %621 = math.exp %620 : vector<48x48xf32>
    %cst_197 = arith.constant dense<0.000000e+00> : vector<48xf32>
    %622 = vector.multi_reduction <add>, %621, %cst_197 [1] : vector<48x48xf32> to vector<48xf32>
    %623 = vector.shape_cast %622 : vector<48xf32> to vector<48x1xf32>
    %624 = tpu.reciprocal %623 {approx = true} : vector<48x1xf32> -> vector<48x1xf32>
    %625 = vector.broadcast %624 : vector<48x1xf32> to vector<48x48xf32>
    %626 = arith.mulf %621, %625 : vector<48x48xf32>
    %cst_198 = arith.constant dense<0.000000e+00> : vector<48x8xf32>
    %627 = tpu.matmul %626, %612, %cst_198 {dimension_numbers = #tpu.dot_dimension_numbers<[1], [0], [0], [1], [0, 0, 1, 1], [], []>} : vector<48x48xf32>, vector<48x8xf32>, vector<48x8xf32> -> vector<48x8xf32>
    %628 = vector.extract_strided_slice %609 {offsets = [0, 8], sizes = [48, 8], strides = [1, 1]} : vector<48x96xf32> to vector<48x8xf32>
    %629 = vector.extract_strided_slice %609 {offsets = [0, 40], sizes = [48, 8], strides = [1, 1]} : vector<48x96xf32> to vector<48x8xf32>
    %630 = vector.extract_strided_slice %609 {offsets = [0, 72], sizes = [48, 8], strides = [1, 1]} : vector<48x96xf32> to vector<48x8xf32>
    %cst_199 = arith.constant dense<0.000000e+00> : vector<48x48xf32>
    %631 = tpu.matmul %628, %629, %cst_199 {dimension_numbers = #tpu.dot_dimension_numbers<[1], [1], [0], [0], [0, 0, 1, 0], [], []>} : vector<48x8xf32>, vector<48x8xf32>, vector<48x48xf32> -> vector<48x48xf32>
    %cst_200 = arith.constant 0.353553385 : f32
    %632 = vector.broadcast %cst_200 : f32 to vector<48x48xf32>
    %633 = arith.mulf %631, %632 : vector<48x48xf32>
    %634 = arith.addf %633, %567 : vector<48x48xf32>
    %cst_201 = arith.constant dense<0xFF800000> : vector<48xf32>
    %635 = vector.multi_reduction <maximumf>, %634, %cst_201 [1] : vector<48x48xf32> to vector<48xf32>
    %636 = vector.shape_cast %635 : vector<48xf32> to vector<48x1xf32>
    %637 = vector.broadcast %636 : vector<48x1xf32> to vector<48x48xf32>
    %638 = arith.subf %634, %637 : vector<48x48xf32>
    %639 = math.exp %638 : vector<48x48xf32>
    %cst_202 = arith.constant dense<0.000000e+00> : vector<48xf32>
    %640 = vector.multi_reduction <add>, %639, %cst_202 [1] : vector<48x48xf32> to vector<48xf32>
    %641 = vector.shape_cast %640 : vector<48xf32> to vector<48x1xf32>
    %642 = tpu.reciprocal %641 {approx = true} : vector<48x1xf32> -> vector<48x1xf32>
    %643 = vector.broadcast %642 : vector<48x1xf32> to vector<48x48xf32>
    %644 = arith.mulf %639, %643 : vector<48x48xf32>
    %cst_203 = arith.constant dense<0.000000e+00> : vector<48x8xf32>
    %645 = tpu.matmul %644, %630, %cst_203 {dimension_numbers = #tpu.dot_dimension_numbers<[1], [0], [0], [1], [0, 0, 1, 1], [], []>} : vector<48x48xf32>, vector<48x8xf32>, vector<48x8xf32> -> vector<48x8xf32>
    %646 = vector.extract_strided_slice %609 {offsets = [0, 16], sizes = [48, 8], strides = [1, 1]} : vector<48x96xf32> to vector<48x8xf32>
    %647 = vector.extract_strided_slice %609 {offsets = [0, 48], sizes = [48, 8], strides = [1, 1]} : vector<48x96xf32> to vector<48x8xf32>
    %648 = vector.extract_strided_slice %609 {offsets = [0, 80], sizes = [48, 8], strides = [1, 1]} : vector<48x96xf32> to vector<48x8xf32>
    %cst_204 = arith.constant dense<0.000000e+00> : vector<48x48xf32>
    %649 = tpu.matmul %646, %647, %cst_204 {dimension_numbers = #tpu.dot_dimension_numbers<[1], [1], [0], [0], [0, 0, 1, 0], [], []>} : vector<48x8xf32>, vector<48x8xf32>, vector<48x48xf32> -> vector<48x48xf32>
    %cst_205 = arith.constant 0.353553385 : f32
    %650 = vector.broadcast %cst_205 : f32 to vector<48x48xf32>
    %651 = arith.mulf %649, %650 : vector<48x48xf32>
    %652 = arith.addf %651, %567 : vector<48x48xf32>
    %cst_206 = arith.constant dense<0xFF800000> : vector<48xf32>
    %653 = vector.multi_reduction <maximumf>, %652, %cst_206 [1] : vector<48x48xf32> to vector<48xf32>
    %654 = vector.shape_cast %653 : vector<48xf32> to vector<48x1xf32>
    %655 = vector.broadcast %654 : vector<48x1xf32> to vector<48x48xf32>
    %656 = arith.subf %652, %655 : vector<48x48xf32>
    %657 = math.exp %656 : vector<48x48xf32>
    %cst_207 = arith.constant dense<0.000000e+00> : vector<48xf32>
    %658 = vector.multi_reduction <add>, %657, %cst_207 [1] : vector<48x48xf32> to vector<48xf32>
    %659 = vector.shape_cast %658 : vector<48xf32> to vector<48x1xf32>
    %660 = tpu.reciprocal %659 {approx = true} : vector<48x1xf32> -> vector<48x1xf32>
    %661 = vector.broadcast %660 : vector<48x1xf32> to vector<48x48xf32>
    %662 = arith.mulf %657, %661 : vector<48x48xf32>
    %cst_208 = arith.constant dense<0.000000e+00> : vector<48x8xf32>
    %663 = tpu.matmul %662, %648, %cst_208 {dimension_numbers = #tpu.dot_dimension_numbers<[1], [0], [0], [1], [0, 0, 1, 1], [], []>} : vector<48x48xf32>, vector<48x8xf32>, vector<48x8xf32> -> vector<48x8xf32>
    %664 = vector.extract_strided_slice %609 {offsets = [0, 24], sizes = [48, 8], strides = [1, 1]} : vector<48x96xf32> to vector<48x8xf32>
    %665 = vector.extract_strided_slice %609 {offsets = [0, 56], sizes = [48, 8], strides = [1, 1]} : vector<48x96xf32> to vector<48x8xf32>
    %666 = vector.extract_strided_slice %609 {offsets = [0, 88], sizes = [48, 8], strides = [1, 1]} : vector<48x96xf32> to vector<48x8xf32>
    %cst_209 = arith.constant dense<0.000000e+00> : vector<48x48xf32>
    %667 = tpu.matmul %664, %665, %cst_209 {dimension_numbers = #tpu.dot_dimension_numbers<[1], [1], [0], [0], [0, 0, 1, 0], [], []>} : vector<48x8xf32>, vector<48x8xf32>, vector<48x48xf32> -> vector<48x48xf32>
    %cst_210 = arith.constant 0.353553385 : f32
    %668 = vector.broadcast %cst_210 : f32 to vector<48x48xf32>
    %669 = arith.mulf %667, %668 : vector<48x48xf32>
    %670 = arith.addf %669, %567 : vector<48x48xf32>
    %cst_211 = arith.constant dense<0xFF800000> : vector<48xf32>
    %671 = vector.multi_reduction <maximumf>, %670, %cst_211 [1] : vector<48x48xf32> to vector<48xf32>
    %672 = vector.shape_cast %671 : vector<48xf32> to vector<48x1xf32>
    %673 = vector.broadcast %672 : vector<48x1xf32> to vector<48x48xf32>
    %674 = arith.subf %670, %673 : vector<48x48xf32>
    %675 = math.exp %674 : vector<48x48xf32>
    %cst_212 = arith.constant dense<0.000000e+00> : vector<48xf32>
    %676 = vector.multi_reduction <add>, %675, %cst_212 [1] : vector<48x48xf32> to vector<48xf32>
    %677 = vector.shape_cast %676 : vector<48xf32> to vector<48x1xf32>
    %678 = tpu.reciprocal %677 {approx = true} : vector<48x1xf32> -> vector<48x1xf32>
    %679 = vector.broadcast %678 : vector<48x1xf32> to vector<48x48xf32>
    %680 = arith.mulf %675, %679 : vector<48x48xf32>
    %cst_213 = arith.constant dense<0.000000e+00> : vector<48x8xf32>
    %681 = tpu.matmul %680, %666, %cst_213 {dimension_numbers = #tpu.dot_dimension_numbers<[1], [0], [0], [1], [0, 0, 1, 1], [], []>} : vector<48x48xf32>, vector<48x8xf32>, vector<48x8xf32> -> vector<48x8xf32>
    %682 = tpu.concatenate %627, %645, %663, %681 in 1 : vector<48x8xf32>, vector<48x8xf32>, vector<48x8xf32>, vector<48x8xf32> -> vector<48x32xf32>
    %cst_214 = arith.constant dense<0.000000e+00> : vector<48x32xf32>
    %683 = tpu.matmul %682, %573, %cst_214 {dimension_numbers = #tpu.dot_dimension_numbers<[1], [0], [0], [1], [0, 0, 1, 1], [], []>} : vector<48x32xf32>, vector<32x32xf32>, vector<48x32xf32> -> vector<48x32xf32>
    %684 = vector.broadcast %580 : vector<1x32xf32> to vector<48x32xf32>
    %685 = arith.addf %683, %684 : vector<48x32xf32>
    %686 = arith.addf %539, %685 : vector<48x32xf32>
    %cst_215 = arith.constant dense<0.000000e+00> : vector<48xf32>
    %687 = vector.multi_reduction <add>, %686, %cst_215 [1] : vector<48x32xf32> to vector<48xf32>
    %688 = vector.shape_cast %687 : vector<48xf32> to vector<48x1xf32>
    %cst_216 = arith.constant 3.200000e+01 : f32
    %689 = vector.broadcast %cst_216 : f32 to vector<48x1xf32>
    %690 = arith.divf %688, %689 : vector<48x1xf32>
    %691 = vector.broadcast %690 : vector<48x1xf32> to vector<48x32xf32>
    %692 = arith.subf %686, %691 : vector<48x32xf32>
    %693 = vector.broadcast %690 : vector<48x1xf32> to vector<48x32xf32>
    %694 = arith.subf %686, %693 : vector<48x32xf32>
    %695 = arith.mulf %692, %694 : vector<48x32xf32>
    %cst_217 = arith.constant dense<0.000000e+00> : vector<48xf32>
    %696 = vector.multi_reduction <add>, %695, %cst_217 [1] : vector<48x32xf32> to vector<48xf32>
    %697 = vector.shape_cast %696 : vector<48xf32> to vector<48x1xf32>
    %cst_218 = arith.constant 3.200000e+01 : f32
    %698 = vector.broadcast %cst_218 : f32 to vector<48x1xf32>
    %699 = arith.divf %697, %698 : vector<48x1xf32>
    %700 = vector.broadcast %690 : vector<48x1xf32> to vector<48x32xf32>
    %701 = arith.subf %686, %700 : vector<48x32xf32>
    %cst_219 = arith.constant 9.99999974E-6 : f32
    %702 = vector.broadcast %cst_219 : f32 to vector<48x1xf32>
    %703 = arith.addf %699, %702 : vector<48x1xf32>
    %704 = math.rsqrt %703 : vector<48x1xf32>
    %705 = vector.broadcast %704 : vector<48x1xf32> to vector<48x32xf32>
    %706 = arith.mulf %701, %705 : vector<48x32xf32>
    %707 = vector.broadcast %581 : vector<1x32xf32> to vector<48x32xf32>
    %708 = arith.mulf %706, %707 : vector<48x32xf32>
    %709 = vector.broadcast %582 : vector<1x32xf32> to vector<48x32xf32>
    %710 = arith.addf %708, %709 : vector<48x32xf32>
    %cst_220 = arith.constant dense<0.000000e+00> : vector<48x64xf32>
    %711 = tpu.matmul %710, %575, %cst_220 {dimension_numbers = #tpu.dot_dimension_numbers<[1], [0], [0], [1], [0, 0, 1, 1], [], []>} : vector<48x32xf32>, vector<32x64xf32>, vector<48x64xf32> -> vector<48x64xf32>
    %712 = vector.broadcast %584 : vector<1x64xf32> to vector<48x64xf32>
    %713 = arith.addf %711, %712 : vector<48x64xf32>
    %cst_221 = arith.constant 5.000000e-01 : f32
    %714 = vector.broadcast %cst_221 : f32 to vector<48x64xf32>
    %715 = arith.mulf %714, %713 : vector<48x64xf32>
    %cst_222 = arith.constant 0.707106769 : f32
    %716 = vector.broadcast %cst_222 : f32 to vector<48x64xf32>
    %717 = arith.mulf %713, %716 : vector<48x64xf32>
    %cst_223 = arith.constant 0.000000e+00 : f32
    %718 = vector.broadcast %cst_223 : f32 to vector<48x64xf32>
    %719 = arith.cmpf oge, %717, %718 : vector<48x64xf32>
    %cst_224 = arith.constant 1.000000e+00 : f32
    %cst_225 = arith.constant -1.000000e+00 : f32
    %720 = vector.broadcast %cst_224 : f32 to vector<48x64xf32>
    %721 = vector.broadcast %cst_225 : f32 to vector<48x64xf32>
    %722 = arith.select %719, %720, %721 : vector<48x64xi1>, vector<48x64xf32>
    %723 = math.absf %717 : vector<48x64xf32>
    %cst_226 = arith.constant 0.327591091 : f32
    %724 = vector.broadcast %cst_226 : f32 to vector<48x64xf32>
    %725 = arith.mulf %724, %723 : vector<48x64xf32>
    %cst_227 = arith.constant 1.000000e+00 : f32
    %726 = vector.broadcast %cst_227 : f32 to vector<48x64xf32>
    %727 = arith.addf %726, %725 : vector<48x64xf32>
    %cst_228 = arith.constant 1.000000e+00 : f32
    %728 = vector.broadcast %cst_228 : f32 to vector<48x64xf32>
    %729 = arith.divf %728, %727 : vector<48x64xf32>
    %cst_229 = arith.constant 1.06140542 : f32
    %730 = vector.broadcast %cst_229 : f32 to vector<48x64xf32>
    %731 = arith.mulf %730, %729 : vector<48x64xf32>
    %cst_230 = arith.constant -1.45315206 : f32
    %732 = vector.broadcast %cst_230 : f32 to vector<48x64xf32>
    %733 = arith.addf %731, %732 : vector<48x64xf32>
    %734 = arith.mulf %733, %729 : vector<48x64xf32>
    %cst_231 = arith.constant 1.42141378 : f32
    %735 = vector.broadcast %cst_231 : f32 to vector<48x64xf32>
    %736 = arith.addf %734, %735 : vector<48x64xf32>
    %737 = arith.mulf %736, %729 : vector<48x64xf32>
    %cst_232 = arith.constant -0.284496725 : f32
    %738 = vector.broadcast %cst_232 : f32 to vector<48x64xf32>
    %739 = arith.addf %737, %738 : vector<48x64xf32>
    %740 = arith.mulf %739, %729 : vector<48x64xf32>
    %cst_233 = arith.constant 0.254829586 : f32
    %741 = vector.broadcast %cst_233 : f32 to vector<48x64xf32>
    %742 = arith.addf %740, %741 : vector<48x64xf32>
    %743 = arith.mulf %742, %729 : vector<48x64xf32>
    %cst_234 = arith.constant 0.000000e+00 : f32
    %744 = vector.broadcast %cst_234 : f32 to vector<48x64xf32>
    %745 = arith.subf %744, %723 : vector<48x64xf32>
    %746 = arith.mulf %745, %723 : vector<48x64xf32>
    %747 = math.exp %746 : vector<48x64xf32>
    %748 = arith.mulf %743, %747 : vector<48x64xf32>
    %cst_235 = arith.constant 1.000000e+00 : f32
    %749 = vector.broadcast %cst_235 : f32 to vector<48x64xf32>
    %750 = arith.subf %749, %748 : vector<48x64xf32>
    %751 = arith.mulf %722, %750 : vector<48x64xf32>
    %cst_236 = arith.constant 1.000000e+00 : f32
    %752 = vector.broadcast %cst_236 : f32 to vector<48x64xf32>
    %753 = arith.addf %752, %751 : vector<48x64xf32>
    %754 = arith.mulf %715, %753 : vector<48x64xf32>
    %cst_237 = arith.constant dense<0.000000e+00> : vector<48x32xf32>
    %755 = tpu.matmul %754, %577, %cst_237 {dimension_numbers = #tpu.dot_dimension_numbers<[1], [0], [0], [1], [0, 0, 1, 1], [], []>} : vector<48x64xf32>, vector<64x32xf32>, vector<48x32xf32> -> vector<48x32xf32>
    %756 = arith.addf %686, %755 : vector<48x32xf32>
    %757 = vector.broadcast %583 : vector<1x32xf32> to vector<48x32xf32>
    %758 = arith.addf %756, %757 : vector<48x32xf32>
    %c3_238 = arith.constant 3 : index
    %c0_239 = arith.constant 0 : index
    %c0_240 = arith.constant 0 : index
    %759 = vector.load %arg8[%c3_238, %c0_239, %c0_240] : memref<4x7x64xf32, #tpu.memory_space<vmem>>, vector<1x7x64xf32>
    %760 = vector.shape_cast %759 : vector<1x7x64xf32> to vector<7x64xf32>
    %c3_241 = arith.constant 3 : index
    %c0_242 = arith.constant 0 : index
    %c0_243 = arith.constant 0 : index
    %761 = vector.load %arg4[%c3_241, %c0_242, %c0_243] : memref<4x32x96xf32, #tpu.memory_space<vmem>>, vector<1x32x96xf32>
    %762 = vector.shape_cast %761 : vector<1x32x96xf32> to vector<32x96xf32>
    %c3_244 = arith.constant 3 : index
    %c0_245 = arith.constant 0 : index
    %c0_246 = arith.constant 0 : index
    %763 = vector.load %arg5[%c3_244, %c0_245, %c0_246] : memref<4x32x32xf32, #tpu.memory_space<vmem>>, vector<1x32x32xf32>
    %764 = vector.shape_cast %763 : vector<1x32x32xf32> to vector<32x32xf32>
    %c3_247 = arith.constant 3 : index
    %c0_248 = arith.constant 0 : index
    %c0_249 = arith.constant 0 : index
    %765 = vector.load %arg6[%c3_247, %c0_248, %c0_249] : memref<4x32x64xf32, #tpu.memory_space<vmem>>, vector<1x32x64xf32>
    %766 = vector.shape_cast %765 : vector<1x32x64xf32> to vector<32x64xf32>
    %c3_250 = arith.constant 3 : index
    %c0_251 = arith.constant 0 : index
    %c0_252 = arith.constant 0 : index
    %767 = vector.load %arg7[%c3_250, %c0_251, %c0_252] : memref<4x64x32xf32, #tpu.memory_space<vmem>>, vector<1x64x32xf32>
    %768 = vector.shape_cast %767 : vector<1x64x32xf32> to vector<64x32xf32>
    %769 = vector.extract_strided_slice %760 {offsets = [0, 0], sizes = [1, 32], strides = [1, 1]} : vector<7x64xf32> to vector<1x32xf32>
    %770 = vector.extract_strided_slice %760 {offsets = [1, 0], sizes = [1, 32], strides = [1, 1]} : vector<7x64xf32> to vector<1x32xf32>
    %771 = vector.extract_strided_slice %760 {offsets = [2, 0], sizes = [1, 32], strides = [1, 1]} : vector<7x64xf32> to vector<1x32xf32>
    %772 = vector.extract_strided_slice %760 {offsets = [3, 0], sizes = [1, 32], strides = [1, 1]} : vector<7x64xf32> to vector<1x32xf32>
    %773 = vector.extract_strided_slice %760 {offsets = [4, 0], sizes = [1, 32], strides = [1, 1]} : vector<7x64xf32> to vector<1x32xf32>
    %774 = vector.extract_strided_slice %760 {offsets = [5, 0], sizes = [1, 32], strides = [1, 1]} : vector<7x64xf32> to vector<1x32xf32>
    %775 = vector.extract_strided_slice %760 {offsets = [6, 0], sizes = [1, 64], strides = [1, 1]} : vector<7x64xf32> to vector<1x64xf32>
    %cst_253 = arith.constant dense<0.000000e+00> : vector<48xf32>
    %776 = vector.multi_reduction <add>, %758, %cst_253 [1] : vector<48x32xf32> to vector<48xf32>
    %777 = vector.shape_cast %776 : vector<48xf32> to vector<48x1xf32>
    %cst_254 = arith.constant 3.200000e+01 : f32
    %778 = vector.broadcast %cst_254 : f32 to vector<48x1xf32>
    %779 = arith.divf %777, %778 : vector<48x1xf32>
    %780 = vector.broadcast %779 : vector<48x1xf32> to vector<48x32xf32>
    %781 = arith.subf %758, %780 : vector<48x32xf32>
    %782 = vector.broadcast %779 : vector<48x1xf32> to vector<48x32xf32>
    %783 = arith.subf %758, %782 : vector<48x32xf32>
    %784 = arith.mulf %781, %783 : vector<48x32xf32>
    %cst_255 = arith.constant dense<0.000000e+00> : vector<48xf32>
    %785 = vector.multi_reduction <add>, %784, %cst_255 [1] : vector<48x32xf32> to vector<48xf32>
    %786 = vector.shape_cast %785 : vector<48xf32> to vector<48x1xf32>
    %cst_256 = arith.constant 3.200000e+01 : f32
    %787 = vector.broadcast %cst_256 : f32 to vector<48x1xf32>
    %788 = arith.divf %786, %787 : vector<48x1xf32>
    %789 = vector.broadcast %779 : vector<48x1xf32> to vector<48x32xf32>
    %790 = arith.subf %758, %789 : vector<48x32xf32>
    %cst_257 = arith.constant 9.99999974E-6 : f32
    %791 = vector.broadcast %cst_257 : f32 to vector<48x1xf32>
    %792 = arith.addf %788, %791 : vector<48x1xf32>
    %793 = math.rsqrt %792 : vector<48x1xf32>
    %794 = vector.broadcast %793 : vector<48x1xf32> to vector<48x32xf32>
    %795 = arith.mulf %790, %794 : vector<48x32xf32>
    %796 = vector.broadcast %769 : vector<1x32xf32> to vector<48x32xf32>
    %797 = arith.mulf %795, %796 : vector<48x32xf32>
    %798 = vector.broadcast %770 : vector<1x32xf32> to vector<48x32xf32>
    %799 = arith.addf %797, %798 : vector<48x32xf32>
    %cst_258 = arith.constant dense<0.000000e+00> : vector<48x96xf32>
    %800 = tpu.matmul %799, %762, %cst_258 {dimension_numbers = #tpu.dot_dimension_numbers<[1], [0], [0], [1], [0, 0, 1, 1], [], []>} : vector<48x32xf32>, vector<32x96xf32>, vector<48x96xf32> -> vector<48x96xf32>
    %801 = vector.extract_strided_slice %800 {offsets = [0, 0], sizes = [48, 8], strides = [1, 1]} : vector<48x96xf32> to vector<48x8xf32>
    %802 = vector.extract_strided_slice %800 {offsets = [0, 32], sizes = [48, 8], strides = [1, 1]} : vector<48x96xf32> to vector<48x8xf32>
    %803 = vector.extract_strided_slice %800 {offsets = [0, 64], sizes = [48, 8], strides = [1, 1]} : vector<48x96xf32> to vector<48x8xf32>
    %cst_259 = arith.constant dense<0.000000e+00> : vector<48x48xf32>
    %804 = tpu.matmul %801, %802, %cst_259 {dimension_numbers = #tpu.dot_dimension_numbers<[1], [1], [0], [0], [0, 0, 1, 0], [], []>} : vector<48x8xf32>, vector<48x8xf32>, vector<48x48xf32> -> vector<48x48xf32>
    %cst_260 = arith.constant 0.353553385 : f32
    %805 = vector.broadcast %cst_260 : f32 to vector<48x48xf32>
    %806 = arith.mulf %804, %805 : vector<48x48xf32>
    %807 = arith.addf %806, %567 : vector<48x48xf32>
    %cst_261 = arith.constant dense<0xFF800000> : vector<48xf32>
    %808 = vector.multi_reduction <maximumf>, %807, %cst_261 [1] : vector<48x48xf32> to vector<48xf32>
    %809 = vector.shape_cast %808 : vector<48xf32> to vector<48x1xf32>
    %810 = vector.broadcast %809 : vector<48x1xf32> to vector<48x48xf32>
    %811 = arith.subf %807, %810 : vector<48x48xf32>
    %812 = math.exp %811 : vector<48x48xf32>
    %cst_262 = arith.constant dense<0.000000e+00> : vector<48xf32>
    %813 = vector.multi_reduction <add>, %812, %cst_262 [1] : vector<48x48xf32> to vector<48xf32>
    %814 = vector.shape_cast %813 : vector<48xf32> to vector<48x1xf32>
    %815 = tpu.reciprocal %814 {approx = true} : vector<48x1xf32> -> vector<48x1xf32>
    %816 = vector.broadcast %815 : vector<48x1xf32> to vector<48x48xf32>
    %817 = arith.mulf %812, %816 : vector<48x48xf32>
    %cst_263 = arith.constant dense<0.000000e+00> : vector<48x8xf32>
    %818 = tpu.matmul %817, %803, %cst_263 {dimension_numbers = #tpu.dot_dimension_numbers<[1], [0], [0], [1], [0, 0, 1, 1], [], []>} : vector<48x48xf32>, vector<48x8xf32>, vector<48x8xf32> -> vector<48x8xf32>
    %819 = vector.extract_strided_slice %800 {offsets = [0, 8], sizes = [48, 8], strides = [1, 1]} : vector<48x96xf32> to vector<48x8xf32>
    %820 = vector.extract_strided_slice %800 {offsets = [0, 40], sizes = [48, 8], strides = [1, 1]} : vector<48x96xf32> to vector<48x8xf32>
    %821 = vector.extract_strided_slice %800 {offsets = [0, 72], sizes = [48, 8], strides = [1, 1]} : vector<48x96xf32> to vector<48x8xf32>
    %cst_264 = arith.constant dense<0.000000e+00> : vector<48x48xf32>
    %822 = tpu.matmul %819, %820, %cst_264 {dimension_numbers = #tpu.dot_dimension_numbers<[1], [1], [0], [0], [0, 0, 1, 0], [], []>} : vector<48x8xf32>, vector<48x8xf32>, vector<48x48xf32> -> vector<48x48xf32>
    %cst_265 = arith.constant 0.353553385 : f32
    %823 = vector.broadcast %cst_265 : f32 to vector<48x48xf32>
    %824 = arith.mulf %822, %823 : vector<48x48xf32>
    %825 = arith.addf %824, %567 : vector<48x48xf32>
    %cst_266 = arith.constant dense<0xFF800000> : vector<48xf32>
    %826 = vector.multi_reduction <maximumf>, %825, %cst_266 [1] : vector<48x48xf32> to vector<48xf32>
    %827 = vector.shape_cast %826 : vector<48xf32> to vector<48x1xf32>
    %828 = vector.broadcast %827 : vector<48x1xf32> to vector<48x48xf32>
    %829 = arith.subf %825, %828 : vector<48x48xf32>
    %830 = math.exp %829 : vector<48x48xf32>
    %cst_267 = arith.constant dense<0.000000e+00> : vector<48xf32>
    %831 = vector.multi_reduction <add>, %830, %cst_267 [1] : vector<48x48xf32> to vector<48xf32>
    %832 = vector.shape_cast %831 : vector<48xf32> to vector<48x1xf32>
    %833 = tpu.reciprocal %832 {approx = true} : vector<48x1xf32> -> vector<48x1xf32>
    %834 = vector.broadcast %833 : vector<48x1xf32> to vector<48x48xf32>
    %835 = arith.mulf %830, %834 : vector<48x48xf32>
    %cst_268 = arith.constant dense<0.000000e+00> : vector<48x8xf32>
    %836 = tpu.matmul %835, %821, %cst_268 {dimension_numbers = #tpu.dot_dimension_numbers<[1], [0], [0], [1], [0, 0, 1, 1], [], []>} : vector<48x48xf32>, vector<48x8xf32>, vector<48x8xf32> -> vector<48x8xf32>
    %837 = vector.extract_strided_slice %800 {offsets = [0, 16], sizes = [48, 8], strides = [1, 1]} : vector<48x96xf32> to vector<48x8xf32>
    %838 = vector.extract_strided_slice %800 {offsets = [0, 48], sizes = [48, 8], strides = [1, 1]} : vector<48x96xf32> to vector<48x8xf32>
    %839 = vector.extract_strided_slice %800 {offsets = [0, 80], sizes = [48, 8], strides = [1, 1]} : vector<48x96xf32> to vector<48x8xf32>
    %cst_269 = arith.constant dense<0.000000e+00> : vector<48x48xf32>
    %840 = tpu.matmul %837, %838, %cst_269 {dimension_numbers = #tpu.dot_dimension_numbers<[1], [1], [0], [0], [0, 0, 1, 0], [], []>} : vector<48x8xf32>, vector<48x8xf32>, vector<48x48xf32> -> vector<48x48xf32>
    %cst_270 = arith.constant 0.353553385 : f32
    %841 = vector.broadcast %cst_270 : f32 to vector<48x48xf32>
    %842 = arith.mulf %840, %841 : vector<48x48xf32>
    %843 = arith.addf %842, %567 : vector<48x48xf32>
    %cst_271 = arith.constant dense<0xFF800000> : vector<48xf32>
    %844 = vector.multi_reduction <maximumf>, %843, %cst_271 [1] : vector<48x48xf32> to vector<48xf32>
    %845 = vector.shape_cast %844 : vector<48xf32> to vector<48x1xf32>
    %846 = vector.broadcast %845 : vector<48x1xf32> to vector<48x48xf32>
    %847 = arith.subf %843, %846 : vector<48x48xf32>
    %848 = math.exp %847 : vector<48x48xf32>
    %cst_272 = arith.constant dense<0.000000e+00> : vector<48xf32>
    %849 = vector.multi_reduction <add>, %848, %cst_272 [1] : vector<48x48xf32> to vector<48xf32>
    %850 = vector.shape_cast %849 : vector<48xf32> to vector<48x1xf32>
    %851 = tpu.reciprocal %850 {approx = true} : vector<48x1xf32> -> vector<48x1xf32>
    %852 = vector.broadcast %851 : vector<48x1xf32> to vector<48x48xf32>
    %853 = arith.mulf %848, %852 : vector<48x48xf32>
    %cst_273 = arith.constant dense<0.000000e+00> : vector<48x8xf32>
    %854 = tpu.matmul %853, %839, %cst_273 {dimension_numbers = #tpu.dot_dimension_numbers<[1], [0], [0], [1], [0, 0, 1, 1], [], []>} : vector<48x48xf32>, vector<48x8xf32>, vector<48x8xf32> -> vector<48x8xf32>
    %855 = vector.extract_strided_slice %800 {offsets = [0, 24], sizes = [48, 8], strides = [1, 1]} : vector<48x96xf32> to vector<48x8xf32>
    %856 = vector.extract_strided_slice %800 {offsets = [0, 56], sizes = [48, 8], strides = [1, 1]} : vector<48x96xf32> to vector<48x8xf32>
    %857 = vector.extract_strided_slice %800 {offsets = [0, 88], sizes = [48, 8], strides = [1, 1]} : vector<48x96xf32> to vector<48x8xf32>
    %cst_274 = arith.constant dense<0.000000e+00> : vector<48x48xf32>
    %858 = tpu.matmul %855, %856, %cst_274 {dimension_numbers = #tpu.dot_dimension_numbers<[1], [1], [0], [0], [0, 0, 1, 0], [], []>} : vector<48x8xf32>, vector<48x8xf32>, vector<48x48xf32> -> vector<48x48xf32>
    %cst_275 = arith.constant 0.353553385 : f32
    %859 = vector.broadcast %cst_275 : f32 to vector<48x48xf32>
    %860 = arith.mulf %858, %859 : vector<48x48xf32>
    %861 = arith.addf %860, %567 : vector<48x48xf32>
    %cst_276 = arith.constant dense<0xFF800000> : vector<48xf32>
    %862 = vector.multi_reduction <maximumf>, %861, %cst_276 [1] : vector<48x48xf32> to vector<48xf32>
    %863 = vector.shape_cast %862 : vector<48xf32> to vector<48x1xf32>
    %864 = vector.broadcast %863 : vector<48x1xf32> to vector<48x48xf32>
    %865 = arith.subf %861, %864 : vector<48x48xf32>
    %866 = math.exp %865 : vector<48x48xf32>
    %cst_277 = arith.constant dense<0.000000e+00> : vector<48xf32>
    %867 = vector.multi_reduction <add>, %866, %cst_277 [1] : vector<48x48xf32> to vector<48xf32>
    %868 = vector.shape_cast %867 : vector<48xf32> to vector<48x1xf32>
    %869 = tpu.reciprocal %868 {approx = true} : vector<48x1xf32> -> vector<48x1xf32>
    %870 = vector.broadcast %869 : vector<48x1xf32> to vector<48x48xf32>
    %871 = arith.mulf %866, %870 : vector<48x48xf32>
    %cst_278 = arith.constant dense<0.000000e+00> : vector<48x8xf32>
    %872 = tpu.matmul %871, %857, %cst_278 {dimension_numbers = #tpu.dot_dimension_numbers<[1], [0], [0], [1], [0, 0, 1, 1], [], []>} : vector<48x48xf32>, vector<48x8xf32>, vector<48x8xf32> -> vector<48x8xf32>
    %873 = tpu.concatenate %818, %836, %854, %872 in 1 : vector<48x8xf32>, vector<48x8xf32>, vector<48x8xf32>, vector<48x8xf32> -> vector<48x32xf32>
    %cst_279 = arith.constant dense<0.000000e+00> : vector<48x32xf32>
    %874 = tpu.matmul %873, %764, %cst_279 {dimension_numbers = #tpu.dot_dimension_numbers<[1], [0], [0], [1], [0, 0, 1, 1], [], []>} : vector<48x32xf32>, vector<32x32xf32>, vector<48x32xf32> -> vector<48x32xf32>
    %875 = vector.broadcast %771 : vector<1x32xf32> to vector<48x32xf32>
    %876 = arith.addf %874, %875 : vector<48x32xf32>
    %877 = arith.addf %758, %876 : vector<48x32xf32>
    %cst_280 = arith.constant dense<0.000000e+00> : vector<48xf32>
    %878 = vector.multi_reduction <add>, %877, %cst_280 [1] : vector<48x32xf32> to vector<48xf32>
    %879 = vector.shape_cast %878 : vector<48xf32> to vector<48x1xf32>
    %cst_281 = arith.constant 3.200000e+01 : f32
    %880 = vector.broadcast %cst_281 : f32 to vector<48x1xf32>
    %881 = arith.divf %879, %880 : vector<48x1xf32>
    %882 = vector.broadcast %881 : vector<48x1xf32> to vector<48x32xf32>
    %883 = arith.subf %877, %882 : vector<48x32xf32>
    %884 = vector.broadcast %881 : vector<48x1xf32> to vector<48x32xf32>
    %885 = arith.subf %877, %884 : vector<48x32xf32>
    %886 = arith.mulf %883, %885 : vector<48x32xf32>
    %cst_282 = arith.constant dense<0.000000e+00> : vector<48xf32>
    %887 = vector.multi_reduction <add>, %886, %cst_282 [1] : vector<48x32xf32> to vector<48xf32>
    %888 = vector.shape_cast %887 : vector<48xf32> to vector<48x1xf32>
    %cst_283 = arith.constant 3.200000e+01 : f32
    %889 = vector.broadcast %cst_283 : f32 to vector<48x1xf32>
    %890 = arith.divf %888, %889 : vector<48x1xf32>
    %891 = vector.broadcast %881 : vector<48x1xf32> to vector<48x32xf32>
    %892 = arith.subf %877, %891 : vector<48x32xf32>
    %cst_284 = arith.constant 9.99999974E-6 : f32
    %893 = vector.broadcast %cst_284 : f32 to vector<48x1xf32>
    %894 = arith.addf %890, %893 : vector<48x1xf32>
    %895 = math.rsqrt %894 : vector<48x1xf32>
    %896 = vector.broadcast %895 : vector<48x1xf32> to vector<48x32xf32>
    %897 = arith.mulf %892, %896 : vector<48x32xf32>
    %898 = vector.broadcast %772 : vector<1x32xf32> to vector<48x32xf32>
    %899 = arith.mulf %897, %898 : vector<48x32xf32>
    %900 = vector.broadcast %773 : vector<1x32xf32> to vector<48x32xf32>
    %901 = arith.addf %899, %900 : vector<48x32xf32>
    %cst_285 = arith.constant dense<0.000000e+00> : vector<48x64xf32>
    %902 = tpu.matmul %901, %766, %cst_285 {dimension_numbers = #tpu.dot_dimension_numbers<[1], [0], [0], [1], [0, 0, 1, 1], [], []>} : vector<48x32xf32>, vector<32x64xf32>, vector<48x64xf32> -> vector<48x64xf32>
    %903 = vector.broadcast %775 : vector<1x64xf32> to vector<48x64xf32>
    %904 = arith.addf %902, %903 : vector<48x64xf32>
    %cst_286 = arith.constant 5.000000e-01 : f32
    %905 = vector.broadcast %cst_286 : f32 to vector<48x64xf32>
    %906 = arith.mulf %905, %904 : vector<48x64xf32>
    %cst_287 = arith.constant 0.707106769 : f32
    %907 = vector.broadcast %cst_287 : f32 to vector<48x64xf32>
    %908 = arith.mulf %904, %907 : vector<48x64xf32>
    %cst_288 = arith.constant 0.000000e+00 : f32
    %909 = vector.broadcast %cst_288 : f32 to vector<48x64xf32>
    %910 = arith.cmpf oge, %908, %909 : vector<48x64xf32>
    %cst_289 = arith.constant 1.000000e+00 : f32
    %cst_290 = arith.constant -1.000000e+00 : f32
    %911 = vector.broadcast %cst_289 : f32 to vector<48x64xf32>
    %912 = vector.broadcast %cst_290 : f32 to vector<48x64xf32>
    %913 = arith.select %910, %911, %912 : vector<48x64xi1>, vector<48x64xf32>
    %914 = math.absf %908 : vector<48x64xf32>
    %cst_291 = arith.constant 0.327591091 : f32
    %915 = vector.broadcast %cst_291 : f32 to vector<48x64xf32>
    %916 = arith.mulf %915, %914 : vector<48x64xf32>
    %cst_292 = arith.constant 1.000000e+00 : f32
    %917 = vector.broadcast %cst_292 : f32 to vector<48x64xf32>
    %918 = arith.addf %917, %916 : vector<48x64xf32>
    %cst_293 = arith.constant 1.000000e+00 : f32
    %919 = vector.broadcast %cst_293 : f32 to vector<48x64xf32>
    %920 = arith.divf %919, %918 : vector<48x64xf32>
    %cst_294 = arith.constant 1.06140542 : f32
    %921 = vector.broadcast %cst_294 : f32 to vector<48x64xf32>
    %922 = arith.mulf %921, %920 : vector<48x64xf32>
    %cst_295 = arith.constant -1.45315206 : f32
    %923 = vector.broadcast %cst_295 : f32 to vector<48x64xf32>
    %924 = arith.addf %922, %923 : vector<48x64xf32>
    %925 = arith.mulf %924, %920 : vector<48x64xf32>
    %cst_296 = arith.constant 1.42141378 : f32
    %926 = vector.broadcast %cst_296 : f32 to vector<48x64xf32>
    %927 = arith.addf %925, %926 : vector<48x64xf32>
    %928 = arith.mulf %927, %920 : vector<48x64xf32>
    %cst_297 = arith.constant -0.284496725 : f32
    %929 = vector.broadcast %cst_297 : f32 to vector<48x64xf32>
    %930 = arith.addf %928, %929 : vector<48x64xf32>
    %931 = arith.mulf %930, %920 : vector<48x64xf32>
    %cst_298 = arith.constant 0.254829586 : f32
    %932 = vector.broadcast %cst_298 : f32 to vector<48x64xf32>
    %933 = arith.addf %931, %932 : vector<48x64xf32>
    %934 = arith.mulf %933, %920 : vector<48x64xf32>
    %cst_299 = arith.constant 0.000000e+00 : f32
    %935 = vector.broadcast %cst_299 : f32 to vector<48x64xf32>
    %936 = arith.subf %935, %914 : vector<48x64xf32>
    %937 = arith.mulf %936, %914 : vector<48x64xf32>
    %938 = math.exp %937 : vector<48x64xf32>
    %939 = arith.mulf %934, %938 : vector<48x64xf32>
    %cst_300 = arith.constant 1.000000e+00 : f32
    %940 = vector.broadcast %cst_300 : f32 to vector<48x64xf32>
    %941 = arith.subf %940, %939 : vector<48x64xf32>
    %942 = arith.mulf %913, %941 : vector<48x64xf32>
    %cst_301 = arith.constant 1.000000e+00 : f32
    %943 = vector.broadcast %cst_301 : f32 to vector<48x64xf32>
    %944 = arith.addf %943, %942 : vector<48x64xf32>
    %945 = arith.mulf %906, %944 : vector<48x64xf32>
    %cst_302 = arith.constant dense<0.000000e+00> : vector<48x32xf32>
    %946 = tpu.matmul %945, %768, %cst_302 {dimension_numbers = #tpu.dot_dimension_numbers<[1], [0], [0], [1], [0, 0, 1, 1], [], []>} : vector<48x64xf32>, vector<64x32xf32>, vector<48x32xf32> -> vector<48x32xf32>
    %947 = arith.addf %877, %946 : vector<48x32xf32>
    %948 = vector.broadcast %774 : vector<1x32xf32> to vector<48x32xf32>
    %949 = arith.addf %947, %948 : vector<48x32xf32>
    %950 = vector.extract_strided_slice %0 {offsets = [3, 0], sizes = [1, 32], strides = [1, 1]} : vector<6x128xf32> to vector<1x32xf32>
    %951 = vector.extract_strided_slice %0 {offsets = [4, 0], sizes = [1, 32], strides = [1, 1]} : vector<6x128xf32> to vector<1x32xf32>
    %cst_303 = arith.constant dense<0.000000e+00> : vector<48xf32>
    %952 = vector.multi_reduction <add>, %949, %cst_303 [1] : vector<48x32xf32> to vector<48xf32>
    %953 = vector.shape_cast %952 : vector<48xf32> to vector<48x1xf32>
    %cst_304 = arith.constant 3.200000e+01 : f32
    %954 = vector.broadcast %cst_304 : f32 to vector<48x1xf32>
    %955 = arith.divf %953, %954 : vector<48x1xf32>
    %956 = vector.broadcast %955 : vector<48x1xf32> to vector<48x32xf32>
    %957 = arith.subf %949, %956 : vector<48x32xf32>
    %958 = vector.broadcast %955 : vector<48x1xf32> to vector<48x32xf32>
    %959 = arith.subf %949, %958 : vector<48x32xf32>
    %960 = arith.mulf %957, %959 : vector<48x32xf32>
    %cst_305 = arith.constant dense<0.000000e+00> : vector<48xf32>
    %961 = vector.multi_reduction <add>, %960, %cst_305 [1] : vector<48x32xf32> to vector<48xf32>
    %962 = vector.shape_cast %961 : vector<48xf32> to vector<48x1xf32>
    %cst_306 = arith.constant 3.200000e+01 : f32
    %963 = vector.broadcast %cst_306 : f32 to vector<48x1xf32>
    %964 = arith.divf %962, %963 : vector<48x1xf32>
    %965 = vector.broadcast %955 : vector<48x1xf32> to vector<48x32xf32>
    %966 = arith.subf %949, %965 : vector<48x32xf32>
    %cst_307 = arith.constant 9.99999974E-6 : f32
    %967 = vector.broadcast %cst_307 : f32 to vector<48x1xf32>
    %968 = arith.addf %964, %967 : vector<48x1xf32>
    %969 = math.rsqrt %968 : vector<48x1xf32>
    %970 = vector.broadcast %969 : vector<48x1xf32> to vector<48x32xf32>
    %971 = arith.mulf %966, %970 : vector<48x32xf32>
    %972 = vector.broadcast %950 : vector<1x32xf32> to vector<48x32xf32>
    %973 = arith.mulf %971, %972 : vector<48x32xf32>
    %974 = vector.broadcast %951 : vector<1x32xf32> to vector<48x32xf32>
    %975 = arith.addf %973, %974 : vector<48x32xf32>
    %c1_308 = arith.constant 1 : index
    %c0_309 = arith.constant 0 : index
    %c0_310 = arith.constant 0 : index
    %976 = vector.load %arg9[%c1_308, %c0_309, %c0_310] : memref<2x32x128xf32, #tpu.memory_space<vmem>>, vector<1x32x128xf32>
    %977 = vector.shape_cast %976 : vector<1x32x128xf32> to vector<32x128xf32>
    %cst_311 = arith.constant dense<0.000000e+00> : vector<48x128xf32>
    %978 = tpu.matmul %975, %977, %cst_311 {dimension_numbers = #tpu.dot_dimension_numbers<[1], [0], [0], [1], [0, 0, 1, 1], [], []>} : vector<48x32xf32>, vector<32x128xf32>, vector<48x128xf32> -> vector<48x128xf32>
    %979 = vector.extract_strided_slice %0 {offsets = [5, 0], sizes = [1, 128], strides = [1, 1]} : vector<6x128xf32> to vector<1x128xf32>
    %980 = vector.broadcast %979 : vector<1x128xf32> to vector<48x128xf32>
    %981 = arith.addf %978, %980 : vector<48x128xf32>
    %c0_312 = arith.constant 0 : index
    %c0_313 = arith.constant 0 : index
    %982 = vector.load %arg12[%c0_312, %c0_313] : memref<48x128xf32, #tpu.memory_space<vmem>>, vector<48x128xf32>
    tpu.vector_store %arg12[%c0_312, %c0_313], %981 {strides = array<i32>} : memref<48x128xf32, #tpu.memory_space<vmem>>, vector<48x128xf32>,
    return
  }
  func.func @transform_0(%arg0: i32, %arg1: memref<2x4xi32, #tpu.memory_space<smem>>) -> (i32, i32) {
    %c0_i32 = arith.constant 0 : i32
    %c0_i32_0 = arith.constant 0 : i32
    %c0_i32_1 = arith.constant 0 : i32
    return %c0_i32, %c0_i32_0 : i32, i32
  }
  func.func @transform_1(%arg0: i32, %arg1: memref<2x4xi32, #tpu.memory_space<smem>>) -> (i32, i32) {
    %c0_i32 = arith.constant 0 : i32
    %c0_i32_0 = arith.constant 0 : i32
    %c0_i32_1 = arith.constant 0 : i32
    return %c0_i32, %c0_i32_0 : i32, i32
  }
  func.func @transform_2(%arg0: i32, %arg1: memref<2x4xi32, #tpu.memory_space<smem>>) -> (i32, i32, i32) {
    %c0_i32 = arith.constant 0 : i32
    %c0_i32_0 = arith.constant 0 : i32
    %c0_i32_1 = arith.constant 0 : i32
    %c0_i32_2 = arith.constant 0 : i32
    return %c0_i32, %c0_i32_0, %c0_i32_1 : i32, i32, i32
  }
  func.func @transform_3(%arg0: i32, %arg1: memref<2x4xi32, #tpu.memory_space<smem>>) -> (i32, i32, i32) {
    %c0_i32 = arith.constant 0 : i32
    %c0_i32_0 = arith.constant 0 : i32
    %c0_i32_1 = arith.constant 0 : i32
    %c0_i32_2 = arith.constant 0 : i32
    return %c0_i32, %c0_i32_0, %c0_i32_1 : i32, i32, i32
  }
  func.func @transform_4(%arg0: i32, %arg1: memref<2x4xi32, #tpu.memory_space<smem>>) -> (i32, i32, i32) {
    %c0_i32 = arith.constant 0 : i32
    %c0_i32_0 = arith.constant 0 : i32
    %c0_i32_1 = arith.constant 0 : i32
    %c0_i32_2 = arith.constant 0 : i32
    return %c0_i32, %c0_i32_0, %c0_i32_1 : i32, i32, i32
  }
  func.func @transform_5(%arg0: i32, %arg1: memref<2x4xi32, #tpu.memory_space<smem>>) -> (i32, i32, i32) {
    %c0_i32 = arith.constant 0 : i32
    %c0_i32_0 = arith.constant 0 : i32
    %c0_i32_1 = arith.constant 0 : i32
    %c0_i32_2 = arith.constant 0 : i32
    return %c0_i32, %c0_i32_0, %c0_i32_1 : i32, i32, i32
  }
  func.func @transform_6(%arg0: i32, %arg1: memref<2x4xi32, #tpu.memory_space<smem>>) -> (i32, i32, i32) {
    %c0_i32 = arith.constant 0 : i32
    %c0_i32_0 = arith.constant 0 : i32
    %c0_i32_1 = arith.constant 0 : i32
    %c0_i32_2 = arith.constant 0 : i32
    return %c0_i32, %c0_i32_0, %c0_i32_1 : i32, i32, i32
  }
  func.func @transform_7(%arg0: i32, %arg1: memref<2x4xi32, #tpu.memory_space<smem>>) -> (i32, i32, i32) {
    %c0_i32 = arith.constant 0 : i32
    %c0_i32_0 = arith.constant 0 : i32
    %c0_i32_1 = arith.constant 0 : i32
    %c0_i32_2 = arith.constant 0 : i32
    return %c0_i32, %c0_i32_0, %c0_i32_1 : i32, i32, i32
  }
  func.func @transform_8(%arg0: i32, %arg1: memref<2x4xi32, #tpu.memory_space<smem>>) -> (i32, i32) {
    %c0_i32 = arith.constant 0 : i32
    %c0_i32_0 = arith.constant 0 : i32
    %c0_i32_1 = arith.constant 0 : i32
    return %c0_i32, %c0_i32_0 : i32, i32
  }
  func.func @transform_9(%arg0: i32, %arg1: memref<2x4xi32, #tpu.memory_space<smem>>) -> (i32, i32) {
    %c0_i32 = arith.constant 0 : i32
    %c0_i32_0 = arith.constant 0 : i32
    %c0_i32_1 = arith.constant 0 : i32
    return %c0_i32, %c0_i32_0 : i32, i32
  }
  func.func @transform_10(%arg0: i32, %arg1: memref<2x4xi32, #tpu.memory_space<smem>>) -> (i32, i32) {
    %c0_i32 = arith.constant 0 : i32
    %c0_i32_0 = arith.constant 0 : i32
    %c0_i32_1 = arith.constant 0 : i32
    return %c0_i32, %c0_i32_0 : i32, i32
  }
}

</mosaic_0001>

<llo_original>
// kernel: mae_vit_forward.1
$region0: #{mae_vit_forward.1}
  #allocation0 [shape = 'u32[]', space=smem, size = 0x4, offset = 0x4, fixed_abs, tag = 'smem constant byte address 0x4 - core index']
  #allocation1 [shape = 'u32[144,128]{1,0:T(1,128)}', space=vmem, size = 0x12000, scoped, tag = 'internal scratch']
  #allocation2 [shape = 's32[1]{0}', space=sflag, size = 0x4, scoped, tag = 'scoped memory for mae_vit_forward.1']
  #allocation3 [shape = 'u8[1024]{0}', space=smem, size = 0x400, scoped, tag = 'prefetched SMEM operand 0']
  %s0 = inlined_call_operand.vmem [shape: s32[2,4], index: 0, kind: input, shape index: {}]
  %s1 = inlined_call_operand.vmem [shape: f32[16,64], index: 1, kind: input, shape index: {}]
  %s2 = inlined_call_operand.vmem [shape: f32[32,32], index: 2, kind: input, shape index: {}]
  %s3 = inlined_call_operand.vmem [shape: f32[4,32,96], index: 3, kind: input, shape index: {}]
  %s4 = inlined_call_operand.vmem [shape: f32[4,32,32], index: 4, kind: input, shape index: {}]
  %s5 = inlined_call_operand.vmem [shape: f32[4,32,64], index: 5, kind: input, shape index: {}]
  %s6 = inlined_call_operand.vmem [shape: f32[4,64,32], index: 6, kind: input, shape index: {}]
  %s7 = inlined_call_operand.vmem [shape: f32[4,7,64], index: 7, kind: input, shape index: {}]
  %s8 = inlined_call_operand.vmem [shape: f32[2,32,128], index: 8, kind: input, shape index: {}]
  %s9 = inlined_call_operand.vmem [shape: f32[6,128], index: 9, kind: input, shape index: {}]
  %s10 = inlined_call_operand.vmem [shape: f32[17,32], index: 10, kind: input, shape index: {}]
  %s11 = inlined_call_operand.vmem [shape: f32[48,128], index: 11, kind: output, shape index: {}]
  %s12 = sld [smem:[#allocation0]]
  $region50: #{mae_vit_forward.1} parent=0
    _
  %s14 = ssub.s32 1, %s12
  %s15 = scalar_select 0, %s14, %s12
  %s16 = sshll.u32 %s0, 4
  %s17 = int_to_ptr.vmem [resolvable:$true] %s16
  %19 = dma.vmem_to_smem %s17, 32, [#allocation3], [#allocation2]
  %20 = dma.done [#allocation2], 32
  %21 = sfence
  // Predicated region
  $region2: #{mae_vit_forward.1} parent=0 // pred_check
    _
  $region3: #{mae_vit_forward.1} parent=0 // pred_check_branch
    %23 = sbr.rel (0) target = $region5
  $region4: #{mae_vit_forward.1} parent=0 // pred_region
    _
  $region5: #{mae_vit_forward.1} parent=0 // pred_fallthru
    _
  // Predicated region
  $region6: #{mae_vit_forward.1} parent=0 // pred_check
    _
  $region7: #{mae_vit_forward.1} parent=0 // pred_check_branch
    %25 = sbr.rel (0) target = $region9
  $region8: #{mae_vit_forward.1} parent=0 // pred_region
    _
  $region9: #{mae_vit_forward.1} parent=0 // pred_fallthru
    _
  // Predicated region
  $region10: #{mae_vit_forward.1} parent=0 // pred_check
    _
  $region11: #{mae_vit_forward.1} parent=0 // pred_check_branch
    %27 = sbr.rel (0) target = $region13
  $region12: #{mae_vit_forward.1} parent=0 // pred_region
    _
  $region13: #{mae_vit_forward.1} parent=0 // pred_fallthru
    _
  // Predicated region
  $region14: #{mae_vit_forward.1} parent=0 // pred_check
    _
  $region15: #{mae_vit_forward.1} parent=0 // pred_check_branch
    %29 = sbr.rel (0) target = $region17
  $region16: #{mae_vit_forward.1} parent=0 // pred_region
    _
  $region17: #{mae_vit_forward.1} parent=0 // pred_fallthru
    _
  // Predicated region
  $region18: #{mae_vit_forward.1} parent=0 // pred_check
    _
  $region19: #{mae_vit_forward.1} parent=0 // pred_check_branch
    %31 = sbr.rel (0) target = $region21
  $region20: #{mae_vit_forward.1} parent=0 // pred_region
    _
  $region21: #{mae_vit_forward.1} parent=0 // pred_fallthru
    _
  // Predicated region
  $region22: #{mae_vit_forward.1} parent=0 // pred_check
    _
  $region23: #{mae_vit_forward.1} parent=0 // pred_check_branch
    %33 = sbr.rel (0) target = $region25
  $region24: #{mae_vit_forward.1} parent=0 // pred_region
    _
  $region25: #{mae_vit_forward.1} parent=0 // pred_fallthru
    _
  // Predicated region
  $region26: #{mae_vit_forward.1} parent=0 // pred_check
    _
  $region27: #{mae_vit_forward.1} parent=0 // pred_check_branch
    %35 = sbr.rel (0) target = $region29
  $region28: #{mae_vit_forward.1} parent=0 // pred_region
    _
  $region29: #{mae_vit_forward.1} parent=0 // pred_fallthru
    _
  // Predicated region
  $region30: #{mae_vit_forward.1} parent=0 // pred_check
    _
  $region31: #{mae_vit_forward.1} parent=0 // pred_check_branch
    %37 = sbr.rel (0) target = $region33
  $region32: #{mae_vit_forward.1} parent=0 // pred_region
    _
  $region33: #{mae_vit_forward.1} parent=0 // pred_fallthru
    _
  // Predicated region
  $region34: #{mae_vit_forward.1} parent=0 // pred_check
    _
  $region35: #{mae_vit_forward.1} parent=0 // pred_check_branch
    %39 = sbr.rel (0) target = $region37
  $region36: #{mae_vit_forward.1} parent=0 // pred_region
    _
  $region37: #{mae_vit_forward.1} parent=0 // pred_fallthru
    _
  // Predicated region
  $region38: #{mae_vit_forward.1} parent=0 // pred_check
    _
  $region39: #{mae_vit_forward.1} parent=0 // pred_check_branch
    %41 = sbr.rel (0) target = $region41
  $region40: #{mae_vit_forward.1} parent=0 // pred_region
    _
  $region41: #{mae_vit_forward.1} parent=0 // pred_fallthru
    _
  %v42 = vld [vmem:[%s9] sm:$0x3f]
  %v43 = vld [vmem:[%s1] sm:$0xff]
  %v44 = vld [vmem:[%s1 + $0x8] sm:$0xff]
  %v45 = vld [vmem:[%s2] sm:$0xff]
  %v46 = vld [vmem:[%s2 + $0x8] sm:$0xff]
  %v47 = vld [vmem:[%s2 + $0x10] sm:$0xff]
  %v48 = vld [vmem:[%s2 + $0x18] sm:$0xff]
  %51 = vrot.lane.b32.xlu0 %v43, 96
  %v52 = vpop.permute.xlu0 %51
  %53 = vrot.lane.b32.xlu0 %v44, 96
  %v54 = vpop.permute.xlu0 %53
  %vm57 = vcmask 261120
  %v58 = vsel %vm57, %v43, 0
  %v60 = vsel %vm57, %v44, 0
  %62 = vmatprep.subr.mxu0 0.0
  %63 = vmatpush1.msra.mxu0 0.0
  %64 = vmatprep.subr.mxu0 0.0
  %65 = vmatpush1.msra.mxu0 0.0
  %66 = vmatprep.subr.mxu0 0.0
  %67 = vmatpush1.msra.mxu0 0.0
  %68 = vmatprep.subr.mxu0 0.0
  %69 = vmatpush1.msra.mxu0 0.0
  %70 = vmatprep.subr.mxu0 0.0
  %71 = vmatpush1.msra.mxu0 0.0
  %72 = vmatprep.subr.mxu0 0.0
  %73 = vmatpush1.msra.mxu0 0.0
  %74 = vmatprep.subr.mxu0 0.0
  %75 = vmatpush1.msra.mxu0 0.0
  %76 = vmatprep.subr.mxu0 0.0
  %77 = vmatpush1.msra.mxu0 0.0
  %78 = vmatprep.subr.mxu0 0.0
  %79 = vmatpush1.msra.mxu0 0.0
  %80 = vmatprep.subr.mxu0 0.0
  %81 = vmatpush1.msra.mxu0 0.0
  %82 = vmatprep.subr.mxu0 0.0
  %83 = vmatpush1.msra.mxu0 0.0
  %84 = vmatprep.subr.mxu0 0.0
  %85 = vmatpush1.msra.mxu0 0.0
  %86 = vmatprep.subr.mxu0 0.0
  %87 = vmatpush1.msra.mxu0 %v48
  %88 = vmatprep.subr.mxu0 0.0
  %89 = vmatpush1.msra.mxu0 %v47
  %90 = vmatprep.subr.mxu0 0.0
  %91 = vmatpush1.msra.mxu0 %v46
  %92 = vmatprep.subr.mxu0 0.0
  %93 = vmatpush1.msra.mxu0 %v45
  %94 = vmatprep.subr.mxu0 0.0
  %95 = vmatpush2.msra.mxu0 0.0
  %96 = vmatprep.subr.mxu0 0.0
  %97 = vmatpush2.msra.mxu0 0.0
  %98 = vmatprep.subr.mxu0 0.0
  %99 = vmatpush2.msra.mxu0 0.0
  %100 = vmatprep.subr.mxu0 0.0
  %101 = vmatpush2.msra.mxu0 0.0
  %102 = vmatprep.subr.mxu0 0.0
  %103 = vmatpush2.msra.mxu0 0.0
  %104 = vmatprep.subr.mxu0 0.0
  %105 = vmatpush2.msra.mxu0 0.0
  %106 = vmatprep.subr.mxu0 0.0
  %107 = vmatpush2.msra.mxu0 0.0
  %108 = vmatprep.subr.mxu0 0.0
  %109 = vmatpush2.msra.mxu0 0.0
  %110 = vmatprep.subr.mxu0 0.0
  %111 = vmatpush2.msra.mxu0 0.0
  %112 = vmatprep.subr.mxu0 0.0
  %113 = vmatpush2.msra.mxu0 0.0
  %114 = vmatprep.subr.mxu0 0.0
  %115 = vmatpush2.msra.mxu0 0.0
  %116 = vmatprep.subr.mxu0 0.0
  %117 = vmatpush2.msra.mxu0 0.0
  %118 = vmatprep.subr.mxu0 0.0
  %119 = vmatpush2.msra.mxu0 0.0
  %120 = vmatprep.subr.mxu0 0.0
  %121 = vmatpush2.msra.mxu0 0.0
  %122 = vmatprep.subr.mxu0 0.0
  %123 = vmatpush2.msra.mxu0 0.0
  %124 = vmatprep.subr.mxu0 0.0
  %125 = vmatpush2.msra.mxu0 0.0
  %126 = vmatprep.mubr.f32.mxu0 0.0
  %127 = vmatmul.mubr.f32.gmra.mxu0 %v58
  %v128 = vpop.f32.mrf.mxu0
  %v129 = vadd.f32 %v52, %v128
  %v130 = vpop.f32.mrf.mxu0
  %131 = vmatprep.mubr.f32.mxu0 0.0
  %132 = vmatmul.mubr.f32.gmra.mxu0 %v60
  %v133 = vpop.f32.mrf.mxu0
  %v134 = vadd.f32 %v54, %v133
  %v135 = vpop.f32.mrf.mxu0
  %136 = vdwg.mxu0
  %v137 = vlaneseq
  %v138 = vshrl.u32 %v137, 7
  %v139 = vadd.s32 %v138, 8
  %v140 = vlaneseq
  %v141 = vand.u32 %v140, 127
  %vm142 = vcmp.ge.s32.totalorder %v138, 0
  %vm143 = vcmp.ge.s32.totalorder %v139, 0
  %vm144 = vcmp.lt.s32.totalorder %v138, 5
  %vm145 = vcmp.lt.s32.totalorder %v139, 5
  %vm146 = vmand %vm142, %vm144
  %vm147 = vmand %vm143, %vm145
  %vm148 = vcmp.ge.s32.totalorder %v141, 0
  %vm149 = vmand %vm146, %vm148
  %vm150 = vmand %vm147, %vm148
  %vm151 = vcmp.lt.s32.totalorder %v141, 5
  %vm152 = vmand %vm149, %vm151
  %vm153 = vmand %vm150, %vm151
  %vm154 = vcmp.ge.s32.totalorder %v138, 8
  %vm155 = vcmp.ge.s32.totalorder %v139, 8
  %vm156 = vcmp.lt.s32.totalorder %v138, 13
  %vm157 = vcmp.lt.s32.totalorder %v139, 13
  %vm158 = vmand %vm154, %vm156
  %vm159 = vmand %vm155, %vm157
  %vm160 = vcmp.ge.s32.totalorder %v141, 8
  %vm161 = vmand %vm158, %vm160
  %vm162 = vmand %vm159, %vm160
  %vm163 = vcmp.lt.s32.totalorder %v141, 13
  %vm164 = vmand %vm161, %vm163
  %vm165 = vmand %vm162, %vm163
  %vm166 = vmor %vm152, %vm164
  %vm167 = vmor %vm153, %vm165
  %v168 = vsel %vm166, 0.0, -1e+30
  %v169 = vsel %vm167, 0.0, -1e+30
  %v170 = vld [vmem:[%s7] sm:$0x7f]
  %v171 = vld [vmem:[%s3] sm:$0xff]
  %v172 = vld [vmem:[%s3 + $0x8] sm:$0xff]
  %v173 = vld [vmem:[%s3 + $0x10] sm:$0xff]
  %v174 = vld [vmem:[%s3 + $0x18] sm:$0xff]
  %v175 = vld [vmem:[%s4] sm:$0xff]
  %v176 = vld [vmem:[%s4 + $0x8] sm:$0xff]
  %v177 = vld [vmem:[%s4 + $0x10] sm:$0xff]
  %v178 = vld [vmem:[%s4 + $0x18] sm:$0xff]
  %v179 = vld [vmem:[%s5] sm:$0xff]
  %v180 = vld [vmem:[%s5 + $0x8] sm:$0xff]
  %v181 = vld [vmem:[%s5 + $0x10] sm:$0xff]
  %v182 = vld [vmem:[%s5 + $0x18] sm:$0xff]
  %v183 = vld [vmem:[%s6] sm:$0xff]
  %v184 = vld [vmem:[%s6 + $0x8] sm:$0xff]
  %v185 = vld [vmem:[%s6 + $0x10] sm:$0xff]
  %v186 = vld [vmem:[%s6 + $0x18] sm:$0xff]
  %v187 = vld [vmem:[%s6 + $0x20] sm:$0xff]
  %v188 = vld [vmem:[%s6 + $0x28] sm:$0xff]
  %v189 = vld [vmem:[%s6 + $0x30] sm:$0xff]
  %v190 = vld [vmem:[%s6 + $0x38] sm:$0xff]
  %v191 = vsel %vm57, %v129, 0.0
  %192 = vadd.xlane.f32.xlu0 %v191
  %v193 = vpop.xlane.xlu0 %192
  %v194 = vsel %vm57, %v134, 0.0
  %195 = vadd.xlane.f32.xlu0 %v194
  %v196 = vpop.xlane.xlu0 %195
  %v197 = vrcp.pop 32.0
  %v198 = vmul.f32 %v193, %v197
  %v199 = vmul.f32 %v196, %v197
  %v200 = vsub.f32 %v129, %v198
  %v201 = vsub.f32 %v134, %v199
  %v202 = vmul.f32 %v200, %v200
  %v203 = vmul.f32 %v201, %v201
  %v204 = vsel %vm57, %v202, 0.0
  %205 = vadd.xlane.f32.xlu0 %v204
  %v206 = vpop.xlane.xlu0 %205
  %v207 = vsel %vm57, %v203, 0.0
  %208 = vadd.xlane.f32.xlu0 %v207
  %v209 = vpop.xlane.xlu0 %208
  %v210 = vmul.f32 %v206, %v197
  %v211 = vmul.f32 %v209, %v197
  %v212 = vadd.f32 %v210, 1e-05
  %v213 = vadd.f32 %v211, 1e-05
  %v214 = vrsqrt.pop %v212
  %v215 = vrsqrt.pop %v213
  %v216 = vmul.f32 %v200, %v214
  %v217 = vmul.f32 %v201, %v215
  %v218 = vlaneseq
  %v219 = vshrl.u32 %v218, 7
  %v220 = vsub.s32 0, %v219
  %v221 = vrot.slane %v170, %v220
  %v222 = vmul.f32 %v216, %v221
  %v223 = vmul.f32 %v217, %v221
  %v224 = vlaneseq
  %v225 = vshrl.u32 %v224, 7
  %v226 = vsub.s32 1, %v225
  %v227 = vrot.slane %v170, %v226
  %v228 = vadd.f32 %v222, %v227
  %v229 = vadd.f32 %v223, %v227
  %v231 = vsel %vm57, %v228, 0
  %v234 = vsel %vm57, %v229, 0
  %236 = vmatprep.subr.mxu0 0.0
  %237 = vmatpush1.msra.mxu0 0.0
  %238 = vmatprep.subr.mxu0 0.0
  %239 = vmatpush1.msra.mxu0 0.0
  %240 = vmatprep.subr.mxu0 0.0
  %241 = vmatpush1.msra.mxu0 0.0
  %242 = vmatprep.subr.mxu0 0.0
  %243 = vmatpush1.msra.mxu0 0.0
  %244 = vmatprep.subr.mxu0 0.0
  %245 = vmatpush1.msra.mxu0 0.0
  %246 = vmatprep.subr.mxu0 0.0
  %247 = vmatpush1.msra.mxu0 0.0
  %248 = vmatprep.subr.mxu0 0.0
  %249 = vmatpush1.msra.mxu0 0.0
  %250 = vmatprep.subr.mxu0 0.0
  %251 = vmatpush1.msra.mxu0 0.0
  %252 = vmatprep.subr.mxu0 0.0
  %253 = vmatpush1.msra.mxu0 0.0
  %254 = vmatprep.subr.mxu0 0.0
  %255 = vmatpush1.msra.mxu0 0.0
  %256 = vmatprep.subr.mxu0 0.0
  %257 = vmatpush1.msra.mxu0 0.0
  %258 = vmatprep.subr.mxu0 0.0
  %259 = vmatpush1.msra.mxu0 0.0
  %260 = vmatprep.subr.mxu0 0.0
  %261 = vmatpush1.msra.mxu0 %v174
  %262 = vmatprep.subr.mxu0 0.0
  %263 = vmatpush1.msra.mxu0 %v173
  %264 = vmatprep.subr.mxu0 0.0
  %265 = vmatpush1.msra.mxu0 %v172
  %266 = vmatprep.subr.mxu0 0.0
  %267 = vmatpush1.msra.mxu0 %v171
  %268 = vmatprep.subr.mxu0 0.0
  %269 = vmatpush2.msra.mxu0 0.0
  %270 = vmatprep.subr.mxu0 0.0
  %271 = vmatpush2.msra.mxu0 0.0
  %272 = vmatprep.subr.mxu0 0.0
  %273 = vmatpush2.msra.mxu0 0.0
  %274 = vmatprep.subr.mxu0 0.0
  %275 = vmatpush2.msra.mxu0 0.0
  %276 = vmatprep.subr.mxu0 0.0
  %277 = vmatpush2.msra.mxu0 0.0
  %278 = vmatprep.subr.mxu0 0.0
  %279 = vmatpush2.msra.mxu0 0.0
  %280 = vmatprep.subr.mxu0 0.0
  %281 = vmatpush2.msra.mxu0 0.0
  %282 = vmatprep.subr.mxu0 0.0
  %283 = vmatpush2.msra.mxu0 0.0
  %284 = vmatprep.subr.mxu0 0.0
  %285 = vmatpush2.msra.mxu0 0.0
  %286 = vmatprep.subr.mxu0 0.0
  %287 = vmatpush2.msra.mxu0 0.0
  %288 = vmatprep.subr.mxu0 0.0
  %289 = vmatpush2.msra.mxu0 0.0
  %290 = vmatprep.subr.mxu0 0.0
  %291 = vmatpush2.msra.mxu0 0.0
  %292 = vmatprep.subr.mxu0 0.0
  %293 = vmatpush2.msra.mxu0 0.0
  %294 = vmatprep.subr.mxu0 0.0
  %295 = vmatpush2.msra.mxu0 0.0
  %296 = vmatprep.subr.mxu0 0.0
  %297 = vmatpush2.msra.mxu0 0.0
  %298 = vmatprep.subr.mxu0 0.0
  %299 = vmatpush2.msra.mxu0 0.0
  %300 = vmatprep.mubr.f32.mxu0 0.0
  %301 = vmatmul.mubr.f32.gmra.mxu0 %v231
  %v302 = vpop.f32.mrf.mxu0
  %v303 = vadd.f32 0.0, %v302
  %v304 = vpop.f32.mrf.mxu0
  %305 = vmatprep.mubr.f32.mxu0 0.0
  %306 = vmatmul.mubr.f32.gmra.mxu0 %v234
  %v307 = vpop.f32.mrf.mxu0
  %v308 = vadd.f32 0.0, %v307
  %v309 = vpop.f32.mrf.mxu0
  %310 = vdwg.mxu0
  %313 = vrot.lane.b32.xlu0 %v303, 96
  %v314 = vpop.permute.xlu0 %313
  %315 = vrot.lane.b32.xlu0 %v308, 96
  %v316 = vpop.permute.xlu0 %315
  %vm317 = vcmask 64512
  %v318 = vsel %vm317, %v303, 0
  %v320 = vsel %vm317, %v308, 0
  %v322 = vsel %vm317, %v314, 0
  %v324 = vsel %vm317, %v316, 0
  %326 = vmatprep.subr.mxu0 0.0
  %327 = vmatpush1.xpose.msra.mxu0 0.0
  %328 = vmatprep.subr.mxu0 0.0
  %329 = vmatpush1.xpose.msra.mxu0 0.0
  %330 = vmatprep.subr.mxu0 0.0
  %331 = vmatpush1.xpose.msra.mxu0 0.0
  %332 = vmatprep.subr.mxu0 0.0
  %333 = vmatpush1.xpose.msra.mxu0 0.0
  %334 = vmatprep.subr.mxu0 0.0
  %335 = vmatpush1.xpose.msra.mxu0 0.0
  %336 = vmatprep.subr.mxu0 0.0
  %337 = vmatpush1.xpose.msra.mxu0 0.0
  %338 = vmatprep.subr.mxu0 0.0
  %339 = vmatpush1.xpose.msra.mxu0 0.0
  %340 = vmatprep.subr.mxu0 0.0
  %341 = vmatpush1.xpose.msra.mxu0 0.0
  %342 = vmatprep.subr.mxu0 0.0
  %343 = vmatpush1.xpose.msra.mxu0 0.0
  %344 = vmatprep.subr.mxu0 0.0
  %345 = vmatpush1.xpose.msra.mxu0 0.0
  %346 = vmatprep.subr.mxu0 0.0
  %347 = vmatpush1.xpose.msra.mxu0 0.0
  %348 = vmatprep.subr.mxu0 0.0
  %349 = vmatpush1.xpose.msra.mxu0 0.0
  %350 = vmatprep.subr.mxu0 0.0
  %351 = vmatpush1.xpose.msra.mxu0 0.0
  %352 = vmatprep.subr.mxu0 0.0
  %353 = vmatpush1.xpose.msra.mxu0 0.0
  %354 = vmatprep.subr.mxu0 0.0
  %355 = vmatpush1.xpose.msra.mxu0 %v324
  %356 = vmatprep.subr.mxu0 0.0
  %357 = vmatpush1.xpose.msra.mxu0 %v322
  %358 = vmatprep.subr.mxu0 0.0
  %359 = vmatpush2.xpose.msra.mxu0 0.0
  %360 = vmatprep.subr.mxu0 0.0
  %361 = vmatpush2.xpose.msra.mxu0 0.0
  %362 = vmatprep.subr.mxu0 0.0
  %363 = vmatpush2.xpose.msra.mxu0 0.0
  %364 = vmatprep.subr.mxu0 0.0
  %365 = vmatpush2.xpose.msra.mxu0 0.0
  %366 = vmatprep.subr.mxu0 0.0
  %367 = vmatpush2.xpose.msra.mxu0 0.0
  %368 = vmatprep.subr.mxu0 0.0
  %369 = vmatpush2.xpose.msra.mxu0 0.0
  %370 = vmatprep.subr.mxu0 0.0
  %371 = vmatpush2.xpose.msra.mxu0 0.0
  %372 = vmatprep.subr.mxu0 0.0
  %373 = vmatpush2.xpose.msra.mxu0 0.0
  %374 = vmatprep.subr.mxu0 0.0
  %375 = vmatpush2.xpose.msra.mxu0 0.0
  %376 = vmatprep.subr.mxu0 0.0
  %377 = vmatpush2.xpose.msra.mxu0 0.0
  %378 = vmatprep.subr.mxu0 0.0
  %379 = vmatpush2.xpose.msra.mxu0 0.0
  %380 = vmatprep.subr.mxu0 0.0
  %381 = vmatpush2.xpose.msra.mxu0 0.0
  %382 = vmatprep.subr.mxu0 0.0
  %383 = vmatpush2.xpose.msra.mxu0 0.0
  %384 = vmatprep.subr.mxu0 0.0
  %385 = vmatpush2.xpose.msra.mxu0 0.0
  %386 = vmatprep.subr.mxu0 0.0
  %387 = vmatpush2.xpose.msra.mxu0 0.0
  %388 = vmatprep.subr.mxu0 0.0
  %389 = vmatpush2.xpose.msra.mxu0 0.0
  %390 = vmatprep.mubr.f32.mxu0 0.0
  %391 = vmatmul.mubr.f32.gmra.mxu0 %v318
  %v392 = vpop.f32.mrf.mxu0
  %v393 = vadd.f32 0.0, %v392
  %v394 = vpop.f32.mrf.mxu0
  %395 = vmatprep.mubr.f32.mxu0 0.0
  %396 = vmatmul.mubr.f32.gmra.mxu0 %v320
  %v397 = vpop.f32.mrf.mxu0
  %v398 = vadd.f32 0.0, %v397
  %v399 = vpop.f32.mrf.mxu0
  %400 = vdwg.mxu0
  %v401 = vmul.f32 %v393, 0.35355338
  %v402 = vmul.f32 %v398, 0.35355338
  %v403 = vadd.f32 %v401, %v168
  %v404 = vadd.f32 %v402, %v169
  %vm405 = vcmask 130048
  %v406 = vsel %vm405, %v403, -inf
  %407 = vmax.xlane.f32.xlu0 %v406
  %v408 = vpop.xlane.xlu0 %407
  %v409 = vsel %vm405, %v404, -inf
  %410 = vmax.xlane.f32.xlu0 %v409
  %v411 = vpop.xlane.xlu0 %410
  %v412 = vsub.f32 %v403, %v408
  %v413 = vsub.f32 %v404, %v411
  %v414 = vmul.f32 %v412, 1.442695
  %v415 = vpow.pop %v414
  %v416 = vmul.f32 %v413, 1.442695
  %v417 = vpow.pop %v416
  %v418 = vsel %vm405, %v415, 0.0
  %419 = vadd.xlane.f32.xlu0 %v418
  %v420 = vpop.xlane.xlu0 %419
  %v421 = vsel %vm405, %v417, 0.0
  %422 = vadd.xlane.f32.xlu0 %v421
  %v423 = vpop.xlane.xlu0 %422
  %v424 = vrcp.pop %v420
  %v425 = vrcp.pop %v423
  %v426 = vmul.f32 %v415, %v424
  %v427 = vmul.f32 %v417, %v425
  %428 = vrot.lane.b32.xlu0 %v303, 64
  %v429 = vpop.permute.xlu0 %428
  %430 = vrot.lane.b32.xlu0 %v308, 64
  %v431 = vpop.permute.xlu0 %430
  %v435 = vsel %vm405, %v426, 0
  %v438 = vsel %vm405, %v427, 0
  %440 = vmatprep.subr.mxu0 0.0
  %441 = vmatpush1.msra.mxu0 0.0
  %442 = vmatprep.subr.mxu0 0.0
  %443 = vmatpush1.msra.mxu0 0.0
  %444 = vmatprep.subr.mxu0 0.0
  %445 = vmatpush1.msra.mxu0 0.0
  %446 = vmatprep.subr.mxu0 0.0
  %447 = vmatpush1.msra.mxu0 0.0
  %448 = vmatprep.subr.mxu0 0.0
  %449 = vmatpush1.msra.mxu0 0.0
  %450 = vmatprep.subr.mxu0 0.0
  %451 = vmatpush1.msra.mxu0 0.0
  %452 = vmatprep.subr.mxu0 0.0
  %453 = vmatpush1.msra.mxu0 0.0
  %454 = vmatprep.subr.mxu0 0.0
  %455 = vmatpush1.msra.mxu0 0.0
  %456 = vmatprep.subr.mxu0 0.0
  %457 = vmatpush1.msra.mxu0 0.0
  %458 = vmatprep.subr.mxu0 0.0
  %459 = vmatpush1.msra.mxu0 0.0
  %460 = vmatprep.subr.mxu0 0.0
  %461 = vmatpush1.msra.mxu0 0.0
  %462 = vmatprep.subr.mxu0 0.0
  %463 = vmatpush1.msra.mxu0 0.0
  %464 = vmatprep.subr.mxu0 0.0
  %465 = vmatpush1.msra.mxu0 0.0
  %466 = vmatprep.subr.mxu0 0.0
  %467 = vmatpush1.msra.mxu0 0.0
  %468 = vmatprep.subr.mxu0 0.0
  %469 = vmatpush1.msra.mxu0 %v431
  %470 = vmatprep.subr.mxu0 0.0
  %471 = vmatpush1.msra.mxu0 %v429
  %472 = vmatprep.subr.mxu0 0.0
  %473 = vmatpush2.msra.mxu0 0.0
  %474 = vmatprep.subr.mxu0 0.0
  %475 = vmatpush2.msra.mxu0 0.0
  %476 = vmatprep.subr.mxu0 0.0
  %477 = vmatpush2.msra.mxu0 0.0
  %478 = vmatprep.subr.mxu0 0.0
  %479 = vmatpush2.msra.mxu0 0.0
  %480 = vmatprep.subr.mxu0 0.0
  %481 = vmatpush2.msra.mxu0 0.0
  %482 = vmatprep.subr.mxu0 0.0
  %483 = vmatpush2.msra.mxu0 0.0
  %484 = vmatprep.subr.mxu0 0.0
  %485 = vmatpush2.msra.mxu0 0.0
  %486 = vmatprep.subr.mxu0 0.0
  %487 = vmatpush2.msra.mxu0 0.0
  %488 = vmatprep.subr.mxu0 0.0
  %489 = vmatpush2.msra.mxu0 0.0
  %490 = vmatprep.subr.mxu0 0.0
  %491 = vmatpush2.msra.mxu0 0.0
  %492 = vmatprep.subr.mxu0 0.0
  %493 = vmatpush2.msra.mxu0 0.0
  %494 = vmatprep.subr.mxu0 0.0
  %495 = vmatpush2.msra.mxu0 0.0
  %496 = vmatprep.subr.mxu0 0.0
  %497 = vmatpush2.msra.mxu0 0.0
  %498 = vmatprep.subr.mxu0 0.0
  %499 = vmatpush2.msra.mxu0 0.0
  %500 = vmatprep.subr.mxu0 0.0
  %501 = vmatpush2.msra.mxu0 0.0
  %502 = vmatprep.subr.mxu0 0.0
  %503 = vmatpush2.msra.mxu0 0.0
  %504 = vmatprep.mubr.f32.mxu0 0.0
  %505 = vmatmul.mubr.f32.gmra.mxu0 %v435
  %v506 = vpop.f32.mrf.mxu0
  %v507 = vadd.f32 0.0, %v506
  %v508 = vpop.f32.mrf.mxu0
  %509 = vmatprep.mubr.f32.mxu0 0.0
  %510 = vmatmul.mubr.f32.gmra.mxu0 %v438
  %v511 = vpop.f32.mrf.mxu0
  %v512 = vadd.f32 0.0, %v511
  %v513 = vpop.f32.mrf.mxu0
  %514 = vdwg.mxu0
  %515 = vrot.lane.b32.xlu0 %v303, 120
  %v516 = vpop.permute.xlu0 %515
  %517 = vrot.lane.b32.xlu0 %v308, 120
  %v518 = vpop.permute.xlu0 %517
  %519 = vrot.lane.b32.xlu0 %v303, 88
  %v520 = vpop.permute.xlu0 %519
  %521 = vrot.lane.b32.xlu0 %v308, 88
  %v522 = vpop.permute.xlu0 %521
  %v523 = vsel %vm317, %v516, 0
  %v525 = vsel %vm317, %v518, 0
  %v527 = vsel %vm317, %v520, 0
  %v529 = vsel %vm317, %v522, 0
  %531 = vmatprep.subr.mxu0 0.0
  %532 = vmatpush1.xpose.msra.mxu0 0.0
  %533 = vmatprep.subr.mxu0 0.0
  %534 = vmatpush1.xpose.msra.mxu0 0.0
  %535 = vmatprep.subr.mxu0 0.0
  %536 = vmatpush1.xpose.msra.mxu0 0.0
  %537 = vmatprep.subr.mxu0 0.0
  %538 = vmatpush1.xpose.msra.mxu0 0.0
  %539 = vmatprep.subr.mxu0 0.0
  %540 = vmatpush1.xpose.msra.mxu0 0.0
  %541 = vmatprep.subr.mxu0 0.0
  %542 = vmatpush1.xpose.msra.mxu0 0.0
  %543 = vmatprep.subr.mxu0 0.0
  %544 = vmatpush1.xpose.msra.mxu0 0.0
  %545 = vmatprep.subr.mxu0 0.0
  %546 = vmatpush1.xpose.msra.mxu0 0.0
  %547 = vmatprep.subr.mxu0 0.0
  %548 = vmatpush1.xpose.msra.mxu0 0.0
  %549 = vmatprep.subr.mxu0 0.0
  %550 = vmatpush1.xpose.msra.mxu0 0.0
  %551 = vmatprep.subr.mxu0 0.0
  %552 = vmatpush1.xpose.msra.mxu0 0.0
  %553 = vmatprep.subr.mxu0 0.0
  %554 = vmatpush1.xpose.msra.mxu0 0.0
  %555 = vmatprep.subr.mxu0 0.0
  %556 = vmatpush1.xpose.msra.mxu0 0.0
  %557 = vmatprep.subr.mxu0 0.0
  %558 = vmatpush1.xpose.msra.mxu0 0.0
  %559 = vmatprep.subr.mxu0 0.0
  %560 = vmatpush1.xpose.msra.mxu0 %v529
  %561 = vmatprep.subr.mxu0 0.0
  %562 = vmatpush1.xpose.msra.mxu0 %v527
  %563 = vmatprep.subr.mxu0 0.0
  %564 = vmatpush2.xpose.msra.mxu0 0.0
  %565 = vmatprep.subr.mxu0 0.0
  %566 = vmatpush2.xpose.msra.mxu0 0.0
  %567 = vmatprep.subr.mxu0 0.0
  %568 = vmatpush2.xpose.msra.mxu0 0.0
  %569 = vmatprep.subr.mxu0 0.0
  %570 = vmatpush2.xpose.msra.mxu0 0.0
  %571 = vmatprep.subr.mxu0 0.0
  %572 = vmatpush2.xpose.msra.mxu0 0.0
  %573 = vmatprep.subr.mxu0 0.0
  %574 = vmatpush2.xpose.msra.mxu0 0.0
  %575 = vmatprep.subr.mxu0 0.0
  %576 = vmatpush2.xpose.msra.mxu0 0.0
  %577 = vmatprep.subr.mxu0 0.0
  %578 = vmatpush2.xpose.msra.mxu0 0.0
  %579 = vmatprep.subr.mxu0 0.0
  %580 = vmatpush2.xpose.msra.mxu0 0.0
  %581 = vmatprep.subr.mxu0 0.0
  %582 = vmatpush2.xpose.msra.mxu0 0.0
  %583 = vmatprep.subr.mxu0 0.0
  %584 = vmatpush2.xpose.msra.mxu0 0.0
  %585 = vmatprep.subr.mxu0 0.0
  %586 = vmatpush2.xpose.msra.mxu0 0.0
  %587 = vmatprep.subr.mxu0 0.0
  %588 = vmatpush2.xpose.msra.mxu0 0.0
  %589 = vmatprep.subr.mxu0 0.0
  %590 = vmatpush2.xpose.msra.mxu0 0.0
  %591 = vmatprep.subr.mxu0 0.0
  %592 = vmatpush2.xpose.msra.mxu0 0.0
  %593 = vmatprep.subr.mxu0 0.0
  %594 = vmatpush2.xpose.msra.mxu0 0.0
  %595 = vmatprep.mubr.f32.mxu0 0.0
  %596 = vmatmul.mubr.f32.gmra.mxu0 %v523
  %v597 = vpop.f32.mrf.mxu0
  %v598 = vadd.f32 0.0, %v597
  %v599 = vpop.f32.mrf.mxu0
  %600 = vmatprep.mubr.f32.mxu0 0.0
  %601 = vmatmul.mubr.f32.gmra.mxu0 %v525
  %v602 = vpop.f32.mrf.mxu0
  %v603 = vadd.f32 0.0, %v602
  %v604 = vpop.f32.mrf.mxu0
  %605 = vdwg.mxu0
  %v606 = vmul.f32 %v598, 0.35355338
  %v607 = vmul.f32 %v603, 0.35355338
  %v608 = vadd.f32 %v606, %v168
  %v609 = vadd.f32 %v607, %v169
  %v610 = vsel %vm405, %v608, -inf
  %611 = vmax.xlane.f32.xlu0 %v610
  %v612 = vpop.xlane.xlu0 %611
  %v613 = vsel %vm405, %v609, -inf
  %614 = vmax.xlane.f32.xlu0 %v613
  %v615 = vpop.xlane.xlu0 %614
  %v616 = vsub.f32 %v608, %v612
  %v617 = vsub.f32 %v609, %v615
  %v618 = vmul.f32 %v616, 1.442695
  %v619 = vpow.pop %v618
  %v620 = vmul.f32 %v617, 1.442695
  %v621 = vpow.pop %v620
  %v622 = vsel %vm405, %v619, 0.0
  %623 = vadd.xlane.f32.xlu0 %v622
  %v624 = vpop.xlane.xlu0 %623
  %v625 = vsel %vm405, %v621, 0.0
  %626 = vadd.xlane.f32.xlu0 %v625
  %v627 = vpop.xlane.xlu0 %626
  %v628 = vrcp.pop %v624
  %v629 = vrcp.pop %v627
  %v630 = vmul.f32 %v619, %v628
  %v631 = vmul.f32 %v621, %v629
  %632 = vrot.lane.b32.xlu0 %v303, 56
  %v633 = vpop.permute.xlu0 %632
  %634 = vrot.lane.b32.xlu0 %v308, 56
  %v635 = vpop.permute.xlu0 %634
  %v639 = vsel %vm405, %v630, 0
  %v642 = vsel %vm405, %v631, 0
  %644 = vmatprep.subr.mxu0 0.0
  %645 = vmatpush1.msra.mxu0 0.0
  %646 = vmatprep.subr.mxu0 0.0
  %647 = vmatpush1.msra.mxu0 0.0
  %648 = vmatprep.subr.mxu0 0.0
  %649 = vmatpush1.msra.mxu0 0.0
  %650 = vmatprep.subr.mxu0 0.0
  %651 = vmatpush1.msra.mxu0 0.0
  %652 = vmatprep.subr.mxu0 0.0
  %653 = vmatpush1.msra.mxu0 0.0
  %654 = vmatprep.subr.mxu0 0.0
  %655 = vmatpush1.msra.mxu0 0.0
  %656 = vmatprep.subr.mxu0 0.0
  %657 = vmatpush1.msra.mxu0 0.0
  %658 = vmatprep.subr.mxu0 0.0
  %659 = vmatpush1.msra.mxu0 0.0
  %660 = vmatprep.subr.mxu0 0.0
  %661 = vmatpush1.msra.mxu0 0.0
  %662 = vmatprep.subr.mxu0 0.0
  %663 = vmatpush1.msra.mxu0 0.0
  %664 = vmatprep.subr.mxu0 0.0
  %665 = vmatpush1.msra.mxu0 0.0
  %666 = vmatprep.subr.mxu0 0.0
  %667 = vmatpush1.msra.mxu0 0.0
  %668 = vmatprep.subr.mxu0 0.0
  %669 = vmatpush1.msra.mxu0 0.0
  %670 = vmatprep.subr.mxu0 0.0
  %671 = vmatpush1.msra.mxu0 0.0
  %672 = vmatprep.subr.mxu0 0.0
  %673 = vmatpush1.msra.mxu0 %v635
  %674 = vmatprep.subr.mxu0 0.0
  %675 = vmatpush1.msra.mxu0 %v633
  %676 = vmatprep.subr.mxu0 0.0
  %677 = vmatpush2.msra.mxu0 0.0
  %678 = vmatprep.subr.mxu0 0.0
  %679 = vmatpush2.msra.mxu0 0.0
  %680 = vmatprep.subr.mxu0 0.0
  %681 = vmatpush2.msra.mxu0 0.0
  %682 = vmatprep.subr.mxu0 0.0
  %683 = vmatpush2.msra.mxu0 0.0
  %684 = vmatprep.subr.mxu0 0.0
  %685 = vmatpush2.msra.mxu0 0.0
  %686 = vmatprep.subr.mxu0 0.0
  %687 = vmatpush2.msra.mxu0 0.0
  %688 = vmatprep.subr.mxu0 0.0
  %689 = vmatpush2.msra.mxu0 0.0
  %690 = vmatprep.subr.mxu0 0.0
  %691 = vmatpush2.msra.mxu0 0.0
  %692 = vmatprep.subr.mxu0 0.0
  %693 = vmatpush2.msra.mxu0 0.0
  %694 = vmatprep.subr.mxu0 0.0
  %695 = vmatpush2.msra.mxu0 0.0
  %696 = vmatprep.subr.mxu0 0.0
  %697 = vmatpush2.msra.mxu0 0.0
  %698 = vmatprep.subr.mxu0 0.0
  %699 = vmatpush2.msra.mxu0 0.0
  %700 = vmatprep.subr.mxu0 0.0
  %701 = vmatpush2.msra.mxu0 0.0
  %702 = vmatprep.subr.mxu0 0.0
  %703 = vmatpush2.msra.mxu0 0.0
  %704 = vmatprep.subr.mxu0 0.0
  %705 = vmatpush2.msra.mxu0 0.0
  %706 = vmatprep.subr.mxu0 0.0
  %707 = vmatpush2.msra.mxu0 0.0
  %708 = vmatprep.mubr.f32.mxu0 0.0
  %709 = vmatmul.mubr.f32.gmra.mxu0 %v639
  %v710 = vpop.f32.mrf.mxu0
  %v711 = vadd.f32 0.0, %v710
  %v712 = vpop.f32.mrf.mxu0
  %713 = vmatprep.mubr.f32.mxu0 0.0
  %714 = vmatmul.mubr.f32.gmra.mxu0 %v642
  %v715 = vpop.f32.mrf.mxu0
  %v716 = vadd.f32 0.0, %v715
  %v717 = vpop.f32.mrf.mxu0
  %718 = vdwg.mxu0
  %719 = vrot.lane.b32.xlu0 %v303, 112
  %v720 = vpop.permute.xlu0 %719
  %721 = vrot.lane.b32.xlu0 %v308, 112
  %v722 = vpop.permute.xlu0 %721
  %723 = vrot.lane.b32.xlu0 %v303, 80
  %v724 = vpop.permute.xlu0 %723
  %725 = vrot.lane.b32.xlu0 %v308, 80
  %v726 = vpop.permute.xlu0 %725
  %v727 = vsel %vm317, %v720, 0
  %v729 = vsel %vm317, %v722, 0
  %v731 = vsel %vm317, %v724, 0
  %v733 = vsel %vm317, %v726, 0
  %735 = vmatprep.subr.mxu0 0.0
  %736 = vmatpush1.xpose.msra.mxu0 0.0
  %737 = vmatprep.subr.mxu0 0.0
  %738 = vmatpush1.xpose.msra.mxu0 0.0
  %739 = vmatprep.subr.mxu0 0.0
  %740 = vmatpush1.xpose.msra.mxu0 0.0
  %741 = vmatprep.subr.mxu0 0.0
  %742 = vmatpush1.xpose.msra.mxu0 0.0
  %743 = vmatprep.subr.mxu0 0.0
  %744 = vmatpush1.xpose.msra.mxu0 0.0
  %745 = vmatprep.subr.mxu0 0.0
  %746 = vmatpush1.xpose.msra.mxu0 0.0
  %747 = vmatprep.subr.mxu0 0.0
  %748 = vmatpush1.xpose.msra.mxu0 0.0
  %749 = vmatprep.subr.mxu0 0.0
  %750 = vmatpush1.xpose.msra.mxu0 0.0
  %751 = vmatprep.subr.mxu0 0.0
  %752 = vmatpush1.xpose.msra.mxu0 0.0
  %753 = vmatprep.subr.mxu0 0.0
  %754 = vmatpush1.xpose.msra.mxu0 0.0
  %755 = vmatprep.subr.mxu0 0.0
  %756 = vmatpush1.xpose.msra.mxu0 0.0
  %757 = vmatprep.subr.mxu0 0.0
  %758 = vmatpush1.xpose.msra.mxu0 0.0
  %759 = vmatprep.subr.mxu0 0.0
  %760 = vmatpush1.xpose.msra.mxu0 0.0
  %761 = vmatprep.subr.mxu0 0.0
  %762 = vmatpush1.xpose.msra.mxu0 0.0
  %763 = vmatprep.subr.mxu0 0.0
  %764 = vmatpush1.xpose.msra.mxu0 %v733
  %765 = vmatprep.subr.mxu0 0.0
  %766 = vmatpush1.xpose.msra.mxu0 %v731
  %767 = vmatprep.subr.mxu0 0.0
  %768 = vmatpush2.xpose.msra.mxu0 0.0
  %769 = vmatprep.subr.mxu0 0.0
  %770 = vmatpush2.xpose.msra.mxu0 0.0
  %771 = vmatprep.subr.mxu0 0.0
  %772 = vmatpush2.xpose.msra.mxu0 0.0
  %773 = vmatprep.subr.mxu0 0.0
  %774 = vmatpush2.xpose.msra.mxu0 0.0
  %775 = vmatprep.subr.mxu0 0.0
  %776 = vmatpush2.xpose.msra.mxu0 0.0
  %777 = vmatprep.subr.mxu0 0.0
  %778 = vmatpush2.xpose.msra.mxu0 0.0
  %779 = vmatprep.subr.mxu0 0.0
  %780 = vmatpush2.xpose.msra.mxu0 0.0
  %781 = vmatprep.subr.mxu0 0.0
  %782 = vmatpush2.xpose.msra.mxu0 0.0
  %783 = vmatprep.subr.mxu0 0.0
  %784 = vmatpush2.xpose.msra.mxu0 0.0
  %785 = vmatprep.subr.mxu0 0.0
  %786 = vmatpush2.xpose.msra.mxu0 0.0
  %787 = vmatprep.subr.mxu0 0.0
  %788 = vmatpush2.xpose.msra.mxu0 0.0
  %789 = vmatprep.subr.mxu0 0.0
  %790 = vmatpush2.xpose.msra.mxu0 0.0
  %791 = vmatprep.subr.mxu0 0.0
  %792 = vmatpush2.xpose.msra.mxu0 0.0
  %793 = vmatprep.subr.mxu0 0.0
  %794 = vmatpush2.xpose.msra.mxu0 0.0
  %795 = vmatprep.subr.mxu0 0.0
  %796 = vmatpush2.xpose.msra.mxu0 0.0
  %797 = vmatprep.subr.mxu0 0.0
  %798 = vmatpush2.xpose.msra.mxu0 0.0
  %799 = vmatprep.mubr.f32.mxu0 0.0
  %800 = vmatmul.mubr.f32.gmra.mxu0 %v727
  %v801 = vpop.f32.mrf.mxu0
  %v802 = vadd.f32 0.0, %v801
  %v803 = vpop.f32.mrf.mxu0
  %804 = vmatprep.mubr.f32.mxu0 0.0
  %805 = vmatmul.mubr.f32.gmra.mxu0 %v729
  %v806 = vpop.f32.mrf.mxu0
  %v807 = vadd.f32 0.0, %v806
  %v808 = vpop.f32.mrf.mxu0
  %809 = vdwg.mxu0
  %v810 = vmul.f32 %v802, 0.35355338
  %v811 = vmul.f32 %v807, 0.35355338
  %v812 = vadd.f32 %v810, %v168
  %v813 = vadd.f32 %v811, %v169
  %v814 = vsel %vm405, %v812, -inf
  %815 = vmax.xlane.f32.xlu0 %v814
  %v816 = vpop.xlane.xlu0 %815
  %v817 = vsel %vm405, %v813, -inf
  %818 = vmax.xlane.f32.xlu0 %v817
  %v819 = vpop.xlane.xlu0 %818
  %v820 = vsub.f32 %v812, %v816
  %v821 = vsub.f32 %v813, %v819
  %v822 = vmul.f32 %v820, 1.442695
  %v823 = vpow.pop %v822
  %v824 = vmul.f32 %v821, 1.442695
  %v825 = vpow.pop %v824
  %v826 = vsel %vm405, %v823, 0.0
  %827 = vadd.xlane.f32.xlu0 %v826
  %v828 = vpop.xlane.xlu0 %827
  %v829 = vsel %vm405, %v825, 0.0
  %830 = vadd.xlane.f32.xlu0 %v829
  %v831 = vpop.xlane.xlu0 %830
  %v832 = vrcp.pop %v828
  %v833 = vrcp.pop %v831
  %v834 = vmul.f32 %v823, %v832
  %v835 = vmul.f32 %v825, %v833
  %836 = vrot.lane.b32.xlu0 %v303, 48
  %v837 = vpop.permute.xlu0 %836
  %838 = vrot.lane.b32.xlu0 %v308, 48
  %v839 = vpop.permute.xlu0 %838
  %v843 = vsel %vm405, %v834, 0
  %v846 = vsel %vm405, %v835, 0
  %848 = vmatprep.subr.mxu0 0.0
  %849 = vmatpush1.msra.mxu0 0.0
  %850 = vmatprep.subr.mxu0 0.0
  %851 = vmatpush1.msra.mxu0 0.0
  %852 = vmatprep.subr.mxu0 0.0
  %853 = vmatpush1.msra.mxu0 0.0
  %854 = vmatprep.subr.mxu0 0.0
  %855 = vmatpush1.msra.mxu0 0.0
  %856 = vmatprep.subr.mxu0 0.0
  %857 = vmatpush1.msra.mxu0 0.0
  %858 = vmatprep.subr.mxu0 0.0
  %859 = vmatpush1.msra.mxu0 0.0
  %860 = vmatprep.subr.mxu0 0.0
  %861 = vmatpush1.msra.mxu0 0.0
  %862 = vmatprep.subr.mxu0 0.0
  %863 = vmatpush1.msra.mxu0 0.0
  %864 = vmatprep.subr.mxu0 0.0
  %865 = vmatpush1.msra.mxu0 0.0
  %866 = vmatprep.subr.mxu0 0.0
  %867 = vmatpush1.msra.mxu0 0.0
  %868 = vmatprep.subr.mxu0 0.0
  %869 = vmatpush1.msra.mxu0 0.0
  %870 = vmatprep.subr.mxu0 0.0
  %871 = vmatpush1.msra.mxu0 0.0
  %872 = vmatprep.subr.mxu0 0.0
  %873 = vmatpush1.msra.mxu0 0.0
  %874 = vmatprep.subr.mxu0 0.0
  %875 = vmatpush1.msra.mxu0 0.0
  %876 = vmatprep.subr.mxu0 0.0
  %877 = vmatpush1.msra.mxu0 %v839
  %878 = vmatprep.subr.mxu0 0.0
  %879 = vmatpush1.msra.mxu0 %v837
  %880 = vmatprep.subr.mxu0 0.0
  %881 = vmatpush2.msra.mxu0 0.0
  %882 = vmatprep.subr.mxu0 0.0
  %883 = vmatpush2.msra.mxu0 0.0
  %884 = vmatprep.subr.mxu0 0.0
  %885 = vmatpush2.msra.mxu0 0.0
  %886 = vmatprep.subr.mxu0 0.0
  %887 = vmatpush2.msra.mxu0 0.0
  %888 = vmatprep.subr.mxu0 0.0
  %889 = vmatpush2.msra.mxu0 0.0
  %890 = vmatprep.subr.mxu0 0.0
  %891 = vmatpush2.msra.mxu0 0.0
  %892 = vmatprep.subr.mxu0 0.0
  %893 = vmatpush2.msra.mxu0 0.0
  %894 = vmatprep.subr.mxu0 0.0
  %895 = vmatpush2.msra.mxu0 0.0
  %896 = vmatprep.subr.mxu0 0.0
  %897 = vmatpush2.msra.mxu0 0.0
  %898 = vmatprep.subr.mxu0 0.0
  %899 = vmatpush2.msra.mxu0 0.0
  %900 = vmatprep.subr.mxu0 0.0
  %901 = vmatpush2.msra.mxu0 0.0
  %902 = vmatprep.subr.mxu0 0.0
  %903 = vmatpush2.msra.mxu0 0.0
  %904 = vmatprep.subr.mxu0 0.0
  %905 = vmatpush2.msra.mxu0 0.0
  %906 = vmatprep.subr.mxu0 0.0
  %907 = vmatpush2.msra.mxu0 0.0
  %908 = vmatprep.subr.mxu0 0.0
  %909 = vmatpush2.msra.mxu0 0.0
  %910 = vmatprep.subr.mxu0 0.0
  %911 = vmatpush2.msra.mxu0 0.0
  %912 = vmatprep.mubr.f32.mxu0 0.0
  %913 = vmatmul.mubr.f32.gmra.mxu0 %v843
  %v914 = vpop.f32.mrf.mxu0
  %v915 = vadd.f32 0.0, %v914
  %v916 = vpop.f32.mrf.mxu0
  %917 = vmatprep.mubr.f32.mxu0 0.0
  %918 = vmatmul.mubr.f32.gmra.mxu0 %v846
  %v919 = vpop.f32.mrf.mxu0
  %v920 = vadd.f32 0.0, %v919
  %v921 = vpop.f32.mrf.mxu0
  %922 = vdwg.mxu0
  %923 = vrot.lane.b32.xlu0 %v303, 104
  %v924 = vpop.permute.xlu0 %923
  %925 = vrot.lane.b32.xlu0 %v308, 104
  %v926 = vpop.permute.xlu0 %925
  %927 = vrot.lane.b32.xlu0 %v303, 72
  %v928 = vpop.permute.xlu0 %927
  %929 = vrot.lane.b32.xlu0 %v308, 72
  %v930 = vpop.permute.xlu0 %929
  %v931 = vsel %vm317, %v924, 0
  %v933 = vsel %vm317, %v926, 0
  %v935 = vsel %vm317, %v928, 0
  %v937 = vsel %vm317, %v930, 0
  %939 = vmatprep.subr.mxu0 0.0
  %940 = vmatpush1.xpose.msra.mxu0 0.0
  %941 = vmatprep.subr.mxu0 0.0
  %942 = vmatpush1.xpose.msra.mxu0 0.0
  %943 = vmatprep.subr.mxu0 0.0
  %944 = vmatpush1.xpose.msra.mxu0 0.0
  %945 = vmatprep.subr.mxu0 0.0
  %946 = vmatpush1.xpose.msra.mxu0 0.0
  %947 = vmatprep.subr.mxu0 0.0
  %948 = vmatpush1.xpose.msra.mxu0 0.0
  %949 = vmatprep.subr.mxu0 0.0
  %950 = vmatpush1.xpose.msra.mxu0 0.0
  %951 = vmatprep.subr.mxu0 0.0
  %952 = vmatpush1.xpose.msra.mxu0 0.0
  %953 = vmatprep.subr.mxu0 0.0
  %954 = vmatpush1.xpose.msra.mxu0 0.0
  %955 = vmatprep.subr.mxu0 0.0
  %956 = vmatpush1.xpose.msra.mxu0 0.0
  %957 = vmatprep.subr.mxu0 0.0
  %958 = vmatpush1.xpose.msra.mxu0 0.0
  %959 = vmatprep.subr.mxu0 0.0
  %960 = vmatpush1.xpose.msra.mxu0 0.0
  %961 = vmatprep.subr.mxu0 0.0
  %962 = vmatpush1.xpose.msra.mxu0 0.0
  %963 = vmatprep.subr.mxu0 0.0
  %964 = vmatpush1.xpose.msra.mxu0 0.0
  %965 = vmatprep.subr.mxu0 0.0
  %966 = vmatpush1.xpose.msra.mxu0 0.0
  %967 = vmatprep.subr.mxu0 0.0
  %968 = vmatpush1.xpose.msra.mxu0 %v937
  %969 = vmatprep.subr.mxu0 0.0
  %970 = vmatpush1.xpose.msra.mxu0 %v935
  %971 = vmatprep.subr.mxu0 0.0
  %972 = vmatpush2.xpose.msra.mxu0 0.0
  %973 = vmatprep.subr.mxu0 0.0
  %974 = vmatpush2.xpose.msra.mxu0 0.0
  %975 = vmatprep.subr.mxu0 0.0
  %976 = vmatpush2.xpose.msra.mxu0 0.0
  %977 = vmatprep.subr.mxu0 0.0
  %978 = vmatpush2.xpose.msra.mxu0 0.0
  %979 = vmatprep.subr.mxu0 0.0
  %980 = vmatpush2.xpose.msra.mxu0 0.0
  %981 = vmatprep.subr.mxu0 0.0
  %982 = vmatpush2.xpose.msra.mxu0 0.0
  %983 = vmatprep.subr.mxu0 0.0
  %984 = vmatpush2.xpose.msra.mxu0 0.0
  %985 = vmatprep.subr.mxu0 0.0
  %986 = vmatpush2.xpose.msra.mxu0 0.0
  %987 = vmatprep.subr.mxu0 0.0
  %988 = vmatpush2.xpose.msra.mxu0 0.0
  %989 = vmatprep.subr.mxu0 0.0
  %990 = vmatpush2.xpose.msra.mxu0 0.0
  %991 = vmatprep.subr.mxu0 0.0
  %992 = vmatpush2.xpose.msra.mxu0 0.0
  %993 = vmatprep.subr.mxu0 0.0
  %994 = vmatpush2.xpose.msra.mxu0 0.0
  %995 = vmatprep.subr.mxu0 0.0
  %996 = vmatpush2.xpose.msra.mxu0 0.0
  %997 = vmatprep.subr.mxu0 0.0
  %998 = vmatpush2.xpose.msra.mxu0 0.0
  %999 = vmatprep.subr.mxu0 0.0
  %1000 = vmatpush2.xpose.msra.mxu0 0.0
  %1001 = vmatprep.subr.mxu0 0.0
  %1002 = vmatpush2.xpose.msra.mxu0 0.0
  %1003 = vmatprep.mubr.f32.mxu0 0.0
  %1004 = vmatmul.mubr.f32.gmra.mxu0 %v931
  %v1005 = vpop.f32.mrf.mxu0
  %v1006 = vadd.f32 0.0, %v1005
  %v1007 = vpop.f32.mrf.mxu0
  %1008 = vmatprep.mubr.f32.mxu0 0.0
  %1009 = vmatmul.mubr.f32.gmra.mxu0 %v933
  %v1010 = vpop.f32.mrf.mxu0
  %v1011 = vadd.f32 0.0, %v1010
  %v1012 = vpop.f32.mrf.mxu0
  %1013 = vdwg.mxu0
  %v1014 = vmul.f32 %v1006, 0.35355338
  %v1015 = vmul.f32 %v1011, 0.35355338
  %v1016 = vadd.f32 %v1014, %v168
  %v1017 = vadd.f32 %v1015, %v169
  %v1018 = vsel %vm405, %v1016, -inf
  %1019 = vmax.xlane.f32.xlu0 %v1018
  %v1020 = vpop.xlane.xlu0 %1019
  %v1021 = vsel %vm405, %v1017, -inf
  %1022 = vmax.xlane.f32.xlu0 %v1021
  %v1023 = vpop.xlane.xlu0 %1022
  %v1024 = vsub.f32 %v1016, %v1020
  %v1025 = vsub.f32 %v1017, %v1023
  %v1026 = vmul.f32 %v1024, 1.442695
  %v1027 = vpow.pop %v1026
  %v1028 = vmul.f32 %v1025, 1.442695
  %v1029 = vpow.pop %v1028
  %v1030 = vsel %vm405, %v1027, 0.0
  %1031 = vadd.xlane.f32.xlu0 %v1030
  %v1032 = vpop.xlane.xlu0 %1031
  %v1033 = vsel %vm405, %v1029, 0.0
  %1034 = vadd.xlane.f32.xlu0 %v1033
  %v1035 = vpop.xlane.xlu0 %1034
  %v1036 = vrcp.pop %v1032
  %v1037 = vrcp.pop %v1035
  %v1038 = vmul.f32 %v1027, %v1036
  %v1039 = vmul.f32 %v1029, %v1037
  %1040 = vrot.lane.b32.xlu0 %v303, 40
  %v1041 = vpop.permute.xlu0 %1040
  %1042 = vrot.lane.b32.xlu0 %v308, 40
  %v1043 = vpop.permute.xlu0 %1042
  %v1047 = vsel %vm405, %v1038, 0
  %v1050 = vsel %vm405, %v1039, 0
  %1052 = vmatprep.subr.mxu0 0.0
  %1053 = vmatpush1.msra.mxu0 0.0
  %1054 = vmatprep.subr.mxu0 0.0
  %1055 = vmatpush1.msra.mxu0 0.0
  %1056 = vmatprep.subr.mxu0 0.0
  %1057 = vmatpush1.msra.mxu0 0.0
  %1058 = vmatprep.subr.mxu0 0.0
  %1059 = vmatpush1.msra.mxu0 0.0
  %1060 = vmatprep.subr.mxu0 0.0
  %1061 = vmatpush1.msra.mxu0 0.0
  %1062 = vmatprep.subr.mxu0 0.0
  %1063 = vmatpush1.msra.mxu0 0.0
  %1064 = vmatprep.subr.mxu0 0.0
  %1065 = vmatpush1.msra.mxu0 0.0
  %1066 = vmatprep.subr.mxu0 0.0
  %1067 = vmatpush1.msra.mxu0 0.0
  %1068 = vmatprep.subr.mxu0 0.0
  %1069 = vmatpush1.msra.mxu0 0.0
  %1070 = vmatprep.subr.mxu0 0.0
  %1071 = vmatpush1.msra.mxu0 0.0
  %1072 = vmatprep.subr.mxu0 0.0
  %1073 = vmatpush1.msra.mxu0 0.0
  %1074 = vmatprep.subr.mxu0 0.0
  %1075 = vmatpush1.msra.mxu0 0.0
  %1076 = vmatprep.subr.mxu0 0.0
  %1077 = vmatpush1.msra.mxu0 0.0
  %1078 = vmatprep.subr.mxu0 0.0
  %1079 = vmatpush1.msra.mxu0 0.0
  %1080 = vmatprep.subr.mxu0 0.0
  %1081 = vmatpush1.msra.mxu0 %v1043
  %1082 = vmatprep.subr.mxu0 0.0
  %1083 = vmatpush1.msra.mxu0 %v1041
  %1084 = vmatprep.subr.mxu0 0.0
  %1085 = vmatpush2.msra.mxu0 0.0
  %1086 = vmatprep.subr.mxu0 0.0
  %1087 = vmatpush2.msra.mxu0 0.0
  %1088 = vmatprep.subr.mxu0 0.0
  %1089 = vmatpush2.msra.mxu0 0.0
  %1090 = vmatprep.subr.mxu0 0.0
  %1091 = vmatpush2.msra.mxu0 0.0
  %1092 = vmatprep.subr.mxu0 0.0
  %1093 = vmatpush2.msra.mxu0 0.0
  %1094 = vmatprep.subr.mxu0 0.0
  %1095 = vmatpush2.msra.mxu0 0.0
  %1096 = vmatprep.subr.mxu0 0.0
  %1097 = vmatpush2.msra.mxu0 0.0
  %1098 = vmatprep.subr.mxu0 0.0
  %1099 = vmatpush2.msra.mxu0 0.0
  %1100 = vmatprep.subr.mxu0 0.0
  %1101 = vmatpush2.msra.mxu0 0.0
  %1102 = vmatprep.subr.mxu0 0.0
  %1103 = vmatpush2.msra.mxu0 0.0
  %1104 = vmatprep.subr.mxu0 0.0
  %1105 = vmatpush2.msra.mxu0 0.0
  %1106 = vmatprep.subr.mxu0 0.0
  %1107 = vmatpush2.msra.mxu0 0.0
  %1108 = vmatprep.subr.mxu0 0.0
  %1109 = vmatpush2.msra.mxu0 0.0
  %1110 = vmatprep.subr.mxu0 0.0
  %1111 = vmatpush2.msra.mxu0 0.0
  %1112 = vmatprep.subr.mxu0 0.0
  %1113 = vmatpush2.msra.mxu0 0.0
  %1114 = vmatprep.subr.mxu0 0.0
  %1115 = vmatpush2.msra.mxu0 0.0
  %1116 = vmatprep.mubr.f32.mxu0 0.0
  %1117 = vmatmul.mubr.f32.gmra.mxu0 %v1047
  %v1118 = vpop.f32.mrf.mxu0
  %v1119 = vadd.f32 0.0, %v1118
  %v1120 = vpop.f32.mrf.mxu0
  %1121 = vmatprep.mubr.f32.mxu0 0.0
  %1122 = vmatmul.mubr.f32.gmra.mxu0 %v1050
  %v1123 = vpop.f32.mrf.mxu0
  %v1124 = vadd.f32 0.0, %v1123
  %v1125 = vpop.f32.mrf.mxu0
  %1126 = vdwg.mxu0
  %1129 = vrot.lane.b32.xlu0 %v711, 8
  %v1130 = vpop.permute.xlu0 %1129
  %1131 = vrot.lane.b32.xlu0 %v716, 8
  %v1132 = vpop.permute.xlu0 %1131
  %1137 = vrot.lane.b32.xlu0 %v915, 16
  %v1138 = vpop.permute.xlu0 %1137
  %1139 = vrot.lane.b32.xlu0 %v920, 16
  %v1140 = vpop.permute.xlu0 %1139
  %1145 = vrot.lane.b32.xlu0 %v1119, 24
  %v1146 = vpop.permute.xlu0 %1145
  %1147 = vrot.lane.b32.xlu0 %v1124, 24
  %v1148 = vpop.permute.xlu0 %1147
  %v1151 = vsel %vm317, %v507, %v1130
  %v1152 = vsel %vm317, %v512, %v1132
  %v1153 = vsel %vm405, %v1151, %v1138
  %v1154 = vsel %vm405, %v1152, %v1140
  %vm1155 = vcmask 195584
  %v1156 = vsel %vm1155, %v1153, %v1146
  %v1157 = vsel %vm1155, %v1154, %v1148
  %v1158 = vlaneseq
  %v1159 = vshrl.u32 %v1158, 7
  %v1160 = vsub.s32 2, %v1159
  %v1161 = vrot.slane %v170, %v1160
  %v1163 = vsel %vm57, %v1156, 0
  %v1166 = vsel %vm57, %v1157, 0
  %1168 = vmatprep.subr.mxu0 0.0
  %1169 = vmatpush1.msra.mxu0 0.0
  %1170 = vmatprep.subr.mxu0 0.0
  %1171 = vmatpush1.msra.mxu0 0.0
  %1172 = vmatprep.subr.mxu0 0.0
  %1173 = vmatpush1.msra.mxu0 0.0
  %1174 = vmatprep.subr.mxu0 0.0
  %1175 = vmatpush1.msra.mxu0 0.0
  %1176 = vmatprep.subr.mxu0 0.0
  %1177 = vmatpush1.msra.mxu0 0.0
  %1178 = vmatprep.subr.mxu0 0.0
  %1179 = vmatpush1.msra.mxu0 0.0
  %1180 = vmatprep.subr.mxu0 0.0
  %1181 = vmatpush1.msra.mxu0 0.0
  %1182 = vmatprep.subr.mxu0 0.0
  %1183 = vmatpush1.msra.mxu0 0.0
  %1184 = vmatprep.subr.mxu0 0.0
  %1185 = vmatpush1.msra.mxu0 0.0
  %1186 = vmatprep.subr.mxu0 0.0
  %1187 = vmatpush1.msra.mxu0 0.0
  %1188 = vmatprep.subr.mxu0 0.0
  %1189 = vmatpush1.msra.mxu0 0.0
  %1190 = vmatprep.subr.mxu0 0.0
  %1191 = vmatpush1.msra.mxu0 0.0
  %1192 = vmatprep.subr.mxu0 0.0
  %1193 = vmatpush1.msra.mxu0 %v178
  %1194 = vmatprep.subr.mxu0 0.0
  %1195 = vmatpush1.msra.mxu0 %v177
  %1196 = vmatprep.subr.mxu0 0.0
  %1197 = vmatpush1.msra.mxu0 %v176
  %1198 = vmatprep.subr.mxu0 0.0
  %1199 = vmatpush1.msra.mxu0 %v175
  %1200 = vmatprep.subr.mxu0 0.0
  %1201 = vmatpush2.msra.mxu0 0.0
  %1202 = vmatprep.subr.mxu0 0.0
  %1203 = vmatpush2.msra.mxu0 0.0
  %1204 = vmatprep.subr.mxu0 0.0
  %1205 = vmatpush2.msra.mxu0 0.0
  %1206 = vmatprep.subr.mxu0 0.0
  %1207 = vmatpush2.msra.mxu0 0.0
  %1208 = vmatprep.subr.mxu0 0.0
  %1209 = vmatpush2.msra.mxu0 0.0
  %1210 = vmatprep.subr.mxu0 0.0
  %1211 = vmatpush2.msra.mxu0 0.0
  %1212 = vmatprep.subr.mxu0 0.0
  %1213 = vmatpush2.msra.mxu0 0.0
  %1214 = vmatprep.subr.mxu0 0.0
  %1215 = vmatpush2.msra.mxu0 0.0
  %1216 = vmatprep.subr.mxu0 0.0
  %1217 = vmatpush2.msra.mxu0 0.0
  %1218 = vmatprep.subr.mxu0 0.0
  %1219 = vmatpush2.msra.mxu0 0.0
  %1220 = vmatprep.subr.mxu0 0.0
  %1221 = vmatpush2.msra.mxu0 0.0
  %1222 = vmatprep.subr.mxu0 0.0
  %1223 = vmatpush2.msra.mxu0 0.0
  %1224 = vmatprep.subr.mxu0 0.0
  %1225 = vmatpush2.msra.mxu0 0.0
  %1226 = vmatprep.subr.mxu0 0.0
  %1227 = vmatpush2.msra.mxu0 0.0
  %1228 = vmatprep.subr.mxu0 0.0
  %1229 = vmatpush2.msra.mxu0 0.0
  %1230 = vmatprep.subr.mxu0 0.0
  %1231 = vmatpush2.msra.mxu0 0.0
  %1232 = vmatprep.mubr.f32.mxu0 0.0
  %1233 = vmatmul.mubr.f32.gmra.mxu0 %v1163
  %v1234 = vpop.f32.mrf.mxu0
  %v1235 = vadd.f32 %v1161, %v1234
  %v1236 = vpop.f32.mrf.mxu0
  %1237 = vmatprep.mubr.f32.mxu0 0.0
  %1238 = vmatmul.mubr.f32.gmra.mxu0 %v1166
  %v1239 = vpop.f32.mrf.mxu0
  %v1240 = vadd.f32 %v1161, %v1239
  %v1241 = vpop.f32.mrf.mxu0
  %1242 = vdwg.mxu0
  %v1243 = vadd.f32 %v129, %v1235
  %v1244 = vadd.f32 %v134, %v1240
  %v1245 = vsel %vm57, %v1243, 0.0
  %1246 = vadd.xlane.f32.xlu0 %v1245
  %v1247 = vpop.xlane.xlu0 %1246
  %v1248 = vsel %vm57, %v1244, 0.0
  %1249 = vadd.xlane.f32.xlu0 %v1248
  %v1250 = vpop.xlane.xlu0 %1249
  %v1251 = vmul.f32 %v1247, %v197
  %v1252 = vmul.f32 %v1250, %v197
  %v1253 = vsub.f32 %v1243, %v1251
  %v1254 = vsub.f32 %v1244, %v1252
  %v1255 = vmul.f32 %v1253, %v1253
  %v1256 = vmul.f32 %v1254, %v1254
  %v1257 = vsel %vm57, %v1255, 0.0
  %1258 = vadd.xlane.f32.xlu0 %v1257
  %v1259 = vpop.xlane.xlu0 %1258
  %v1260 = vsel %vm57, %v1256, 0.0
  %1261 = vadd.xlane.f32.xlu0 %v1260
  %v1262 = vpop.xlane.xlu0 %1261
  %v1263 = vmul.f32 %v1259, %v197
  %v1264 = vmul.f32 %v1262, %v197
  %v1265 = vadd.f32 %v1263, 1e-05
  %v1266 = vadd.f32 %v1264, 1e-05
  %v1267 = vrsqrt.pop %v1265
  %v1268 = vrsqrt.pop %v1266
  %v1269 = vmul.f32 %v1253, %v1267
  %v1270 = vmul.f32 %v1254, %v1268
  %v1271 = vlaneseq
  %v1272 = vshrl.u32 %v1271, 7
  %v1273 = vsub.s32 3, %v1272
  %v1274 = vrot.slane %v170, %v1273
  %v1275 = vmul.f32 %v1269, %v1274
  %v1276 = vmul.f32 %v1270, %v1274
  %v1277 = vlaneseq
  %v1278 = vshrl.u32 %v1277, 7
  %v1279 = vsub.s32 4, %v1278
  %v1280 = vrot.slane %v170, %v1279
  %v1281 = vadd.f32 %v1275, %v1280
  %v1282 = vadd.f32 %v1276, %v1280
  %v1283 = vlaneseq
  %v1284 = vshrl.u32 %v1283, 7
  %v1285 = vsub.s32 6, %v1284
  %v1286 = vrot.slane %v170, %v1285
  %v1288 = vsel %vm57, %v1281, 0
  %v1291 = vsel %vm57, %v1282, 0
  %1293 = vmatprep.subr.mxu0 0.0
  %1294 = vmatpush1.msra.mxu0 0.0
  %1295 = vmatprep.subr.mxu0 0.0
  %1296 = vmatpush1.msra.mxu0 0.0
  %1297 = vmatprep.subr.mxu0 0.0
  %1298 = vmatpush1.msra.mxu0 0.0
  %1299 = vmatprep.subr.mxu0 0.0
  %1300 = vmatpush1.msra.mxu0 0.0
  %1301 = vmatprep.subr.mxu0 0.0
  %1302 = vmatpush1.msra.mxu0 0.0
  %1303 = vmatprep.subr.mxu0 0.0
  %1304 = vmatpush1.msra.mxu0 0.0
  %1305 = vmatprep.subr.mxu0 0.0
  %1306 = vmatpush1.msra.mxu0 0.0
  %1307 = vmatprep.subr.mxu0 0.0
  %1308 = vmatpush1.msra.mxu0 0.0
  %1309 = vmatprep.subr.mxu0 0.0
  %1310 = vmatpush1.msra.mxu0 0.0
  %1311 = vmatprep.subr.mxu0 0.0
  %1312 = vmatpush1.msra.mxu0 0.0
  %1313 = vmatprep.subr.mxu0 0.0
  %1314 = vmatpush1.msra.mxu0 0.0
  %1315 = vmatprep.subr.mxu0 0.0
  %1316 = vmatpush1.msra.mxu0 0.0
  %1317 = vmatprep.subr.mxu0 0.0
  %1318 = vmatpush1.msra.mxu0 %v182
  %1319 = vmatprep.subr.mxu0 0.0
  %1320 = vmatpush1.msra.mxu0 %v181
  %1321 = vmatprep.subr.mxu0 0.0
  %1322 = vmatpush1.msra.mxu0 %v180
  %1323 = vmatprep.subr.mxu0 0.0
  %1324 = vmatpush1.msra.mxu0 %v179
  %1325 = vmatprep.subr.mxu0 0.0
  %1326 = vmatpush2.msra.mxu0 0.0
  %1327 = vmatprep.subr.mxu0 0.0
  %1328 = vmatpush2.msra.mxu0 0.0
  %1329 = vmatprep.subr.mxu0 0.0
  %1330 = vmatpush2.msra.mxu0 0.0
  %1331 = vmatprep.subr.mxu0 0.0
  %1332 = vmatpush2.msra.mxu0 0.0
  %1333 = vmatprep.subr.mxu0 0.0
  %1334 = vmatpush2.msra.mxu0 0.0
  %1335 = vmatprep.subr.mxu0 0.0
  %1336 = vmatpush2.msra.mxu0 0.0
  %1337 = vmatprep.subr.mxu0 0.0
  %1338 = vmatpush2.msra.mxu0 0.0
  %1339 = vmatprep.subr.mxu0 0.0
  %1340 = vmatpush2.msra.mxu0 0.0
  %1341 = vmatprep.subr.mxu0 0.0
  %1342 = vmatpush2.msra.mxu0 0.0
  %1343 = vmatprep.subr.mxu0 0.0
  %1344 = vmatpush2.msra.mxu0 0.0
  %1345 = vmatprep.subr.mxu0 0.0
  %1346 = vmatpush2.msra.mxu0 0.0
  %1347 = vmatprep.subr.mxu0 0.0
  %1348 = vmatpush2.msra.mxu0 0.0
  %1349 = vmatprep.subr.mxu0 0.0
  %1350 = vmatpush2.msra.mxu0 0.0
  %1351 = vmatprep.subr.mxu0 0.0
  %1352 = vmatpush2.msra.mxu0 0.0
  %1353 = vmatprep.subr.mxu0 0.0
  %1354 = vmatpush2.msra.mxu0 0.0
  %1355 = vmatprep.subr.mxu0 0.0
  %1356 = vmatpush2.msra.mxu0 0.0
  %1357 = vmatprep.mubr.f32.mxu0 0.0
  %1358 = vmatmul.mubr.f32.gmra.mxu0 %v1288
  %v1359 = vpop.f32.mrf.mxu0
  %v1360 = vadd.f32 %v1286, %v1359
  %v1361 = vpop.f32.mrf.mxu0
  %1362 = vmatprep.mubr.f32.mxu0 0.0
  %1363 = vmatmul.mubr.f32.gmra.mxu0 %v1291
  %v1364 = vpop.f32.mrf.mxu0
  %v1365 = vadd.f32 %v1286, %v1364
  %v1366 = vpop.f32.mrf.mxu0
  %1367 = vdwg.mxu0
  %v1368 = vmul.f32 %v1360, 0.5
  %v1369 = vmul.f32 %v1365, 0.5
  %v1370 = vmul.f32 %v1360, 0.70710677
  %v1371 = vmul.f32 %v1365, 0.70710677
  %vm1372 = vcmp.ge.f32.partialorder %v1370, 0.0
  %vm1373 = vcmp.ge.f32.partialorder %v1371, 0.0
  %v1374 = vsel %vm1372, 1.0, -1.0
  %v1375 = vsel %vm1373, 1.0, -1.0
  %v1376 = vand.u32 2147483647, %v1370
  %v1377 = vand.u32 2147483647, %v1371
  %v1378 = vmul.f32 %v1376, 0.3275911
  %v1379 = vmul.f32 %v1377, 0.3275911
  %v1380 = vadd.f32 %v1378, 1.0
  %v1381 = vadd.f32 %v1379, 1.0
  %v1382 = vrcp.pop %v1380
  %v1383 = vmul.f32 1.0, %v1382
  %v1384 = vrcp.pop %v1381
  %v1385 = vmul.f32 1.0, %v1384
  %v1386 = vmul.f32 %v1383, 1.0614054
  %v1387 = vmul.f32 %v1385, 1.0614054
  %v1388 = vadd.f32 %v1386, -1.4531521
  %v1389 = vadd.f32 %v1387, -1.4531521
  %v1390 = vmul.f32 %v1388, %v1383
  %v1391 = vmul.f32 %v1389, %v1385
  %v1392 = vadd.f32 %v1390, 1.4214138
  %v1393 = vadd.f32 %v1391, 1.4214138
  %v1394 = vmul.f32 %v1392, %v1383
  %v1395 = vmul.f32 %v1393, %v1385
  %v1396 = vadd.f32 %v1394, -0.28449672
  %v1397 = vadd.f32 %v1395, -0.28449672
  %v1398 = vmul.f32 %v1396, %v1383
  %v1399 = vmul.f32 %v1397, %v1385
  %v1400 = vadd.f32 %v1398, 0.2548296
  %v1401 = vadd.f32 %v1399, 0.2548296
  %v1402 = vmul.f32 %v1400, %v1383
  %v1403 = vmul.f32 %v1401, %v1385
  %v1404 = vsub.f32 0.0, %v1376
  %v1405 = vsub.f32 0.0, %v1377
  %v1406 = vmul.f32 %v1404, %v1376
  %v1407 = vmul.f32 %v1405, %v1377
  %v1408 = vmul.f32 %v1406, 1.442695
  %v1409 = vpow.pop %v1408
  %v1410 = vmul.f32 %v1407, 1.442695
  %v1411 = vpow.pop %v1410
  %v1412 = vmul.f32 %v1402, %v1409
  %v1413 = vmul.f32 %v1403, %v1411
  %v1414 = vsub.f32 1.0, %v1412
  %v1415 = vsub.f32 1.0, %v1413
  %v1416 = vmul.f32 %v1374, %v1414
  %v1417 = vmul.f32 %v1375, %v1415
  %v1418 = vadd.f32 %v1416, 1.0
  %v1419 = vadd.f32 %v1417, 1.0
  %v1420 = vmul.f32 %v1368, %v1418
  %v1421 = vmul.f32 %v1369, %v1419
  %vm1422 = vcmask 523264
  %v1424 = vsel %vm1422, %v1420, 0
  %v1427 = vsel %vm1422, %v1421, 0
  %1429 = vmatprep.subr.mxu0 0.0
  %1430 = vmatpush1.msra.mxu0 0.0
  %1431 = vmatprep.subr.mxu0 0.0
  %1432 = vmatpush1.msra.mxu0 0.0
  %1433 = vmatprep.subr.mxu0 0.0
  %1434 = vmatpush1.msra.mxu0 0.0
  %1435 = vmatprep.subr.mxu0 0.0
  %1436 = vmatpush1.msra.mxu0 0.0
  %1437 = vmatprep.subr.mxu0 0.0
  %1438 = vmatpush1.msra.mxu0 0.0
  %1439 = vmatprep.subr.mxu0 0.0
  %1440 = vmatpush1.msra.mxu0 0.0
  %1441 = vmatprep.subr.mxu0 0.0
  %1442 = vmatpush1.msra.mxu0 0.0
  %1443 = vmatprep.subr.mxu0 0.0
  %1444 = vmatpush1.msra.mxu0 0.0
  %1445 = vmatprep.subr.mxu0 0.0
  %1446 = vmatpush1.msra.mxu0 %v190
  %1447 = vmatprep.subr.mxu0 0.0
  %1448 = vmatpush1.msra.mxu0 %v189
  %1449 = vmatprep.subr.mxu0 0.0
  %1450 = vmatpush1.msra.mxu0 %v188
  %1451 = vmatprep.subr.mxu0 0.0
  %1452 = vmatpush1.msra.mxu0 %v187
  %1453 = vmatprep.subr.mxu0 0.0
  %1454 = vmatpush1.msra.mxu0 %v186
  %1455 = vmatprep.subr.mxu0 0.0
  %1456 = vmatpush1.msra.mxu0 %v185
  %1457 = vmatprep.subr.mxu0 0.0
  %1458 = vmatpush1.msra.mxu0 %v184
  %1459 = vmatprep.subr.mxu0 0.0
  %1460 = vmatpush1.msra.mxu0 %v183
  %1461 = vmatprep.subr.mxu0 0.0
  %1462 = vmatpush2.msra.mxu0 0.0
  %1463 = vmatprep.subr.mxu0 0.0
  %1464 = vmatpush2.msra.mxu0 0.0
  %1465 = vmatprep.subr.mxu0 0.0
  %1466 = vmatpush2.msra.mxu0 0.0
  %1467 = vmatprep.subr.mxu0 0.0
  %1468 = vmatpush2.msra.mxu0 0.0
  %1469 = vmatprep.subr.mxu0 0.0
  %1470 = vmatpush2.msra.mxu0 0.0
  %1471 = vmatprep.subr.mxu0 0.0
  %1472 = vmatpush2.msra.mxu0 0.0
  %1473 = vmatprep.subr.mxu0 0.0
  %1474 = vmatpush2.msra.mxu0 0.0
  %1475 = vmatprep.subr.mxu0 0.0
  %1476 = vmatpush2.msra.mxu0 0.0
  %1477 = vmatprep.subr.mxu0 0.0
  %1478 = vmatpush2.msra.mxu0 0.0
  %1479 = vmatprep.subr.mxu0 0.0
  %1480 = vmatpush2.msra.mxu0 0.0
  %1481 = vmatprep.subr.mxu0 0.0
  %1482 = vmatpush2.msra.mxu0 0.0
  %1483 = vmatprep.subr.mxu0 0.0
  %1484 = vmatpush2.msra.mxu0 0.0
  %1485 = vmatprep.subr.mxu0 0.0
  %1486 = vmatpush2.msra.mxu0 0.0
  %1487 = vmatprep.subr.mxu0 0.0
  %1488 = vmatpush2.msra.mxu0 0.0
  %1489 = vmatprep.subr.mxu0 0.0
  %1490 = vmatpush2.msra.mxu0 0.0
  %1491 = vmatprep.subr.mxu0 0.0
  %1492 = vmatpush2.msra.mxu0 0.0
  %1493 = vmatprep.mubr.f32.mxu0 0.0
  %1494 = vmatmul.mubr.f32.gmra.mxu0 %v1424
  %v1495 = vpop.f32.mrf.mxu0
  %v1496 = vadd.f32 0.0, %v1495
  %v1497 = vpop.f32.mrf.mxu0
  %1498 = vmatprep.mubr.f32.mxu0 0.0
  %1499 = vmatmul.mubr.f32.gmra.mxu0 %v1427
  %v1500 = vpop.f32.mrf.mxu0
  %v1501 = vadd.f32 0.0, %v1500
  %v1502 = vpop.f32.mrf.mxu0
  %1503 = vdwg.mxu0
  %v1504 = vadd.f32 %v1243, %v1496
  %v1505 = vadd.f32 %v1244, %v1501
  %v1506 = vlaneseq
  %v1507 = vshrl.u32 %v1506, 7
  %v1508 = vsub.s32 5, %v1507
  %v1509 = vrot.slane %v170, %v1508
  %v1510 = vadd.f32 %v1504, %v1509
  %v1511 = vadd.f32 %v1505, %v1509
  %s1512 = scalar_lea.vmem %s7, 8
  %v1513 = vld [vmem:[%s1512] sm:$0x7f]
  %s1514 = scalar_lea.vmem %s3, 32
  %v1515 = vld [vmem:[%s1514] sm:$0xff]
  %v1516 = vld [vmem:[%s1514 + $0x8] sm:$0xff]
  %v1517 = vld [vmem:[%s1514 + $0x10] sm:$0xff]
  %v1518 = vld [vmem:[%s1514 + $0x18] sm:$0xff]
  %s1519 = scalar_lea.vmem %s4, 32
  %v1520 = vld [vmem:[%s1519] sm:$0xff]
  %v1521 = vld [vmem:[%s1519 + $0x8] sm:$0xff]
  %v1522 = vld [vmem:[%s1519 + $0x10] sm:$0xff]
  %v1523 = vld [vmem:[%s1519 + $0x18] sm:$0xff]
  %s1524 = scalar_lea.vmem %s5, 32
  %v1525 = vld [vmem:[%s1524] sm:$0xff]
  %v1526 = vld [vmem:[%s1524 + $0x8] sm:$0xff]
  %v1527 = vld [vmem:[%s1524 + $0x10] sm:$0xff]
  %v1528 = vld [vmem:[%s1524 + $0x18] sm:$0xff]
  %s1529 = scalar_lea.vmem %s6, 64
  %v1530 = vld [vmem:[%s1529] sm:$0xff]
  %v1531 = vld [vmem:[%s1529 + $0x8] sm:$0xff]
  %v1532 = vld [vmem:[%s1529 + $0x10] sm:$0xff]
  %v1533 = vld [vmem:[%s1529 + $0x18] sm:$0xff]
  %v1534 = vld [vmem:[%s1529 + $0x20] sm:$0xff]
  %v1535 = vld [vmem:[%s1529 + $0x28] sm:$0xff]
  %v1536 = vld [vmem:[%s1529 + $0x30] sm:$0xff]
  %v1537 = vld [vmem:[%s1529 + $0x38] sm:$0xff]
  %v1538 = vsel %vm57, %v1510, 0.0
  %1539 = vadd.xlane.f32.xlu0 %v1538
  %v1540 = vpop.xlane.xlu0 %1539
  %v1541 = vsel %vm57, %v1511, 0.0
  %1542 = vadd.xlane.f32.xlu0 %v1541
  %v1543 = vpop.xlane.xlu0 %1542
  %v1544 = vmul.f32 %v1540, %v197
  %v1545 = vmul.f32 %v1543, %v197
  %v1546 = vsub.f32 %v1510, %v1544
  %v1547 = vsub.f32 %v1511, %v1545
  %v1548 = vmul.f32 %v1546, %v1546
  %v1549 = vmul.f32 %v1547, %v1547
  %v1550 = vsel %vm57, %v1548, 0.0
  %1551 = vadd.xlane.f32.xlu0 %v1550
  %v1552 = vpop.xlane.xlu0 %1551
  %v1553 = vsel %vm57, %v1549, 0.0
  %1554 = vadd.xlane.f32.xlu0 %v1553
  %v1555 = vpop.xlane.xlu0 %1554
  %v1556 = vmul.f32 %v1552, %v197
  %v1557 = vmul.f32 %v1555, %v197
  %v1558 = vadd.f32 %v1556, 1e-05
  %v1559 = vadd.f32 %v1557, 1e-05
  %v1560 = vrsqrt.pop %v1558
  %v1561 = vrsqrt.pop %v1559
  %v1562 = vmul.f32 %v1546, %v1560
  %v1563 = vmul.f32 %v1547, %v1561
  %v1564 = vlaneseq
  %v1565 = vshrl.u32 %v1564, 7
  %v1566 = vsub.s32 0, %v1565
  %v1567 = vrot.slane %v1513, %v1566
  %v1568 = vmul.f32 %v1562, %v1567
  %v1569 = vmul.f32 %v1563, %v1567
  %v1570 = vlaneseq
  %v1571 = vshrl.u32 %v1570, 7
  %v1572 = vsub.s32 1, %v1571
  %v1573 = vrot.slane %v1513, %v1572
  %v1574 = vadd.f32 %v1568, %v1573
  %v1575 = vadd.f32 %v1569, %v1573
  %v1577 = vsel %vm57, %v1574, 0
  %v1580 = vsel %vm57, %v1575, 0
  %1582 = vmatprep.subr.mxu0 0.0
  %1583 = vmatpush1.msra.mxu0 0.0
  %1584 = vmatprep.subr.mxu0 0.0
  %1585 = vmatpush1.msra.mxu0 0.0
  %1586 = vmatprep.subr.mxu0 0.0
  %1587 = vmatpush1.msra.mxu0 0.0
  %1588 = vmatprep.subr.mxu0 0.0
  %1589 = vmatpush1.msra.mxu0 0.0
  %1590 = vmatprep.subr.mxu0 0.0
  %1591 = vmatpush1.msra.mxu0 0.0
  %1592 = vmatprep.subr.mxu0 0.0
  %1593 = vmatpush1.msra.mxu0 0.0
  %1594 = vmatprep.subr.mxu0 0.0
  %1595 = vmatpush1.msra.mxu0 0.0
  %1596 = vmatprep.subr.mxu0 0.0
  %1597 = vmatpush1.msra.mxu0 0.0
  %1598 = vmatprep.subr.mxu0 0.0
  %1599 = vmatpush1.msra.mxu0 0.0
  %1600 = vmatprep.subr.mxu0 0.0
  %1601 = vmatpush1.msra.mxu0 0.0
  %1602 = vmatprep.subr.mxu0 0.0
  %1603 = vmatpush1.msra.mxu0 0.0
  %1604 = vmatprep.subr.mxu0 0.0
  %1605 = vmatpush1.msra.mxu0 0.0
  %1606 = vmatprep.subr.mxu0 0.0
  %1607 = vmatpush1.msra.mxu0 %v1518
  %1608 = vmatprep.subr.mxu0 0.0
  %1609 = vmatpush1.msra.mxu0 %v1517
  %1610 = vmatprep.subr.mxu0 0.0
  %1611 = vmatpush1.msra.mxu0 %v1516
  %1612 = vmatprep.subr.mxu0 0.0
  %1613 = vmatpush1.msra.mxu0 %v1515
  %1614 = vmatprep.subr.mxu0 0.0
  %1615 = vmatpush2.msra.mxu0 0.0
  %1616 = vmatprep.subr.mxu0 0.0
  %1617 = vmatpush2.msra.mxu0 0.0
  %1618 = vmatprep.subr.mxu0 0.0
  %1619 = vmatpush2.msra.mxu0 0.0
  %1620 = vmatprep.subr.mxu0 0.0
  %1621 = vmatpush2.msra.mxu0 0.0
  %1622 = vmatprep.subr.mxu0 0.0
  %1623 = vmatpush2.msra.mxu0 0.0
  %1624 = vmatprep.subr.mxu0 0.0
  %1625 = vmatpush2.msra.mxu0 0.0
  %1626 = vmatprep.subr.mxu0 0.0
  %1627 = vmatpush2.msra.mxu0 0.0
  %1628 = vmatprep.subr.mxu0 0.0
  %1629 = vmatpush2.msra.mxu0 0.0
  %1630 = vmatprep.subr.mxu0 0.0
  %1631 = vmatpush2.msra.mxu0 0.0
  %1632 = vmatprep.subr.mxu0 0.0
  %1633 = vmatpush2.msra.mxu0 0.0
  %1634 = vmatprep.subr.mxu0 0.0
  %1635 = vmatpush2.msra.mxu0 0.0
  %1636 = vmatprep.subr.mxu0 0.0
  %1637 = vmatpush2.msra.mxu0 0.0
  %1638 = vmatprep.subr.mxu0 0.0
  %1639 = vmatpush2.msra.mxu0 0.0
  %1640 = vmatprep.subr.mxu0 0.0
  %1641 = vmatpush2.msra.mxu0 0.0
  %1642 = vmatprep.subr.mxu0 0.0
  %1643 = vmatpush2.msra.mxu0 0.0
  %1644 = vmatprep.subr.mxu0 0.0
  %1645 = vmatpush2.msra.mxu0 0.0
  %1646 = vmatprep.mubr.f32.mxu0 0.0
  %1647 = vmatmul.mubr.f32.gmra.mxu0 %v1577
  %v1648 = vpop.f32.mrf.mxu0
  %v1649 = vadd.f32 0.0, %v1648
  %v1650 = vpop.f32.mrf.mxu0
  %1651 = vmatprep.mubr.f32.mxu0 0.0
  %1652 = vmatmul.mubr.f32.gmra.mxu0 %v1580
  %v1653 = vpop.f32.mrf.mxu0
  %v1654 = vadd.f32 0.0, %v1653
  %v1655 = vpop.f32.mrf.mxu0
  %1656 = vdwg.mxu0
  %1659 = vrot.lane.b32.xlu0 %v1649, 96
  %v1660 = vpop.permute.xlu0 %1659
  %1661 = vrot.lane.b32.xlu0 %v1654, 96
  %v1662 = vpop.permute.xlu0 %1661
  %v1663 = vsel %vm317, %v1649, 0
  %v1665 = vsel %vm317, %v1654, 0
  %v1667 = vsel %vm317, %v1660, 0
  %v1669 = vsel %vm317, %v1662, 0
  %1671 = vmatprep.subr.mxu0 0.0
  %1672 = vmatpush1.xpose.msra.mxu0 0.0
  %1673 = vmatprep.subr.mxu0 0.0
  %1674 = vmatpush1.xpose.msra.mxu0 0.0
  %1675 = vmatprep.subr.mxu0 0.0
  %1676 = vmatpush1.xpose.msra.mxu0 0.0
  %1677 = vmatprep.subr.mxu0 0.0
  %1678 = vmatpush1.xpose.msra.mxu0 0.0
  %1679 = vmatprep.subr.mxu0 0.0
  %1680 = vmatpush1.xpose.msra.mxu0 0.0
  %1681 = vmatprep.subr.mxu0 0.0
  %1682 = vmatpush1.xpose.msra.mxu0 0.0
  %1683 = vmatprep.subr.mxu0 0.0
  %1684 = vmatpush1.xpose.msra.mxu0 0.0
  %1685 = vmatprep.subr.mxu0 0.0
  %1686 = vmatpush1.xpose.msra.mxu0 0.0
  %1687 = vmatprep.subr.mxu0 0.0
  %1688 = vmatpush1.xpose.msra.mxu0 0.0
  %1689 = vmatprep.subr.mxu0 0.0
  %1690 = vmatpush1.xpose.msra.mxu0 0.0
  %1691 = vmatprep.subr.mxu0 0.0
  %1692 = vmatpush1.xpose.msra.mxu0 0.0
  %1693 = vmatprep.subr.mxu0 0.0
  %1694 = vmatpush1.xpose.msra.mxu0 0.0
  %1695 = vmatprep.subr.mxu0 0.0
  %1696 = vmatpush1.xpose.msra.mxu0 0.0
  %1697 = vmatprep.subr.mxu0 0.0
  %1698 = vmatpush1.xpose.msra.mxu0 0.0
  %1699 = vmatprep.subr.mxu0 0.0
  %1700 = vmatpush1.xpose.msra.mxu0 %v1669
  %1701 = vmatprep.subr.mxu0 0.0
  %1702 = vmatpush1.xpose.msra.mxu0 %v1667
  %1703 = vmatprep.subr.mxu0 0.0
  %1704 = vmatpush2.xpose.msra.mxu0 0.0
  %1705 = vmatprep.subr.mxu0 0.0
  %1706 = vmatpush2.xpose.msra.mxu0 0.0
  %1707 = vmatprep.subr.mxu0 0.0
  %1708 = vmatpush2.xpose.msra.mxu0 0.0
  %1709 = vmatprep.subr.mxu0 0.0
  %1710 = vmatpush2.xpose.msra.mxu0 0.0
  %1711 = vmatprep.subr.mxu0 0.0
  %1712 = vmatpush2.xpose.msra.mxu0 0.0
  %1713 = vmatprep.subr.mxu0 0.0
  %1714 = vmatpush2.xpose.msra.mxu0 0.0
  %1715 = vmatprep.subr.mxu0 0.0
  %1716 = vmatpush2.xpose.msra.mxu0 0.0
  %1717 = vmatprep.subr.mxu0 0.0
  %1718 = vmatpush2.xpose.msra.mxu0 0.0
  %1719 = vmatprep.subr.mxu0 0.0
  %1720 = vmatpush2.xpose.msra.mxu0 0.0
  %1721 = vmatprep.subr.mxu0 0.0
  %1722 = vmatpush2.xpose.msra.mxu0 0.0
  %1723 = vmatprep.subr.mxu0 0.0
  %1724 = vmatpush2.xpose.msra.mxu0 0.0
  %1725 = vmatprep.subr.mxu0 0.0
  %1726 = vmatpush2.xpose.msra.mxu0 0.0
  %1727 = vmatprep.subr.mxu0 0.0
  %1728 = vmatpush2.xpose.msra.mxu0 0.0
  %1729 = vmatprep.subr.mxu0 0.0
  %1730 = vmatpush2.xpose.msra.mxu0 0.0
  %1731 = vmatprep.subr.mxu0 0.0
  %1732 = vmatpush2.xpose.msra.mxu0 0.0
  %1733 = vmatprep.subr.mxu0 0.0
  %1734 = vmatpush2.xpose.msra.mxu0 0.0
  %1735 = vmatprep.mubr.f32.mxu0 0.0
  %1736 = vmatmul.mubr.f32.gmra.mxu0 %v1663
  %v1737 = vpop.f32.mrf.mxu0
  %v1738 = vadd.f32 0.0, %v1737
  %v1739 = vpop.f32.mrf.mxu0
  %1740 = vmatprep.mubr.f32.mxu0 0.0
  %1741 = vmatmul.mubr.f32.gmra.mxu0 %v1665
  %v1742 = vpop.f32.mrf.mxu0
  %v1743 = vadd.f32 0.0, %v1742
  %v1744 = vpop.f32.mrf.mxu0
  %1745 = vdwg.mxu0
  %v1746 = vmul.f32 %v1738, 0.35355338
  %v1747 = vmul.f32 %v1743, 0.35355338
  %v1748 = vadd.f32 %v1746, %v168
  %v1749 = vadd.f32 %v1747, %v169
  %v1750 = vsel %vm405, %v1748, -inf
  %1751 = vmax.xlane.f32.xlu0 %v1750
  %v1752 = vpop.xlane.xlu0 %1751
  %v1753 = vsel %vm405, %v1749, -inf
  %1754 = vmax.xlane.f32.xlu0 %v1753
  %v1755 = vpop.xlane.xlu0 %1754
  %v1756 = vsub.f32 %v1748, %v1752
  %v1757 = vsub.f32 %v1749, %v1755
  %v1758 = vmul.f32 %v1756, 1.442695
  %v1759 = vpow.pop %v1758
  %v1760 = vmul.f32 %v1757, 1.442695
  %v1761 = vpow.pop %v1760
  %v1762 = vsel %vm405, %v1759, 0.0
  %1763 = vadd.xlane.f32.xlu0 %v1762
  %v1764 = vpop.xlane.xlu0 %1763
  %v1765 = vsel %vm405, %v1761, 0.0
  %1766 = vadd.xlane.f32.xlu0 %v1765
  %v1767 = vpop.xlane.xlu0 %1766
  %v1768 = vrcp.pop %v1764
  %v1769 = vrcp.pop %v1767
  %v1770 = vmul.f32 %v1759, %v1768
  %v1771 = vmul.f32 %v1761, %v1769
  %1772 = vrot.lane.b32.xlu0 %v1649, 64
  %v1773 = vpop.permute.xlu0 %1772
  %1774 = vrot.lane.b32.xlu0 %v1654, 64
  %v1775 = vpop.permute.xlu0 %1774
  %v1779 = vsel %vm405, %v1770, 0
  %v1782 = vsel %vm405, %v1771, 0
  %1784 = vmatprep.subr.mxu0 0.0
  %1785 = vmatpush1.msra.mxu0 0.0
  %1786 = vmatprep.subr.mxu0 0.0
  %1787 = vmatpush1.msra.mxu0 0.0
  %1788 = vmatprep.subr.mxu0 0.0
  %1789 = vmatpush1.msra.mxu0 0.0
  %1790 = vmatprep.subr.mxu0 0.0
  %1791 = vmatpush1.msra.mxu0 0.0
  %1792 = vmatprep.subr.mxu0 0.0
  %1793 = vmatpush1.msra.mxu0 0.0
  %1794 = vmatprep.subr.mxu0 0.0
  %1795 = vmatpush1.msra.mxu0 0.0
  %1796 = vmatprep.subr.mxu0 0.0
  %1797 = vmatpush1.msra.mxu0 0.0
  %1798 = vmatprep.subr.mxu0 0.0
  %1799 = vmatpush1.msra.mxu0 0.0
  %1800 = vmatprep.subr.mxu0 0.0
  %1801 = vmatpush1.msra.mxu0 0.0
  %1802 = vmatprep.subr.mxu0 0.0
  %1803 = vmatpush1.msra.mxu0 0.0
  %1804 = vmatprep.subr.mxu0 0.0
  %1805 = vmatpush1.msra.mxu0 0.0
  %1806 = vmatprep.subr.mxu0 0.0
  %1807 = vmatpush1.msra.mxu0 0.0
  %1808 = vmatprep.subr.mxu0 0.0
  %1809 = vmatpush1.msra.mxu0 0.0
  %1810 = vmatprep.subr.mxu0 0.0
  %1811 = vmatpush1.msra.mxu0 0.0
  %1812 = vmatprep.subr.mxu0 0.0
  %1813 = vmatpush1.msra.mxu0 %v1775
  %1814 = vmatprep.subr.mxu0 0.0
  %1815 = vmatpush1.msra.mxu0 %v1773
  %1816 = vmatprep.subr.mxu0 0.0
  %1817 = vmatpush2.msra.mxu0 0.0
  %1818 = vmatprep.subr.mxu0 0.0
  %1819 = vmatpush2.msra.mxu0 0.0
  %1820 = vmatprep.subr.mxu0 0.0
  %1821 = vmatpush2.msra.mxu0 0.0
  %1822 = vmatprep.subr.mxu0 0.0
  %1823 = vmatpush2.msra.mxu0 0.0
  %1824 = vmatprep.subr.mxu0 0.0
  %1825 = vmatpush2.msra.mxu0 0.0
  %1826 = vmatprep.subr.mxu0 0.0
  %1827 = vmatpush2.msra.mxu0 0.0
  %1828 = vmatprep.subr.mxu0 0.0
  %1829 = vmatpush2.msra.mxu0 0.0
  %1830 = vmatprep.subr.mxu0 0.0
  %1831 = vmatpush2.msra.mxu0 0.0
  %1832 = vmatprep.subr.mxu0 0.0
  %1833 = vmatpush2.msra.mxu0 0.0
  %1834 = vmatprep.subr.mxu0 0.0
  %1835 = vmatpush2.msra.mxu0 0.0
  %1836 = vmatprep.subr.mxu0 0.0
  %1837 = vmatpush2.msra.mxu0 0.0
  %1838 = vmatprep.subr.mxu0 0.0
  %1839 = vmatpush2.msra.mxu0 0.0
  %1840 = vmatprep.subr.mxu0 0.0
  %1841 = vmatpush2.msra.mxu0 0.0
  %1842 = vmatprep.subr.mxu0 0.0
  %1843 = vmatpush2.msra.mxu0 0.0
  %1844 = vmatprep.subr.mxu0 0.0
  %1845 = vmatpush2.msra.mxu0 0.0
  %1846 = vmatprep.subr.mxu0 0.0
  %1847 = vmatpush2.msra.mxu0 0.0
  %1848 = vmatprep.mubr.f32.mxu0 0.0
  %1849 = vmatmul.mubr.f32.gmra.mxu0 %v1779
  %v1850 = vpop.f32.mrf.mxu0
  %v1851 = vadd.f32 0.0, %v1850
  %v1852 = vpop.f32.mrf.mxu0
  %1853 = vmatprep.mubr.f32.mxu0 0.0
  %1854 = vmatmul.mubr.f32.gmra.mxu0 %v1782
  %v1855 = vpop.f32.mrf.mxu0
  %v1856 = vadd.f32 0.0, %v1855
  %v1857 = vpop.f32.mrf.mxu0
  %1858 = vdwg.mxu0
  %1859 = vrot.lane.b32.xlu0 %v1649, 120
  %v1860 = vpop.permute.xlu0 %1859
  %1861 = vrot.lane.b32.xlu0 %v1654, 120
  %v1862 = vpop.permute.xlu0 %1861
  %1863 = vrot.lane.b32.xlu0 %v1649, 88
  %v1864 = vpop.permute.xlu0 %1863
  %1865 = vrot.lane.b32.xlu0 %v1654, 88
  %v1866 = vpop.permute.xlu0 %1865
  %v1867 = vsel %vm317, %v1860, 0
  %v1869 = vsel %vm317, %v1862, 0
  %v1871 = vsel %vm317, %v1864, 0
  %v1873 = vsel %vm317, %v1866, 0
  %1875 = vmatprep.subr.mxu0 0.0
  %1876 = vmatpush1.xpose.msra.mxu0 0.0
  %1877 = vmatprep.subr.mxu0 0.0
  %1878 = vmatpush1.xpose.msra.mxu0 0.0
  %1879 = vmatprep.subr.mxu0 0.0
  %1880 = vmatpush1.xpose.msra.mxu0 0.0
  %1881 = vmatprep.subr.mxu0 0.0
  %1882 = vmatpush1.xpose.msra.mxu0 0.0
  %1883 = vmatprep.subr.mxu0 0.0
  %1884 = vmatpush1.xpose.msra.mxu0 0.0
  %1885 = vmatprep.subr.mxu0 0.0
  %1886 = vmatpush1.xpose.msra.mxu0 0.0
  %1887 = vmatprep.subr.mxu0 0.0
  %1888 = vmatpush1.xpose.msra.mxu0 0.0
  %1889 = vmatprep.subr.mxu0 0.0
  %1890 = vmatpush1.xpose.msra.mxu0 0.0
  %1891 = vmatprep.subr.mxu0 0.0
  %1892 = vmatpush1.xpose.msra.mxu0 0.0
  %1893 = vmatprep.subr.mxu0 0.0
  %1894 = vmatpush1.xpose.msra.mxu0 0.0
  %1895 = vmatprep.subr.mxu0 0.0
  %1896 = vmatpush1.xpose.msra.mxu0 0.0
  %1897 = vmatprep.subr.mxu0 0.0
  %1898 = vmatpush1.xpose.msra.mxu0 0.0
  %1899 = vmatprep.subr.mxu0 0.0
  %1900 = vmatpush1.xpose.msra.mxu0 0.0
  %1901 = vmatprep.subr.mxu0 0.0
  %1902 = vmatpush1.xpose.msra.mxu0 0.0
  %1903 = vmatprep.subr.mxu0 0.0
  %1904 = vmatpush1.xpose.msra.mxu0 %v1873
  %1905 = vmatprep.subr.mxu0 0.0
  %1906 = vmatpush1.xpose.msra.mxu0 %v1871
  %1907 = vmatprep.subr.mxu0 0.0
  %1908 = vmatpush2.xpose.msra.mxu0 0.0
  %1909 = vmatprep.subr.mxu0 0.0
  %1910 = vmatpush2.xpose.msra.mxu0 0.0
  %1911 = vmatprep.subr.mxu0 0.0
  %1912 = vmatpush2.xpose.msra.mxu0 0.0
  %1913 = vmatprep.subr.mxu0 0.0
  %1914 = vmatpush2.xpose.msra.mxu0 0.0
  %1915 = vmatprep.subr.mxu0 0.0
  %1916 = vmatpush2.xpose.msra.mxu0 0.0
  %1917 = vmatprep.subr.mxu0 0.0
  %1918 = vmatpush2.xpose.msra.mxu0 0.0
  %1919 = vmatprep.subr.mxu0 0.0
  %1920 = vmatpush2.xpose.msra.mxu0 0.0
  %1921 = vmatprep.subr.mxu0 0.0
  %1922 = vmatpush2.xpose.msra.mxu0 0.0
  %1923 = vmatprep.subr.mxu0 0.0
  %1924 = vmatpush2.xpose.msra.mxu0 0.0
  %1925 = vmatprep.subr.mxu0 0.0
  %1926 = vmatpush2.xpose.msra.mxu0 0.0
  %1927 = vmatprep.subr.mxu0 0.0
  %1928 = vmatpush2.xpose.msra.mxu0 0.0
  %1929 = vmatprep.subr.mxu0 0.0
  %1930 = vmatpush2.xpose.msra.mxu0 0.0
  %1931 = vmatprep.subr.mxu0 0.0
  %1932 = vmatpush2.xpose.msra.mxu0 0.0
  %1933 = vmatprep.subr.mxu0 0.0
  %1934 = vmatpush2.xpose.msra.mxu0 0.0
  %1935 = vmatprep.subr.mxu0 0.0
  %1936 = vmatpush2.xpose.msra.mxu0 0.0
  %1937 = vmatprep.subr.mxu0 0.0
  %1938 = vmatpush2.xpose.msra.mxu0 0.0
  %1939 = vmatprep.mubr.f32.mxu0 0.0
  %1940 = vmatmul.mubr.f32.gmra.mxu0 %v1867
  %v1941 = vpop.f32.mrf.mxu0
  %v1942 = vadd.f32 0.0, %v1941
  %v1943 = vpop.f32.mrf.mxu0
  %1944 = vmatprep.mubr.f32.mxu0 0.0
  %1945 = vmatmul.mubr.f32.gmra.mxu0 %v1869
  %v1946 = vpop.f32.mrf.mxu0
  %v1947 = vadd.f32 0.0, %v1946
  %v1948 = vpop.f32.mrf.mxu0
  %1949 = vdwg.mxu0
  %v1950 = vmul.f32 %v1942, 0.35355338
  %v1951 = vmul.f32 %v1947, 0.35355338
  %v1952 = vadd.f32 %v1950, %v168
  %v1953 = vadd.f32 %v1951, %v169
  %v1954 = vsel %vm405, %v1952, -inf
  %1955 = vmax.xlane.f32.xlu0 %v1954
  %v1956 = vpop.xlane.xlu0 %1955
  %v1957 = vsel %vm405, %v1953, -inf
  %1958 = vmax.xlane.f32.xlu0 %v1957
  %v1959 = vpop.xlane.xlu0 %1958
  %v1960 = vsub.f32 %v1952, %v1956
  %v1961 = vsub.f32 %v1953, %v1959
  %v1962 = vmul.f32 %v1960, 1.442695
  %v1963 = vpow.pop %v1962
  %v1964 = vmul.f32 %v1961, 1.442695
  %v1965 = vpow.pop %v1964
  %v1966 = vsel %vm405, %v1963, 0.0
  %1967 = vadd.xlane.f32.xlu0 %v1966
  %v1968 = vpop.xlane.xlu0 %1967
  %v1969 = vsel %vm405, %v1965, 0.0
  %1970 = vadd.xlane.f32.xlu0 %v1969
  %v1971 = vpop.xlane.xlu0 %1970
  %v1972 = vrcp.pop %v1968
  %v1973 = vrcp.pop %v1971
  %v1974 = vmul.f32 %v1963, %v1972
  %v1975 = vmul.f32 %v1965, %v1973
  %1976 = vrot.lane.b32.xlu0 %v1649, 56
  %v1977 = vpop.permute.xlu0 %1976
  %1978 = vrot.lane.b32.xlu0 %v1654, 56
  %v1979 = vpop.permute.xlu0 %1978
  %v1983 = vsel %vm405, %v1974, 0
  %v1986 = vsel %vm405, %v1975, 0
  %1988 = vmatprep.subr.mxu0 0.0
  %1989 = vmatpush1.msra.mxu0 0.0
  %1990 = vmatprep.subr.mxu0 0.0
  %1991 = vmatpush1.msra.mxu0 0.0
  %1992 = vmatprep.subr.mxu0 0.0
  %1993 = vmatpush1.msra.mxu0 0.0
  %1994 = vmatprep.subr.mxu0 0.0
  %1995 = vmatpush1.msra.mxu0 0.0
  %1996 = vmatprep.subr.mxu0 0.0
  %1997 = vmatpush1.msra.mxu0 0.0
  %1998 = vmatprep.subr.mxu0 0.0
  %1999 = vmatpush1.msra.mxu0 0.0
  %2000 = vmatprep.subr.mxu0 0.0
  %2001 = vmatpush1.msra.mxu0 0.0
  %2002 = vmatprep.subr.mxu0 0.0
  %2003 = vmatpush1.msra.mxu0 0.0
  %2004 = vmatprep.subr.mxu0 0.0
  %2005 = vmatpush1.msra.mxu0 0.0
  %2006 = vmatprep.subr.mxu0 0.0
  %2007 = vmatpush1.msra.mxu0 0.0
  %2008 = vmatprep.subr.mxu0 0.0
  %2009 = vmatpush1.msra.mxu0 0.0
  %2010 = vmatprep.subr.mxu0 0.0
  %2011 = vmatpush1.msra.mxu0 0.0
  %2012 = vmatprep.subr.mxu0 0.0
  %2013 = vmatpush1.msra.mxu0 0.0
  %2014 = vmatprep.subr.mxu0 0.0
  %2015 = vmatpush1.msra.mxu0 0.0
  %2016 = vmatprep.subr.mxu0 0.0
  %2017 = vmatpush1.msra.mxu0 %v1979
  %2018 = vmatprep.subr.mxu0 0.0
  %2019 = vmatpush1.msra.mxu0 %v1977
  %2020 = vmatprep.subr.mxu0 0.0
  %2021 = vmatpush2.msra.mxu0 0.0
  %2022 = vmatprep.subr.mxu0 0.0
  %2023 = vmatpush2.msra.mxu0 0.0
  %2024 = vmatprep.subr.mxu0 0.0
  %2025 = vmatpush2.msra.mxu0 0.0
  %2026 = vmatprep.subr.mxu0 0.0
  %2027 = vmatpush2.msra.mxu0 0.0
  %2028 = vmatprep.subr.mxu0 0.0
  %2029 = vmatpush2.msra.mxu0 0.0
  %2030 = vmatprep.subr.mxu0 0.0
  %2031 = vmatpush2.msra.mxu0 0.0
  %2032 = vmatprep.subr.mxu0 0.0
  %2033 = vmatpush2.msra.mxu0 0.0
  %2034 = vmatprep.subr.mxu0 0.0
  %2035 = vmatpush2.msra.mxu0 0.0
  %2036 = vmatprep.subr.mxu0 0.0
  %2037 = vmatpush2.msra.mxu0 0.0
  %2038 = vmatprep.subr.mxu0 0.0
  %2039 = vmatpush2.msra.mxu0 0.0
  %2040 = vmatprep.subr.mxu0 0.0
  %2041 = vmatpush2.msra.mxu0 0.0
  %2042 = vmatprep.subr.mxu0 0.0
  %2043 = vmatpush2.msra.mxu0 0.0
  %2044 = vmatprep.subr.mxu0 0.0
  %2045 = vmatpush2.msra.mxu0 0.0
  %2046 = vmatprep.subr.mxu0 0.0
  %2047 = vmatpush2.msra.mxu0 0.0
  %2048 = vmatprep.subr.mxu0 0.0
  %2049 = vmatpush2.msra.mxu0 0.0
  %2050 = vmatprep.subr.mxu0 0.0
  %2051 = vmatpush2.msra.mxu0 0.0
  %2052 = vmatprep.mubr.f32.mxu0 0.0
  %2053 = vmatmul.mubr.f32.gmra.mxu0 %v1983
  %v2054 = vpop.f32.mrf.mxu0
  %v2055 = vadd.f32 0.0, %v2054
  %v2056 = vpop.f32.mrf.mxu0
  %2057 = vmatprep.mubr.f32.mxu0 0.0
  %2058 = vmatmul.mubr.f32.gmra.mxu0 %v1986
  %v2059 = vpop.f32.mrf.mxu0
  %v2060 = vadd.f32 0.0, %v2059
  %v2061 = vpop.f32.mrf.mxu0
  %2062 = vdwg.mxu0
  %2063 = vrot.lane.b32.xlu0 %v1649, 112
  %v2064 = vpop.permute.xlu0 %2063
  %2065 = vrot.lane.b32.xlu0 %v1654, 112
  %v2066 = vpop.permute.xlu0 %2065
  %2067 = vrot.lane.b32.xlu0 %v1649, 80
  %v2068 = vpop.permute.xlu0 %2067
  %2069 = vrot.lane.b32.xlu0 %v1654, 80
  %v2070 = vpop.permute.xlu0 %2069
  %v2071 = vsel %vm317, %v2064, 0
  %v2073 = vsel %vm317, %v2066, 0
  %v2075 = vsel %vm317, %v2068, 0
  %v2077 = vsel %vm317, %v2070, 0
  %2079 = vmatprep.subr.mxu0 0.0
  %2080 = vmatpush1.xpose.msra.mxu0 0.0
  %2081 = vmatprep.subr.mxu0 0.0
  %2082 = vmatpush1.xpose.msra.mxu0 0.0
  %2083 = vmatprep.subr.mxu0 0.0
  %2084 = vmatpush1.xpose.msra.mxu0 0.0
  %2085 = vmatprep.subr.mxu0 0.0
  %2086 = vmatpush1.xpose.msra.mxu0 0.0
  %2087 = vmatprep.subr.mxu0 0.0
  %2088 = vmatpush1.xpose.msra.mxu0 0.0
  %2089 = vmatprep.subr.mxu0 0.0
  %2090 = vmatpush1.xpose.msra.mxu0 0.0
  %2091 = vmatprep.subr.mxu0 0.0
  %2092 = vmatpush1.xpose.msra.mxu0 0.0
  %2093 = vmatprep.subr.mxu0 0.0
  %2094 = vmatpush1.xpose.msra.mxu0 0.0
  %2095 = vmatprep.subr.mxu0 0.0
  %2096 = vmatpush1.xpose.msra.mxu0 0.0
  %2097 = vmatprep.subr.mxu0 0.0
  %2098 = vmatpush1.xpose.msra.mxu0 0.0
  %2099 = vmatprep.subr.mxu0 0.0
  %2100 = vmatpush1.xpose.msra.mxu0 0.0
  %2101 = vmatprep.subr.mxu0 0.0
  %2102 = vmatpush1.xpose.msra.mxu0 0.0
  %2103 = vmatprep.subr.mxu0 0.0
  %2104 = vmatpush1.xpose.msra.mxu0 0.0
  %2105 = vmatprep.subr.mxu0 0.0
  %2106 = vmatpush1.xpose.msra.mxu0 0.0
  %2107 = vmatprep.subr.mxu0 0.0
  %2108 = vmatpush1.xpose.msra.mxu0 %v2077
  %2109 = vmatprep.subr.mxu0 0.0
  %2110 = vmatpush1.xpose.msra.mxu0 %v2075
  %2111 = vmatprep.subr.mxu0 0.0
  %2112 = vmatpush2.xpose.msra.mxu0 0.0
  %2113 = vmatprep.subr.mxu0 0.0
  %2114 = vmatpush2.xpose.msra.mxu0 0.0
  %2115 = vmatprep.subr.mxu0 0.0
  %2116 = vmatpush2.xpose.msra.mxu0 0.0
  %2117 = vmatprep.subr.mxu0 0.0
  %2118 = vmatpush2.xpose.msra.mxu0 0.0
  %2119 = vmatprep.subr.mxu0 0.0
  %2120 = vmatpush2.xpose.msra.mxu0 0.0
  %2121 = vmatprep.subr.mxu0 0.0
  %2122 = vmatpush2.xpose.msra.mxu0 0.0
  %2123 = vmatprep.subr.mxu0 0.0
  %2124 = vmatpush2.xpose.msra.mxu0 0.0
  %2125 = vmatprep.subr.mxu0 0.0
  %2126 = vmatpush2.xpose.msra.mxu0 0.0
  %2127 = vmatprep.subr.mxu0 0.0
  %2128 = vmatpush2.xpose.msra.mxu0 0.0
  %2129 = vmatprep.subr.mxu0 0.0
  %2130 = vmatpush2.xpose.msra.mxu0 0.0
  %2131 = vmatprep.subr.mxu0 0.0
  %2132 = vmatpush2.xpose.msra.mxu0 0.0
  %2133 = vmatprep.subr.mxu0 0.0
  %2134 = vmatpush2.xpose.msra.mxu0 0.0
  %2135 = vmatprep.subr.mxu0 0.0
  %2136 = vmatpush2.xpose.msra.mxu0 0.0
  %2137 = vmatprep.subr.mxu0 0.0
  %2138 = vmatpush2.xpose.msra.mxu0 0.0
  %2139 = vmatprep.subr.mxu0 0.0
  %2140 = vmatpush2.xpose.msra.mxu0 0.0
  %2141 = vmatprep.subr.mxu0 0.0
  %2142 = vmatpush2.xpose.msra.mxu0 0.0
  %2143 = vmatprep.mubr.f32.mxu0 0.0
  %2144 = vmatmul.mubr.f32.gmra.mxu0 %v2071
  %v2145 = vpop.f32.mrf.mxu0
  %v2146 = vadd.f32 0.0, %v2145
  %v2147 = vpop.f32.mrf.mxu0
  %2148 = vmatprep.mubr.f32.mxu0 0.0
  %2149 = vmatmul.mubr.f32.gmra.mxu0 %v2073
  %v2150 = vpop.f32.mrf.mxu0
  %v2151 = vadd.f32 0.0, %v2150
  %v2152 = vpop.f32.mrf.mxu0
  %2153 = vdwg.mxu0
  %v2154 = vmul.f32 %v2146, 0.35355338
  %v2155 = vmul.f32 %v2151, 0.35355338
  %v2156 = vadd.f32 %v2154, %v168
  %v2157 = vadd.f32 %v2155, %v169
  %v2158 = vsel %vm405, %v2156, -inf
  %2159 = vmax.xlane.f32.xlu0 %v2158
  %v2160 = vpop.xlane.xlu0 %2159
  %v2161 = vsel %vm405, %v2157, -inf
  %2162 = vmax.xlane.f32.xlu0 %v2161
  %v2163 = vpop.xlane.xlu0 %2162
  %v2164 = vsub.f32 %v2156, %v2160
  %v2165 = vsub.f32 %v2157, %v2163
  %v2166 = vmul.f32 %v2164, 1.442695
  %v2167 = vpow.pop %v2166
  %v2168 = vmul.f32 %v2165, 1.442695
  %v2169 = vpow.pop %v2168
  %v2170 = vsel %vm405, %v2167, 0.0
  %2171 = vadd.xlane.f32.xlu0 %v2170
  %v2172 = vpop.xlane.xlu0 %2171
  %v2173 = vsel %vm405, %v2169, 0.0
  %2174 = vadd.xlane.f32.xlu0 %v2173
  %v2175 = vpop.xlane.xlu0 %2174
  %v2176 = vrcp.pop %v2172
  %v2177 = vrcp.pop %v2175
  %v2178 = vmul.f32 %v2167, %v2176
  %v2179 = vmul.f32 %v2169, %v2177
  %2180 = vrot.lane.b32.xlu0 %v1649, 48
  %v2181 = vpop.permute.xlu0 %2180
  %2182 = vrot.lane.b32.xlu0 %v1654, 48
  %v2183 = vpop.permute.xlu0 %2182
  %v2187 = vsel %vm405, %v2178, 0
  %v2190 = vsel %vm405, %v2179, 0
  %2192 = vmatprep.subr.mxu0 0.0
  %2193 = vmatpush1.msra.mxu0 0.0
  %2194 = vmatprep.subr.mxu0 0.0
  %2195 = vmatpush1.msra.mxu0 0.0
  %2196 = vmatprep.subr.mxu0 0.0
  %2197 = vmatpush1.msra.mxu0 0.0
  %2198 = vmatprep.subr.mxu0 0.0
  %2199 = vmatpush1.msra.mxu0 0.0
  %2200 = vmatprep.subr.mxu0 0.0
  %2201 = vmatpush1.msra.mxu0 0.0
  %2202 = vmatprep.subr.mxu0 0.0
  %2203 = vmatpush1.msra.mxu0 0.0
  %2204 = vmatprep.subr.mxu0 0.0
  %2205 = vmatpush1.msra.mxu0 0.0
  %2206 = vmatprep.subr.mxu0 0.0
  %2207 = vmatpush1.msra.mxu0 0.0
  %2208 = vmatprep.subr.mxu0 0.0
  %2209 = vmatpush1.msra.mxu0 0.0
  %2210 = vmatprep.subr.mxu0 0.0
  %2211 = vmatpush1.msra.mxu0 0.0
  %2212 = vmatprep.subr.mxu0 0.0
  %2213 = vmatpush1.msra.mxu0 0.0
  %2214 = vmatprep.subr.mxu0 0.0
  %2215 = vmatpush1.msra.mxu0 0.0
  %2216 = vmatprep.subr.mxu0 0.0
  %2217 = vmatpush1.msra.mxu0 0.0
  %2218 = vmatprep.subr.mxu0 0.0
  %2219 = vmatpush1.msra.mxu0 0.0
  %2220 = vmatprep.subr.mxu0 0.0
  %2221 = vmatpush1.msra.mxu0 %v2183
  %2222 = vmatprep.subr.mxu0 0.0
  %2223 = vmatpush1.msra.mxu0 %v2181
  %2224 = vmatprep.subr.mxu0 0.0
  %2225 = vmatpush2.msra.mxu0 0.0
  %2226 = vmatprep.subr.mxu0 0.0
  %2227 = vmatpush2.msra.mxu0 0.0
  %2228 = vmatprep.subr.mxu0 0.0
  %2229 = vmatpush2.msra.mxu0 0.0
  %2230 = vmatprep.subr.mxu0 0.0
  %2231 = vmatpush2.msra.mxu0 0.0
  %2232 = vmatprep.subr.mxu0 0.0
  %2233 = vmatpush2.msra.mxu0 0.0
  %2234 = vmatprep.subr.mxu0 0.0
  %2235 = vmatpush2.msra.mxu0 0.0
  %2236 = vmatprep.subr.mxu0 0.0
  %2237 = vmatpush2.msra.mxu0 0.0
  %2238 = vmatprep.subr.mxu0 0.0
  %2239 = vmatpush2.msra.mxu0 0.0
  %2240 = vmatprep.subr.mxu0 0.0
  %2241 = vmatpush2.msra.mxu0 0.0
  %2242 = vmatprep.subr.mxu0 0.0
  %2243 = vmatpush2.msra.mxu0 0.0
  %2244 = vmatprep.subr.mxu0 0.0
  %2245 = vmatpush2.msra.mxu0 0.0
  %2246 = vmatprep.subr.mxu0 0.0
  %2247 = vmatpush2.msra.mxu0 0.0
  %2248 = vmatprep.subr.mxu0 0.0
  %2249 = vmatpush2.msra.mxu0 0.0
  %2250 = vmatprep.subr.mxu0 0.0
  %2251 = vmatpush2.msra.mxu0 0.0
  %2252 = vmatprep.subr.mxu0 0.0
  %2253 = vmatpush2.msra.mxu0 0.0
  %2254 = vmatprep.subr.mxu0 0.0
  %2255 = vmatpush2.msra.mxu0 0.0
  %2256 = vmatprep.mubr.f32.mxu0 0.0
  %2257 = vmatmul.mubr.f32.gmra.mxu0 %v2187
  %v2258 = vpop.f32.mrf.mxu0
  %v2259 = vadd.f32 0.0, %v2258
  %v2260 = vpop.f32.mrf.mxu0
  %2261 = vmatprep.mubr.f32.mxu0 0.0
  %2262 = vmatmul.mubr.f32.gmra.mxu0 %v2190
  %v2263 = vpop.f32.mrf.mxu0
  %v2264 = vadd.f32 0.0, %v2263
  %v2265 = vpop.f32.mrf.mxu0
  %2266 = vdwg.mxu0
  %2267 = vrot.lane.b32.xlu0 %v1649, 104
  %v2268 = vpop.permute.xlu0 %2267
  %2269 = vrot.lane.b32.xlu0 %v1654, 104
  %v2270 = vpop.permute.xlu0 %2269
  %2271 = vrot.lane.b32.xlu0 %v1649, 72
  %v2272 = vpop.permute.xlu0 %2271
  %2273 = vrot.lane.b32.xlu0 %v1654, 72
  %v2274 = vpop.permute.xlu0 %2273
  %v2275 = vsel %vm317, %v2268, 0
  %v2277 = vsel %vm317, %v2270, 0
  %v2279 = vsel %vm317, %v2272, 0
  %v2281 = vsel %vm317, %v2274, 0
  %2283 = vmatprep.subr.mxu0 0.0
  %2284 = vmatpush1.xpose.msra.mxu0 0.0
  %2285 = vmatprep.subr.mxu0 0.0
  %2286 = vmatpush1.xpose.msra.mxu0 0.0
  %2287 = vmatprep.subr.mxu0 0.0
  %2288 = vmatpush1.xpose.msra.mxu0 0.0
  %2289 = vmatprep.subr.mxu0 0.0
  %2290 = vmatpush1.xpose.msra.mxu0 0.0
  %2291 = vmatprep.subr.mxu0 0.0
  %2292 = vmatpush1.xpose.msra.mxu0 0.0
  %2293 = vmatprep.subr.mxu0 0.0
  %2294 = vmatpush1.xpose.msra.mxu0 0.0
  %2295 = vmatprep.subr.mxu0 0.0
  %2296 = vmatpush1.xpose.msra.mxu0 0.0
  %2297 = vmatprep.subr.mxu0 0.0
  %2298 = vmatpush1.xpose.msra.mxu0 0.0
  %2299 = vmatprep.subr.mxu0 0.0
  %2300 = vmatpush1.xpose.msra.mxu0 0.0
  %2301 = vmatprep.subr.mxu0 0.0
  %2302 = vmatpush1.xpose.msra.mxu0 0.0
  %2303 = vmatprep.subr.mxu0 0.0
  %2304 = vmatpush1.xpose.msra.mxu0 0.0
  %2305 = vmatprep.subr.mxu0 0.0
  %2306 = vmatpush1.xpose.msra.mxu0 0.0
  %2307 = vmatprep.subr.mxu0 0.0
  %2308 = vmatpush1.xpose.msra.mxu0 0.0
  %2309 = vmatprep.subr.mxu0 0.0
  %2310 = vmatpush1.xpose.msra.mxu0 0.0
  %2311 = vmatprep.subr.mxu0 0.0
  %2312 = vmatpush1.xpose.msra.mxu0 %v2281
  %2313 = vmatprep.subr.mxu0 0.0
  %2314 = vmatpush1.xpose.msra.mxu0 %v2279
  %2315 = vmatprep.subr.mxu0 0.0
  %2316 = vmatpush2.xpose.msra.mxu0 0.0
  %2317 = vmatprep.subr.mxu0 0.0
  %2318 = vmatpush2.xpose.msra.mxu0 0.0
  %2319 = vmatprep.subr.mxu0 0.0
  %2320 = vmatpush2.xpose.msra.mxu0 0.0
  %2321 = vmatprep.subr.mxu0 0.0
  %2322 = vmatpush2.xpose.msra.mxu0 0.0
  %2323 = vmatprep.subr.mxu0 0.0
  %2324 = vmatpush2.xpose.msra.mxu0 0.0
  %2325 = vmatprep.subr.mxu0 0.0
  %2326 = vmatpush2.xpose.msra.mxu0 0.0
  %2327 = vmatprep.subr.mxu0 0.0
  %2328 = vmatpush2.xpose.msra.mxu0 0.0
  %2329 = vmatprep.subr.mxu0 0.0
  %2330 = vmatpush2.xpose.msra.mxu0 0.0
  %2331 = vmatprep.subr.mxu0 0.0
  %2332 = vmatpush2.xpose.msra.mxu0 0.0
  %2333 = vmatprep.subr.mxu0 0.0
  %2334 = vmatpush2.xpose.msra.mxu0 0.0
  %2335 = vmatprep.subr.mxu0 0.0
  %2336 = vmatpush2.xpose.msra.mxu0 0.0
  %2337 = vmatprep.subr.mxu0 0.0
  %2338 = vmatpush2.xpose.msra.mxu0 0.0
  %2339 = vmatprep.subr.mxu0 0.0
  %2340 = vmatpush2.xpose.msra.mxu0 0.0
  %2341 = vmatprep.subr.mxu0 0.0
  %2342 = vmatpush2.xpose.msra.mxu0 0.0
  %2343 = vmatprep.subr.mxu0 0.0
  %2344 = vmatpush2.xpose.msra.mxu0 0.0
  %2345 = vmatprep.subr.mxu0 0.0
  %2346 = vmatpush2.xpose.msra.mxu0 0.0
  %2347 = vmatprep.mubr.f32.mxu0 0.0
  %2348 = vmatmul.mubr.f32.gmra.mxu0 %v2275
  %v2349 = vpop.f32.mrf.mxu0
  %v2350 = vadd.f32 0.0, %v2349
  %v2351 = vpop.f32.mrf.mxu0
  %2352 = vmatprep.mubr.f32.mxu0 0.0
  %2353 = vmatmul.mubr.f32.gmra.mxu0 %v2277
  %v2354 = vpop.f32.mrf.mxu0
  %v2355 = vadd.f32 0.0, %v2354
  %v2356 = vpop.f32.mrf.mxu0
  %2357 = vdwg.mxu0
  %v2358 = vmul.f32 %v2350, 0.35355338
  %v2359 = vmul.f32 %v2355, 0.35355338
  %v2360 = vadd.f32 %v2358, %v168
  %v2361 = vadd.f32 %v2359, %v169
  %v2362 = vsel %vm405, %v2360, -inf
  %2363 = vmax.xlane.f32.xlu0 %v2362
  %v2364 = vpop.xlane.xlu0 %2363
  %v2365 = vsel %vm405, %v2361, -inf
  %2366 = vmax.xlane.f32.xlu0 %v2365
  %v2367 = vpop.xlane.xlu0 %2366
  %v2368 = vsub.f32 %v2360, %v2364
  %v2369 = vsub.f32 %v2361, %v2367
  %v2370 = vmul.f32 %v2368, 1.442695
  %v2371 = vpow.pop %v2370
  %v2372 = vmul.f32 %v2369, 1.442695
  %v2373 = vpow.pop %v2372
  %v2374 = vsel %vm405, %v2371, 0.0
  %2375 = vadd.xlane.f32.xlu0 %v2374
  %v2376 = vpop.xlane.xlu0 %2375
  %v2377 = vsel %vm405, %v2373, 0.0
  %2378 = vadd.xlane.f32.xlu0 %v2377
  %v2379 = vpop.xlane.xlu0 %2378
  %v2380 = vrcp.pop %v2376
  %v2381 = vrcp.pop %v2379
  %v2382 = vmul.f32 %v2371, %v2380
  %v2383 = vmul.f32 %v2373, %v2381
  %2384 = vrot.lane.b32.xlu0 %v1649, 40
  %v2385 = vpop.permute.xlu0 %2384
  %2386 = vrot.lane.b32.xlu0 %v1654, 40
  %v2387 = vpop.permute.xlu0 %2386
  %v2391 = vsel %vm405, %v2382, 0
  %v2394 = vsel %vm405, %v2383, 0
  %2396 = vmatprep.subr.mxu0 0.0
  %2397 = vmatpush1.msra.mxu0 0.0
  %2398 = vmatprep.subr.mxu0 0.0
  %2399 = vmatpush1.msra.mxu0 0.0
  %2400 = vmatprep.subr.mxu0 0.0
  %2401 = vmatpush1.msra.mxu0 0.0
  %2402 = vmatprep.subr.mxu0 0.0
  %2403 = vmatpush1.msra.mxu0 0.0
  %2404 = vmatprep.subr.mxu0 0.0
  %2405 = vmatpush1.msra.mxu0 0.0
  %2406 = vmatprep.subr.mxu0 0.0
  %2407 = vmatpush1.msra.mxu0 0.0
  %2408 = vmatprep.subr.mxu0 0.0
  %2409 = vmatpush1.msra.mxu0 0.0
  %2410 = vmatprep.subr.mxu0 0.0
  %2411 = vmatpush1.msra.mxu0 0.0
  %2412 = vmatprep.subr.mxu0 0.0
  %2413 = vmatpush1.msra.mxu0 0.0
  %2414 = vmatprep.subr.mxu0 0.0
  %2415 = vmatpush1.msra.mxu0 0.0
  %2416 = vmatprep.subr.mxu0 0.0
  %2417 = vmatpush1.msra.mxu0 0.0
  %2418 = vmatprep.subr.mxu0 0.0
  %2419 = vmatpush1.msra.mxu0 0.0
  %2420 = vmatprep.subr.mxu0 0.0
  %2421 = vmatpush1.msra.mxu0 0.0
  %2422 = vmatprep.subr.mxu0 0.0
  %2423 = vmatpush1.msra.mxu0 0.0
  %2424 = vmatprep.subr.mxu0 0.0
  %2425 = vmatpush1.msra.mxu0 %v2387
  %2426 = vmatprep.subr.mxu0 0.0
  %2427 = vmatpush1.msra.mxu0 %v2385
  %2428 = vmatprep.subr.mxu0 0.0
  %2429 = vmatpush2.msra.mxu0 0.0
  %2430 = vmatprep.subr.mxu0 0.0
  %2431 = vmatpush2.msra.mxu0 0.0
  %2432 = vmatprep.subr.mxu0 0.0
  %2433 = vmatpush2.msra.mxu0 0.0
  %2434 = vmatprep.subr.mxu0 0.0
  %2435 = vmatpush2.msra.mxu0 0.0
  %2436 = vmatprep.subr.mxu0 0.0
  %2437 = vmatpush2.msra.mxu0 0.0
  %2438 = vmatprep.subr.mxu0 0.0
  %2439 = vmatpush2.msra.mxu0 0.0
  %2440 = vmatprep.subr.mxu0 0.0
  %2441 = vmatpush2.msra.mxu0 0.0
  %2442 = vmatprep.subr.mxu0 0.0
  %2443 = vmatpush2.msra.mxu0 0.0
  %2444 = vmatprep.subr.mxu0 0.0
  %2445 = vmatpush2.msra.mxu0 0.0
  %2446 = vmatprep.subr.mxu0 0.0
  %2447 = vmatpush2.msra.mxu0 0.0
  %2448 = vmatprep.subr.mxu0 0.0
  %2449 = vmatpush2.msra.mxu0 0.0
  %2450 = vmatprep.subr.mxu0 0.0
  %2451 = vmatpush2.msra.mxu0 0.0
  %2452 = vmatprep.subr.mxu0 0.0
  %2453 = vmatpush2.msra.mxu0 0.0
  %2454 = vmatprep.subr.mxu0 0.0
  %2455 = vmatpush2.msra.mxu0 0.0
  %2456 = vmatprep.subr.mxu0 0.0
  %2457 = vmatpush2.msra.mxu0 0.0
  %2458 = vmatprep.subr.mxu0 0.0
  %2459 = vmatpush2.msra.mxu0 0.0
  %2460 = vmatprep.mubr.f32.mxu0 0.0
  %2461 = vmatmul.mubr.f32.gmra.mxu0 %v2391
  %v2462 = vpop.f32.mrf.mxu0
  %v2463 = vadd.f32 0.0, %v2462
  %v2464 = vpop.f32.mrf.mxu0
  %2465 = vmatprep.mubr.f32.mxu0 0.0
  %2466 = vmatmul.mubr.f32.gmra.mxu0 %v2394
  %v2467 = vpop.f32.mrf.mxu0
  %v2468 = vadd.f32 0.0, %v2467
  %v2469 = vpop.f32.mrf.mxu0
  %2470 = vdwg.mxu0
  %2473 = vrot.lane.b32.xlu0 %v2055, 8
  %v2474 = vpop.permute.xlu0 %2473
  %2475 = vrot.lane.b32.xlu0 %v2060, 8
  %v2476 = vpop.permute.xlu0 %2475
  %2481 = vrot.lane.b32.xlu0 %v2259, 16
  %v2482 = vpop.permute.xlu0 %2481
  %2483 = vrot.lane.b32.xlu0 %v2264, 16
  %v2484 = vpop.permute.xlu0 %2483
  %2489 = vrot.lane.b32.xlu0 %v2463, 24
  %v2490 = vpop.permute.xlu0 %2489
  %2491 = vrot.lane.b32.xlu0 %v2468, 24
  %v2492 = vpop.permute.xlu0 %2491
  %v2495 = vsel %vm317, %v1851, %v2474
  %v2496 = vsel %vm317, %v1856, %v2476
  %v2497 = vsel %vm405, %v2495, %v2482
  %v2498 = vsel %vm405, %v2496, %v2484
  %v2499 = vsel %vm1155, %v2497, %v2490
  %v2500 = vsel %vm1155, %v2498, %v2492
  %v2501 = vlaneseq
  %v2502 = vshrl.u32 %v2501, 7
  %v2503 = vsub.s32 2, %v2502
  %v2504 = vrot.slane %v1513, %v2503
  %v2506 = vsel %vm57, %v2499, 0
  %v2509 = vsel %vm57, %v2500, 0
  %2511 = vmatprep.subr.mxu0 0.0
  %2512 = vmatpush1.msra.mxu0 0.0
  %2513 = vmatprep.subr.mxu0 0.0
  %2514 = vmatpush1.msra.mxu0 0.0
  %2515 = vmatprep.subr.mxu0 0.0
  %2516 = vmatpush1.msra.mxu0 0.0
  %2517 = vmatprep.subr.mxu0 0.0
  %2518 = vmatpush1.msra.mxu0 0.0
  %2519 = vmatprep.subr.mxu0 0.0
  %2520 = vmatpush1.msra.mxu0 0.0
  %2521 = vmatprep.subr.mxu0 0.0
  %2522 = vmatpush1.msra.mxu0 0.0
  %2523 = vmatprep.subr.mxu0 0.0
  %2524 = vmatpush1.msra.mxu0 0.0
  %2525 = vmatprep.subr.mxu0 0.0
  %2526 = vmatpush1.msra.mxu0 0.0
  %2527 = vmatprep.subr.mxu0 0.0
  %2528 = vmatpush1.msra.mxu0 0.0
  %2529 = vmatprep.subr.mxu0 0.0
  %2530 = vmatpush1.msra.mxu0 0.0
  %2531 = vmatprep.subr.mxu0 0.0
  %2532 = vmatpush1.msra.mxu0 0.0
  %2533 = vmatprep.subr.mxu0 0.0
  %2534 = vmatpush1.msra.mxu0 0.0
  %2535 = vmatprep.subr.mxu0 0.0
  %2536 = vmatpush1.msra.mxu0 %v1523
  %2537 = vmatprep.subr.mxu0 0.0
  %2538 = vmatpush1.msra.mxu0 %v1522
  %2539 = vmatprep.subr.mxu0 0.0
  %2540 = vmatpush1.msra.mxu0 %v1521
  %2541 = vmatprep.subr.mxu0 0.0
  %2542 = vmatpush1.msra.mxu0 %v1520
  %2543 = vmatprep.subr.mxu0 0.0
  %2544 = vmatpush2.msra.mxu0 0.0
  %2545 = vmatprep.subr.mxu0 0.0
  %2546 = vmatpush2.msra.mxu0 0.0
  %2547 = vmatprep.subr.mxu0 0.0
  %2548 = vmatpush2.msra.mxu0 0.0
  %2549 = vmatprep.subr.mxu0 0.0
  %2550 = vmatpush2.msra.mxu0 0.0
  %2551 = vmatprep.subr.mxu0 0.0
  %2552 = vmatpush2.msra.mxu0 0.0
  %2553 = vmatprep.subr.mxu0 0.0
  %2554 = vmatpush2.msra.mxu0 0.0
  %2555 = vmatprep.subr.mxu0 0.0
  %2556 = vmatpush2.msra.mxu0 0.0
  %2557 = vmatprep.subr.mxu0 0.0
  %2558 = vmatpush2.msra.mxu0 0.0
  %2559 = vmatprep.subr.mxu0 0.0
  %2560 = vmatpush2.msra.mxu0 0.0
  %2561 = vmatprep.subr.mxu0 0.0
  %2562 = vmatpush2.msra.mxu0 0.0
  %2563 = vmatprep.subr.mxu0 0.0
  %2564 = vmatpush2.msra.mxu0 0.0
  %2565 = vmatprep.subr.mxu0 0.0
  %2566 = vmatpush2.msra.mxu0 0.0
  %2567 = vmatprep.subr.mxu0 0.0
  %2568 = vmatpush2.msra.mxu0 0.0
  %2569 = vmatprep.subr.mxu0 0.0
  %2570 = vmatpush2.msra.mxu0 0.0
  %2571 = vmatprep.subr.mxu0 0.0
  %2572 = vmatpush2.msra.mxu0 0.0
  %2573 = vmatprep.subr.mxu0 0.0
  %2574 = vmatpush2.msra.mxu0 0.0
  %2575 = vmatprep.mubr.f32.mxu0 0.0
  %2576 = vmatmul.mubr.f32.gmra.mxu0 %v2506
  %v2577 = vpop.f32.mrf.mxu0
  %v2578 = vadd.f32 %v2504, %v2577
  %v2579 = vpop.f32.mrf.mxu0
  %2580 = vmatprep.mubr.f32.mxu0 0.0
  %2581 = vmatmul.mubr.f32.gmra.mxu0 %v2509
  %v2582 = vpop.f32.mrf.mxu0
  %v2583 = vadd.f32 %v2504, %v2582
  %v2584 = vpop.f32.mrf.mxu0
  %2585 = vdwg.mxu0
  %v2586 = vadd.f32 %v1510, %v2578
  %v2587 = vadd.f32 %v1511, %v2583
  %v2588 = vsel %vm57, %v2586, 0.0
  %2589 = vadd.xlane.f32.xlu0 %v2588
  %v2590 = vpop.xlane.xlu0 %2589
  %v2591 = vsel %vm57, %v2587, 0.0
  %2592 = vadd.xlane.f32.xlu0 %v2591
  %v2593 = vpop.xlane.xlu0 %2592
  %v2594 = vmul.f32 %v2590, %v197
  %v2595 = vmul.f32 %v2593, %v197
  %v2596 = vsub.f32 %v2586, %v2594
  %v2597 = vsub.f32 %v2587, %v2595
  %v2598 = vmul.f32 %v2596, %v2596
  %v2599 = vmul.f32 %v2597, %v2597
  %v2600 = vsel %vm57, %v2598, 0.0
  %2601 = vadd.xlane.f32.xlu0 %v2600
  %v2602 = vpop.xlane.xlu0 %2601
  %v2603 = vsel %vm57, %v2599, 0.0
  %2604 = vadd.xlane.f32.xlu0 %v2603
  %v2605 = vpop.xlane.xlu0 %2604
  %v2606 = vmul.f32 %v2602, %v197
  %v2607 = vmul.f32 %v2605, %v197
  %v2608 = vadd.f32 %v2606, 1e-05
  %v2609 = vadd.f32 %v2607, 1e-05
  %v2610 = vrsqrt.pop %v2608
  %v2611 = vrsqrt.pop %v2609
  %v2612 = vmul.f32 %v2596, %v2610
  %v2613 = vmul.f32 %v2597, %v2611
  %v2614 = vlaneseq
  %v2615 = vshrl.u32 %v2614, 7
  %v2616 = vsub.s32 3, %v2615
  %v2617 = vrot.slane %v1513, %v2616
  %v2618 = vmul.f32 %v2612, %v2617
  %v2619 = vmul.f32 %v2613, %v2617
  %v2620 = vlaneseq
  %v2621 = vshrl.u32 %v2620, 7
  %v2622 = vsub.s32 4, %v2621
  %v2623 = vrot.slane %v1513, %v2622
  %v2624 = vadd.f32 %v2618, %v2623
  %v2625 = vadd.f32 %v2619, %v2623
  %v2626 = vlaneseq
  %v2627 = vshrl.u32 %v2626, 7
  %v2628 = vsub.s32 6, %v2627
  %v2629 = vrot.slane %v1513, %v2628
  %v2631 = vsel %vm57, %v2624, 0
  %v2634 = vsel %vm57, %v2625, 0
  %2636 = vmatprep.subr.mxu0 0.0
  %2637 = vmatpush1.msra.mxu0 0.0
  %2638 = vmatprep.subr.mxu0 0.0
  %2639 = vmatpush1.msra.mxu0 0.0
  %2640 = vmatprep.subr.mxu0 0.0
  %2641 = vmatpush1.msra.mxu0 0.0
  %2642 = vmatprep.subr.mxu0 0.0
  %2643 = vmatpush1.msra.mxu0 0.0
  %2644 = vmatprep.subr.mxu0 0.0
  %2645 = vmatpush1.msra.mxu0 0.0
  %2646 = vmatprep.subr.mxu0 0.0
  %2647 = vmatpush1.msra.mxu0 0.0
  %2648 = vmatprep.subr.mxu0 0.0
  %2649 = vmatpush1.msra.mxu0 0.0
  %2650 = vmatprep.subr.mxu0 0.0
  %2651 = vmatpush1.msra.mxu0 0.0
  %2652 = vmatprep.subr.mxu0 0.0
  %2653 = vmatpush1.msra.mxu0 0.0
  %2654 = vmatprep.subr.mxu0 0.0
  %2655 = vmatpush1.msra.mxu0 0.0
  %2656 = vmatprep.subr.mxu0 0.0
  %2657 = vmatpush1.msra.mxu0 0.0
  %2658 = vmatprep.subr.mxu0 0.0
  %2659 = vmatpush1.msra.mxu0 0.0
  %2660 = vmatprep.subr.mxu0 0.0
  %2661 = vmatpush1.msra.mxu0 %v1528
  %2662 = vmatprep.subr.mxu0 0.0
  %2663 = vmatpush1.msra.mxu0 %v1527
  %2664 = vmatprep.subr.mxu0 0.0
  %2665 = vmatpush1.msra.mxu0 %v1526
  %2666 = vmatprep.subr.mxu0 0.0
  %2667 = vmatpush1.msra.mxu0 %v1525
  %2668 = vmatprep.subr.mxu0 0.0
  %2669 = vmatpush2.msra.mxu0 0.0
  %2670 = vmatprep.subr.mxu0 0.0
  %2671 = vmatpush2.msra.mxu0 0.0
  %2672 = vmatprep.subr.mxu0 0.0
  %2673 = vmatpush2.msra.mxu0 0.0
  %2674 = vmatprep.subr.mxu0 0.0
  %2675 = vmatpush2.msra.mxu0 0.0
  %2676 = vmatprep.subr.mxu0 0.0
  %2677 = vmatpush2.msra.mxu0 0.0
  %2678 = vmatprep.subr.mxu0 0.0
  %2679 = vmatpush2.msra.mxu0 0.0
  %2680 = vmatprep.subr.mxu0 0.0
  %2681 = vmatpush2.msra.mxu0 0.0
  %2682 = vmatprep.subr.mxu0 0.0
  %2683 = vmatpush2.msra.mxu0 0.0
  %2684 = vmatprep.subr.mxu0 0.0
  %2685 = vmatpush2.msra.mxu0 0.0
  %2686 = vmatprep.subr.mxu0 0.0
  %2687 = vmatpush2.msra.mxu0 0.0
  %2688 = vmatprep.subr.mxu0 0.0
  %2689 = vmatpush2.msra.mxu0 0.0
  %2690 = vmatprep.subr.mxu0 0.0
  %2691 = vmatpush2.msra.mxu0 0.0
  %2692 = vmatprep.subr.mxu0 0.0
  %2693 = vmatpush2.msra.mxu0 0.0
  %2694 = vmatprep.subr.mxu0 0.0
  %2695 = vmatpush2.msra.mxu0 0.0
  %2696 = vmatprep.subr.mxu0 0.0
  %2697 = vmatpush2.msra.mxu0 0.0
  %2698 = vmatprep.subr.mxu0 0.0
  %2699 = vmatpush2.msra.mxu0 0.0
  %2700 = vmatprep.mubr.f32.mxu0 0.0
  %2701 = vmatmul.mubr.f32.gmra.mxu0 %v2631
  %v2702 = vpop.f32.mrf.mxu0
  %v2703 = vadd.f32 %v2629, %v2702
  %v2704 = vpop.f32.mrf.mxu0
  %2705 = vmatprep.mubr.f32.mxu0 0.0
  %2706 = vmatmul.mubr.f32.gmra.mxu0 %v2634
  %v2707 = vpop.f32.mrf.mxu0
  %v2708 = vadd.f32 %v2629, %v2707
  %v2709 = vpop.f32.mrf.mxu0
  %2710 = vdwg.mxu0
  %v2711 = vmul.f32 %v2703, 0.5
  %v2712 = vmul.f32 %v2708, 0.5
  %v2713 = vmul.f32 %v2703, 0.70710677
  %v2714 = vmul.f32 %v2708, 0.70710677
  %vm2715 = vcmp.ge.f32.partialorder %v2713, 0.0
  %vm2716 = vcmp.ge.f32.partialorder %v2714, 0.0
  %v2717 = vsel %vm2715, 1.0, -1.0
  %v2718 = vsel %vm2716, 1.0, -1.0
  %v2719 = vand.u32 2147483647, %v2713
  %v2720 = vand.u32 2147483647, %v2714
  %v2721 = vmul.f32 %v2719, 0.3275911
  %v2722 = vmul.f32 %v2720, 0.3275911
  %v2723 = vadd.f32 %v2721, 1.0
  %v2724 = vadd.f32 %v2722, 1.0
  %v2725 = vrcp.pop %v2723
  %v2726 = vmul.f32 1.0, %v2725
  %v2727 = vrcp.pop %v2724
  %v2728 = vmul.f32 1.0, %v2727
  %v2729 = vmul.f32 %v2726, 1.0614054
  %v2730 = vmul.f32 %v2728, 1.0614054
  %v2731 = vadd.f32 %v2729, -1.4531521
  %v2732 = vadd.f32 %v2730, -1.4531521
  %v2733 = vmul.f32 %v2731, %v2726
  %v2734 = vmul.f32 %v2732, %v2728
  %v2735 = vadd.f32 %v2733, 1.4214138
  %v2736 = vadd.f32 %v2734, 1.4214138
  %v2737 = vmul.f32 %v2735, %v2726
  %v2738 = vmul.f32 %v2736, %v2728
  %v2739 = vadd.f32 %v2737, -0.28449672
  %v2740 = vadd.f32 %v2738, -0.28449672
  %v2741 = vmul.f32 %v2739, %v2726
  %v2742 = vmul.f32 %v2740, %v2728
  %v2743 = vadd.f32 %v2741, 0.2548296
  %v2744 = vadd.f32 %v2742, 0.2548296
  %v2745 = vmul.f32 %v2743, %v2726
  %v2746 = vmul.f32 %v2744, %v2728
  %v2747 = vsub.f32 0.0, %v2719
  %v2748 = vsub.f32 0.0, %v2720
  %v2749 = vmul.f32 %v2747, %v2719
  %v2750 = vmul.f32 %v2748, %v2720
  %v2751 = vmul.f32 %v2749, 1.442695
  %v2752 = vpow.pop %v2751
  %v2753 = vmul.f32 %v2750, 1.442695
  %v2754 = vpow.pop %v2753
  %v2755 = vmul.f32 %v2745, %v2752
  %v2756 = vmul.f32 %v2746, %v2754
  %v2757 = vsub.f32 1.0, %v2755
  %v2758 = vsub.f32 1.0, %v2756
  %v2759 = vmul.f32 %v2717, %v2757
  %v2760 = vmul.f32 %v2718, %v2758
  %v2761 = vadd.f32 %v2759, 1.0
  %v2762 = vadd.f32 %v2760, 1.0
  %v2763 = vmul.f32 %v2711, %v2761
  %v2764 = vmul.f32 %v2712, %v2762
  %v2766 = vsel %vm1422, %v2763, 0
  %v2769 = vsel %vm1422, %v2764, 0
  %2771 = vmatprep.subr.mxu0 0.0
  %2772 = vmatpush1.msra.mxu0 0.0
  %2773 = vmatprep.subr.mxu0 0.0
  %2774 = vmatpush1.msra.mxu0 0.0
  %2775 = vmatprep.subr.mxu0 0.0
  %2776 = vmatpush1.msra.mxu0 0.0
  %2777 = vmatprep.subr.mxu0 0.0
  %2778 = vmatpush1.msra.mxu0 0.0
  %2779 = vmatprep.subr.mxu0 0.0
  %2780 = vmatpush1.msra.mxu0 0.0
  %2781 = vmatprep.subr.mxu0 0.0
  %2782 = vmatpush1.msra.mxu0 0.0
  %2783 = vmatprep.subr.mxu0 0.0
  %2784 = vmatpush1.msra.mxu0 0.0
  %2785 = vmatprep.subr.mxu0 0.0
  %2786 = vmatpush1.msra.mxu0 0.0
  %2787 = vmatprep.subr.mxu0 0.0
  %2788 = vmatpush1.msra.mxu0 %v1537
  %2789 = vmatprep.subr.mxu0 0.0
  %2790 = vmatpush1.msra.mxu0 %v1536
  %2791 = vmatprep.subr.mxu0 0.0
  %2792 = vmatpush1.msra.mxu0 %v1535
  %2793 = vmatprep.subr.mxu0 0.0
  %2794 = vmatpush1.msra.mxu0 %v1534
  %2795 = vmatprep.subr.mxu0 0.0
  %2796 = vmatpush1.msra.mxu0 %v1533
  %2797 = vmatprep.subr.mxu0 0.0
  %2798 = vmatpush1.msra.mxu0 %v1532
  %2799 = vmatprep.subr.mxu0 0.0
  %2800 = vmatpush1.msra.mxu0 %v1531
  %2801 = vmatprep.subr.mxu0 0.0
  %2802 = vmatpush1.msra.mxu0 %v1530
  %2803 = vmatprep.subr.mxu0 0.0
  %2804 = vmatpush2.msra.mxu0 0.0
  %2805 = vmatprep.subr.mxu0 0.0
  %2806 = vmatpush2.msra.mxu0 0.0
  %2807 = vmatprep.subr.mxu0 0.0
  %2808 = vmatpush2.msra.mxu0 0.0
  %2809 = vmatprep.subr.mxu0 0.0
  %2810 = vmatpush2.msra.mxu0 0.0
  %2811 = vmatprep.subr.mxu0 0.0
  %2812 = vmatpush2.msra.mxu0 0.0
  %2813 = vmatprep.subr.mxu0 0.0
  %2814 = vmatpush2.msra.mxu0 0.0
  %2815 = vmatprep.subr.mxu0 0.0
  %2816 = vmatpush2.msra.mxu0 0.0
  %2817 = vmatprep.subr.mxu0 0.0
  %2818 = vmatpush2.msra.mxu0 0.0
  %2819 = vmatprep.subr.mxu0 0.0
  %2820 = vmatpush2.msra.mxu0 0.0
  %2821 = vmatprep.subr.mxu0 0.0
  %2822 = vmatpush2.msra.mxu0 0.0
  %2823 = vmatprep.subr.mxu0 0.0
  %2824 = vmatpush2.msra.mxu0 0.0
  %2825 = vmatprep.subr.mxu0 0.0
  %2826 = vmatpush2.msra.mxu0 0.0
  %2827 = vmatprep.subr.mxu0 0.0
  %2828 = vmatpush2.msra.mxu0 0.0
  %2829 = vmatprep.subr.mxu0 0.0
  %2830 = vmatpush2.msra.mxu0 0.0
  %2831 = vmatprep.subr.mxu0 0.0
  %2832 = vmatpush2.msra.mxu0 0.0
  %2833 = vmatprep.subr.mxu0 0.0
  %2834 = vmatpush2.msra.mxu0 0.0
  %2835 = vmatprep.mubr.f32.mxu0 0.0
  %2836 = vmatmul.mubr.f32.gmra.mxu0 %v2766
  %v2837 = vpop.f32.mrf.mxu0
  %v2838 = vadd.f32 0.0, %v2837
  %v2839 = vpop.f32.mrf.mxu0
  %2840 = vmatprep.mubr.f32.mxu0 0.0
  %2841 = vmatmul.mubr.f32.gmra.mxu0 %v2769
  %v2842 = vpop.f32.mrf.mxu0
  %v2843 = vadd.f32 0.0, %v2842
  %v2844 = vpop.f32.mrf.mxu0
  %2845 = vdwg.mxu0
  %v2846 = vadd.f32 %v2586, %v2838
  %v2847 = vadd.f32 %v2587, %v2843
  %v2848 = vlaneseq
  %v2849 = vshrl.u32 %v2848, 7
  %v2850 = vsub.s32 5, %v2849
  %v2851 = vrot.slane %v1513, %v2850
  %v2852 = vadd.f32 %v2846, %v2851
  %v2853 = vadd.f32 %v2847, %v2851
  %v2854 = vsel %vm57, %v2852, 0.0
  %2855 = vadd.xlane.f32.xlu0 %v2854
  %v2856 = vpop.xlane.xlu0 %2855
  %v2857 = vsel %vm57, %v2853, 0.0
  %2858 = vadd.xlane.f32.xlu0 %v2857
  %v2859 = vpop.xlane.xlu0 %2858
  %v2860 = vmul.f32 %v2856, %v197
  %v2861 = vmul.f32 %v2859, %v197
  %v2862 = vsub.f32 %v2852, %v2860
  %v2863 = vsub.f32 %v2853, %v2861
  %v2864 = vmul.f32 %v2862, %v2862
  %v2865 = vmul.f32 %v2863, %v2863
  %v2866 = vsel %vm57, %v2864, 0.0
  %2867 = vadd.xlane.f32.xlu0 %v2866
  %v2868 = vpop.xlane.xlu0 %2867
  %v2869 = vsel %vm57, %v2865, 0.0
  %2870 = vadd.xlane.f32.xlu0 %v2869
  %v2871 = vpop.xlane.xlu0 %2870
  %v2872 = vmul.f32 %v2868, %v197
  %v2873 = vmul.f32 %v2871, %v197
  %v2874 = vadd.f32 %v2872, 1e-05
  %v2875 = vadd.f32 %v2873, 1e-05
  %v2876 = vrsqrt.pop %v2874
  %v2877 = vrsqrt.pop %v2875
  %v2878 = vmul.f32 %v2862, %v2876
  %v2879 = vmul.f32 %v2863, %v2877
  %v2880 = vlaneseq
  %v2881 = vshrl.u32 %v2880, 7
  %v2882 = vsub.s32 0, %v2881
  %v2883 = vrot.slane %v42, %v2882
  %v2884 = vmul.f32 %v2878, %v2883
  %v2885 = vmul.f32 %v2879, %v2883
  %v2886 = vlaneseq
  %v2887 = vshrl.u32 %v2886, 7
  %v2888 = vsub.s32 1, %v2887
  %v2889 = vrot.slane %v42, %v2888
  %v2890 = vadd.f32 %v2884, %v2889
  %v2891 = vadd.f32 %v2885, %v2889
  %v2892 = vld [vmem:[%s8] sm:$0xff]
  %v2893 = vld [vmem:[%s8 + $0x8] sm:$0xff]
  %v2894 = vld [vmem:[%s8 + $0x10] sm:$0xff]
  %v2895 = vld [vmem:[%s8 + $0x18] sm:$0xff]
  %v2896 = vlaneseq
  %v2897 = vshrl.u32 %v2896, 7
  %v2898 = vsub.s32 2, %v2897
  %v2899 = vrot.slane %v42, %v2898
  %v2901 = vsel %vm57, %v2890, 0
  %v2904 = vsel %vm57, %v2891, 0
  %2906 = vmatprep.subr.mxu0 0.0
  %2907 = vmatpush1.msra.mxu0 0.0
  %2908 = vmatprep.subr.mxu0 0.0
  %2909 = vmatpush1.msra.mxu0 0.0
  %2910 = vmatprep.subr.mxu0 0.0
  %2911 = vmatpush1.msra.mxu0 0.0
  %2912 = vmatprep.subr.mxu0 0.0
  %2913 = vmatpush1.msra.mxu0 0.0
  %2914 = vmatprep.subr.mxu0 0.0
  %2915 = vmatpush1.msra.mxu0 0.0
  %2916 = vmatprep.subr.mxu0 0.0
  %2917 = vmatpush1.msra.mxu0 0.0
  %2918 = vmatprep.subr.mxu0 0.0
  %2919 = vmatpush1.msra.mxu0 0.0
  %2920 = vmatprep.subr.mxu0 0.0
  %2921 = vmatpush1.msra.mxu0 0.0
  %2922 = vmatprep.subr.mxu0 0.0
  %2923 = vmatpush1.msra.mxu0 0.0
  %2924 = vmatprep.subr.mxu0 0.0
  %2925 = vmatpush1.msra.mxu0 0.0
  %2926 = vmatprep.subr.mxu0 0.0
  %2927 = vmatpush1.msra.mxu0 0.0
  %2928 = vmatprep.subr.mxu0 0.0
  %2929 = vmatpush1.msra.mxu0 0.0
  %2930 = vmatprep.subr.mxu0 0.0
  %2931 = vmatpush1.msra.mxu0 %v2895
  %2932 = vmatprep.subr.mxu0 0.0
  %2933 = vmatpush1.msra.mxu0 %v2894
  %2934 = vmatprep.subr.mxu0 0.0
  %2935 = vmatpush1.msra.mxu0 %v2893
  %2936 = vmatprep.subr.mxu0 0.0
  %2937 = vmatpush1.msra.mxu0 %v2892
  %2938 = vmatprep.subr.mxu0 0.0
  %2939 = vmatpush2.msra.mxu0 0.0
  %2940 = vmatprep.subr.mxu0 0.0
  %2941 = vmatpush2.msra.mxu0 0.0
  %2942 = vmatprep.subr.mxu0 0.0
  %2943 = vmatpush2.msra.mxu0 0.0
  %2944 = vmatprep.subr.mxu0 0.0
  %2945 = vmatpush2.msra.mxu0 0.0
  %2946 = vmatprep.subr.mxu0 0.0
  %2947 = vmatpush2.msra.mxu0 0.0
  %2948 = vmatprep.subr.mxu0 0.0
  %2949 = vmatpush2.msra.mxu0 0.0
  %2950 = vmatprep.subr.mxu0 0.0
  %2951 = vmatpush2.msra.mxu0 0.0
  %2952 = vmatprep.subr.mxu0 0.0
  %2953 = vmatpush2.msra.mxu0 0.0
  %2954 = vmatprep.subr.mxu0 0.0
  %2955 = vmatpush2.msra.mxu0 0.0
  %2956 = vmatprep.subr.mxu0 0.0
  %2957 = vmatpush2.msra.mxu0 0.0
  %2958 = vmatprep.subr.mxu0 0.0
  %2959 = vmatpush2.msra.mxu0 0.0
  %2960 = vmatprep.subr.mxu0 0.0
  %2961 = vmatpush2.msra.mxu0 0.0
  %2962 = vmatprep.subr.mxu0 0.0
  %2963 = vmatpush2.msra.mxu0 0.0
  %2964 = vmatprep.subr.mxu0 0.0
  %2965 = vmatpush2.msra.mxu0 0.0
  %2966 = vmatprep.subr.mxu0 0.0
  %2967 = vmatpush2.msra.mxu0 0.0
  %2968 = vmatprep.subr.mxu0 0.0
  %2969 = vmatpush2.msra.mxu0 0.0
  %2970 = vmatprep.mubr.f32.mxu0 0.0
  %2971 = vmatmul.mubr.f32.gmra.mxu0 %v2901
  %v2972 = vpop.f32.mrf.mxu0
  %v2973 = vadd.f32 %v2899, %v2972
  %v2974 = vpop.f32.mrf.mxu0
  %2975 = vmatprep.mubr.f32.mxu0 0.0
  %2976 = vmatmul.mubr.f32.gmra.mxu0 %v2904
  %v2977 = vpop.f32.mrf.mxu0
  %v2978 = vadd.f32 %v2899, %v2977
  %v2979 = vpop.f32.mrf.mxu0
  %2980 = vdwg.mxu0
  %v2981 = vld [vmem:[%s10] sm:$0xff]
  %v2982 = vld [vmem:[%s10 + $0x8] sm:$0xff]
  %v2983 = vld [vmem:[%s10 + $0x10] sm:$0x1]
  %v2984 = vlaneseq
  %v2985 = vshrl.u32 %v2984, 7
  %v2986 = vsub.s32 0, %v2985
  %v2987 = vrot.slane %v2983, %v2986
  %v2988 = vadd.f32 %v2981, %v2987
  %v2989 = vadd.f32 %v2982, %v2987
  %s2990 = sld [smem:[#allocation3]]
  %v2992 = vrot.slane %v2983, 7
  %v2994 = vsub.f32 %v2973, %v2992
  %v2995 = vstv %s2990
  %vm2996 = vcmp.eq.s32.totalorder %v138, %v2995
  %vm2997 = vcmp.eq.s32.totalorder %v139, %v2995
  %v2998 = vlaneseq
  %v2999 = vshrl.u32 %v2998, 7
  %v3000 = vsub.s32 1, %v2999
  %v3001 = vrot.slane %v2994, %v3000
  %v3002 = vadd.f32 %v2988, %v3001
  %v3003 = vadd.f32 %v2989, %v3001
  %v3004 = vsel %vm2996, 1, 0
  %v3005 = vsel %vm2997, 1, 0
  %vm3006 = vcmp.eq.s32.totalorder %v3004, 1
  %vm3007 = vcmp.eq.s32.totalorder %v3005, 1
  %v3008 = vsel %vm3006, %v3002, %v2988
  %v3009 = vsel %vm3007, %v3003, %v2989
  %s3010 = sld [smem:[#allocation3 + $0x1]]
  %v3011 = vrot.slane %v2983, 6
  %v3013 = vsub.f32 %v2973, %v3011
  %v3014 = vstv %s3010
  %vm3015 = vcmp.eq.s32.totalorder %v138, %v3014
  %vm3016 = vcmp.eq.s32.totalorder %v139, %v3014
  %v3017 = vlaneseq
  %v3018 = vshrl.u32 %v3017, 7
  %v3019 = vsub.s32 2, %v3018
  %v3020 = vrot.slane %v3013, %v3019
  %v3021 = vadd.f32 %v3008, %v3020
  %v3022 = vadd.f32 %v3009, %v3020
  %v3023 = vsel %vm3015, 1, 0
  %v3024 = vsel %vm3016, 1, 0
  %vm3025 = vcmp.eq.s32.totalorder %v3023, 1
  %vm3026 = vcmp.eq.s32.totalorder %v3024, 1
  %v3027 = vsel %vm3025, %v3021, %v3008
  %v3028 = vsel %vm3026, %v3022, %v3009
  %s3029 = sld [smem:[#allocation3 + $0x2]]
  %v3030 = vrot.slane %v2983, 5
  %v3032 = vsub.f32 %v2973, %v3030
  %v3033 = vstv %s3029
  %vm3034 = vcmp.eq.s32.totalorder %v138, %v3033
  %vm3035 = vcmp.eq.s32.totalorder %v139, %v3033
  %v3036 = vlaneseq
  %v3037 = vshrl.u32 %v3036, 7
  %v3038 = vsub.s32 3, %v3037
  %v3039 = vrot.slane %v3032, %v3038
  %v3040 = vadd.f32 %v3027, %v3039
  %v3041 = vadd.f32 %v3028, %v3039
  %v3042 = vsel %vm3034, 1, 0
  %v3043 = vsel %vm3035, 1, 0
  %vm3044 = vcmp.eq.s32.totalorder %v3042, 1
  %vm3045 = vcmp.eq.s32.totalorder %v3043, 1
  %v3046 = vsel %vm3044, %v3040, %v3027
  %v3047 = vsel %vm3045, %v3041, %v3028
  %s3048 = sld [smem:[#allocation3 + $0x3]]
  %v3049 = vrot.slane %v2983, 4
  %v3051 = vsub.f32 %v2973, %v3049
  %v3052 = vstv %s3048
  %vm3053 = vcmp.eq.s32.totalorder %v138, %v3052
  %vm3054 = vcmp.eq.s32.totalorder %v139, %v3052
  %v3055 = vlaneseq
  %v3056 = vshrl.u32 %v3055, 7
  %v3057 = vsub.s32 4, %v3056
  %v3058 = vrot.slane %v3051, %v3057
  %v3059 = vadd.f32 %v3046, %v3058
  %v3060 = vadd.f32 %v3047, %v3058
  %v3061 = vsel %vm3053, 1, 0
  %v3062 = vsel %vm3054, 1, 0
  %vm3063 = vcmp.eq.s32.totalorder %v3061, 1
  %vm3064 = vcmp.eq.s32.totalorder %v3062, 1
  %v3065 = vsel %vm3063, %v3059, %v3046
  %v3066 = vsel %vm3064, %v3060, %v3047
  %s3067 = sld [smem:[#allocation3 + $0x80]]
  %v3068 = vsub.f32 %v2978, %v2992
  %v3069 = vstv %s3067
  %vm3070 = vcmp.eq.s32.totalorder %v138, %v3069
  %vm3071 = vcmp.eq.s32.totalorder %v139, %v3069
  %v3072 = vlaneseq
  %v3073 = vshrl.u32 %v3072, 7
  %v3074 = vsub.s32 1, %v3073
  %v3075 = vrot.slane %v3068, %v3074
  %v3076 = vadd.f32 %v2988, %v3075
  %v3077 = vadd.f32 %v2989, %v3075
  %v3078 = vsel %vm3070, 1, 0
  %v3079 = vsel %vm3071, 1, 0
  %vm3080 = vcmp.eq.s32.totalorder %v3078, 1
  %vm3081 = vcmp.eq.s32.totalorder %v3079, 1
  %v3082 = vsel %vm3080, %v3076, %v2988
  %v3083 = vsel %vm3081, %v3077, %v2989
  %s3084 = sld [smem:[#allocation3 + $0x81]]
  %v3085 = vsub.f32 %v2978, %v3011
  %v3086 = vstv %s3084
  %vm3087 = vcmp.eq.s32.totalorder %v138, %v3086
  %vm3088 = vcmp.eq.s32.totalorder %v139, %v3086
  %v3089 = vlaneseq
  %v3090 = vshrl.u32 %v3089, 7
  %v3091 = vsub.s32 2, %v3090
  %v3092 = vrot.slane %v3085, %v3091
  %v3093 = vadd.f32 %v3082, %v3092
  %v3094 = vadd.f32 %v3083, %v3092
  %v3095 = vsel %vm3087, 1, 0
  %v3096 = vsel %vm3088, 1, 0
  %vm3097 = vcmp.eq.s32.totalorder %v3095, 1
  %vm3098 = vcmp.eq.s32.totalorder %v3096, 1
  %v3099 = vsel %vm3097, %v3093, %v3082
  %v3100 = vsel %vm3098, %v3094, %v3083
  %s3101 = sld [smem:[#allocation3 + $0x82]]
  %v3102 = vsub.f32 %v2978, %v3030
  %v3103 = vstv %s3101
  %vm3104 = vcmp.eq.s32.totalorder %v138, %v3103
  %vm3105 = vcmp.eq.s32.totalorder %v139, %v3103
  %v3106 = vlaneseq
  %v3107 = vshrl.u32 %v3106, 7
  %v3108 = vsub.s32 3, %v3107
  %v3109 = vrot.slane %v3102, %v3108
  %v3110 = vadd.f32 %v3099, %v3109
  %v3111 = vadd.f32 %v3100, %v3109
  %v3112 = vsel %vm3104, 1, 0
  %v3113 = vsel %vm3105, 1, 0
  %vm3114 = vcmp.eq.s32.totalorder %v3112, 1
  %vm3115 = vcmp.eq.s32.totalorder %v3113, 1
  %v3116 = vsel %vm3114, %v3110, %v3099
  %v3117 = vsel %vm3115, %v3111, %v3100
  %s3118 = sld [smem:[#allocation3 + $0x83]]
  %v3119 = vsub.f32 %v2978, %v3049
  %v3120 = vstv %s3118
  %vm3121 = vcmp.eq.s32.totalorder %v138, %v3120
  %vm3122 = vcmp.eq.s32.totalorder %v139, %v3120
  %v3123 = vlaneseq
  %v3124 = vshrl.u32 %v3123, 7
  %v3125 = vsub.s32 4, %v3124
  %v3126 = vrot.slane %v3119, %v3125
  %v3127 = vadd.f32 %v3116, %v3126
  %v3128 = vadd.f32 %v3117, %v3126
  %v3129 = vsel %vm3121, 1, 0
  %v3130 = vsel %vm3122, 1, 0
  %vm3131 = vcmp.eq.s32.totalorder %v3129, 1
  %vm3132 = vcmp.eq.s32.totalorder %v3130, 1
  %v3133 = vsel %vm3131, %v3127, %v3116
  %v3134 = vsel %vm3132, %v3128, %v3117
  %vm3137 = vcmask 1040384
  %v3138 = vrot.slane %v3065, 7
  %v3139 = vrot.slane %v3066, 7
  %v3140 = vsel %vm3137, %v3138, %v3139
  %v3146 = vrot.slane %v3133, 7
  %v3147 = vrot.slane %v3134, 7
  %v3148 = vsel %vm3137, %v3146, %v3147
  %v3152 = vsel %vm3137, %v2973, %v3138
  %v3153 = vsel %vm3137, %v3139, 0.0
  %v3154 = vsel %vm3137, %v2978, %v3146
  %v3155 = vsel %vm3137, %v3147, 0.0
  %v3156 = vadd.s32 %v138, 16
  %v3157 = vadd.s32 %v138, 24
  %v3158 = vadd.s32 %v138, 32
  %v3159 = vadd.s32 %v138, 40
  %vm3160 = vcmp.ge.s32.totalorder %v3156, 0
  %vm3161 = vcmp.ge.s32.totalorder %v3157, 0
  %vm3162 = vcmp.ge.s32.totalorder %v3158, 0
  %vm3163 = vcmp.ge.s32.totalorder %v3159, 0
  %vm3164 = vcmp.lt.s32.totalorder %v138, 17
  %vm3165 = vcmp.lt.s32.totalorder %v139, 17
  %vm3166 = vcmp.lt.s32.totalorder %v3156, 17
  %vm3167 = vcmp.lt.s32.totalorder %v3157, 17
  %vm3168 = vcmp.lt.s32.totalorder %v3158, 17
  %vm3169 = vcmp.lt.s32.totalorder %v3159, 17
  %vm3170 = vmand %vm142, %vm3164
  %vm3171 = vmand %vm143, %vm3165
  %vm3172 = vmand %vm3160, %vm3166
  %vm3173 = vmand %vm3161, %vm3167
  %vm3174 = vmand %vm3162, %vm3168
  %vm3175 = vmand %vm3163, %vm3169
  %vm3176 = vmand %vm3170, %vm148
  %vm3177 = vmand %vm3171, %vm148
  %vm3178 = vmand %vm3172, %vm148
  %vm3179 = vmand %vm3173, %vm148
  %vm3180 = vmand %vm3174, %vm148
  %vm3181 = vmand %vm3175, %vm148
  %vm3182 = vcmp.lt.s32.totalorder %v141, 17
  %vm3183 = vmand %vm3176, %vm3182
  %vm3184 = vmand %vm3177, %vm3182
  %vm3185 = vmand %vm3178, %vm3182
  %vm3186 = vmand %vm3179, %vm3182
  %vm3187 = vmand %vm3180, %vm3182
  %vm3188 = vmand %vm3181, %vm3182
  %vm3189 = vcmp.ge.s32.totalorder %v138, 24
  %vm3190 = vcmp.ge.s32.totalorder %v139, 24
  %vm3191 = vcmp.ge.s32.totalorder %v3156, 24
  %vm3192 = vcmp.ge.s32.totalorder %v3157, 24
  %vm3193 = vcmp.ge.s32.totalorder %v3158, 24
  %vm3194 = vcmp.ge.s32.totalorder %v3159, 24
  %vm3195 = vcmp.lt.s32.totalorder %v138, 41
  %vm3196 = vcmp.lt.s32.totalorder %v139, 41
  %vm3197 = vcmp.lt.s32.totalorder %v3156, 41
  %vm3198 = vcmp.lt.s32.totalorder %v3157, 41
  %vm3199 = vcmp.lt.s32.totalorder %v3158, 41
  %vm3200 = vcmp.lt.s32.totalorder %v3159, 41
  %vm3201 = vmand %vm3189, %vm3195
  %vm3202 = vmand %vm3190, %vm3196
  %vm3203 = vmand %vm3191, %vm3197
  %vm3204 = vmand %vm3192, %vm3198
  %vm3205 = vmand %vm3193, %vm3199
  %vm3206 = vmand %vm3194, %vm3200
  %vm3207 = vcmp.ge.s32.totalorder %v141, 24
  %vm3208 = vmand %vm3201, %vm3207
  %vm3209 = vmand %vm3202, %vm3207
  %vm3210 = vmand %vm3203, %vm3207
  %vm3211 = vmand %vm3204, %vm3207
  %vm3212 = vmand %vm3205, %vm3207
  %vm3213 = vmand %vm3206, %vm3207
  %vm3214 = vcmp.lt.s32.totalorder %v141, 41
  %vm3215 = vmand %vm3208, %vm3214
  %vm3216 = vmand %vm3209, %vm3214
  %vm3217 = vmand %vm3210, %vm3214
  %vm3218 = vmand %vm3211, %vm3214
  %vm3219 = vmand %vm3212, %vm3214
  %vm3220 = vmand %vm3213, %vm3214
  %vm3221 = vmor %vm3183, %vm3215
  %vm3222 = vmor %vm3184, %vm3216
  %vm3223 = vmor %vm3185, %vm3217
  %vm3224 = vmor %vm3186, %vm3218
  %vm3225 = vmor %vm3187, %vm3219
  %vm3226 = vmor %vm3188, %vm3220
  %v3227 = vsel %vm3221, 0.0, -1e+30
  %v3228 = vsel %vm3222, 0.0, -1e+30
  %v3229 = vsel %vm3223, 0.0, -1e+30
  %v3230 = vsel %vm3224, 0.0, -1e+30
  %v3231 = vsel %vm3225, 0.0, -1e+30
  %v3232 = vsel %vm3226, 0.0, -1e+30
  %s3233 = scalar_lea.vmem %s7, 16
  %v3234 = vld [vmem:[%s3233] sm:$0x7f]
  %s3235 = scalar_lea.vmem %s3, 64
  %v3236 = vld [vmem:[%s3235] sm:$0xff]
  %v3237 = vld [vmem:[%s3235 + $0x8] sm:$0xff]
  %v3238 = vld [vmem:[%s3235 + $0x10] sm:$0xff]
  %v3239 = vld [vmem:[%s3235 + $0x18] sm:$0xff]
  %s3240 = scalar_lea.vmem %s4, 64
  %v3241 = vld [vmem:[%s3240] sm:$0xff]
  %v3242 = vld [vmem:[%s3240 + $0x8] sm:$0xff]
  %v3243 = vld [vmem:[%s3240 + $0x10] sm:$0xff]
  %v3244 = vld [vmem:[%s3240 + $0x18] sm:$0xff]
  %s3245 = scalar_lea.vmem %s5, 64
  %v3246 = vld [vmem:[%s3245] sm:$0xff]
  %v3247 = vld [vmem:[%s3245 + $0x8] sm:$0xff]
  %v3248 = vld [vmem:[%s3245 + $0x10] sm:$0xff]
  %v3249 = vld [vmem:[%s3245 + $0x18] sm:$0xff]
  %s3250 = scalar_lea.vmem %s6, 128
  %v3251 = vld [vmem:[%s3250] sm:$0xff]
  %v3252 = vld [vmem:[%s3250 + $0x8] sm:$0xff]
  %v3253 = vld [vmem:[%s3250 + $0x10] sm:$0xff]
  %v3254 = vld [vmem:[%s3250 + $0x18] sm:$0xff]
  %v3255 = vld [vmem:[%s3250 + $0x20] sm:$0xff]
  %v3256 = vld [vmem:[%s3250 + $0x28] sm:$0xff]
  %v3257 = vld [vmem:[%s3250 + $0x30] sm:$0xff]
  %v3258 = vld [vmem:[%s3250 + $0x38] sm:$0xff]
  %v3259 = vsel %vm57, %v3152, 0.0
  %3260 = vadd.xlane.f32.xlu0 %v3259
  %v3261 = vpop.xlane.xlu0 %3260
  %v3262 = vsel %vm57, %v3140, 0.0
  %3263 = vadd.xlane.f32.xlu0 %v3262
  %v3264 = vpop.xlane.xlu0 %3263
  %v3265 = vsel %vm57, %v3153, 0.0
  %3266 = vadd.xlane.f32.xlu0 %v3265
  %v3267 = vpop.xlane.xlu0 %3266
  %v3268 = vsel %vm57, %v3154, 0.0
  %3269 = vadd.xlane.f32.xlu0 %v3268
  %v3270 = vpop.xlane.xlu0 %3269
  %v3271 = vsel %vm57, %v3148, 0.0
  %3272 = vadd.xlane.f32.xlu0 %v3271
  %v3273 = vpop.xlane.xlu0 %3272
  %v3274 = vsel %vm57, %v3155, 0.0
  %3275 = vadd.xlane.f32.xlu0 %v3274
  %v3276 = vpop.xlane.xlu0 %3275
  %v3277 = vmul.f32 %v3261, %v197
  %v3278 = vmul.f32 %v3264, %v197
  %v3279 = vmul.f32 %v3267, %v197
  %v3280 = vmul.f32 %v3270, %v197
  %v3281 = vmul.f32 %v3273, %v197
  %v3282 = vmul.f32 %v3276, %v197
  %v3283 = vsub.f32 %v3152, %v3277
  %v3284 = vsub.f32 %v3140, %v3278
  %v3285 = vsub.f32 %v3153, %v3279
  %v3286 = vsub.f32 %v3154, %v3280
  %v3287 = vsub.f32 %v3148, %v3281
  %v3288 = vsub.f32 %v3155, %v3282
  %v3289 = vmul.f32 %v3283, %v3283
  %v3290 = vmul.f32 %v3284, %v3284
  %v3291 = vmul.f32 %v3285, %v3285
  %v3292 = vmul.f32 %v3286, %v3286
  %v3293 = vmul.f32 %v3287, %v3287
  %v3294 = vmul.f32 %v3288, %v3288
  %v3295 = vsel %vm57, %v3289, 0.0
  %3296 = vadd.xlane.f32.xlu0 %v3295
  %v3297 = vpop.xlane.xlu0 %3296
  %v3298 = vsel %vm57, %v3290, 0.0
  %3299 = vadd.xlane.f32.xlu0 %v3298
  %v3300 = vpop.xlane.xlu0 %3299
  %v3301 = vsel %vm57, %v3291, 0.0
  %3302 = vadd.xlane.f32.xlu0 %v3301
  %v3303 = vpop.xlane.xlu0 %3302
  %v3304 = vsel %vm57, %v3292, 0.0
  %3305 = vadd.xlane.f32.xlu0 %v3304
  %v3306 = vpop.xlane.xlu0 %3305
  %v3307 = vsel %vm57, %v3293, 0.0
  %3308 = vadd.xlane.f32.xlu0 %v3307
  %v3309 = vpop.xlane.xlu0 %3308
  %v3310 = vsel %vm57, %v3294, 0.0
  %3311 = vadd.xlane.f32.xlu0 %v3310
  %v3312 = vpop.xlane.xlu0 %3311
  %v3313 = vmul.f32 %v3297, %v197
  %v3314 = vmul.f32 %v3300, %v197
  %v3315 = vmul.f32 %v3303, %v197
  %v3316 = vmul.f32 %v3306, %v197
  %v3317 = vmul.f32 %v3309, %v197
  %v3318 = vmul.f32 %v3312, %v197
  %v3319 = vadd.f32 %v3313, 1e-05
  %v3320 = vadd.f32 %v3314, 1e-05
  %v3321 = vadd.f32 %v3315, 1e-05
  %v3322 = vadd.f32 %v3316, 1e-05
  %v3323 = vadd.f32 %v3317, 1e-05
  %v3324 = vadd.f32 %v3318, 1e-05
  %v3325 = vrsqrt.pop %v3319
  %v3326 = vrsqrt.pop %v3320
  %v3327 = vrsqrt.pop %v3321
  %v3328 = vrsqrt.pop %v3322
  %v3329 = vrsqrt.pop %v3323
  %v3330 = vrsqrt.pop %v3324
  %v3331 = vmul.f32 %v3283, %v3325
  %v3332 = vmul.f32 %v3284, %v3326
  %v3333 = vmul.f32 %v3285, %v3327
  %v3334 = vmul.f32 %v3286, %v3328
  %v3335 = vmul.f32 %v3287, %v3329
  %v3336 = vmul.f32 %v3288, %v3330
  %v3337 = vlaneseq
  %v3338 = vshrl.u32 %v3337, 7
  %v3339 = vsub.s32 0, %v3338
  %v3340 = vrot.slane %v3234, %v3339
  %v3341 = vmul.f32 %v3331, %v3340
  %v3342 = vmul.f32 %v3332, %v3340
  %v3343 = vmul.f32 %v3333, %v3340
  %v3344 = vmul.f32 %v3334, %v3340
  %v3345 = vmul.f32 %v3335, %v3340
  %v3346 = vmul.f32 %v3336, %v3340
  %v3347 = vlaneseq
  %v3348 = vshrl.u32 %v3347, 7
  %v3349 = vsub.s32 1, %v3348
  %v3350 = vrot.slane %v3234, %v3349
  %v3351 = vadd.f32 %v3341, %v3350
  %v3352 = vadd.f32 %v3342, %v3350
  %v3353 = vadd.f32 %v3343, %v3350
  %v3354 = vadd.f32 %v3344, %v3350
  %v3355 = vadd.f32 %v3345, %v3350
  %v3356 = vadd.f32 %v3346, %v3350
  %v3358 = vsel %vm57, %v3351, 0
  %v3361 = vsel %vm57, %v3352, 0
  %v3364 = vsel %vm57, %v3353, 0
  %v3367 = vsel %vm57, %v3354, 0
  %v3370 = vsel %vm57, %v3355, 0
  %v3373 = vsel %vm57, %v3356, 0
  %3375 = vmatprep.subr.mxu0 0.0
  %3376 = vmatpush1.msra.mxu0 0.0
  %3377 = vmatprep.subr.mxu0 0.0
  %3378 = vmatpush1.msra.mxu0 0.0
  %3379 = vmatprep.subr.mxu0 0.0
  %3380 = vmatpush1.msra.mxu0 0.0
  %3381 = vmatprep.subr.mxu0 0.0
  %3382 = vmatpush1.msra.mxu0 0.0
  %3383 = vmatprep.subr.mxu0 0.0
  %3384 = vmatpush1.msra.mxu0 0.0
  %3385 = vmatprep.subr.mxu0 0.0
  %3386 = vmatpush1.msra.mxu0 0.0
  %3387 = vmatprep.subr.mxu0 0.0
  %3388 = vmatpush1.msra.mxu0 0.0
  %3389 = vmatprep.subr.mxu0 0.0
  %3390 = vmatpush1.msra.mxu0 0.0
  %3391 = vmatprep.subr.mxu0 0.0
  %3392 = vmatpush1.msra.mxu0 0.0
  %3393 = vmatprep.subr.mxu0 0.0
  %3394 = vmatpush1.msra.mxu0 0.0
  %3395 = vmatprep.subr.mxu0 0.0
  %3396 = vmatpush1.msra.mxu0 0.0
  %3397 = vmatprep.subr.mxu0 0.0
  %3398 = vmatpush1.msra.mxu0 0.0
  %3399 = vmatprep.subr.mxu0 0.0
  %3400 = vmatpush1.msra.mxu0 %v3239
  %3401 = vmatprep.subr.mxu0 0.0
  %3402 = vmatpush1.msra.mxu0 %v3238
  %3403 = vmatprep.subr.mxu0 0.0
  %3404 = vmatpush1.msra.mxu0 %v3237
  %3405 = vmatprep.subr.mxu0 0.0
  %3406 = vmatpush1.msra.mxu0 %v3236
  %3407 = vmatprep.subr.mxu0 0.0
  %3408 = vmatpush2.msra.mxu0 0.0
  %3409 = vmatprep.subr.mxu0 0.0
  %3410 = vmatpush2.msra.mxu0 0.0
  %3411 = vmatprep.subr.mxu0 0.0
  %3412 = vmatpush2.msra.mxu0 0.0
  %3413 = vmatprep.subr.mxu0 0.0
  %3414 = vmatpush2.msra.mxu0 0.0
  %3415 = vmatprep.subr.mxu0 0.0
  %3416 = vmatpush2.msra.mxu0 0.0
  %3417 = vmatprep.subr.mxu0 0.0
  %3418 = vmatpush2.msra.mxu0 0.0
  %3419 = vmatprep.subr.mxu0 0.0
  %3420 = vmatpush2.msra.mxu0 0.0
  %3421 = vmatprep.subr.mxu0 0.0
  %3422 = vmatpush2.msra.mxu0 0.0
  %3423 = vmatprep.subr.mxu0 0.0
  %3424 = vmatpush2.msra.mxu0 0.0
  %3425 = vmatprep.subr.mxu0 0.0
  %3426 = vmatpush2.msra.mxu0 0.0
  %3427 = vmatprep.subr.mxu0 0.0
  %3428 = vmatpush2.msra.mxu0 0.0
  %3429 = vmatprep.subr.mxu0 0.0
  %3430 = vmatpush2.msra.mxu0 0.0
  %3431 = vmatprep.subr.mxu0 0.0
  %3432 = vmatpush2.msra.mxu0 0.0
  %3433 = vmatprep.subr.mxu0 0.0
  %3434 = vmatpush2.msra.mxu0 0.0
  %3435 = vmatprep.subr.mxu0 0.0
  %3436 = vmatpush2.msra.mxu0 0.0
  %3437 = vmatprep.subr.mxu0 0.0
  %3438 = vmatpush2.msra.mxu0 0.0
  %3439 = vmatprep.mubr.f32.mxu0 0.0
  %3440 = vmatmul.mubr.f32.gmra.mxu0 %v3358
  %v3441 = vpop.f32.mrf.mxu0
  %v3442 = vadd.f32 0.0, %v3441
  %v3443 = vpop.f32.mrf.mxu0
  %3444 = vmatprep.mubr.f32.mxu0 0.0
  %3445 = vmatmul.mubr.f32.gmra.mxu0 %v3361
  %v3446 = vpop.f32.mrf.mxu0
  %v3447 = vadd.f32 0.0, %v3446
  %v3448 = vpop.f32.mrf.mxu0
  %3449 = vmatprep.mubr.f32.mxu0 0.0
  %3450 = vmatmul.mubr.f32.gmra.mxu0 %v3364
  %v3451 = vpop.f32.mrf.mxu0
  %v3452 = vadd.f32 0.0, %v3451
  %v3453 = vpop.f32.mrf.mxu0
  %3454 = vmatprep.mubr.f32.mxu0 0.0
  %3455 = vmatmul.mubr.f32.gmra.mxu0 %v3367
  %v3456 = vpop.f32.mrf.mxu0
  %v3457 = vadd.f32 0.0, %v3456
  %v3458 = vpop.f32.mrf.mxu0
  %3459 = vmatprep.mubr.f32.mxu0 0.0
  %3460 = vmatmul.mubr.f32.gmra.mxu0 %v3370
  %v3461 = vpop.f32.mrf.mxu0
  %v3462 = vadd.f32 0.0, %v3461
  %v3463 = vpop.f32.mrf.mxu0
  %3464 = vmatprep.mubr.f32.mxu0 0.0
  %3465 = vmatmul.mubr.f32.gmra.mxu0 %v3373
  %v3466 = vpop.f32.mrf.mxu0
  %v3467 = vadd.f32 0.0, %v3466
  %v3468 = vpop.f32.mrf.mxu0
  %3469 = vdwg.mxu0
  %3476 = vrot.lane.b32.xlu0 %v3442, 96
  %v3477 = vpop.permute.xlu0 %3476
  %3478 = vrot.lane.b32.xlu0 %v3447, 96
  %v3479 = vpop.permute.xlu0 %3478
  %3480 = vrot.lane.b32.xlu0 %v3452, 96
  %v3481 = vpop.permute.xlu0 %3480
  %3482 = vrot.lane.b32.xlu0 %v3457, 96
  %v3483 = vpop.permute.xlu0 %3482
  %3484 = vrot.lane.b32.xlu0 %v3462, 96
  %v3485 = vpop.permute.xlu0 %3484
  %3486 = vrot.lane.b32.xlu0 %v3467, 96
  %v3487 = vpop.permute.xlu0 %3486
  %v3488 = vsel %vm317, %v3442, 0
  %v3490 = vsel %vm317, %v3447, 0
  %v3492 = vsel %vm317, %v3452, 0
  %v3494 = vsel %vm317, %v3457, 0
  %v3496 = vsel %vm317, %v3462, 0
  %v3498 = vsel %vm317, %v3467, 0
  %v3500 = vsel %vm317, %v3477, 0
  %v3502 = vsel %vm317, %v3479, 0
  %v3504 = vsel %vm317, %v3481, 0
  %v3506 = vsel %vm317, %v3483, 0
  %v3508 = vsel %vm317, %v3485, 0
  %v3510 = vsel %vm317, %v3487, 0
  %3512 = vmatprep.subr.mxu0 0.0
  %3513 = vmatpush1.xpose.msra.mxu0 0.0
  %3514 = vmatprep.subr.mxu0 0.0
  %3515 = vmatpush1.xpose.msra.mxu0 0.0
  %3516 = vmatprep.subr.mxu0 0.0
  %3517 = vmatpush1.xpose.msra.mxu0 0.0
  %3518 = vmatprep.subr.mxu0 0.0
  %3519 = vmatpush1.xpose.msra.mxu0 0.0
  %3520 = vmatprep.subr.mxu0 0.0
  %3521 = vmatpush1.xpose.msra.mxu0 0.0
  %3522 = vmatprep.subr.mxu0 0.0
  %3523 = vmatpush1.xpose.msra.mxu0 0.0
  %3524 = vmatprep.subr.mxu0 0.0
  %3525 = vmatpush1.xpose.msra.mxu0 0.0
  %3526 = vmatprep.subr.mxu0 0.0
  %3527 = vmatpush1.xpose.msra.mxu0 0.0
  %3528 = vmatprep.subr.mxu0 0.0
  %3529 = vmatpush1.xpose.msra.mxu0 0.0
  %3530 = vmatprep.subr.mxu0 0.0
  %3531 = vmatpush1.xpose.msra.mxu0 0.0
  %3532 = vmatprep.subr.mxu0 0.0
  %3533 = vmatpush1.xpose.msra.mxu0 %v3510
  %3534 = vmatprep.subr.mxu0 0.0
  %3535 = vmatpush1.xpose.msra.mxu0 %v3508
  %3536 = vmatprep.subr.mxu0 0.0
  %3537 = vmatpush1.xpose.msra.mxu0 %v3506
  %3538 = vmatprep.subr.mxu0 0.0
  %3539 = vmatpush1.xpose.msra.mxu0 %v3504
  %3540 = vmatprep.subr.mxu0 0.0
  %3541 = vmatpush1.xpose.msra.mxu0 %v3502
  %3542 = vmatprep.subr.mxu0 0.0
  %3543 = vmatpush1.xpose.msra.mxu0 %v3500
  %3544 = vmatprep.subr.mxu0 0.0
  %3545 = vmatpush2.xpose.msra.mxu0 0.0
  %3546 = vmatprep.subr.mxu0 0.0
  %3547 = vmatpush2.xpose.msra.mxu0 0.0
  %3548 = vmatprep.subr.mxu0 0.0
  %3549 = vmatpush2.xpose.msra.mxu0 0.0
  %3550 = vmatprep.subr.mxu0 0.0
  %3551 = vmatpush2.xpose.msra.mxu0 0.0
  %3552 = vmatprep.subr.mxu0 0.0
  %3553 = vmatpush2.xpose.msra.mxu0 0.0
  %3554 = vmatprep.subr.mxu0 0.0
  %3555 = vmatpush2.xpose.msra.mxu0 0.0
  %3556 = vmatprep.subr.mxu0 0.0
  %3557 = vmatpush2.xpose.msra.mxu0 0.0
  %3558 = vmatprep.subr.mxu0 0.0
  %3559 = vmatpush2.xpose.msra.mxu0 0.0
  %3560 = vmatprep.subr.mxu0 0.0
  %3561 = vmatpush2.xpose.msra.mxu0 0.0
  %3562 = vmatprep.subr.mxu0 0.0
  %3563 = vmatpush2.xpose.msra.mxu0 0.0
  %3564 = vmatprep.subr.mxu0 0.0
  %3565 = vmatpush2.xpose.msra.mxu0 0.0
  %3566 = vmatprep.subr.mxu0 0.0
  %3567 = vmatpush2.xpose.msra.mxu0 0.0
  %3568 = vmatprep.subr.mxu0 0.0
  %3569 = vmatpush2.xpose.msra.mxu0 0.0
  %3570 = vmatprep.subr.mxu0 0.0
  %3571 = vmatpush2.xpose.msra.mxu0 0.0
  %3572 = vmatprep.subr.mxu0 0.0
  %3573 = vmatpush2.xpose.msra.mxu0 0.0
  %3574 = vmatprep.subr.mxu0 0.0
  %3575 = vmatpush2.xpose.msra.mxu0 0.0
  %3576 = vmatprep.mubr.f32.mxu0 0.0
  %3577 = vmatmul.mubr.f32.gmra.mxu0 %v3488
  %v3578 = vpop.f32.mrf.mxu0
  %v3579 = vadd.f32 0.0, %v3578
  %v3580 = vpop.f32.mrf.mxu0
  %3581 = vmatprep.mubr.f32.mxu0 0.0
  %3582 = vmatmul.mubr.f32.gmra.mxu0 %v3490
  %v3583 = vpop.f32.mrf.mxu0
  %v3584 = vadd.f32 0.0, %v3583
  %v3585 = vpop.f32.mrf.mxu0
  %3586 = vmatprep.mubr.f32.mxu0 0.0
  %3587 = vmatmul.mubr.f32.gmra.mxu0 %v3492
  %v3588 = vpop.f32.mrf.mxu0
  %v3589 = vadd.f32 0.0, %v3588
  %v3590 = vpop.f32.mrf.mxu0
  %3591 = vmatprep.mubr.f32.mxu0 0.0
  %3592 = vmatmul.mubr.f32.gmra.mxu0 %v3494
  %v3593 = vpop.f32.mrf.mxu0
  %v3594 = vadd.f32 0.0, %v3593
  %v3595 = vpop.f32.mrf.mxu0
  %3596 = vmatprep.mubr.f32.mxu0 0.0
  %3597 = vmatmul.mubr.f32.gmra.mxu0 %v3496
  %v3598 = vpop.f32.mrf.mxu0
  %v3599 = vadd.f32 0.0, %v3598
  %v3600 = vpop.f32.mrf.mxu0
  %3601 = vmatprep.mubr.f32.mxu0 0.0
  %3602 = vmatmul.mubr.f32.gmra.mxu0 %v3498
  %v3603 = vpop.f32.mrf.mxu0
  %v3604 = vadd.f32 0.0, %v3603
  %v3605 = vpop.f32.mrf.mxu0
  %3606 = vdwg.mxu0
  %v3607 = vmul.f32 %v3579, 0.35355338
  %v3608 = vmul.f32 %v3584, 0.35355338
  %v3609 = vmul.f32 %v3589, 0.35355338
  %v3610 = vmul.f32 %v3594, 0.35355338
  %v3611 = vmul.f32 %v3599, 0.35355338
  %v3612 = vmul.f32 %v3604, 0.35355338
  %v3613 = vadd.f32 %v3607, %v3227
  %v3614 = vadd.f32 %v3608, %v3228
  %v3615 = vadd.f32 %v3609, %v3229
  %v3616 = vadd.f32 %v3610, %v3230
  %v3617 = vadd.f32 %v3611, %v3231
  %v3618 = vadd.f32 %v3612, %v3232
  %vm3619 = vcmask 392192
  %v3620 = vsel %vm3619, %v3613, -inf
  %3621 = vmax.xlane.f32.xlu0 %v3620
  %v3622 = vpop.xlane.xlu0 %3621
  %v3623 = vsel %vm3619, %v3614, -inf
  %3624 = vmax.xlane.f32.xlu0 %v3623
  %v3625 = vpop.xlane.xlu0 %3624
  %v3626 = vsel %vm3619, %v3615, -inf
  %3627 = vmax.xlane.f32.xlu0 %v3626
  %v3628 = vpop.xlane.xlu0 %3627
  %v3629 = vsel %vm3619, %v3616, -inf
  %3630 = vmax.xlane.f32.xlu0 %v3629
  %v3631 = vpop.xlane.xlu0 %3630
  %v3632 = vsel %vm3619, %v3617, -inf
  %3633 = vmax.xlane.f32.xlu0 %v3632
  %v3634 = vpop.xlane.xlu0 %3633
  %v3635 = vsel %vm3619, %v3618, -inf
  %3636 = vmax.xlane.f32.xlu0 %v3635
  %v3637 = vpop.xlane.xlu0 %3636
  %v3638 = vsub.f32 %v3613, %v3622
  %v3639 = vsub.f32 %v3614, %v3625
  %v3640 = vsub.f32 %v3615, %v3628
  %v3641 = vsub.f32 %v3616, %v3631
  %v3642 = vsub.f32 %v3617, %v3634
  %v3643 = vsub.f32 %v3618, %v3637
  %v3644 = vmul.f32 %v3638, 1.442695
  %v3645 = vpow.pop %v3644
  %v3646 = vmul.f32 %v3639, 1.442695
  %v3647 = vpow.pop %v3646
  %v3648 = vmul.f32 %v3640, 1.442695
  %v3649 = vpow.pop %v3648
  %v3650 = vmul.f32 %v3641, 1.442695
  %v3651 = vpow.pop %v3650
  %v3652 = vmul.f32 %v3642, 1.442695
  %v3653 = vpow.pop %v3652
  %v3654 = vmul.f32 %v3643, 1.442695
  %v3655 = vpow.pop %v3654
  %v3656 = vsel %vm3619, %v3645, 0.0
  %3657 = vadd.xlane.f32.xlu0 %v3656
  %v3658 = vpop.xlane.xlu0 %3657
  %v3659 = vsel %vm3619, %v3647, 0.0
  %3660 = vadd.xlane.f32.xlu0 %v3659
  %v3661 = vpop.xlane.xlu0 %3660
  %v3662 = vsel %vm3619, %v3649, 0.0
  %3663 = vadd.xlane.f32.xlu0 %v3662
  %v3664 = vpop.xlane.xlu0 %3663
  %v3665 = vsel %vm3619, %v3651, 0.0
  %3666 = vadd.xlane.f32.xlu0 %v3665
  %v3667 = vpop.xlane.xlu0 %3666
  %v3668 = vsel %vm3619, %v3653, 0.0
  %3669 = vadd.xlane.f32.xlu0 %v3668
  %v3670 = vpop.xlane.xlu0 %3669
  %v3671 = vsel %vm3619, %v3655, 0.0
  %3672 = vadd.xlane.f32.xlu0 %v3671
  %v3673 = vpop.xlane.xlu0 %3672
  %v3674 = vrcp.pop %v3658
  %v3675 = vrcp.pop %v3661
  %v3676 = vrcp.pop %v3664
  %v3677 = vrcp.pop %v3667
  %v3678 = vrcp.pop %v3670
  %v3679 = vrcp.pop %v3673
  %v3680 = vmul.f32 %v3645, %v3674
  %v3681 = vmul.f32 %v3647, %v3675
  %v3682 = vmul.f32 %v3649, %v3676
  %v3683 = vmul.f32 %v3651, %v3677
  %v3684 = vmul.f32 %v3653, %v3678
  %v3685 = vmul.f32 %v3655, %v3679
  %3686 = vrot.lane.b32.xlu0 %v3442, 64
  %v3687 = vpop.permute.xlu0 %3686
  %3688 = vrot.lane.b32.xlu0 %v3447, 64
  %v3689 = vpop.permute.xlu0 %3688
  %3690 = vrot.lane.b32.xlu0 %v3452, 64
  %v3691 = vpop.permute.xlu0 %3690
  %3692 = vrot.lane.b32.xlu0 %v3457, 64
  %v3693 = vpop.permute.xlu0 %3692
  %3694 = vrot.lane.b32.xlu0 %v3462, 64
  %v3695 = vpop.permute.xlu0 %3694
  %3696 = vrot.lane.b32.xlu0 %v3467, 64
  %v3697 = vpop.permute.xlu0 %3696
  %v3705 = vsel %vm3619, %v3680, 0
  %v3708 = vsel %vm3619, %v3681, 0
  %v3711 = vsel %vm3619, %v3682, 0
  %v3714 = vsel %vm3619, %v3683, 0
  %v3717 = vsel %vm3619, %v3684, 0
  %v3720 = vsel %vm3619, %v3685, 0
  %3722 = vmatprep.subr.mxu0 0.0
  %3723 = vmatpush1.msra.mxu0 0.0
  %3724 = vmatprep.subr.mxu0 0.0
  %3725 = vmatpush1.msra.mxu0 0.0
  %3726 = vmatprep.subr.mxu0 0.0
  %3727 = vmatpush1.msra.mxu0 0.0
  %3728 = vmatprep.subr.mxu0 0.0
  %3729 = vmatpush1.msra.mxu0 0.0
  %3730 = vmatprep.subr.mxu0 0.0
  %3731 = vmatpush1.msra.mxu0 0.0
  %3732 = vmatprep.subr.mxu0 0.0
  %3733 = vmatpush1.msra.mxu0 0.0
  %3734 = vmatprep.subr.mxu0 0.0
  %3735 = vmatpush1.msra.mxu0 0.0
  %3736 = vmatprep.subr.mxu0 0.0
  %3737 = vmatpush1.msra.mxu0 0.0
  %3738 = vmatprep.subr.mxu0 0.0
  %3739 = vmatpush1.msra.mxu0 0.0
  %3740 = vmatprep.subr.mxu0 0.0
  %3741 = vmatpush1.msra.mxu0 0.0
  %3742 = vmatprep.subr.mxu0 0.0
  %3743 = vmatpush1.msra.mxu0 %v3697
  %3744 = vmatprep.subr.mxu0 0.0
  %3745 = vmatpush1.msra.mxu0 %v3695
  %3746 = vmatprep.subr.mxu0 0.0
  %3747 = vmatpush1.msra.mxu0 %v3693
  %3748 = vmatprep.subr.mxu0 0.0
  %3749 = vmatpush1.msra.mxu0 %v3691
  %3750 = vmatprep.subr.mxu0 0.0
  %3751 = vmatpush1.msra.mxu0 %v3689
  %3752 = vmatprep.subr.mxu0 0.0
  %3753 = vmatpush1.msra.mxu0 %v3687
  %3754 = vmatprep.subr.mxu0 0.0
  %3755 = vmatpush2.msra.mxu0 0.0
  %3756 = vmatprep.subr.mxu0 0.0
  %3757 = vmatpush2.msra.mxu0 0.0
  %3758 = vmatprep.subr.mxu0 0.0
  %3759 = vmatpush2.msra.mxu0 0.0
  %3760 = vmatprep.subr.mxu0 0.0
  %3761 = vmatpush2.msra.mxu0 0.0
  %3762 = vmatprep.subr.mxu0 0.0
  %3763 = vmatpush2.msra.mxu0 0.0
  %3764 = vmatprep.subr.mxu0 0.0
  %3765 = vmatpush2.msra.mxu0 0.0
  %3766 = vmatprep.subr.mxu0 0.0
  %3767 = vmatpush2.msra.mxu0 0.0
  %3768 = vmatprep.subr.mxu0 0.0
  %3769 = vmatpush2.msra.mxu0 0.0
  %3770 = vmatprep.subr.mxu0 0.0
  %3771 = vmatpush2.msra.mxu0 0.0
  %3772 = vmatprep.subr.mxu0 0.0
  %3773 = vmatpush2.msra.mxu0 0.0
  %3774 = vmatprep.subr.mxu0 0.0
  %3775 = vmatpush2.msra.mxu0 0.0
  %3776 = vmatprep.subr.mxu0 0.0
  %3777 = vmatpush2.msra.mxu0 0.0
  %3778 = vmatprep.subr.mxu0 0.0
  %3779 = vmatpush2.msra.mxu0 0.0
  %3780 = vmatprep.subr.mxu0 0.0
  %3781 = vmatpush2.msra.mxu0 0.0
  %3782 = vmatprep.subr.mxu0 0.0
  %3783 = vmatpush2.msra.mxu0 0.0
  %3784 = vmatprep.subr.mxu0 0.0
  %3785 = vmatpush2.msra.mxu0 0.0
  %3786 = vmatprep.mubr.f32.mxu0 0.0
  %3787 = vmatmul.mubr.f32.gmra.mxu0 %v3705
  %v3788 = vpop.f32.mrf.mxu0
  %v3789 = vadd.f32 0.0, %v3788
  %v3790 = vpop.f32.mrf.mxu0
  %3791 = vmatprep.mubr.f32.mxu0 0.0
  %3792 = vmatmul.mubr.f32.gmra.mxu0 %v3708
  %v3793 = vpop.f32.mrf.mxu0
  %v3794 = vadd.f32 0.0, %v3793
  %v3795 = vpop.f32.mrf.mxu0
  %3796 = vmatprep.mubr.f32.mxu0 0.0
  %3797 = vmatmul.mubr.f32.gmra.mxu0 %v3711
  %v3798 = vpop.f32.mrf.mxu0
  %v3799 = vadd.f32 0.0, %v3798
  %v3800 = vpop.f32.mrf.mxu0
  %3801 = vmatprep.mubr.f32.mxu0 0.0
  %3802 = vmatmul.mubr.f32.gmra.mxu0 %v3714
  %v3803 = vpop.f32.mrf.mxu0
  %v3804 = vadd.f32 0.0, %v3803
  %v3805 = vpop.f32.mrf.mxu0
  %3806 = vmatprep.mubr.f32.mxu0 0.0
  %3807 = vmatmul.mubr.f32.gmra.mxu0 %v3717
  %v3808 = vpop.f32.mrf.mxu0
  %v3809 = vadd.f32 0.0, %v3808
  %v3810 = vpop.f32.mrf.mxu0
  %3811 = vmatprep.mubr.f32.mxu0 0.0
  %3812 = vmatmul.mubr.f32.gmra.mxu0 %v3720
  %v3813 = vpop.f32.mrf.mxu0
  %v3814 = vadd.f32 0.0, %v3813
  %v3815 = vpop.f32.mrf.mxu0
  %3816 = vdwg.mxu0
  %3817 = vrot.lane.b32.xlu0 %v3442, 120
  %v3818 = vpop.permute.xlu0 %3817
  %3819 = vrot.lane.b32.xlu0 %v3447, 120
  %v3820 = vpop.permute.xlu0 %3819
  %3821 = vrot.lane.b32.xlu0 %v3452, 120
  %v3822 = vpop.permute.xlu0 %3821
  %3823 = vrot.lane.b32.xlu0 %v3457, 120
  %v3824 = vpop.permute.xlu0 %3823
  %3825 = vrot.lane.b32.xlu0 %v3462, 120
  %v3826 = vpop.permute.xlu0 %3825
  %3827 = vrot.lane.b32.xlu0 %v3467, 120
  %v3828 = vpop.permute.xlu0 %3827
  %3829 = vrot.lane.b32.xlu0 %v3442, 88
  %v3830 = vpop.permute.xlu0 %3829
  %3831 = vrot.lane.b32.xlu0 %v3447, 88
  %v3832 = vpop.permute.xlu0 %3831
  %3833 = vrot.lane.b32.xlu0 %v3452, 88
  %v3834 = vpop.permute.xlu0 %3833
  %3835 = vrot.lane.b32.xlu0 %v3457, 88
  %v3836 = vpop.permute.xlu0 %3835
  %3837 = vrot.lane.b32.xlu0 %v3462, 88
  %v3838 = vpop.permute.xlu0 %3837
  %3839 = vrot.lane.b32.xlu0 %v3467, 88
  %v3840 = vpop.permute.xlu0 %3839
  %v3841 = vsel %vm317, %v3818, 0
  %v3843 = vsel %vm317, %v3820, 0
  %v3845 = vsel %vm317, %v3822, 0
  %v3847 = vsel %vm317, %v3824, 0
  %v3849 = vsel %vm317, %v3826, 0
  %v3851 = vsel %vm317, %v3828, 0
  %v3853 = vsel %vm317, %v3830, 0
  %v3855 = vsel %vm317, %v3832, 0
  %v3857 = vsel %vm317, %v3834, 0
  %v3859 = vsel %vm317, %v3836, 0
  %v3861 = vsel %vm317, %v3838, 0
  %v3863 = vsel %vm317, %v3840, 0
  %3865 = vmatprep.subr.mxu0 0.0
  %3866 = vmatpush1.xpose.msra.mxu0 0.0
  %3867 = vmatprep.subr.mxu0 0.0
  %3868 = vmatpush1.xpose.msra.mxu0 0.0
  %3869 = vmatprep.subr.mxu0 0.0
  %3870 = vmatpush1.xpose.msra.mxu0 0.0
  %3871 = vmatprep.subr.mxu0 0.0
  %3872 = vmatpush1.xpose.msra.mxu0 0.0
  %3873 = vmatprep.subr.mxu0 0.0
  %3874 = vmatpush1.xpose.msra.mxu0 0.0
  %3875 = vmatprep.subr.mxu0 0.0
  %3876 = vmatpush1.xpose.msra.mxu0 0.0
  %3877 = vmatprep.subr.mxu0 0.0
  %3878 = vmatpush1.xpose.msra.mxu0 0.0
  %3879 = vmatprep.subr.mxu0 0.0
  %3880 = vmatpush1.xpose.msra.mxu0 0.0
  %3881 = vmatprep.subr.mxu0 0.0
  %3882 = vmatpush1.xpose.msra.mxu0 0.0
  %3883 = vmatprep.subr.mxu0 0.0
  %3884 = vmatpush1.xpose.msra.mxu0 0.0
  %3885 = vmatprep.subr.mxu0 0.0
  %3886 = vmatpush1.xpose.msra.mxu0 %v3863
  %3887 = vmatprep.subr.mxu0 0.0
  %3888 = vmatpush1.xpose.msra.mxu0 %v3861
  %3889 = vmatprep.subr.mxu0 0.0
  %3890 = vmatpush1.xpose.msra.mxu0 %v3859
  %3891 = vmatprep.subr.mxu0 0.0
  %3892 = vmatpush1.xpose.msra.mxu0 %v3857
  %3893 = vmatprep.subr.mxu0 0.0
  %3894 = vmatpush1.xpose.msra.mxu0 %v3855
  %3895 = vmatprep.subr.mxu0 0.0
  %3896 = vmatpush1.xpose.msra.mxu0 %v3853
  %3897 = vmatprep.subr.mxu0 0.0
  %3898 = vmatpush2.xpose.msra.mxu0 0.0
  %3899 = vmatprep.subr.mxu0 0.0
  %3900 = vmatpush2.xpose.msra.mxu0 0.0
  %3901 = vmatprep.subr.mxu0 0.0
  %3902 = vmatpush2.xpose.msra.mxu0 0.0
  %3903 = vmatprep.subr.mxu0 0.0
  %3904 = vmatpush2.xpose.msra.mxu0 0.0
  %3905 = vmatprep.subr.mxu0 0.0
  %3906 = vmatpush2.xpose.msra.mxu0 0.0
  %3907 = vmatprep.subr.mxu0 0.0
  %3908 = vmatpush2.xpose.msra.mxu0 0.0
  %3909 = vmatprep.subr.mxu0 0.0
  %3910 = vmatpush2.xpose.msra.mxu0 0.0
  %3911 = vmatprep.subr.mxu0 0.0
  %3912 = vmatpush2.xpose.msra.mxu0 0.0
  %3913 = vmatprep.subr.mxu0 0.0
  %3914 = vmatpush2.xpose.msra.mxu0 0.0
  %3915 = vmatprep.subr.mxu0 0.0
  %3916 = vmatpush2.xpose.msra.mxu0 0.0
  %3917 = vmatprep.subr.mxu0 0.0
  %3918 = vmatpush2.xpose.msra.mxu0 0.0
  %3919 = vmatprep.subr.mxu0 0.0
  %3920 = vmatpush2.xpose.msra.mxu0 0.0
  %3921 = vmatprep.subr.mxu0 0.0
  %3922 = vmatpush2.xpose.msra.mxu0 0.0
  %3923 = vmatprep.subr.mxu0 0.0
  %3924 = vmatpush2.xpose.msra.mxu0 0.0
  %3925 = vmatprep.subr.mxu0 0.0
  %3926 = vmatpush2.xpose.msra.mxu0 0.0
  %3927 = vmatprep.subr.mxu0 0.0
  %3928 = vmatpush2.xpose.msra.mxu0 0.0
  %3929 = vmatprep.mubr.f32.mxu0 0.0
  %3930 = vmatmul.mubr.f32.gmra.mxu0 %v3841
  %v3931 = vpop.f32.mrf.mxu0
  %v3932 = vadd.f32 0.0, %v3931
  %v3933 = vpop.f32.mrf.mxu0
  %3934 = vmatprep.mubr.f32.mxu0 0.0
  %3935 = vmatmul.mubr.f32.gmra.mxu0 %v3843
  %v3936 = vpop.f32.mrf.mxu0
  %v3937 = vadd.f32 0.0, %v3936
  %v3938 = vpop.f32.mrf.mxu0
  %3939 = vmatprep.mubr.f32.mxu0 0.0
  %3940 = vmatmul.mubr.f32.gmra.mxu0 %v3845
  %v3941 = vpop.f32.mrf.mxu0
  %v3942 = vadd.f32 0.0, %v3941
  %v3943 = vpop.f32.mrf.mxu0
  %3944 = vmatprep.mubr.f32.mxu0 0.0
  %3945 = vmatmul.mubr.f32.gmra.mxu0 %v3847
  %v3946 = vpop.f32.mrf.mxu0
  %v3947 = vadd.f32 0.0, %v3946
  %v3948 = vpop.f32.mrf.mxu0
  %3949 = vmatprep.mubr.f32.mxu0 0.0
  %3950 = vmatmul.mubr.f32.gmra.mxu0 %v3849
  %v3951 = vpop.f32.mrf.mxu0
  %v3952 = vadd.f32 0.0, %v3951
  %v3953 = vpop.f32.mrf.mxu0
  %3954 = vmatprep.mubr.f32.mxu0 0.0
  %3955 = vmatmul.mubr.f32.gmra.mxu0 %v3851
  %v3956 = vpop.f32.mrf.mxu0
  %v3957 = vadd.f32 0.0, %v3956
  %v3958 = vpop.f32.mrf.mxu0
  %3959 = vdwg.mxu0
  %v3960 = vmul.f32 %v3932, 0.35355338
  %v3961 = vmul.f32 %v3937, 0.35355338
  %v3962 = vmul.f32 %v3942, 0.35355338
  %v3963 = vmul.f32 %v3947, 0.35355338
  %v3964 = vmul.f32 %v3952, 0.35355338
  %v3965 = vmul.f32 %v3957, 0.35355338
  %v3966 = vadd.f32 %v3960, %v3227
  %v3967 = vadd.f32 %v3961, %v3228
  %v3968 = vadd.f32 %v3962, %v3229
  %v3969 = vadd.f32 %v3963, %v3230
  %v3970 = vadd.f32 %v3964, %v3231
  %v3971 = vadd.f32 %v3965, %v3232
  %v3972 = vsel %vm3619, %v3966, -inf
  %3973 = vmax.xlane.f32.xlu0 %v3972
  %v3974 = vpop.xlane.xlu0 %3973
  %v3975 = vsel %vm3619, %v3967, -inf
  %3976 = vmax.xlane.f32.xlu0 %v3975
  %v3977 = vpop.xlane.xlu0 %3976
  %v3978 = vsel %vm3619, %v3968, -inf
  %3979 = vmax.xlane.f32.xlu0 %v3978
  %v3980 = vpop.xlane.xlu0 %3979
  %v3981 = vsel %vm3619, %v3969, -inf
  %3982 = vmax.xlane.f32.xlu0 %v3981
  %v3983 = vpop.xlane.xlu0 %3982
  %v3984 = vsel %vm3619, %v3970, -inf
  %3985 = vmax.xlane.f32.xlu0 %v3984
  %v3986 = vpop.xlane.xlu0 %3985
  %v3987 = vsel %vm3619, %v3971, -inf
  %3988 = vmax.xlane.f32.xlu0 %v3987
  %v3989 = vpop.xlane.xlu0 %3988
  %v3990 = vsub.f32 %v3966, %v3974
  %v3991 = vsub.f32 %v3967, %v3977
  %v3992 = vsub.f32 %v3968, %v3980
  %v3993 = vsub.f32 %v3969, %v3983
  %v3994 = vsub.f32 %v3970, %v3986
  %v3995 = vsub.f32 %v3971, %v3989
  %v3996 = vmul.f32 %v3990, 1.442695
  %v3997 = vpow.pop %v3996
  %v3998 = vmul.f32 %v3991, 1.442695
  %v3999 = vpow.pop %v3998
  %v4000 = vmul.f32 %v3992, 1.442695
  %v4001 = vpow.pop %v4000
  %v4002 = vmul.f32 %v3993, 1.442695
  %v4003 = vpow.pop %v4002
  %v4004 = vmul.f32 %v3994, 1.442695
  %v4005 = vpow.pop %v4004
  %v4006 = vmul.f32 %v3995, 1.442695
  %v4007 = vpow.pop %v4006
  %v4008 = vsel %vm3619, %v3997, 0.0
  %4009 = vadd.xlane.f32.xlu0 %v4008
  %v4010 = vpop.xlane.xlu0 %4009
  %v4011 = vsel %vm3619, %v3999, 0.0
  %4012 = vadd.xlane.f32.xlu0 %v4011
  %v4013 = vpop.xlane.xlu0 %4012
  %v4014 = vsel %vm3619, %v4001, 0.0
  %4015 = vadd.xlane.f32.xlu0 %v4014
  %v4016 = vpop.xlane.xlu0 %4015
  %v4017 = vsel %vm3619, %v4003, 0.0
  %4018 = vadd.xlane.f32.xlu0 %v4017
  %v4019 = vpop.xlane.xlu0 %4018
  %v4020 = vsel %vm3619, %v4005, 0.0
  %4021 = vadd.xlane.f32.xlu0 %v4020
  %v4022 = vpop.xlane.xlu0 %4021
  %v4023 = vsel %vm3619, %v4007, 0.0
  %4024 = vadd.xlane.f32.xlu0 %v4023
  %v4025 = vpop.xlane.xlu0 %4024
  %v4026 = vrcp.pop %v4010
  %v4027 = vrcp.pop %v4013
  %v4028 = vrcp.pop %v4016
  %v4029 = vrcp.pop %v4019
  %v4030 = vrcp.pop %v4022
  %v4031 = vrcp.pop %v4025
  %v4032 = vmul.f32 %v3997, %v4026
  %v4033 = vmul.f32 %v3999, %v4027
  %v4034 = vmul.f32 %v4001, %v4028
  %v4035 = vmul.f32 %v4003, %v4029
  %v4036 = vmul.f32 %v4005, %v4030
  %v4037 = vmul.f32 %v4007, %v4031
  %4038 = vrot.lane.b32.xlu0 %v3442, 56
  %v4039 = vpop.permute.xlu0 %4038
  %4040 = vrot.lane.b32.xlu0 %v3447, 56
  %v4041 = vpop.permute.xlu0 %4040
  %4042 = vrot.lane.b32.xlu0 %v3452, 56
  %v4043 = vpop.permute.xlu0 %4042
  %4044 = vrot.lane.b32.xlu0 %v3457, 56
  %v4045 = vpop.permute.xlu0 %4044
  %4046 = vrot.lane.b32.xlu0 %v3462, 56
  %v4047 = vpop.permute.xlu0 %4046
  %4048 = vrot.lane.b32.xlu0 %v3467, 56
  %v4049 = vpop.permute.xlu0 %4048
  %v4057 = vsel %vm3619, %v4032, 0
  %v4060 = vsel %vm3619, %v4033, 0
  %v4063 = vsel %vm3619, %v4034, 0
  %v4066 = vsel %vm3619, %v4035, 0
  %v4069 = vsel %vm3619, %v4036, 0
  %v4072 = vsel %vm3619, %v4037, 0
  %4074 = vmatprep.subr.mxu0 0.0
  %4075 = vmatpush1.msra.mxu0 0.0
  %4076 = vmatprep.subr.mxu0 0.0
  %4077 = vmatpush1.msra.mxu0 0.0
  %4078 = vmatprep.subr.mxu0 0.0
  %4079 = vmatpush1.msra.mxu0 0.0
  %4080 = vmatprep.subr.mxu0 0.0
  %4081 = vmatpush1.msra.mxu0 0.0
  %4082 = vmatprep.subr.mxu0 0.0
  %4083 = vmatpush1.msra.mxu0 0.0
  %4084 = vmatprep.subr.mxu0 0.0
  %4085 = vmatpush1.msra.mxu0 0.0
  %4086 = vmatprep.subr.mxu0 0.0
  %4087 = vmatpush1.msra.mxu0 0.0
  %4088 = vmatprep.subr.mxu0 0.0
  %4089 = vmatpush1.msra.mxu0 0.0
  %4090 = vmatprep.subr.mxu0 0.0
  %4091 = vmatpush1.msra.mxu0 0.0
  %4092 = vmatprep.subr.mxu0 0.0
  %4093 = vmatpush1.msra.mxu0 0.0
  %4094 = vmatprep.subr.mxu0 0.0
  %4095 = vmatpush1.msra.mxu0 %v4049
  %4096 = vmatprep.subr.mxu0 0.0
  %4097 = vmatpush1.msra.mxu0 %v4047
  %4098 = vmatprep.subr.mxu0 0.0
  %4099 = vmatpush1.msra.mxu0 %v4045
  %4100 = vmatprep.subr.mxu0 0.0
  %4101 = vmatpush1.msra.mxu0 %v4043
  %4102 = vmatprep.subr.mxu0 0.0
  %4103 = vmatpush1.msra.mxu0 %v4041
  %4104 = vmatprep.subr.mxu0 0.0
  %4105 = vmatpush1.msra.mxu0 %v4039
  %4106 = vmatprep.subr.mxu0 0.0
  %4107 = vmatpush2.msra.mxu0 0.0
  %4108 = vmatprep.subr.mxu0 0.0
  %4109 = vmatpush2.msra.mxu0 0.0
  %4110 = vmatprep.subr.mxu0 0.0
  %4111 = vmatpush2.msra.mxu0 0.0
  %4112 = vmatprep.subr.mxu0 0.0
  %4113 = vmatpush2.msra.mxu0 0.0
  %4114 = vmatprep.subr.mxu0 0.0
  %4115 = vmatpush2.msra.mxu0 0.0
  %4116 = vmatprep.subr.mxu0 0.0
  %4117 = vmatpush2.msra.mxu0 0.0
  %4118 = vmatprep.subr.mxu0 0.0
  %4119 = vmatpush2.msra.mxu0 0.0
  %4120 = vmatprep.subr.mxu0 0.0
  %4121 = vmatpush2.msra.mxu0 0.0
  %4122 = vmatprep.subr.mxu0 0.0
  %4123 = vmatpush2.msra.mxu0 0.0
  %4124 = vmatprep.subr.mxu0 0.0
  %4125 = vmatpush2.msra.mxu0 0.0
  %4126 = vmatprep.subr.mxu0 0.0
  %4127 = vmatpush2.msra.mxu0 0.0
  %4128 = vmatprep.subr.mxu0 0.0
  %4129 = vmatpush2.msra.mxu0 0.0
  %4130 = vmatprep.subr.mxu0 0.0
  %4131 = vmatpush2.msra.mxu0 0.0
  %4132 = vmatprep.subr.mxu0 0.0
  %4133 = vmatpush2.msra.mxu0 0.0
  %4134 = vmatprep.subr.mxu0 0.0
  %4135 = vmatpush2.msra.mxu0 0.0
  %4136 = vmatprep.subr.mxu0 0.0
  %4137 = vmatpush2.msra.mxu0 0.0
  %4138 = vmatprep.mubr.f32.mxu0 0.0
  %4139 = vmatmul.mubr.f32.gmra.mxu0 %v4057
  %v4140 = vpop.f32.mrf.mxu0
  %v4141 = vadd.f32 0.0, %v4140
  %v4142 = vpop.f32.mrf.mxu0
  %4143 = vmatprep.mubr.f32.mxu0 0.0
  %4144 = vmatmul.mubr.f32.gmra.mxu0 %v4060
  %v4145 = vpop.f32.mrf.mxu0
  %v4146 = vadd.f32 0.0, %v4145
  %v4147 = vpop.f32.mrf.mxu0
  %4148 = vmatprep.mubr.f32.mxu0 0.0
  %4149 = vmatmul.mubr.f32.gmra.mxu0 %v4063
  %v4150 = vpop.f32.mrf.mxu0
  %v4151 = vadd.f32 0.0, %v4150
  %v4152 = vpop.f32.mrf.mxu0
  %4153 = vmatprep.mubr.f32.mxu0 0.0
  %4154 = vmatmul.mubr.f32.gmra.mxu0 %v4066
  %v4155 = vpop.f32.mrf.mxu0
  %v4156 = vadd.f32 0.0, %v4155
  %v4157 = vpop.f32.mrf.mxu0
  %4158 = vmatprep.mubr.f32.mxu0 0.0
  %4159 = vmatmul.mubr.f32.gmra.mxu0 %v4069
  %v4160 = vpop.f32.mrf.mxu0
  %v4161 = vadd.f32 0.0, %v4160
  %v4162 = vpop.f32.mrf.mxu0
  %4163 = vmatprep.mubr.f32.mxu0 0.0
  %4164 = vmatmul.mubr.f32.gmra.mxu0 %v4072
  %v4165 = vpop.f32.mrf.mxu0
  %v4166 = vadd.f32 0.0, %v4165
  %v4167 = vpop.f32.mrf.mxu0
  %4168 = vdwg.mxu0
  %4169 = vrot.lane.b32.xlu0 %v3442, 112
  %v4170 = vpop.permute.xlu0 %4169
  %4171 = vrot.lane.b32.xlu0 %v3447, 112
  %v4172 = vpop.permute.xlu0 %4171
  %4173 = vrot.lane.b32.xlu0 %v3452, 112
  %v4174 = vpop.permute.xlu0 %4173
  %4175 = vrot.lane.b32.xlu0 %v3457, 112
  %v4176 = vpop.permute.xlu0 %4175
  %4177 = vrot.lane.b32.xlu0 %v3462, 112
  %v4178 = vpop.permute.xlu0 %4177
  %4179 = vrot.lane.b32.xlu0 %v3467, 112
  %v4180 = vpop.permute.xlu0 %4179
  %4181 = vrot.lane.b32.xlu0 %v3442, 80
  %v4182 = vpop.permute.xlu0 %4181
  %4183 = vrot.lane.b32.xlu0 %v3447, 80
  %v4184 = vpop.permute.xlu0 %4183
  %4185 = vrot.lane.b32.xlu0 %v3452, 80
  %v4186 = vpop.permute.xlu0 %4185
  %4187 = vrot.lane.b32.xlu0 %v3457, 80
  %v4188 = vpop.permute.xlu0 %4187
  %4189 = vrot.lane.b32.xlu0 %v3462, 80
  %v4190 = vpop.permute.xlu0 %4189
  %4191 = vrot.lane.b32.xlu0 %v3467, 80
  %v4192 = vpop.permute.xlu0 %4191
  %v4193 = vsel %vm317, %v4170, 0
  %v4195 = vsel %vm317, %v4172, 0
  %v4197 = vsel %vm317, %v4174, 0
  %v4199 = vsel %vm317, %v4176, 0
  %v4201 = vsel %vm317, %v4178, 0
  %v4203 = vsel %vm317, %v4180, 0
  %v4205 = vsel %vm317, %v4182, 0
  %v4207 = vsel %vm317, %v4184, 0
  %v4209 = vsel %vm317, %v4186, 0
  %v4211 = vsel %vm317, %v4188, 0
  %v4213 = vsel %vm317, %v4190, 0
  %v4215 = vsel %vm317, %v4192, 0
  %4217 = vmatprep.subr.mxu0 0.0
  %4218 = vmatpush1.xpose.msra.mxu0 0.0
  %4219 = vmatprep.subr.mxu0 0.0
  %4220 = vmatpush1.xpose.msra.mxu0 0.0
  %4221 = vmatprep.subr.mxu0 0.0
  %4222 = vmatpush1.xpose.msra.mxu0 0.0
  %4223 = vmatprep.subr.mxu0 0.0
  %4224 = vmatpush1.xpose.msra.mxu0 0.0
  %4225 = vmatprep.subr.mxu0 0.0
  %4226 = vmatpush1.xpose.msra.mxu0 0.0
  %4227 = vmatprep.subr.mxu0 0.0
  %4228 = vmatpush1.xpose.msra.mxu0 0.0
  %4229 = vmatprep.subr.mxu0 0.0
  %4230 = vmatpush1.xpose.msra.mxu0 0.0
  %4231 = vmatprep.subr.mxu0 0.0
  %4232 = vmatpush1.xpose.msra.mxu0 0.0
  %4233 = vmatprep.subr.mxu0 0.0
  %4234 = vmatpush1.xpose.msra.mxu0 0.0
  %4235 = vmatprep.subr.mxu0 0.0
  %4236 = vmatpush1.xpose.msra.mxu0 0.0
  %4237 = vmatprep.subr.mxu0 0.0
  %4238 = vmatpush1.xpose.msra.mxu0 %v4215
  %4239 = vmatprep.subr.mxu0 0.0
  %4240 = vmatpush1.xpose.msra.mxu0 %v4213
  %4241 = vmatprep.subr.mxu0 0.0
  %4242 = vmatpush1.xpose.msra.mxu0 %v4211
  %4243 = vmatprep.subr.mxu0 0.0
  %4244 = vmatpush1.xpose.msra.mxu0 %v4209
  %4245 = vmatprep.subr.mxu0 0.0
  %4246 = vmatpush1.xpose.msra.mxu0 %v4207
  %4247 = vmatprep.subr.mxu0 0.0
  %4248 = vmatpush1.xpose.msra.mxu0 %v4205
  %4249 = vmatprep.subr.mxu0 0.0
  %4250 = vmatpush2.xpose.msra.mxu0 0.0
  %4251 = vmatprep.subr.mxu0 0.0
  %4252 = vmatpush2.xpose.msra.mxu0 0.0
  %4253 = vmatprep.subr.mxu0 0.0
  %4254 = vmatpush2.xpose.msra.mxu0 0.0
  %4255 = vmatprep.subr.mxu0 0.0
  %4256 = vmatpush2.xpose.msra.mxu0 0.0
  %4257 = vmatprep.subr.mxu0 0.0
  %4258 = vmatpush2.xpose.msra.mxu0 0.0
  %4259 = vmatprep.subr.mxu0 0.0
  %4260 = vmatpush2.xpose.msra.mxu0 0.0
  %4261 = vmatprep.subr.mxu0 0.0
  %4262 = vmatpush2.xpose.msra.mxu0 0.0
  %4263 = vmatprep.subr.mxu0 0.0
  %4264 = vmatpush2.xpose.msra.mxu0 0.0
  %4265 = vmatprep.subr.mxu0 0.0
  %4266 = vmatpush2.xpose.msra.mxu0 0.0
  %4267 = vmatprep.subr.mxu0 0.0
  %4268 = vmatpush2.xpose.msra.mxu0 0.0
  %4269 = vmatprep.subr.mxu0 0.0
  %4270 = vmatpush2.xpose.msra.mxu0 0.0
  %4271 = vmatprep.subr.mxu0 0.0
  %4272 = vmatpush2.xpose.msra.mxu0 0.0
  %4273 = vmatprep.subr.mxu0 0.0
  %4274 = vmatpush2.xpose.msra.mxu0 0.0
  %4275 = vmatprep.subr.mxu0 0.0
  %4276 = vmatpush2.xpose.msra.mxu0 0.0
  %4277 = vmatprep.subr.mxu0 0.0
  %4278 = vmatpush2.xpose.msra.mxu0 0.0
  %4279 = vmatprep.subr.mxu0 0.0
  %4280 = vmatpush2.xpose.msra.mxu0 0.0
  %4281 = vmatprep.mubr.f32.mxu0 0.0
  %4282 = vmatmul.mubr.f32.gmra.mxu0 %v4193
  %v4283 = vpop.f32.mrf.mxu0
  %v4284 = vadd.f32 0.0, %v4283
  %v4285 = vpop.f32.mrf.mxu0
  %4286 = vmatprep.mubr.f32.mxu0 0.0
  %4287 = vmatmul.mubr.f32.gmra.mxu0 %v4195
  %v4288 = vpop.f32.mrf.mxu0
  %v4289 = vadd.f32 0.0, %v4288
  %v4290 = vpop.f32.mrf.mxu0
  %4291 = vmatprep.mubr.f32.mxu0 0.0
  %4292 = vmatmul.mubr.f32.gmra.mxu0 %v4197
  %v4293 = vpop.f32.mrf.mxu0
  %v4294 = vadd.f32 0.0, %v4293
  %v4295 = vpop.f32.mrf.mxu0
  %4296 = vmatprep.mubr.f32.mxu0 0.0
  %4297 = vmatmul.mubr.f32.gmra.mxu0 %v4199
  %v4298 = vpop.f32.mrf.mxu0
  %v4299 = vadd.f32 0.0, %v4298
  %v4300 = vpop.f32.mrf.mxu0
  %4301 = vmatprep.mubr.f32.mxu0 0.0
  %4302 = vmatmul.mubr.f32.gmra.mxu0 %v4201
  %v4303 = vpop.f32.mrf.mxu0
  %v4304 = vadd.f32 0.0, %v4303
  %v4305 = vpop.f32.mrf.mxu0
  %4306 = vmatprep.mubr.f32.mxu0 0.0
  %4307 = vmatmul.mubr.f32.gmra.mxu0 %v4203
  %v4308 = vpop.f32.mrf.mxu0
  %v4309 = vadd.f32 0.0, %v4308
  %v4310 = vpop.f32.mrf.mxu0
  %4311 = vdwg.mxu0
  %v4312 = vmul.f32 %v4284, 0.35355338
  %v4313 = vmul.f32 %v4289, 0.35355338
  %v4314 = vmul.f32 %v4294, 0.35355338
  %v4315 = vmul.f32 %v4299, 0.35355338
  %v4316 = vmul.f32 %v4304, 0.35355338
  %v4317 = vmul.f32 %v4309, 0.35355338
  %v4318 = vadd.f32 %v4312, %v3227
  %v4319 = vadd.f32 %v4313, %v3228
  %v4320 = vadd.f32 %v4314, %v3229
  %v4321 = vadd.f32 %v4315, %v3230
  %v4322 = vadd.f32 %v4316, %v3231
  %v4323 = vadd.f32 %v4317, %v3232
  %v4324 = vsel %vm3619, %v4318, -inf
  %4325 = vmax.xlane.f32.xlu0 %v4324
  %v4326 = vpop.xlane.xlu0 %4325
  %v4327 = vsel %vm3619, %v4319, -inf
  %4328 = vmax.xlane.f32.xlu0 %v4327
  %v4329 = vpop.xlane.xlu0 %4328
  %v4330 = vsel %vm3619, %v4320, -inf
  %4331 = vmax.xlane.f32.xlu0 %v4330
  %v4332 = vpop.xlane.xlu0 %4331
  %v4333 = vsel %vm3619, %v4321, -inf
  %4334 = vmax.xlane.f32.xlu0 %v4333
  %v4335 = vpop.xlane.xlu0 %4334
  %v4336 = vsel %vm3619, %v4322, -inf
  %4337 = vmax.xlane.f32.xlu0 %v4336
  %v4338 = vpop.xlane.xlu0 %4337
  %v4339 = vsel %vm3619, %v4323, -inf
  %4340 = vmax.xlane.f32.xlu0 %v4339
  %v4341 = vpop.xlane.xlu0 %4340
  %v4342 = vsub.f32 %v4318, %v4326
  %v4343 = vsub.f32 %v4319, %v4329
  %v4344 = vsub.f32 %v4320, %v4332
  %v4345 = vsub.f32 %v4321, %v4335
  %v4346 = vsub.f32 %v4322, %v4338
  %v4347 = vsub.f32 %v4323, %v4341
  %v4348 = vmul.f32 %v4342, 1.442695
  %v4349 = vpow.pop %v4348
  %v4350 = vmul.f32 %v4343, 1.442695
  %v4351 = vpow.pop %v4350
  %v4352 = vmul.f32 %v4344, 1.442695
  %v4353 = vpow.pop %v4352
  %v4354 = vmul.f32 %v4345, 1.442695
  %v4355 = vpow.pop %v4354
  %v4356 = vmul.f32 %v4346, 1.442695
  %v4357 = vpow.pop %v4356
  %v4358 = vmul.f32 %v4347, 1.442695
  %v4359 = vpow.pop %v4358
  %v4360 = vsel %vm3619, %v4349, 0.0
  %4361 = vadd.xlane.f32.xlu0 %v4360
  %v4362 = vpop.xlane.xlu0 %4361
  %v4363 = vsel %vm3619, %v4351, 0.0
  %4364 = vadd.xlane.f32.xlu0 %v4363
  %v4365 = vpop.xlane.xlu0 %4364
  %v4366 = vsel %vm3619, %v4353, 0.0
  %4367 = vadd.xlane.f32.xlu0 %v4366
  %v4368 = vpop.xlane.xlu0 %4367
  %v4369 = vsel %vm3619, %v4355, 0.0
  %4370 = vadd.xlane.f32.xlu0 %v4369
  %v4371 = vpop.xlane.xlu0 %4370
  %v4372 = vsel %vm3619, %v4357, 0.0
  %4373 = vadd.xlane.f32.xlu0 %v4372
  %v4374 = vpop.xlane.xlu0 %4373
  %v4375 = vsel %vm3619, %v4359, 0.0
  %4376 = vadd.xlane.f32.xlu0 %v4375
  %v4377 = vpop.xlane.xlu0 %4376
  %v4378 = vrcp.pop %v4362
  %v4379 = vrcp.pop %v4365
  %v4380 = vrcp.pop %v4368
  %v4381 = vrcp.pop %v4371
  %v4382 = vrcp.pop %v4374
  %v4383 = vrcp.pop %v4377
  %v4384 = vmul.f32 %v4349, %v4378
  %v4385 = vmul.f32 %v4351, %v4379
  %v4386 = vmul.f32 %v4353, %v4380
  %v4387 = vmul.f32 %v4355, %v4381
  %v4388 = vmul.f32 %v4357, %v4382
  %v4389 = vmul.f32 %v4359, %v4383
  %4390 = vrot.lane.b32.xlu0 %v3442, 48
  %v4391 = vpop.permute.xlu0 %4390
  %4392 = vrot.lane.b32.xlu0 %v3447, 48
  %v4393 = vpop.permute.xlu0 %4392
  %4394 = vrot.lane.b32.xlu0 %v3452, 48
  %v4395 = vpop.permute.xlu0 %4394
  %4396 = vrot.lane.b32.xlu0 %v3457, 48
  %v4397 = vpop.permute.xlu0 %4396
  %4398 = vrot.lane.b32.xlu0 %v3462, 48
  %v4399 = vpop.permute.xlu0 %4398
  %4400 = vrot.lane.b32.xlu0 %v3467, 48
  %v4401 = vpop.permute.xlu0 %4400
  %v4409 = vsel %vm3619, %v4384, 0
  %v4412 = vsel %vm3619, %v4385, 0
  %v4415 = vsel %vm3619, %v4386, 0
  %v4418 = vsel %vm3619, %v4387, 0
  %v4421 = vsel %vm3619, %v4388, 0
  %v4424 = vsel %vm3619, %v4389, 0
  %4426 = vmatprep.subr.mxu0 0.0
  %4427 = vmatpush1.msra.mxu0 0.0
  %4428 = vmatprep.subr.mxu0 0.0
  %4429 = vmatpush1.msra.mxu0 0.0
  %4430 = vmatprep.subr.mxu0 0.0
  %4431 = vmatpush1.msra.mxu0 0.0
  %4432 = vmatprep.subr.mxu0 0.0
  %4433 = vmatpush1.msra.mxu0 0.0
  %4434 = vmatprep.subr.mxu0 0.0
  %4435 = vmatpush1.msra.mxu0 0.0
  %4436 = vmatprep.subr.mxu0 0.0
  %4437 = vmatpush1.msra.mxu0 0.0
  %4438 = vmatprep.subr.mxu0 0.0
  %4439 = vmatpush1.msra.mxu0 0.0
  %4440 = vmatprep.subr.mxu0 0.0
  %4441 = vmatpush1.msra.mxu0 0.0
  %4442 = vmatprep.subr.mxu0 0.0
  %4443 = vmatpush1.msra.mxu0 0.0
  %4444 = vmatprep.subr.mxu0 0.0
  %4445 = vmatpush1.msra.mxu0 0.0
  %4446 = vmatprep.subr.mxu0 0.0
  %4447 = vmatpush1.msra.mxu0 %v4401
  %4448 = vmatprep.subr.mxu0 0.0
  %4449 = vmatpush1.msra.mxu0 %v4399
  %4450 = vmatprep.subr.mxu0 0.0
  %4451 = vmatpush1.msra.mxu0 %v4397
  %4452 = vmatprep.subr.mxu0 0.0
  %4453 = vmatpush1.msra.mxu0 %v4395
  %4454 = vmatprep.subr.mxu0 0.0
  %4455 = vmatpush1.msra.mxu0 %v4393
  %4456 = vmatprep.subr.mxu0 0.0
  %4457 = vmatpush1.msra.mxu0 %v4391
  %4458 = vmatprep.subr.mxu0 0.0
  %4459 = vmatpush2.msra.mxu0 0.0
  %4460 = vmatprep.subr.mxu0 0.0
  %4461 = vmatpush2.msra.mxu0 0.0
  %4462 = vmatprep.subr.mxu0 0.0
  %4463 = vmatpush2.msra.mxu0 0.0
  %4464 = vmatprep.subr.mxu0 0.0
  %4465 = vmatpush2.msra.mxu0 0.0
  %4466 = vmatprep.subr.mxu0 0.0
  %4467 = vmatpush2.msra.mxu0 0.0
  %4468 = vmatprep.subr.mxu0 0.0
  %4469 = vmatpush2.msra.mxu0 0.0
  %4470 = vmatprep.subr.mxu0 0.0
  %4471 = vmatpush2.msra.mxu0 0.0
  %4472 = vmatprep.subr.mxu0 0.0
  %4473 = vmatpush2.msra.mxu0 0.0
  %4474 = vmatprep.subr.mxu0 0.0
  %4475 = vmatpush2.msra.mxu0 0.0
  %4476 = vmatprep.subr.mxu0 0.0
  %4477 = vmatpush2.msra.mxu0 0.0
  %4478 = vmatprep.subr.mxu0 0.0
  %4479 = vmatpush2.msra.mxu0 0.0
  %4480 = vmatprep.subr.mxu0 0.0
  %4481 = vmatpush2.msra.mxu0 0.0
  %4482 = vmatprep.subr.mxu0 0.0
  %4483 = vmatpush2.msra.mxu0 0.0
  %4484 = vmatprep.subr.mxu0 0.0
  %4485 = vmatpush2.msra.mxu0 0.0
  %4486 = vmatprep.subr.mxu0 0.0
  %4487 = vmatpush2.msra.mxu0 0.0
  %4488 = vmatprep.subr.mxu0 0.0
  %4489 = vmatpush2.msra.mxu0 0.0
  %4490 = vmatprep.mubr.f32.mxu0 0.0
  %4491 = vmatmul.mubr.f32.gmra.mxu0 %v4409
  %v4492 = vpop.f32.mrf.mxu0
  %v4493 = vadd.f32 0.0, %v4492
  %v4494 = vpop.f32.mrf.mxu0
  %4495 = vmatprep.mubr.f32.mxu0 0.0
  %4496 = vmatmul.mubr.f32.gmra.mxu0 %v4412
  %v4497 = vpop.f32.mrf.mxu0
  %v4498 = vadd.f32 0.0, %v4497
  %v4499 = vpop.f32.mrf.mxu0
  %4500 = vmatprep.mubr.f32.mxu0 0.0
  %4501 = vmatmul.mubr.f32.gmra.mxu0 %v4415
  %v4502 = vpop.f32.mrf.mxu0
  %v4503 = vadd.f32 0.0, %v4502
  %v4504 = vpop.f32.mrf.mxu0
  %4505 = vmatprep.mubr.f32.mxu0 0.0
  %4506 = vmatmul.mubr.f32.gmra.mxu0 %v4418
  %v4507 = vpop.f32.mrf.mxu0
  %v4508 = vadd.f32 0.0, %v4507
  %v4509 = vpop.f32.mrf.mxu0
  %4510 = vmatprep.mubr.f32.mxu0 0.0
  %4511 = vmatmul.mubr.f32.gmra.mxu0 %v4421
  %v4512 = vpop.f32.mrf.mxu0
  %v4513 = vadd.f32 0.0, %v4512
  %v4514 = vpop.f32.mrf.mxu0
  %4515 = vmatprep.mubr.f32.mxu0 0.0
  %4516 = vmatmul.mubr.f32.gmra.mxu0 %v4424
  %v4517 = vpop.f32.mrf.mxu0
  %v4518 = vadd.f32 0.0, %v4517
  %v4519 = vpop.f32.mrf.mxu0
  %4520 = vdwg.mxu0
  %4521 = vrot.lane.b32.xlu0 %v3442, 104
  %v4522 = vpop.permute.xlu0 %4521
  %4523 = vrot.lane.b32.xlu0 %v3447, 104
  %v4524 = vpop.permute.xlu0 %4523
  %4525 = vrot.lane.b32.xlu0 %v3452, 104
  %v4526 = vpop.permute.xlu0 %4525
  %4527 = vrot.lane.b32.xlu0 %v3457, 104
  %v4528 = vpop.permute.xlu0 %4527
  %4529 = vrot.lane.b32.xlu0 %v3462, 104
  %v4530 = vpop.permute.xlu0 %4529
  %4531 = vrot.lane.b32.xlu0 %v3467, 104
  %v4532 = vpop.permute.xlu0 %4531
  %4533 = vrot.lane.b32.xlu0 %v3442, 72
  %v4534 = vpop.permute.xlu0 %4533
  %4535 = vrot.lane.b32.xlu0 %v3447, 72
  %v4536 = vpop.permute.xlu0 %4535
  %4537 = vrot.lane.b32.xlu0 %v3452, 72
  %v4538 = vpop.permute.xlu0 %4537
  %4539 = vrot.lane.b32.xlu0 %v3457, 72
  %v4540 = vpop.permute.xlu0 %4539
  %4541 = vrot.lane.b32.xlu0 %v3462, 72
  %v4542 = vpop.permute.xlu0 %4541
  %4543 = vrot.lane.b32.xlu0 %v3467, 72
  %v4544 = vpop.permute.xlu0 %4543
  %v4545 = vsel %vm317, %v4522, 0
  %v4547 = vsel %vm317, %v4524, 0
  %v4549 = vsel %vm317, %v4526, 0
  %v4551 = vsel %vm317, %v4528, 0
  %v4553 = vsel %vm317, %v4530, 0
  %v4555 = vsel %vm317, %v4532, 0
  %v4557 = vsel %vm317, %v4534, 0
  %v4559 = vsel %vm317, %v4536, 0
  %v4561 = vsel %vm317, %v4538, 0
  %v4563 = vsel %vm317, %v4540, 0
  %v4565 = vsel %vm317, %v4542, 0
  %v4567 = vsel %vm317, %v4544, 0
  %4569 = vmatprep.subr.mxu0 0.0
  %4570 = vmatpush1.xpose.msra.mxu0 0.0
  %4571 = vmatprep.subr.mxu0 0.0
  %4572 = vmatpush1.xpose.msra.mxu0 0.0
  %4573 = vmatprep.subr.mxu0 0.0
  %4574 = vmatpush1.xpose.msra.mxu0 0.0
  %4575 = vmatprep.subr.mxu0 0.0
  %4576 = vmatpush1.xpose.msra.mxu0 0.0
  %4577 = vmatprep.subr.mxu0 0.0
  %4578 = vmatpush1.xpose.msra.mxu0 0.0
  %4579 = vmatprep.subr.mxu0 0.0
  %4580 = vmatpush1.xpose.msra.mxu0 0.0
  %4581 = vmatprep.subr.mxu0 0.0
  %4582 = vmatpush1.xpose.msra.mxu0 0.0
  %4583 = vmatprep.subr.mxu0 0.0
  %4584 = vmatpush1.xpose.msra.mxu0 0.0
  %4585 = vmatprep.subr.mxu0 0.0
  %4586 = vmatpush1.xpose.msra.mxu0 0.0
  %4587 = vmatprep.subr.mxu0 0.0
  %4588 = vmatpush1.xpose.msra.mxu0 0.0
  %4589 = vmatprep.subr.mxu0 0.0
  %4590 = vmatpush1.xpose.msra.mxu0 %v4567
  %4591 = vmatprep.subr.mxu0 0.0
  %4592 = vmatpush1.xpose.msra.mxu0 %v4565
  %4593 = vmatprep.subr.mxu0 0.0
  %4594 = vmatpush1.xpose.msra.mxu0 %v4563
  %4595 = vmatprep.subr.mxu0 0.0
  %4596 = vmatpush1.xpose.msra.mxu0 %v4561
  %4597 = vmatprep.subr.mxu0 0.0
  %4598 = vmatpush1.xpose.msra.mxu0 %v4559
  %4599 = vmatprep.subr.mxu0 0.0
  %4600 = vmatpush1.xpose.msra.mxu0 %v4557
  %4601 = vmatprep.subr.mxu0 0.0
  %4602 = vmatpush2.xpose.msra.mxu0 0.0
  %4603 = vmatprep.subr.mxu0 0.0
  %4604 = vmatpush2.xpose.msra.mxu0 0.0
  %4605 = vmatprep.subr.mxu0 0.0
  %4606 = vmatpush2.xpose.msra.mxu0 0.0
  %4607 = vmatprep.subr.mxu0 0.0
  %4608 = vmatpush2.xpose.msra.mxu0 0.0
  %4609 = vmatprep.subr.mxu0 0.0
  %4610 = vmatpush2.xpose.msra.mxu0 0.0
  %4611 = vmatprep.subr.mxu0 0.0
  %4612 = vmatpush2.xpose.msra.mxu0 0.0
  %4613 = vmatprep.subr.mxu0 0.0
  %4614 = vmatpush2.xpose.msra.mxu0 0.0
  %4615 = vmatprep.subr.mxu0 0.0
  %4616 = vmatpush2.xpose.msra.mxu0 0.0
  %4617 = vmatprep.subr.mxu0 0.0
  %4618 = vmatpush2.xpose.msra.mxu0 0.0
  %4619 = vmatprep.subr.mxu0 0.0
  %4620 = vmatpush2.xpose.msra.mxu0 0.0
  %4621 = vmatprep.subr.mxu0 0.0
  %4622 = vmatpush2.xpose.msra.mxu0 0.0
  %4623 = vmatprep.subr.mxu0 0.0
  %4624 = vmatpush2.xpose.msra.mxu0 0.0
  %4625 = vmatprep.subr.mxu0 0.0
  %4626 = vmatpush2.xpose.msra.mxu0 0.0
  %4627 = vmatprep.subr.mxu0 0.0
  %4628 = vmatpush2.xpose.msra.mxu0 0.0
  %4629 = vmatprep.subr.mxu0 0.0
  %4630 = vmatpush2.xpose.msra.mxu0 0.0
  %4631 = vmatprep.subr.mxu0 0.0
  %4632 = vmatpush2.xpose.msra.mxu0 0.0
  %4633 = vmatprep.mubr.f32.mxu0 0.0
  %4634 = vmatmul.mubr.f32.gmra.mxu0 %v4545
  %v4635 = vpop.f32.mrf.mxu0
  %v4636 = vadd.f32 0.0, %v4635
  %v4637 = vpop.f32.mrf.mxu0
  %4638 = vmatprep.mubr.f32.mxu0 0.0
  %4639 = vmatmul.mubr.f32.gmra.mxu0 %v4547
  %v4640 = vpop.f32.mrf.mxu0
  %v4641 = vadd.f32 0.0, %v4640
  %v4642 = vpop.f32.mrf.mxu0
  %4643 = vmatprep.mubr.f32.mxu0 0.0
  %4644 = vmatmul.mubr.f32.gmra.mxu0 %v4549
  %v4645 = vpop.f32.mrf.mxu0
  %v4646 = vadd.f32 0.0, %v4645
  %v4647 = vpop.f32.mrf.mxu0
  %4648 = vmatprep.mubr.f32.mxu0 0.0
  %4649 = vmatmul.mubr.f32.gmra.mxu0 %v4551
  %v4650 = vpop.f32.mrf.mxu0
  %v4651 = vadd.f32 0.0, %v4650
  %v4652 = vpop.f32.mrf.mxu0
  %4653 = vmatprep.mubr.f32.mxu0 0.0
  %4654 = vmatmul.mubr.f32.gmra.mxu0 %v4553
  %v4655 = vpop.f32.mrf.mxu0
  %v4656 = vadd.f32 0.0, %v4655
  %v4657 = vpop.f32.mrf.mxu0
  %4658 = vmatprep.mubr.f32.mxu0 0.0
  %4659 = vmatmul.mubr.f32.gmra.mxu0 %v4555
  %v4660 = vpop.f32.mrf.mxu0
  %v4661 = vadd.f32 0.0, %v4660
  %v4662 = vpop.f32.mrf.mxu0
  %4663 = vdwg.mxu0
  %v4664 = vmul.f32 %v4636, 0.35355338
  %v4665 = vmul.f32 %v4641, 0.35355338
  %v4666 = vmul.f32 %v4646, 0.35355338
  %v4667 = vmul.f32 %v4651, 0.35355338
  %v4668 = vmul.f32 %v4656, 0.35355338
  %v4669 = vmul.f32 %v4661, 0.35355338
  %v4670 = vadd.f32 %v4664, %v3227
  %v4671 = vadd.f32 %v4665, %v3228
  %v4672 = vadd.f32 %v4666, %v3229
  %v4673 = vadd.f32 %v4667, %v3230
  %v4674 = vadd.f32 %v4668, %v3231
  %v4675 = vadd.f32 %v4669, %v3232
  %v4676 = vsel %vm3619, %v4670, -inf
  %4677 = vmax.xlane.f32.xlu0 %v4676
  %v4678 = vpop.xlane.xlu0 %4677
  %v4679 = vsel %vm3619, %v4671, -inf
  %4680 = vmax.xlane.f32.xlu0 %v4679
  %v4681 = vpop.xlane.xlu0 %4680
  %v4682 = vsel %vm3619, %v4672, -inf
  %4683 = vmax.xlane.f32.xlu0 %v4682
  %v4684 = vpop.xlane.xlu0 %4683
  %v4685 = vsel %vm3619, %v4673, -inf
  %4686 = vmax.xlane.f32.xlu0 %v4685
  %v4687 = vpop.xlane.xlu0 %4686
  %v4688 = vsel %vm3619, %v4674, -inf
  %4689 = vmax.xlane.f32.xlu0 %v4688
  %v4690 = vpop.xlane.xlu0 %4689
  %v4691 = vsel %vm3619, %v4675, -inf
  %4692 = vmax.xlane.f32.xlu0 %v4691
  %v4693 = vpop.xlane.xlu0 %4692
  %v4694 = vsub.f32 %v4670, %v4678
  %v4695 = vsub.f32 %v4671, %v4681
  %v4696 = vsub.f32 %v4672, %v4684
  %v4697 = vsub.f32 %v4673, %v4687
  %v4698 = vsub.f32 %v4674, %v4690
  %v4699 = vsub.f32 %v4675, %v4693
  %v4700 = vmul.f32 %v4694, 1.442695
  %v4701 = vpow.pop %v4700
  %v4702 = vmul.f32 %v4695, 1.442695
  %v4703 = vpow.pop %v4702
  %v4704 = vmul.f32 %v4696, 1.442695
  %v4705 = vpow.pop %v4704
  %v4706 = vmul.f32 %v4697, 1.442695
  %v4707 = vpow.pop %v4706
  %v4708 = vmul.f32 %v4698, 1.442695
  %v4709 = vpow.pop %v4708
  %v4710 = vmul.f32 %v4699, 1.442695
  %v4711 = vpow.pop %v4710
  %v4712 = vsel %vm3619, %v4701, 0.0
  %4713 = vadd.xlane.f32.xlu0 %v4712
  %v4714 = vpop.xlane.xlu0 %4713
  %v4715 = vsel %vm3619, %v4703, 0.0
  %4716 = vadd.xlane.f32.xlu0 %v4715
  %v4717 = vpop.xlane.xlu0 %4716
  %v4718 = vsel %vm3619, %v4705, 0.0
  %4719 = vadd.xlane.f32.xlu0 %v4718
  %v4720 = vpop.xlane.xlu0 %4719
  %v4721 = vsel %vm3619, %v4707, 0.0
  %4722 = vadd.xlane.f32.xlu0 %v4721
  %v4723 = vpop.xlane.xlu0 %4722
  %v4724 = vsel %vm3619, %v4709, 0.0
  %4725 = vadd.xlane.f32.xlu0 %v4724
  %v4726 = vpop.xlane.xlu0 %4725
  %v4727 = vsel %vm3619, %v4711, 0.0
  %4728 = vadd.xlane.f32.xlu0 %v4727
  %v4729 = vpop.xlane.xlu0 %4728
  %v4730 = vrcp.pop %v4714
  %v4731 = vrcp.pop %v4717
  %v4732 = vrcp.pop %v4720
  %v4733 = vrcp.pop %v4723
  %v4734 = vrcp.pop %v4726
  %v4735 = vrcp.pop %v4729
  %v4736 = vmul.f32 %v4701, %v4730
  %v4737 = vmul.f32 %v4703, %v4731
  %v4738 = vmul.f32 %v4705, %v4732
  %v4739 = vmul.f32 %v4707, %v4733
  %v4740 = vmul.f32 %v4709, %v4734
  %v4741 = vmul.f32 %v4711, %v4735
  %4742 = vrot.lane.b32.xlu0 %v3442, 40
  %v4743 = vpop.permute.xlu0 %4742
  %4744 = vrot.lane.b32.xlu0 %v3447, 40
  %v4745 = vpop.permute.xlu0 %4744
  %4746 = vrot.lane.b32.xlu0 %v3452, 40
  %v4747 = vpop.permute.xlu0 %4746
  %4748 = vrot.lane.b32.xlu0 %v3457, 40
  %v4749 = vpop.permute.xlu0 %4748
  %4750 = vrot.lane.b32.xlu0 %v3462, 40
  %v4751 = vpop.permute.xlu0 %4750
  %4752 = vrot.lane.b32.xlu0 %v3467, 40
  %v4753 = vpop.permute.xlu0 %4752
  %v4761 = vsel %vm3619, %v4736, 0
  %v4764 = vsel %vm3619, %v4737, 0
  %v4767 = vsel %vm3619, %v4738, 0
  %v4770 = vsel %vm3619, %v4739, 0
  %v4773 = vsel %vm3619, %v4740, 0
  %v4776 = vsel %vm3619, %v4741, 0
  %4778 = vmatprep.subr.mxu0 0.0
  %4779 = vmatpush1.msra.mxu0 0.0
  %4780 = vmatprep.subr.mxu0 0.0
  %4781 = vmatpush1.msra.mxu0 0.0
  %4782 = vmatprep.subr.mxu0 0.0
  %4783 = vmatpush1.msra.mxu0 0.0
  %4784 = vmatprep.subr.mxu0 0.0
  %4785 = vmatpush1.msra.mxu0 0.0
  %4786 = vmatprep.subr.mxu0 0.0
  %4787 = vmatpush1.msra.mxu0 0.0
  %4788 = vmatprep.subr.mxu0 0.0
  %4789 = vmatpush1.msra.mxu0 0.0
  %4790 = vmatprep.subr.mxu0 0.0
  %4791 = vmatpush1.msra.mxu0 0.0
  %4792 = vmatprep.subr.mxu0 0.0
  %4793 = vmatpush1.msra.mxu0 0.0
  %4794 = vmatprep.subr.mxu0 0.0
  %4795 = vmatpush1.msra.mxu0 0.0
  %4796 = vmatprep.subr.mxu0 0.0
  %4797 = vmatpush1.msra.mxu0 0.0
  %4798 = vmatprep.subr.mxu0 0.0
  %4799 = vmatpush1.msra.mxu0 %v4753
  %4800 = vmatprep.subr.mxu0 0.0
  %4801 = vmatpush1.msra.mxu0 %v4751
  %4802 = vmatprep.subr.mxu0 0.0
  %4803 = vmatpush1.msra.mxu0 %v4749
  %4804 = vmatprep.subr.mxu0 0.0
  %4805 = vmatpush1.msra.mxu0 %v4747
  %4806 = vmatprep.subr.mxu0 0.0
  %4807 = vmatpush1.msra.mxu0 %v4745
  %4808 = vmatprep.subr.mxu0 0.0
  %4809 = vmatpush1.msra.mxu0 %v4743
  %4810 = vmatprep.subr.mxu0 0.0
  %4811 = vmatpush2.msra.mxu0 0.0
  %4812 = vmatprep.subr.mxu0 0.0
  %4813 = vmatpush2.msra.mxu0 0.0
  %4814 = vmatprep.subr.mxu0 0.0
  %4815 = vmatpush2.msra.mxu0 0.0
  %4816 = vmatprep.subr.mxu0 0.0
  %4817 = vmatpush2.msra.mxu0 0.0
  %4818 = vmatprep.subr.mxu0 0.0
  %4819 = vmatpush2.msra.mxu0 0.0
  %4820 = vmatprep.subr.mxu0 0.0
  %4821 = vmatpush2.msra.mxu0 0.0
  %4822 = vmatprep.subr.mxu0 0.0
  %4823 = vmatpush2.msra.mxu0 0.0
  %4824 = vmatprep.subr.mxu0 0.0
  %4825 = vmatpush2.msra.mxu0 0.0
  %4826 = vmatprep.subr.mxu0 0.0
  %4827 = vmatpush2.msra.mxu0 0.0
  %4828 = vmatprep.subr.mxu0 0.0
  %4829 = vmatpush2.msra.mxu0 0.0
  %4830 = vmatprep.subr.mxu0 0.0
  %4831 = vmatpush2.msra.mxu0 0.0
  %4832 = vmatprep.subr.mxu0 0.0
  %4833 = vmatpush2.msra.mxu0 0.0
  %4834 = vmatprep.subr.mxu0 0.0
  %4835 = vmatpush2.msra.mxu0 0.0
  %4836 = vmatprep.subr.mxu0 0.0
  %4837 = vmatpush2.msra.mxu0 0.0
  %4838 = vmatprep.subr.mxu0 0.0
  %4839 = vmatpush2.msra.mxu0 0.0
  %4840 = vmatprep.subr.mxu0 0.0
  %4841 = vmatpush2.msra.mxu0 0.0
  %4842 = vmatprep.mubr.f32.mxu0 0.0
  %4843 = vmatmul.mubr.f32.gmra.mxu0 %v4761
  %v4844 = vpop.f32.mrf.mxu0
  %v4845 = vadd.f32 0.0, %v4844
  %v4846 = vpop.f32.mrf.mxu0
  %4847 = vmatprep.mubr.f32.mxu0 0.0
  %4848 = vmatmul.mubr.f32.gmra.mxu0 %v4764
  %v4849 = vpop.f32.mrf.mxu0
  %v4850 = vadd.f32 0.0, %v4849
  %v4851 = vpop.f32.mrf.mxu0
  %4852 = vmatprep.mubr.f32.mxu0 0.0
  %4853 = vmatmul.mubr.f32.gmra.mxu0 %v4767
  %v4854 = vpop.f32.mrf.mxu0
  %v4855 = vadd.f32 0.0, %v4854
  %v4856 = vpop.f32.mrf.mxu0
  %4857 = vmatprep.mubr.f32.mxu0 0.0
  %4858 = vmatmul.mubr.f32.gmra.mxu0 %v4770
  %v4859 = vpop.f32.mrf.mxu0
  %v4860 = vadd.f32 0.0, %v4859
  %v4861 = vpop.f32.mrf.mxu0
  %4862 = vmatprep.mubr.f32.mxu0 0.0
  %4863 = vmatmul.mubr.f32.gmra.mxu0 %v4773
  %v4864 = vpop.f32.mrf.mxu0
  %v4865 = vadd.f32 0.0, %v4864
  %v4866 = vpop.f32.mrf.mxu0
  %4867 = vmatprep.mubr.f32.mxu0 0.0
  %4868 = vmatmul.mubr.f32.gmra.mxu0 %v4776
  %v4869 = vpop.f32.mrf.mxu0
  %v4870 = vadd.f32 0.0, %v4869
  %v4871 = vpop.f32.mrf.mxu0
  %4872 = vdwg.mxu0
  %4879 = vrot.lane.b32.xlu0 %v4141, 8
  %v4880 = vpop.permute.xlu0 %4879
  %4881 = vrot.lane.b32.xlu0 %v4146, 8
  %v4882 = vpop.permute.xlu0 %4881
  %4883 = vrot.lane.b32.xlu0 %v4151, 8
  %v4884 = vpop.permute.xlu0 %4883
  %4885 = vrot.lane.b32.xlu0 %v4156, 8
  %v4886 = vpop.permute.xlu0 %4885
  %4887 = vrot.lane.b32.xlu0 %v4161, 8
  %v4888 = vpop.permute.xlu0 %4887
  %4889 = vrot.lane.b32.xlu0 %v4166, 8
  %v4890 = vpop.permute.xlu0 %4889
  %4903 = vrot.lane.b32.xlu0 %v4493, 16
  %v4904 = vpop.permute.xlu0 %4903
  %4905 = vrot.lane.b32.xlu0 %v4498, 16
  %v4906 = vpop.permute.xlu0 %4905
  %4907 = vrot.lane.b32.xlu0 %v4503, 16
  %v4908 = vpop.permute.xlu0 %4907
  %4909 = vrot.lane.b32.xlu0 %v4508, 16
  %v4910 = vpop.permute.xlu0 %4909
  %4911 = vrot.lane.b32.xlu0 %v4513, 16
  %v4912 = vpop.permute.xlu0 %4911
  %4913 = vrot.lane.b32.xlu0 %v4518, 16
  %v4914 = vpop.permute.xlu0 %4913
  %4927 = vrot.lane.b32.xlu0 %v4845, 24
  %v4928 = vpop.permute.xlu0 %4927
  %4929 = vrot.lane.b32.xlu0 %v4850, 24
  %v4930 = vpop.permute.xlu0 %4929
  %4931 = vrot.lane.b32.xlu0 %v4855, 24
  %v4932 = vpop.permute.xlu0 %4931
  %4933 = vrot.lane.b32.xlu0 %v4860, 24
  %v4934 = vpop.permute.xlu0 %4933
  %4935 = vrot.lane.b32.xlu0 %v4865, 24
  %v4936 = vpop.permute.xlu0 %4935
  %4937 = vrot.lane.b32.xlu0 %v4870, 24
  %v4938 = vpop.permute.xlu0 %4937
  %v4945 = vsel %vm317, %v3789, %v4880
  %v4946 = vsel %vm317, %v3794, %v4882
  %v4947 = vsel %vm317, %v3799, %v4884
  %v4948 = vsel %vm317, %v3804, %v4886
  %v4949 = vsel %vm317, %v3809, %v4888
  %v4950 = vsel %vm317, %v3814, %v4890
  %v4951 = vsel %vm405, %v4945, %v4904
  %v4952 = vsel %vm405, %v4946, %v4906
  %v4953 = vsel %vm405, %v4947, %v4908
  %v4954 = vsel %vm405, %v4948, %v4910
  %v4955 = vsel %vm405, %v4949, %v4912
  %v4956 = vsel %vm405, %v4950, %v4914
  %v4957 = vsel %vm1155, %v4951, %v4928
  %v4958 = vsel %vm1155, %v4952, %v4930
  %v4959 = vsel %vm1155, %v4953, %v4932
  %v4960 = vsel %vm1155, %v4954, %v4934
  %v4961 = vsel %vm1155, %v4955, %v4936
  %v4962 = vsel %vm1155, %v4956, %v4938
  %v4963 = vlaneseq
  %v4964 = vshrl.u32 %v4963, 7
  %v4965 = vsub.s32 2, %v4964
  %v4966 = vrot.slane %v3234, %v4965
  %v4968 = vsel %vm57, %v4957, 0
  %v4971 = vsel %vm57, %v4958, 0
  %v4974 = vsel %vm57, %v4959, 0
  %v4977 = vsel %vm57, %v4960, 0
  %v4980 = vsel %vm57, %v4961, 0
  %v4983 = vsel %vm57, %v4962, 0
  %4985 = vmatprep.subr.mxu0 0.0
  %4986 = vmatpush1.msra.mxu0 0.0
  %4987 = vmatprep.subr.mxu0 0.0
  %4988 = vmatpush1.msra.mxu0 0.0
  %4989 = vmatprep.subr.mxu0 0.0
  %4990 = vmatpush1.msra.mxu0 0.0
  %4991 = vmatprep.subr.mxu0 0.0
  %4992 = vmatpush1.msra.mxu0 0.0
  %4993 = vmatprep.subr.mxu0 0.0
  %4994 = vmatpush1.msra.mxu0 0.0
  %4995 = vmatprep.subr.mxu0 0.0
  %4996 = vmatpush1.msra.mxu0 0.0
  %4997 = vmatprep.subr.mxu0 0.0
  %4998 = vmatpush1.msra.mxu0 0.0
  %4999 = vmatprep.subr.mxu0 0.0
  %5000 = vmatpush1.msra.mxu0 0.0
  %5001 = vmatprep.subr.mxu0 0.0
  %5002 = vmatpush1.msra.mxu0 0.0
  %5003 = vmatprep.subr.mxu0 0.0
  %5004 = vmatpush1.msra.mxu0 0.0
  %5005 = vmatprep.subr.mxu0 0.0
  %5006 = vmatpush1.msra.mxu0 0.0
  %5007 = vmatprep.subr.mxu0 0.0
  %5008 = vmatpush1.msra.mxu0 0.0
  %5009 = vmatprep.subr.mxu0 0.0
  %5010 = vmatpush1.msra.mxu0 %v3244
  %5011 = vmatprep.subr.mxu0 0.0
  %5012 = vmatpush1.msra.mxu0 %v3243
  %5013 = vmatprep.subr.mxu0 0.0
  %5014 = vmatpush1.msra.mxu0 %v3242
  %5015 = vmatprep.subr.mxu0 0.0
  %5016 = vmatpush1.msra.mxu0 %v3241
  %5017 = vmatprep.subr.mxu0 0.0
  %5018 = vmatpush2.msra.mxu0 0.0
  %5019 = vmatprep.subr.mxu0 0.0
  %5020 = vmatpush2.msra.mxu0 0.0
  %5021 = vmatprep.subr.mxu0 0.0
  %5022 = vmatpush2.msra.mxu0 0.0
  %5023 = vmatprep.subr.mxu0 0.0
  %5024 = vmatpush2.msra.mxu0 0.0
  %5025 = vmatprep.subr.mxu0 0.0
  %5026 = vmatpush2.msra.mxu0 0.0
  %5027 = vmatprep.subr.mxu0 0.0
  %5028 = vmatpush2.msra.mxu0 0.0
  %5029 = vmatprep.subr.mxu0 0.0
  %5030 = vmatpush2.msra.mxu0 0.0
  %5031 = vmatprep.subr.mxu0 0.0
  %5032 = vmatpush2.msra.mxu0 0.0
  %5033 = vmatprep.subr.mxu0 0.0
  %5034 = vmatpush2.msra.mxu0 0.0
  %5035 = vmatprep.subr.mxu0 0.0
  %5036 = vmatpush2.msra.mxu0 0.0
  %5037 = vmatprep.subr.mxu0 0.0
  %5038 = vmatpush2.msra.mxu0 0.0
  %5039 = vmatprep.subr.mxu0 0.0
  %5040 = vmatpush2.msra.mxu0 0.0
  %5041 = vmatprep.subr.mxu0 0.0
  %5042 = vmatpush2.msra.mxu0 0.0
  %5043 = vmatprep.subr.mxu0 0.0
  %5044 = vmatpush2.msra.mxu0 0.0
  %5045 = vmatprep.subr.mxu0 0.0
  %5046 = vmatpush2.msra.mxu0 0.0
  %5047 = vmatprep.subr.mxu0 0.0
  %5048 = vmatpush2.msra.mxu0 0.0
  %5049 = vmatprep.mubr.f32.mxu0 0.0
  %5050 = vmatmul.mubr.f32.gmra.mxu0 %v4968
  %v5051 = vpop.f32.mrf.mxu0
  %v5052 = vadd.f32 %v4966, %v5051
  %v5053 = vpop.f32.mrf.mxu0
  %5054 = vmatprep.mubr.f32.mxu0 0.0
  %5055 = vmatmul.mubr.f32.gmra.mxu0 %v4971
  %v5056 = vpop.f32.mrf.mxu0
  %v5057 = vadd.f32 %v4966, %v5056
  %v5058 = vpop.f32.mrf.mxu0
  %5059 = vmatprep.mubr.f32.mxu0 0.0
  %5060 = vmatmul.mubr.f32.gmra.mxu0 %v4974
  %v5061 = vpop.f32.mrf.mxu0
  %v5062 = vadd.f32 %v4966, %v5061
  %v5063 = vpop.f32.mrf.mxu0
  %5064 = vmatprep.mubr.f32.mxu0 0.0
  %5065 = vmatmul.mubr.f32.gmra.mxu0 %v4977
  %v5066 = vpop.f32.mrf.mxu0
  %v5067 = vadd.f32 %v4966, %v5066
  %v5068 = vpop.f32.mrf.mxu0
  %5069 = vmatprep.mubr.f32.mxu0 0.0
  %5070 = vmatmul.mubr.f32.gmra.mxu0 %v4980
  %v5071 = vpop.f32.mrf.mxu0
  %v5072 = vadd.f32 %v4966, %v5071
  %v5073 = vpop.f32.mrf.mxu0
  %5074 = vmatprep.mubr.f32.mxu0 0.0
  %5075 = vmatmul.mubr.f32.gmra.mxu0 %v4983
  %v5076 = vpop.f32.mrf.mxu0
  %v5077 = vadd.f32 %v4966, %v5076
  %v5078 = vpop.f32.mrf.mxu0
  %5079 = vdwg.mxu0
  %v5080 = vadd.f32 %v3152, %v5052
  %v5081 = vadd.f32 %v3140, %v5057
  %v5082 = vadd.f32 %v3153, %v5062
  %v5083 = vadd.f32 %v3154, %v5067
  %v5084 = vadd.f32 %v3148, %v5072
  %v5085 = vadd.f32 %v3155, %v5077
  %v5086 = vsel %vm57, %v5080, 0.0
  %5087 = vadd.xlane.f32.xlu0 %v5086
  %v5088 = vpop.xlane.xlu0 %5087
  %v5089 = vsel %vm57, %v5081, 0.0
  %5090 = vadd.xlane.f32.xlu0 %v5089
  %v5091 = vpop.xlane.xlu0 %5090
  %v5092 = vsel %vm57, %v5082, 0.0
  %5093 = vadd.xlane.f32.xlu0 %v5092
  %v5094 = vpop.xlane.xlu0 %5093
  %v5095 = vsel %vm57, %v5083, 0.0
  %5096 = vadd.xlane.f32.xlu0 %v5095
  %v5097 = vpop.xlane.xlu0 %5096
  %v5098 = vsel %vm57, %v5084, 0.0
  %5099 = vadd.xlane.f32.xlu0 %v5098
  %v5100 = vpop.xlane.xlu0 %5099
  %v5101 = vsel %vm57, %v5085, 0.0
  %5102 = vadd.xlane.f32.xlu0 %v5101
  %v5103 = vpop.xlane.xlu0 %5102
  %v5104 = vmul.f32 %v5088, %v197
  %v5105 = vmul.f32 %v5091, %v197
  %v5106 = vmul.f32 %v5094, %v197
  %v5107 = vmul.f32 %v5097, %v197
  %v5108 = vmul.f32 %v5100, %v197
  %v5109 = vmul.f32 %v5103, %v197
  %v5110 = vsub.f32 %v5080, %v5104
  %v5111 = vsub.f32 %v5081, %v5105
  %v5112 = vsub.f32 %v5082, %v5106
  %v5113 = vsub.f32 %v5083, %v5107
  %v5114 = vsub.f32 %v5084, %v5108
  %v5115 = vsub.f32 %v5085, %v5109
  %v5116 = vmul.f32 %v5110, %v5110
  %v5117 = vmul.f32 %v5111, %v5111
  %v5118 = vmul.f32 %v5112, %v5112
  %v5119 = vmul.f32 %v5113, %v5113
  %v5120 = vmul.f32 %v5114, %v5114
  %v5121 = vmul.f32 %v5115, %v5115
  %v5122 = vsel %vm57, %v5116, 0.0
  %5123 = vadd.xlane.f32.xlu0 %v5122
  %v5124 = vpop.xlane.xlu0 %5123
  %v5125 = vsel %vm57, %v5117, 0.0
  %5126 = vadd.xlane.f32.xlu0 %v5125
  %v5127 = vpop.xlane.xlu0 %5126
  %v5128 = vsel %vm57, %v5118, 0.0
  %5129 = vadd.xlane.f32.xlu0 %v5128
  %v5130 = vpop.xlane.xlu0 %5129
  %v5131 = vsel %vm57, %v5119, 0.0
  %5132 = vadd.xlane.f32.xlu0 %v5131
  %v5133 = vpop.xlane.xlu0 %5132
  %v5134 = vsel %vm57, %v5120, 0.0
  %5135 = vadd.xlane.f32.xlu0 %v5134
  %v5136 = vpop.xlane.xlu0 %5135
  %v5137 = vsel %vm57, %v5121, 0.0
  %5138 = vadd.xlane.f32.xlu0 %v5137
  %v5139 = vpop.xlane.xlu0 %5138
  %v5140 = vmul.f32 %v5124, %v197
  %v5141 = vmul.f32 %v5127, %v197
  %v5142 = vmul.f32 %v5130, %v197
  %v5143 = vmul.f32 %v5133, %v197
  %v5144 = vmul.f32 %v5136, %v197
  %v5145 = vmul.f32 %v5139, %v197
  %v5146 = vadd.f32 %v5140, 1e-05
  %v5147 = vadd.f32 %v5141, 1e-05
  %v5148 = vadd.f32 %v5142, 1e-05
  %v5149 = vadd.f32 %v5143, 1e-05
  %v5150 = vadd.f32 %v5144, 1e-05
  %v5151 = vadd.f32 %v5145, 1e-05
  %v5152 = vrsqrt.pop %v5146
  %v5153 = vrsqrt.pop %v5147
  %v5154 = vrsqrt.pop %v5148
  %v5155 = vrsqrt.pop %v5149
  %v5156 = vrsqrt.pop %v5150
  %v5157 = vrsqrt.pop %v5151
  %v5158 = vmul.f32 %v5110, %v5152
  %v5159 = vmul.f32 %v5111, %v5153
  %v5160 = vmul.f32 %v5112, %v5154
  %v5161 = vmul.f32 %v5113, %v5155
  %v5162 = vmul.f32 %v5114, %v5156
  %v5163 = vmul.f32 %v5115, %v5157
  %v5164 = vlaneseq
  %v5165 = vshrl.u32 %v5164, 7
  %v5166 = vsub.s32 3, %v5165
  %v5167 = vrot.slane %v3234, %v5166
  %v5168 = vmul.f32 %v5158, %v5167
  %v5169 = vmul.f32 %v5159, %v5167
  %v5170 = vmul.f32 %v5160, %v5167
  %v5171 = vmul.f32 %v5161, %v5167
  %v5172 = vmul.f32 %v5162, %v5167
  %v5173 = vmul.f32 %v5163, %v5167
  %v5174 = vlaneseq
  %v5175 = vshrl.u32 %v5174, 7
  %v5176 = vsub.s32 4, %v5175
  %v5177 = vrot.slane %v3234, %v5176
  %v5178 = vadd.f32 %v5168, %v5177
  %v5179 = vadd.f32 %v5169, %v5177
  %v5180 = vadd.f32 %v5170, %v5177
  %v5181 = vadd.f32 %v5171, %v5177
  %v5182 = vadd.f32 %v5172, %v5177
  %v5183 = vadd.f32 %v5173, %v5177
  %v5184 = vlaneseq
  %v5185 = vshrl.u32 %v5184, 7
  %v5186 = vsub.s32 6, %v5185
  %v5187 = vrot.slane %v3234, %v5186
  %v5189 = vsel %vm57, %v5178, 0
  %v5192 = vsel %vm57, %v5179, 0
  %v5195 = vsel %vm57, %v5180, 0
  %v5198 = vsel %vm57, %v5181, 0
  %v5201 = vsel %vm57, %v5182, 0
  %v5204 = vsel %vm57, %v5183, 0
  %5206 = vmatprep.subr.mxu0 0.0
  %5207 = vmatpush1.msra.mxu0 0.0
  %5208 = vmatprep.subr.mxu0 0.0
  %5209 = vmatpush1.msra.mxu0 0.0
  %5210 = vmatprep.subr.mxu0 0.0
  %5211 = vmatpush1.msra.mxu0 0.0
  %5212 = vmatprep.subr.mxu0 0.0
  %5213 = vmatpush1.msra.mxu0 0.0
  %5214 = vmatprep.subr.mxu0 0.0
  %5215 = vmatpush1.msra.mxu0 0.0
  %5216 = vmatprep.subr.mxu0 0.0
  %5217 = vmatpush1.msra.mxu0 0.0
  %5218 = vmatprep.subr.mxu0 0.0
  %5219 = vmatpush1.msra.mxu0 0.0
  %5220 = vmatprep.subr.mxu0 0.0
  %5221 = vmatpush1.msra.mxu0 0.0
  %5222 = vmatprep.subr.mxu0 0.0
  %5223 = vmatpush1.msra.mxu0 0.0
  %5224 = vmatprep.subr.mxu0 0.0
  %5225 = vmatpush1.msra.mxu0 0.0
  %5226 = vmatprep.subr.mxu0 0.0
  %5227 = vmatpush1.msra.mxu0 0.0
  %5228 = vmatprep.subr.mxu0 0.0
  %5229 = vmatpush1.msra.mxu0 0.0
  %5230 = vmatprep.subr.mxu0 0.0
  %5231 = vmatpush1.msra.mxu0 %v3249
  %5232 = vmatprep.subr.mxu0 0.0
  %5233 = vmatpush1.msra.mxu0 %v3248
  %5234 = vmatprep.subr.mxu0 0.0
  %5235 = vmatpush1.msra.mxu0 %v3247
  %5236 = vmatprep.subr.mxu0 0.0
  %5237 = vmatpush1.msra.mxu0 %v3246
  %5238 = vmatprep.subr.mxu0 0.0
  %5239 = vmatpush2.msra.mxu0 0.0
  %5240 = vmatprep.subr.mxu0 0.0
  %5241 = vmatpush2.msra.mxu0 0.0
  %5242 = vmatprep.subr.mxu0 0.0
  %5243 = vmatpush2.msra.mxu0 0.0
  %5244 = vmatprep.subr.mxu0 0.0
  %5245 = vmatpush2.msra.mxu0 0.0
  %5246 = vmatprep.subr.mxu0 0.0
  %5247 = vmatpush2.msra.mxu0 0.0
  %5248 = vmatprep.subr.mxu0 0.0
  %5249 = vmatpush2.msra.mxu0 0.0
  %5250 = vmatprep.subr.mxu0 0.0
  %5251 = vmatpush2.msra.mxu0 0.0
  %5252 = vmatprep.subr.mxu0 0.0
  %5253 = vmatpush2.msra.mxu0 0.0
  %5254 = vmatprep.subr.mxu0 0.0
  %5255 = vmatpush2.msra.mxu0 0.0
  %5256 = vmatprep.subr.mxu0 0.0
  %5257 = vmatpush2.msra.mxu0 0.0
  %5258 = vmatprep.subr.mxu0 0.0
  %5259 = vmatpush2.msra.mxu0 0.0
  %5260 = vmatprep.subr.mxu0 0.0
  %5261 = vmatpush2.msra.mxu0 0.0
  %5262 = vmatprep.subr.mxu0 0.0
  %5263 = vmatpush2.msra.mxu0 0.0
  %5264 = vmatprep.subr.mxu0 0.0
  %5265 = vmatpush2.msra.mxu0 0.0
  %5266 = vmatprep.subr.mxu0 0.0
  %5267 = vmatpush2.msra.mxu0 0.0
  %5268 = vmatprep.subr.mxu0 0.0
  %5269 = vmatpush2.msra.mxu0 0.0
  %5270 = vmatprep.mubr.f32.mxu0 0.0
  %5271 = vmatmul.mubr.f32.gmra.mxu0 %v5189
  %v5272 = vpop.f32.mrf.mxu0
  %v5273 = vadd.f32 %v5187, %v5272
  %v5274 = vpop.f32.mrf.mxu0
  %5275 = vmatprep.mubr.f32.mxu0 0.0
  %5276 = vmatmul.mubr.f32.gmra.mxu0 %v5192
  %v5277 = vpop.f32.mrf.mxu0
  %v5278 = vadd.f32 %v5187, %v5277
  %v5279 = vpop.f32.mrf.mxu0
  %5280 = vmatprep.mubr.f32.mxu0 0.0
  %5281 = vmatmul.mubr.f32.gmra.mxu0 %v5195
  %v5282 = vpop.f32.mrf.mxu0
  %v5283 = vadd.f32 %v5187, %v5282
  %v5284 = vpop.f32.mrf.mxu0
  %5285 = vmatprep.mubr.f32.mxu0 0.0
  %5286 = vmatmul.mubr.f32.gmra.mxu0 %v5198
  %v5287 = vpop.f32.mrf.mxu0
  %v5288 = vadd.f32 %v5187, %v5287
  %v5289 = vpop.f32.mrf.mxu0
  %5290 = vmatprep.mubr.f32.mxu0 0.0
  %5291 = vmatmul.mubr.f32.gmra.mxu0 %v5201
  %v5292 = vpop.f32.mrf.mxu0
  %v5293 = vadd.f32 %v5187, %v5292
  %v5294 = vpop.f32.mrf.mxu0
  %5295 = vmatprep.mubr.f32.mxu0 0.0
  %5296 = vmatmul.mubr.f32.gmra.mxu0 %v5204
  %v5297 = vpop.f32.mrf.mxu0
  %v5298 = vadd.f32 %v5187, %v5297
  %v5299 = vpop.f32.mrf.mxu0
  %5300 = vdwg.mxu0
  %v5301 = vmul.f32 %v5273, 0.5
  %v5302 = vmul.f32 %v5278, 0.5
  %v5303 = vmul.f32 %v5283, 0.5
  %v5304 = vmul.f32 %v5288, 0.5
  %v5305 = vmul.f32 %v5293, 0.5
  %v5306 = vmul.f32 %v5298, 0.5
  %v5307 = vmul.f32 %v5273, 0.70710677
  %v5308 = vmul.f32 %v5278, 0.70710677
  %v5309 = vmul.f32 %v5283, 0.70710677
  %v5310 = vmul.f32 %v5288, 0.70710677
  %v5311 = vmul.f32 %v5293, 0.70710677
  %v5312 = vmul.f32 %v5298, 0.70710677
  %vm5313 = vcmp.ge.f32.partialorder %v5307, 0.0
  %vm5314 = vcmp.ge.f32.partialorder %v5308, 0.0
  %vm5315 = vcmp.ge.f32.partialorder %v5309, 0.0
  %vm5316 = vcmp.ge.f32.partialorder %v5310, 0.0
  %vm5317 = vcmp.ge.f32.partialorder %v5311, 0.0
  %vm5318 = vcmp.ge.f32.partialorder %v5312, 0.0
  %v5319 = vsel %vm5313, 1.0, -1.0
  %v5320 = vsel %vm5314, 1.0, -1.0
  %v5321 = vsel %vm5315, 1.0, -1.0
  %v5322 = vsel %vm5316, 1.0, -1.0
  %v5323 = vsel %vm5317, 1.0, -1.0
  %v5324 = vsel %vm5318, 1.0, -1.0
  %v5325 = vand.u32 2147483647, %v5307
  %v5326 = vand.u32 2147483647, %v5308
  %v5327 = vand.u32 2147483647, %v5309
  %v5328 = vand.u32 2147483647, %v5310
  %v5329 = vand.u32 2147483647, %v5311
  %v5330 = vand.u32 2147483647, %v5312
  %v5331 = vmul.f32 %v5325, 0.3275911
  %v5332 = vmul.f32 %v5326, 0.3275911
  %v5333 = vmul.f32 %v5327, 0.3275911
  %v5334 = vmul.f32 %v5328, 0.3275911
  %v5335 = vmul.f32 %v5329, 0.3275911
  %v5336 = vmul.f32 %v5330, 0.3275911
  %v5337 = vadd.f32 %v5331, 1.0
  %v5338 = vadd.f32 %v5332, 1.0
  %v5339 = vadd.f32 %v5333, 1.0
  %v5340 = vadd.f32 %v5334, 1.0
  %v5341 = vadd.f32 %v5335, 1.0
  %v5342 = vadd.f32 %v5336, 1.0
  %v5343 = vrcp.pop %v5337
  %v5344 = vmul.f32 1.0, %v5343
  %v5345 = vrcp.pop %v5338
  %v5346 = vmul.f32 1.0, %v5345
  %v5347 = vrcp.pop %v5339
  %v5348 = vmul.f32 1.0, %v5347
  %v5349 = vrcp.pop %v5340
  %v5350 = vmul.f32 1.0, %v5349
  %v5351 = vrcp.pop %v5341
  %v5352 = vmul.f32 1.0, %v5351
  %v5353 = vrcp.pop %v5342
  %v5354 = vmul.f32 1.0, %v5353
  %v5355 = vmul.f32 %v5344, 1.0614054
  %v5356 = vmul.f32 %v5346, 1.0614054
  %v5357 = vmul.f32 %v5348, 1.0614054
  %v5358 = vmul.f32 %v5350, 1.0614054
  %v5359 = vmul.f32 %v5352, 1.0614054
  %v5360 = vmul.f32 %v5354, 1.0614054
  %v5361 = vadd.f32 %v5355, -1.4531521
  %v5362 = vadd.f32 %v5356, -1.4531521
  %v5363 = vadd.f32 %v5357, -1.4531521
  %v5364 = vadd.f32 %v5358, -1.4531521
  %v5365 = vadd.f32 %v5359, -1.4531521
  %v5366 = vadd.f32 %v5360, -1.4531521
  %v5367 = vmul.f32 %v5361, %v5344
  %v5368 = vmul.f32 %v5362, %v5346
  %v5369 = vmul.f32 %v5363, %v5348
  %v5370 = vmul.f32 %v5364, %v5350
  %v5371 = vmul.f32 %v5365, %v5352
  %v5372 = vmul.f32 %v5366, %v5354
  %v5373 = vadd.f32 %v5367, 1.4214138
  %v5374 = vadd.f32 %v5368, 1.4214138
  %v5375 = vadd.f32 %v5369, 1.4214138
  %v5376 = vadd.f32 %v5370, 1.4214138
  %v5377 = vadd.f32 %v5371, 1.4214138
  %v5378 = vadd.f32 %v5372, 1.4214138
  %v5379 = vmul.f32 %v5373, %v5344
  %v5380 = vmul.f32 %v5374, %v5346
  %v5381 = vmul.f32 %v5375, %v5348
  %v5382 = vmul.f32 %v5376, %v5350
  %v5383 = vmul.f32 %v5377, %v5352
  %v5384 = vmul.f32 %v5378, %v5354
  %v5385 = vadd.f32 %v5379, -0.28449672
  %v5386 = vadd.f32 %v5380, -0.28449672
  %v5387 = vadd.f32 %v5381, -0.28449672
  %v5388 = vadd.f32 %v5382, -0.28449672
  %v5389 = vadd.f32 %v5383, -0.28449672
  %v5390 = vadd.f32 %v5384, -0.28449672
  %v5391 = vmul.f32 %v5385, %v5344
  %v5392 = vmul.f32 %v5386, %v5346
  %v5393 = vmul.f32 %v5387, %v5348
  %v5394 = vmul.f32 %v5388, %v5350
  %v5395 = vmul.f32 %v5389, %v5352
  %v5396 = vmul.f32 %v5390, %v5354
  %v5397 = vadd.f32 %v5391, 0.2548296
  %v5398 = vadd.f32 %v5392, 0.2548296
  %v5399 = vadd.f32 %v5393, 0.2548296
  %v5400 = vadd.f32 %v5394, 0.2548296
  %v5401 = vadd.f32 %v5395, 0.2548296
  %v5402 = vadd.f32 %v5396, 0.2548296
  %v5403 = vmul.f32 %v5397, %v5344
  %v5404 = vmul.f32 %v5398, %v5346
  %v5405 = vmul.f32 %v5399, %v5348
  %v5406 = vmul.f32 %v5400, %v5350
  %v5407 = vmul.f32 %v5401, %v5352
  %v5408 = vmul.f32 %v5402, %v5354
  %v5409 = vsub.f32 0.0, %v5325
  %v5410 = vsub.f32 0.0, %v5326
  %v5411 = vsub.f32 0.0, %v5327
  %v5412 = vsub.f32 0.0, %v5328
  %v5413 = vsub.f32 0.0, %v5329
  %v5414 = vsub.f32 0.0, %v5330
  %v5415 = vmul.f32 %v5409, %v5325
  %v5416 = vmul.f32 %v5410, %v5326
  %v5417 = vmul.f32 %v5411, %v5327
  %v5418 = vmul.f32 %v5412, %v5328
  %v5419 = vmul.f32 %v5413, %v5329
  %v5420 = vmul.f32 %v5414, %v5330
  %v5421 = vmul.f32 %v5415, 1.442695
  %v5422 = vpow.pop %v5421
  %v5423 = vmul.f32 %v5416, 1.442695
  %v5424 = vpow.pop %v5423
  %v5425 = vmul.f32 %v5417, 1.442695
  %v5426 = vpow.pop %v5425
  %v5427 = vmul.f32 %v5418, 1.442695
  %v5428 = vpow.pop %v5427
  %v5429 = vmul.f32 %v5419, 1.442695
  %v5430 = vpow.pop %v5429
  %v5431 = vmul.f32 %v5420, 1.442695
  %v5432 = vpow.pop %v5431
  %v5433 = vmul.f32 %v5403, %v5422
  %v5434 = vmul.f32 %v5404, %v5424
  %v5435 = vmul.f32 %v5405, %v5426
  %v5436 = vmul.f32 %v5406, %v5428
  %v5437 = vmul.f32 %v5407, %v5430
  %v5438 = vmul.f32 %v5408, %v5432
  %v5439 = vsub.f32 1.0, %v5433
  %v5440 = vsub.f32 1.0, %v5434
  %v5441 = vsub.f32 1.0, %v5435
  %v5442 = vsub.f32 1.0, %v5436
  %v5443 = vsub.f32 1.0, %v5437
  %v5444 = vsub.f32 1.0, %v5438
  %v5445 = vmul.f32 %v5319, %v5439
  %v5446 = vmul.f32 %v5320, %v5440
  %v5447 = vmul.f32 %v5321, %v5441
  %v5448 = vmul.f32 %v5322, %v5442
  %v5449 = vmul.f32 %v5323, %v5443
  %v5450 = vmul.f32 %v5324, %v5444
  %v5451 = vadd.f32 %v5445, 1.0
  %v5452 = vadd.f32 %v5446, 1.0
  %v5453 = vadd.f32 %v5447, 1.0
  %v5454 = vadd.f32 %v5448, 1.0
  %v5455 = vadd.f32 %v5449, 1.0
  %v5456 = vadd.f32 %v5450, 1.0
  %v5457 = vmul.f32 %v5301, %v5451
  %v5458 = vmul.f32 %v5302, %v5452
  %v5459 = vmul.f32 %v5303, %v5453
  %v5460 = vmul.f32 %v5304, %v5454
  %v5461 = vmul.f32 %v5305, %v5455
  %v5462 = vmul.f32 %v5306, %v5456
  %v5464 = vsel %vm1422, %v5457, 0
  %v5467 = vsel %vm1422, %v5458, 0
  %v5470 = vsel %vm1422, %v5459, 0
  %v5473 = vsel %vm1422, %v5460, 0
  %v5476 = vsel %vm1422, %v5461, 0
  %v5479 = vsel %vm1422, %v5462, 0
  %5481 = vmatprep.subr.mxu0 0.0
  %5482 = vmatpush1.msra.mxu0 0.0
  %5483 = vmatprep.subr.mxu0 0.0
  %5484 = vmatpush1.msra.mxu0 0.0
  %5485 = vmatprep.subr.mxu0 0.0
  %5486 = vmatpush1.msra.mxu0 0.0
  %5487 = vmatprep.subr.mxu0 0.0
  %5488 = vmatpush1.msra.mxu0 0.0
  %5489 = vmatprep.subr.mxu0 0.0
  %5490 = vmatpush1.msra.mxu0 0.0
  %5491 = vmatprep.subr.mxu0 0.0
  %5492 = vmatpush1.msra.mxu0 0.0
  %5493 = vmatprep.subr.mxu0 0.0
  %5494 = vmatpush1.msra.mxu0 0.0
  %5495 = vmatprep.subr.mxu0 0.0
  %5496 = vmatpush1.msra.mxu0 0.0
  %5497 = vmatprep.subr.mxu0 0.0
  %5498 = vmatpush1.msra.mxu0 %v3258
  %5499 = vmatprep.subr.mxu0 0.0
  %5500 = vmatpush1.msra.mxu0 %v3257
  %5501 = vmatprep.subr.mxu0 0.0
  %5502 = vmatpush1.msra.mxu0 %v3256
  %5503 = vmatprep.subr.mxu0 0.0
  %5504 = vmatpush1.msra.mxu0 %v3255
  %5505 = vmatprep.subr.mxu0 0.0
  %5506 = vmatpush1.msra.mxu0 %v3254
  %5507 = vmatprep.subr.mxu0 0.0
  %5508 = vmatpush1.msra.mxu0 %v3253
  %5509 = vmatprep.subr.mxu0 0.0
  %5510 = vmatpush1.msra.mxu0 %v3252
  %5511 = vmatprep.subr.mxu0 0.0
  %5512 = vmatpush1.msra.mxu0 %v3251
  %5513 = vmatprep.subr.mxu0 0.0
  %5514 = vmatpush2.msra.mxu0 0.0
  %5515 = vmatprep.subr.mxu0 0.0
  %5516 = vmatpush2.msra.mxu0 0.0
  %5517 = vmatprep.subr.mxu0 0.0
  %5518 = vmatpush2.msra.mxu0 0.0
  %5519 = vmatprep.subr.mxu0 0.0
  %5520 = vmatpush2.msra.mxu0 0.0
  %5521 = vmatprep.subr.mxu0 0.0
  %5522 = vmatpush2.msra.mxu0 0.0
  %5523 = vmatprep.subr.mxu0 0.0
  %5524 = vmatpush2.msra.mxu0 0.0
  %5525 = vmatprep.subr.mxu0 0.0
  %5526 = vmatpush2.msra.mxu0 0.0
  %5527 = vmatprep.subr.mxu0 0.0
  %5528 = vmatpush2.msra.mxu0 0.0
  %5529 = vmatprep.subr.mxu0 0.0
  %5530 = vmatpush2.msra.mxu0 0.0
  %5531 = vmatprep.subr.mxu0 0.0
  %5532 = vmatpush2.msra.mxu0 0.0
  %5533 = vmatprep.subr.mxu0 0.0
  %5534 = vmatpush2.msra.mxu0 0.0
  %5535 = vmatprep.subr.mxu0 0.0
  %5536 = vmatpush2.msra.mxu0 0.0
  %5537 = vmatprep.subr.mxu0 0.0
  %5538 = vmatpush2.msra.mxu0 0.0
  %5539 = vmatprep.subr.mxu0 0.0
  %5540 = vmatpush2.msra.mxu0 0.0
  %5541 = vmatprep.subr.mxu0 0.0
  %5542 = vmatpush2.msra.mxu0 0.0
  %5543 = vmatprep.subr.mxu0 0.0
  %5544 = vmatpush2.msra.mxu0 0.0
  %5545 = vmatprep.mubr.f32.mxu0 0.0
  %5546 = vmatmul.mubr.f32.gmra.mxu0 %v5464
  %v5547 = vpop.f32.mrf.mxu0
  %v5548 = vadd.f32 0.0, %v5547
  %v5549 = vpop.f32.mrf.mxu0
  %5550 = vmatprep.mubr.f32.mxu0 0.0
  %5551 = vmatmul.mubr.f32.gmra.mxu0 %v5467
  %v5552 = vpop.f32.mrf.mxu0
  %v5553 = vadd.f32 0.0, %v5552
  %v5554 = vpop.f32.mrf.mxu0
  %5555 = vmatprep.mubr.f32.mxu0 0.0
  %5556 = vmatmul.mubr.f32.gmra.mxu0 %v5470
  %v5557 = vpop.f32.mrf.mxu0
  %v5558 = vadd.f32 0.0, %v5557
  %v5559 = vpop.f32.mrf.mxu0
  %5560 = vmatprep.mubr.f32.mxu0 0.0
  %5561 = vmatmul.mubr.f32.gmra.mxu0 %v5473
  %v5562 = vpop.f32.mrf.mxu0
  %v5563 = vadd.f32 0.0, %v5562
  %v5564 = vpop.f32.mrf.mxu0
  %5565 = vmatprep.mubr.f32.mxu0 0.0
  %5566 = vmatmul.mubr.f32.gmra.mxu0 %v5476
  %v5567 = vpop.f32.mrf.mxu0
  %v5568 = vadd.f32 0.0, %v5567
  %v5569 = vpop.f32.mrf.mxu0
  %5570 = vmatprep.mubr.f32.mxu0 0.0
  %5571 = vmatmul.mubr.f32.gmra.mxu0 %v5479
  %v5572 = vpop.f32.mrf.mxu0
  %v5573 = vadd.f32 0.0, %v5572
  %v5574 = vpop.f32.mrf.mxu0
  %5575 = vdwg.mxu0
  %v5576 = vadd.f32 %v5080, %v5548
  %v5577 = vadd.f32 %v5081, %v5553
  %v5578 = vadd.f32 %v5082, %v5558
  %v5579 = vadd.f32 %v5083, %v5563
  %v5580 = vadd.f32 %v5084, %v5568
  %v5581 = vadd.f32 %v5085, %v5573
  %v5582 = vlaneseq
  %v5583 = vshrl.u32 %v5582, 7
  %v5584 = vsub.s32 5, %v5583
  %v5585 = vrot.slane %v3234, %v5584
  %v5586 = vadd.f32 %v5576, %v5585
  %v5587 = vadd.f32 %v5577, %v5585
  %v5588 = vadd.f32 %v5578, %v5585
  %v5589 = vadd.f32 %v5579, %v5585
  %v5590 = vadd.f32 %v5580, %v5585
  %v5591 = vadd.f32 %v5581, %v5585
  %s5592 = scalar_lea.vmem %s7, 24
  %v5593 = vld [vmem:[%s5592] sm:$0x7f]
  %s5594 = scalar_lea.vmem %s3, 96
  %v5595 = vld [vmem:[%s5594] sm:$0xff]
  %v5596 = vld [vmem:[%s5594 + $0x8] sm:$0xff]
  %v5597 = vld [vmem:[%s5594 + $0x10] sm:$0xff]
  %v5598 = vld [vmem:[%s5594 + $0x18] sm:$0xff]
  %s5599 = scalar_lea.vmem %s4, 96
  %v5600 = vld [vmem:[%s5599] sm:$0xff]
  %v5601 = vld [vmem:[%s5599 + $0x8] sm:$0xff]
  %v5602 = vld [vmem:[%s5599 + $0x10] sm:$0xff]
  %v5603 = vld [vmem:[%s5599 + $0x18] sm:$0xff]
  %s5604 = scalar_lea.vmem %s5, 96
  %v5605 = vld [vmem:[%s5604] sm:$0xff]
  %v5606 = vld [vmem:[%s5604 + $0x8] sm:$0xff]
  %v5607 = vld [vmem:[%s5604 + $0x10] sm:$0xff]
  %v5608 = vld [vmem:[%s5604 + $0x18] sm:$0xff]
  %s5609 = scalar_lea.vmem %s6, 192
  %v5610 = vld [vmem:[%s5609] sm:$0xff]
  %v5611 = vld [vmem:[%s5609 + $0x8] sm:$0xff]
  %v5612 = vld [vmem:[%s5609 + $0x10] sm:$0xff]
  %v5613 = vld [vmem:[%s5609 + $0x18] sm:$0xff]
  %v5614 = vld [vmem:[%s5609 + $0x20] sm:$0xff]
  %v5615 = vld [vmem:[%s5609 + $0x28] sm:$0xff]
  %v5616 = vld [vmem:[%s5609 + $0x30] sm:$0xff]
  %v5617 = vld [vmem:[%s5609 + $0x38] sm:$0xff]
  %v5618 = vsel %vm57, %v5586, 0.0
  %5619 = vadd.xlane.f32.xlu0 %v5618
  %v5620 = vpop.xlane.xlu0 %5619
  %v5621 = vsel %vm57, %v5587, 0.0
  %5622 = vadd.xlane.f32.xlu0 %v5621
  %v5623 = vpop.xlane.xlu0 %5622
  %v5624 = vsel %vm57, %v5588, 0.0
  %5625 = vadd.xlane.f32.xlu0 %v5624
  %v5626 = vpop.xlane.xlu0 %5625
  %v5627 = vsel %vm57, %v5589, 0.0
  %5628 = vadd.xlane.f32.xlu0 %v5627
  %v5629 = vpop.xlane.xlu0 %5628
  %v5630 = vsel %vm57, %v5590, 0.0
  %5631 = vadd.xlane.f32.xlu0 %v5630
  %v5632 = vpop.xlane.xlu0 %5631
  %v5633 = vsel %vm57, %v5591, 0.0
  %5634 = vadd.xlane.f32.xlu0 %v5633
  %v5635 = vpop.xlane.xlu0 %5634
  %v5636 = vmul.f32 %v5620, %v197
  %v5637 = vmul.f32 %v5623, %v197
  %v5638 = vmul.f32 %v5626, %v197
  %v5639 = vmul.f32 %v5629, %v197
  %v5640 = vmul.f32 %v5632, %v197
  %v5641 = vmul.f32 %v5635, %v197
  %v5642 = vsub.f32 %v5586, %v5636
  %v5643 = vsub.f32 %v5587, %v5637
  %v5644 = vsub.f32 %v5588, %v5638
  %v5645 = vsub.f32 %v5589, %v5639
  %v5646 = vsub.f32 %v5590, %v5640
  %v5647 = vsub.f32 %v5591, %v5641
  %v5648 = vmul.f32 %v5642, %v5642
  %v5649 = vmul.f32 %v5643, %v5643
  %v5650 = vmul.f32 %v5644, %v5644
  %v5651 = vmul.f32 %v5645, %v5645
  %v5652 = vmul.f32 %v5646, %v5646
  %v5653 = vmul.f32 %v5647, %v5647
  %v5654 = vsel %vm57, %v5648, 0.0
  %5655 = vadd.xlane.f32.xlu0 %v5654
  %v5656 = vpop.xlane.xlu0 %5655
  %v5657 = vsel %vm57, %v5649, 0.0
  %5658 = vadd.xlane.f32.xlu0 %v5657
  %v5659 = vpop.xlane.xlu0 %5658
  %v5660 = vsel %vm57, %v5650, 0.0
  %5661 = vadd.xlane.f32.xlu0 %v5660
  %v5662 = vpop.xlane.xlu0 %5661
  %v5663 = vsel %vm57, %v5651, 0.0
  %5664 = vadd.xlane.f32.xlu0 %v5663
  %v5665 = vpop.xlane.xlu0 %5664
  %v5666 = vsel %vm57, %v5652, 0.0
  %5667 = vadd.xlane.f32.xlu0 %v5666
  %v5668 = vpop.xlane.xlu0 %5667
  %v5669 = vsel %vm57, %v5653, 0.0
  %5670 = vadd.xlane.f32.xlu0 %v5669
  %v5671 = vpop.xlane.xlu0 %5670
  %v5672 = vmul.f32 %v5656, %v197
  %v5673 = vmul.f32 %v5659, %v197
  %v5674 = vmul.f32 %v5662, %v197
  %v5675 = vmul.f32 %v5665, %v197
  %v5676 = vmul.f32 %v5668, %v197
  %v5677 = vmul.f32 %v5671, %v197
  %v5678 = vadd.f32 %v5672, 1e-05
  %v5679 = vadd.f32 %v5673, 1e-05
  %v5680 = vadd.f32 %v5674, 1e-05
  %v5681 = vadd.f32 %v5675, 1e-05
  %v5682 = vadd.f32 %v5676, 1e-05
  %v5683 = vadd.f32 %v5677, 1e-05
  %v5684 = vrsqrt.pop %v5678
  %v5685 = vrsqrt.pop %v5679
  %v5686 = vrsqrt.pop %v5680
  %v5687 = vrsqrt.pop %v5681
  %v5688 = vrsqrt.pop %v5682
  %v5689 = vrsqrt.pop %v5683
  %v5690 = vmul.f32 %v5642, %v5684
  %v5691 = vmul.f32 %v5643, %v5685
  %v5692 = vmul.f32 %v5644, %v5686
  %v5693 = vmul.f32 %v5645, %v5687
  %v5694 = vmul.f32 %v5646, %v5688
  %v5695 = vmul.f32 %v5647, %v5689
  %v5696 = vlaneseq
  %v5697 = vshrl.u32 %v5696, 7
  %v5698 = vsub.s32 0, %v5697
  %v5699 = vrot.slane %v5593, %v5698
  %v5700 = vmul.f32 %v5690, %v5699
  %v5701 = vmul.f32 %v5691, %v5699
  %v5702 = vmul.f32 %v5692, %v5699
  %v5703 = vmul.f32 %v5693, %v5699
  %v5704 = vmul.f32 %v5694, %v5699
  %v5705 = vmul.f32 %v5695, %v5699
  %v5706 = vlaneseq
  %v5707 = vshrl.u32 %v5706, 7
  %v5708 = vsub.s32 1, %v5707
  %v5709 = vrot.slane %v5593, %v5708
  %v5710 = vadd.f32 %v5700, %v5709
  %v5711 = vadd.f32 %v5701, %v5709
  %v5712 = vadd.f32 %v5702, %v5709
  %v5713 = vadd.f32 %v5703, %v5709
  %v5714 = vadd.f32 %v5704, %v5709
  %v5715 = vadd.f32 %v5705, %v5709
  %v5717 = vsel %vm57, %v5710, 0
  %v5720 = vsel %vm57, %v5711, 0
  %v5723 = vsel %vm57, %v5712, 0
  %v5726 = vsel %vm57, %v5713, 0
  %v5729 = vsel %vm57, %v5714, 0
  %v5732 = vsel %vm57, %v5715, 0
  %5734 = vmatprep.subr.mxu0 0.0
  %5735 = vmatpush1.msra.mxu0 0.0
  %5736 = vmatprep.subr.mxu0 0.0
  %5737 = vmatpush1.msra.mxu0 0.0
  %5738 = vmatprep.subr.mxu0 0.0
  %5739 = vmatpush1.msra.mxu0 0.0
  %5740 = vmatprep.subr.mxu0 0.0
  %5741 = vmatpush1.msra.mxu0 0.0
  %5742 = vmatprep.subr.mxu0 0.0
  %5743 = vmatpush1.msra.mxu0 0.0
  %5744 = vmatprep.subr.mxu0 0.0
  %5745 = vmatpush1.msra.mxu0 0.0
  %5746 = vmatprep.subr.mxu0 0.0
  %5747 = vmatpush1.msra.mxu0 0.0
  %5748 = vmatprep.subr.mxu0 0.0
  %5749 = vmatpush1.msra.mxu0 0.0
  %5750 = vmatprep.subr.mxu0 0.0
  %5751 = vmatpush1.msra.mxu0 0.0
  %5752 = vmatprep.subr.mxu0 0.0
  %5753 = vmatpush1.msra.mxu0 0.0
  %5754 = vmatprep.subr.mxu0 0.0
  %5755 = vmatpush1.msra.mxu0 0.0
  %5756 = vmatprep.subr.mxu0 0.0
  %5757 = vmatpush1.msra.mxu0 0.0
  %5758 = vmatprep.subr.mxu0 0.0
  %5759 = vmatpush1.msra.mxu0 %v5598
  %5760 = vmatprep.subr.mxu0 0.0
  %5761 = vmatpush1.msra.mxu0 %v5597
  %5762 = vmatprep.subr.mxu0 0.0
  %5763 = vmatpush1.msra.mxu0 %v5596
  %5764 = vmatprep.subr.mxu0 0.0
  %5765 = vmatpush1.msra.mxu0 %v5595
  %5766 = vmatprep.subr.mxu0 0.0
  %5767 = vmatpush2.msra.mxu0 0.0
  %5768 = vmatprep.subr.mxu0 0.0
  %5769 = vmatpush2.msra.mxu0 0.0
  %5770 = vmatprep.subr.mxu0 0.0
  %5771 = vmatpush2.msra.mxu0 0.0
  %5772 = vmatprep.subr.mxu0 0.0
  %5773 = vmatpush2.msra.mxu0 0.0
  %5774 = vmatprep.subr.mxu0 0.0
  %5775 = vmatpush2.msra.mxu0 0.0
  %5776 = vmatprep.subr.mxu0 0.0
  %5777 = vmatpush2.msra.mxu0 0.0
  %5778 = vmatprep.subr.mxu0 0.0
  %5779 = vmatpush2.msra.mxu0 0.0
  %5780 = vmatprep.subr.mxu0 0.0
  %5781 = vmatpush2.msra.mxu0 0.0
  %5782 = vmatprep.subr.mxu0 0.0
  %5783 = vmatpush2.msra.mxu0 0.0
  %5784 = vmatprep.subr.mxu0 0.0
  %5785 = vmatpush2.msra.mxu0 0.0
  %5786 = vmatprep.subr.mxu0 0.0
  %5787 = vmatpush2.msra.mxu0 0.0
  %5788 = vmatprep.subr.mxu0 0.0
  %5789 = vmatpush2.msra.mxu0 0.0
  %5790 = vmatprep.subr.mxu0 0.0
  %5791 = vmatpush2.msra.mxu0 0.0
  %5792 = vmatprep.subr.mxu0 0.0
  %5793 = vmatpush2.msra.mxu0 0.0
  %5794 = vmatprep.subr.mxu0 0.0
  %5795 = vmatpush2.msra.mxu0 0.0
  %5796 = vmatprep.subr.mxu0 0.0
  %5797 = vmatpush2.msra.mxu0 0.0
  %5798 = vmatprep.mubr.f32.mxu0 0.0
  %5799 = vmatmul.mubr.f32.gmra.mxu0 %v5717
  %v5800 = vpop.f32.mrf.mxu0
  %v5801 = vadd.f32 0.0, %v5800
  %v5802 = vpop.f32.mrf.mxu0
  %5803 = vmatprep.mubr.f32.mxu0 0.0
  %5804 = vmatmul.mubr.f32.gmra.mxu0 %v5720
  %v5805 = vpop.f32.mrf.mxu0
  %v5806 = vadd.f32 0.0, %v5805
  %v5807 = vpop.f32.mrf.mxu0
  %5808 = vmatprep.mubr.f32.mxu0 0.0
  %5809 = vmatmul.mubr.f32.gmra.mxu0 %v5723
  %v5810 = vpop.f32.mrf.mxu0
  %v5811 = vadd.f32 0.0, %v5810
  %v5812 = vpop.f32.mrf.mxu0
  %5813 = vmatprep.mubr.f32.mxu0 0.0
  %5814 = vmatmul.mubr.f32.gmra.mxu0 %v5726
  %v5815 = vpop.f32.mrf.mxu0
  %v5816 = vadd.f32 0.0, %v5815
  %v5817 = vpop.f32.mrf.mxu0
  %5818 = vmatprep.mubr.f32.mxu0 0.0
  %5819 = vmatmul.mubr.f32.gmra.mxu0 %v5729
  %v5820 = vpop.f32.mrf.mxu0
  %v5821 = vadd.f32 0.0, %v5820
  %v5822 = vpop.f32.mrf.mxu0
  %5823 = vmatprep.mubr.f32.mxu0 0.0
  %5824 = vmatmul.mubr.f32.gmra.mxu0 %v5732
  %v5825 = vpop.f32.mrf.mxu0
  %v5826 = vadd.f32 0.0, %v5825
  %v5827 = vpop.f32.mrf.mxu0
  %5828 = vdwg.mxu0
  %5835 = vrot.lane.b32.xlu0 %v5801, 96
  %v5836 = vpop.permute.xlu0 %5835
  %5837 = vrot.lane.b32.xlu0 %v5806, 96
  %v5838 = vpop.permute.xlu0 %5837
  %5839 = vrot.lane.b32.xlu0 %v5811, 96
  %v5840 = vpop.permute.xlu0 %5839
  %5841 = vrot.lane.b32.xlu0 %v5816, 96
  %v5842 = vpop.permute.xlu0 %5841
  %5843 = vrot.lane.b32.xlu0 %v5821, 96
  %v5844 = vpop.permute.xlu0 %5843
  %5845 = vrot.lane.b32.xlu0 %v5826, 96
  %v5846 = vpop.permute.xlu0 %5845
  %v5847 = vsel %vm317, %v5801, 0
  %v5849 = vsel %vm317, %v5806, 0
  %v5851 = vsel %vm317, %v5811, 0
  %v5853 = vsel %vm317, %v5816, 0
  %v5855 = vsel %vm317, %v5821, 0
  %v5857 = vsel %vm317, %v5826, 0
  %v5859 = vsel %vm317, %v5836, 0
  %v5861 = vsel %vm317, %v5838, 0
  %v5863 = vsel %vm317, %v5840, 0
  %v5865 = vsel %vm317, %v5842, 0
  %v5867 = vsel %vm317, %v5844, 0
  %v5869 = vsel %vm317, %v5846, 0
  %5871 = vmatprep.subr.mxu0 0.0
  %5872 = vmatpush1.xpose.msra.mxu0 0.0
  %5873 = vmatprep.subr.mxu0 0.0
  %5874 = vmatpush1.xpose.msra.mxu0 0.0
  %5875 = vmatprep.subr.mxu0 0.0
  %5876 = vmatpush1.xpose.msra.mxu0 0.0
  %5877 = vmatprep.subr.mxu0 0.0
  %5878 = vmatpush1.xpose.msra.mxu0 0.0
  %5879 = vmatprep.subr.mxu0 0.0
  %5880 = vmatpush1.xpose.msra.mxu0 0.0
  %5881 = vmatprep.subr.mxu0 0.0
  %5882 = vmatpush1.xpose.msra.mxu0 0.0
  %5883 = vmatprep.subr.mxu0 0.0
  %5884 = vmatpush1.xpose.msra.mxu0 0.0
  %5885 = vmatprep.subr.mxu0 0.0
  %5886 = vmatpush1.xpose.msra.mxu0 0.0
  %5887 = vmatprep.subr.mxu0 0.0
  %5888 = vmatpush1.xpose.msra.mxu0 0.0
  %5889 = vmatprep.subr.mxu0 0.0
  %5890 = vmatpush1.xpose.msra.mxu0 0.0
  %5891 = vmatprep.subr.mxu0 0.0
  %5892 = vmatpush1.xpose.msra.mxu0 %v5869
  %5893 = vmatprep.subr.mxu0 0.0
  %5894 = vmatpush1.xpose.msra.mxu0 %v5867
  %5895 = vmatprep.subr.mxu0 0.0
  %5896 = vmatpush1.xpose.msra.mxu0 %v5865
  %5897 = vmatprep.subr.mxu0 0.0
  %5898 = vmatpush1.xpose.msra.mxu0 %v5863
  %5899 = vmatprep.subr.mxu0 0.0
  %5900 = vmatpush1.xpose.msra.mxu0 %v5861
  %5901 = vmatprep.subr.mxu0 0.0
  %5902 = vmatpush1.xpose.msra.mxu0 %v5859
  %5903 = vmatprep.subr.mxu0 0.0
  %5904 = vmatpush2.xpose.msra.mxu0 0.0
  %5905 = vmatprep.subr.mxu0 0.0
  %5906 = vmatpush2.xpose.msra.mxu0 0.0
  %5907 = vmatprep.subr.mxu0 0.0
  %5908 = vmatpush2.xpose.msra.mxu0 0.0
  %5909 = vmatprep.subr.mxu0 0.0
  %5910 = vmatpush2.xpose.msra.mxu0 0.0
  %5911 = vmatprep.subr.mxu0 0.0
  %5912 = vmatpush2.xpose.msra.mxu0 0.0
  %5913 = vmatprep.subr.mxu0 0.0
  %5914 = vmatpush2.xpose.msra.mxu0 0.0
  %5915 = vmatprep.subr.mxu0 0.0
  %5916 = vmatpush2.xpose.msra.mxu0 0.0
  %5917 = vmatprep.subr.mxu0 0.0
  %5918 = vmatpush2.xpose.msra.mxu0 0.0
  %5919 = vmatprep.subr.mxu0 0.0
  %5920 = vmatpush2.xpose.msra.mxu0 0.0
  %5921 = vmatprep.subr.mxu0 0.0
  %5922 = vmatpush2.xpose.msra.mxu0 0.0
  %5923 = vmatprep.subr.mxu0 0.0
  %5924 = vmatpush2.xpose.msra.mxu0 0.0
  %5925 = vmatprep.subr.mxu0 0.0
  %5926 = vmatpush2.xpose.msra.mxu0 0.0
  %5927 = vmatprep.subr.mxu0 0.0
  %5928 = vmatpush2.xpose.msra.mxu0 0.0
  %5929 = vmatprep.subr.mxu0 0.0
  %5930 = vmatpush2.xpose.msra.mxu0 0.0
  %5931 = vmatprep.subr.mxu0 0.0
  %5932 = vmatpush2.xpose.msra.mxu0 0.0
  %5933 = vmatprep.subr.mxu0 0.0
  %5934 = vmatpush2.xpose.msra.mxu0 0.0
  %5935 = vmatprep.mubr.f32.mxu0 0.0
  %5936 = vmatmul.mubr.f32.gmra.mxu0 %v5847
  %v5937 = vpop.f32.mrf.mxu0
  %v5938 = vadd.f32 0.0, %v5937
  %v5939 = vpop.f32.mrf.mxu0
  %5940 = vmatprep.mubr.f32.mxu0 0.0
  %5941 = vmatmul.mubr.f32.gmra.mxu0 %v5849
  %v5942 = vpop.f32.mrf.mxu0
  %v5943 = vadd.f32 0.0, %v5942
  %v5944 = vpop.f32.mrf.mxu0
  %5945 = vmatprep.mubr.f32.mxu0 0.0
  %5946 = vmatmul.mubr.f32.gmra.mxu0 %v5851
  %v5947 = vpop.f32.mrf.mxu0
  %v5948 = vadd.f32 0.0, %v5947
  %v5949 = vpop.f32.mrf.mxu0
  %5950 = vmatprep.mubr.f32.mxu0 0.0
  %5951 = vmatmul.mubr.f32.gmra.mxu0 %v5853
  %v5952 = vpop.f32.mrf.mxu0
  %v5953 = vadd.f32 0.0, %v5952
  %v5954 = vpop.f32.mrf.mxu0
  %5955 = vmatprep.mubr.f32.mxu0 0.0
  %5956 = vmatmul.mubr.f32.gmra.mxu0 %v5855
  %v5957 = vpop.f32.mrf.mxu0
  %v5958 = vadd.f32 0.0, %v5957
  %v5959 = vpop.f32.mrf.mxu0
  %5960 = vmatprep.mubr.f32.mxu0 0.0
  %5961 = vmatmul.mubr.f32.gmra.mxu0 %v5857
  %v5962 = vpop.f32.mrf.mxu0
  %v5963 = vadd.f32 0.0, %v5962
  %v5964 = vpop.f32.mrf.mxu0
  %5965 = vdwg.mxu0
  %v5966 = vmul.f32 %v5938, 0.35355338
  %v5967 = vmul.f32 %v5943, 0.35355338
  %v5968 = vmul.f32 %v5948, 0.35355338
  %v5969 = vmul.f32 %v5953, 0.35355338
  %v5970 = vmul.f32 %v5958, 0.35355338
  %v5971 = vmul.f32 %v5963, 0.35355338
  %v5972 = vadd.f32 %v5966, %v3227
  %v5973 = vadd.f32 %v5967, %v3228
  %v5974 = vadd.f32 %v5968, %v3229
  %v5975 = vadd.f32 %v5969, %v3230
  %v5976 = vadd.f32 %v5970, %v3231
  %v5977 = vadd.f32 %v5971, %v3232
  %v5978 = vsel %vm3619, %v5972, -inf
  %5979 = vmax.xlane.f32.xlu0 %v5978
  %v5980 = vpop.xlane.xlu0 %5979
  %v5981 = vsel %vm3619, %v5973, -inf
  %5982 = vmax.xlane.f32.xlu0 %v5981
  %v5983 = vpop.xlane.xlu0 %5982
  %v5984 = vsel %vm3619, %v5974, -inf
  %5985 = vmax.xlane.f32.xlu0 %v5984
  %v5986 = vpop.xlane.xlu0 %5985
  %v5987 = vsel %vm3619, %v5975, -inf
  %5988 = vmax.xlane.f32.xlu0 %v5987
  %v5989 = vpop.xlane.xlu0 %5988
  %v5990 = vsel %vm3619, %v5976, -inf
  %5991 = vmax.xlane.f32.xlu0 %v5990
  %v5992 = vpop.xlane.xlu0 %5991
  %v5993 = vsel %vm3619, %v5977, -inf
  %5994 = vmax.xlane.f32.xlu0 %v5993
  %v5995 = vpop.xlane.xlu0 %5994
  %v5996 = vsub.f32 %v5972, %v5980
  %v5997 = vsub.f32 %v5973, %v5983
  %v5998 = vsub.f32 %v5974, %v5986
  %v5999 = vsub.f32 %v5975, %v5989
  %v6000 = vsub.f32 %v5976, %v5992
  %v6001 = vsub.f32 %v5977, %v5995
  %v6002 = vmul.f32 %v5996, 1.442695
  %v6003 = vpow.pop %v6002
  %v6004 = vmul.f32 %v5997, 1.442695
  %v6005 = vpow.pop %v6004
  %v6006 = vmul.f32 %v5998, 1.442695
  %v6007 = vpow.pop %v6006
  %v6008 = vmul.f32 %v5999, 1.442695
  %v6009 = vpow.pop %v6008
  %v6010 = vmul.f32 %v6000, 1.442695
  %v6011 = vpow.pop %v6010
  %v6012 = vmul.f32 %v6001, 1.442695
  %v6013 = vpow.pop %v6012
  %v6014 = vsel %vm3619, %v6003, 0.0
  %6015 = vadd.xlane.f32.xlu0 %v6014
  %v6016 = vpop.xlane.xlu0 %6015
  %v6017 = vsel %vm3619, %v6005, 0.0
  %6018 = vadd.xlane.f32.xlu0 %v6017
  %v6019 = vpop.xlane.xlu0 %6018
  %v6020 = vsel %vm3619, %v6007, 0.0
  %6021 = vadd.xlane.f32.xlu0 %v6020
  %v6022 = vpop.xlane.xlu0 %6021
  %v6023 = vsel %vm3619, %v6009, 0.0
  %6024 = vadd.xlane.f32.xlu0 %v6023
  %v6025 = vpop.xlane.xlu0 %6024
  %v6026 = vsel %vm3619, %v6011, 0.0
  %6027 = vadd.xlane.f32.xlu0 %v6026
  %v6028 = vpop.xlane.xlu0 %6027
  %v6029 = vsel %vm3619, %v6013, 0.0
  %6030 = vadd.xlane.f32.xlu0 %v6029
  %v6031 = vpop.xlane.xlu0 %6030
  %v6032 = vrcp.pop %v6016
  %v6033 = vrcp.pop %v6019
  %v6034 = vrcp.pop %v6022
  %v6035 = vrcp.pop %v6025
  %v6036 = vrcp.pop %v6028
  %v6037 = vrcp.pop %v6031
  %v6038 = vmul.f32 %v6003, %v6032
  %v6039 = vmul.f32 %v6005, %v6033
  %v6040 = vmul.f32 %v6007, %v6034
  %v6041 = vmul.f32 %v6009, %v6035
  %v6042 = vmul.f32 %v6011, %v6036
  %v6043 = vmul.f32 %v6013, %v6037
  %6044 = vrot.lane.b32.xlu0 %v5801, 64
  %v6045 = vpop.permute.xlu0 %6044
  %6046 = vrot.lane.b32.xlu0 %v5806, 64
  %v6047 = vpop.permute.xlu0 %6046
  %6048 = vrot.lane.b32.xlu0 %v5811, 64
  %v6049 = vpop.permute.xlu0 %6048
  %6050 = vrot.lane.b32.xlu0 %v5816, 64
  %v6051 = vpop.permute.xlu0 %6050
  %6052 = vrot.lane.b32.xlu0 %v5821, 64
  %v6053 = vpop.permute.xlu0 %6052
  %6054 = vrot.lane.b32.xlu0 %v5826, 64
  %v6055 = vpop.permute.xlu0 %6054
  %v6063 = vsel %vm3619, %v6038, 0
  %v6066 = vsel %vm3619, %v6039, 0
  %v6069 = vsel %vm3619, %v6040, 0
  %v6072 = vsel %vm3619, %v6041, 0
  %v6075 = vsel %vm3619, %v6042, 0
  %v6078 = vsel %vm3619, %v6043, 0
  %6080 = vmatprep.subr.mxu0 0.0
  %6081 = vmatpush1.msra.mxu0 0.0
  %6082 = vmatprep.subr.mxu0 0.0
  %6083 = vmatpush1.msra.mxu0 0.0
  %6084 = vmatprep.subr.mxu0 0.0
  %6085 = vmatpush1.msra.mxu0 0.0
  %6086 = vmatprep.subr.mxu0 0.0
  %6087 = vmatpush1.msra.mxu0 0.0
  %6088 = vmatprep.subr.mxu0 0.0
  %6089 = vmatpush1.msra.mxu0 0.0
  %6090 = vmatprep.subr.mxu0 0.0
  %6091 = vmatpush1.msra.mxu0 0.0
  %6092 = vmatprep.subr.mxu0 0.0
  %6093 = vmatpush1.msra.mxu0 0.0
  %6094 = vmatprep.subr.mxu0 0.0
  %6095 = vmatpush1.msra.mxu0 0.0
  %6096 = vmatprep.subr.mxu0 0.0
  %6097 = vmatpush1.msra.mxu0 0.0
  %6098 = vmatprep.subr.mxu0 0.0
  %6099 = vmatpush1.msra.mxu0 0.0
  %6100 = vmatprep.subr.mxu0 0.0
  %6101 = vmatpush1.msra.mxu0 %v6055
  %6102 = vmatprep.subr.mxu0 0.0
  %6103 = vmatpush1.msra.mxu0 %v6053
  %6104 = vmatprep.subr.mxu0 0.0
  %6105 = vmatpush1.msra.mxu0 %v6051
  %6106 = vmatprep.subr.mxu0 0.0
  %6107 = vmatpush1.msra.mxu0 %v6049
  %6108 = vmatprep.subr.mxu0 0.0
  %6109 = vmatpush1.msra.mxu0 %v6047
  %6110 = vmatprep.subr.mxu0 0.0
  %6111 = vmatpush1.msra.mxu0 %v6045
  %6112 = vmatprep.subr.mxu0 0.0
  %6113 = vmatpush2.msra.mxu0 0.0
  %6114 = vmatprep.subr.mxu0 0.0
  %6115 = vmatpush2.msra.mxu0 0.0
  %6116 = vmatprep.subr.mxu0 0.0
  %6117 = vmatpush2.msra.mxu0 0.0
  %6118 = vmatprep.subr.mxu0 0.0
  %6119 = vmatpush2.msra.mxu0 0.0
  %6120 = vmatprep.subr.mxu0 0.0
  %6121 = vmatpush2.msra.mxu0 0.0
  %6122 = vmatprep.subr.mxu0 0.0
  %6123 = vmatpush2.msra.mxu0 0.0
  %6124 = vmatprep.subr.mxu0 0.0
  %6125 = vmatpush2.msra.mxu0 0.0
  %6126 = vmatprep.subr.mxu0 0.0
  %6127 = vmatpush2.msra.mxu0 0.0
  %6128 = vmatprep.subr.mxu0 0.0
  %6129 = vmatpush2.msra.mxu0 0.0
  %6130 = vmatprep.subr.mxu0 0.0
  %6131 = vmatpush2.msra.mxu0 0.0
  %6132 = vmatprep.subr.mxu0 0.0
  %6133 = vmatpush2.msra.mxu0 0.0
  %6134 = vmatprep.subr.mxu0 0.0
  %6135 = vmatpush2.msra.mxu0 0.0
  %6136 = vmatprep.subr.mxu0 0.0
  %6137 = vmatpush2.msra.mxu0 0.0
  %6138 = vmatprep.subr.mxu0 0.0
  %6139 = vmatpush2.msra.mxu0 0.0
  %6140 = vmatprep.subr.mxu0 0.0
  %6141 = vmatpush2.msra.mxu0 0.0
  %6142 = vmatprep.subr.mxu0 0.0
  %6143 = vmatpush2.msra.mxu0 0.0
  %6144 = vmatprep.mubr.f32.mxu0 0.0
  %6145 = vmatmul.mubr.f32.gmra.mxu0 %v6063
  %v6146 = vpop.f32.mrf.mxu0
  %v6147 = vadd.f32 0.0, %v6146
  %v6148 = vpop.f32.mrf.mxu0
  %6149 = vmatprep.mubr.f32.mxu0 0.0
  %6150 = vmatmul.mubr.f32.gmra.mxu0 %v6066
  %v6151 = vpop.f32.mrf.mxu0
  %v6152 = vadd.f32 0.0, %v6151
  %v6153 = vpop.f32.mrf.mxu0
  %6154 = vmatprep.mubr.f32.mxu0 0.0
  %6155 = vmatmul.mubr.f32.gmra.mxu0 %v6069
  %v6156 = vpop.f32.mrf.mxu0
  %v6157 = vadd.f32 0.0, %v6156
  %v6158 = vpop.f32.mrf.mxu0
  %6159 = vmatprep.mubr.f32.mxu0 0.0
  %6160 = vmatmul.mubr.f32.gmra.mxu0 %v6072
  %v6161 = vpop.f32.mrf.mxu0
  %v6162 = vadd.f32 0.0, %v6161
  %v6163 = vpop.f32.mrf.mxu0
  %6164 = vmatprep.mubr.f32.mxu0 0.0
  %6165 = vmatmul.mubr.f32.gmra.mxu0 %v6075
  %v6166 = vpop.f32.mrf.mxu0
  %v6167 = vadd.f32 0.0, %v6166
  %v6168 = vpop.f32.mrf.mxu0
  %6169 = vmatprep.mubr.f32.mxu0 0.0
  %6170 = vmatmul.mubr.f32.gmra.mxu0 %v6078
  %v6171 = vpop.f32.mrf.mxu0
  %v6172 = vadd.f32 0.0, %v6171
  %v6173 = vpop.f32.mrf.mxu0
  %6174 = vdwg.mxu0
  %6175 = vrot.lane.b32.xlu0 %v5801, 120
  %v6176 = vpop.permute.xlu0 %6175
  %6177 = vrot.lane.b32.xlu0 %v5806, 120
  %v6178 = vpop.permute.xlu0 %6177
  %6179 = vrot.lane.b32.xlu0 %v5811, 120
  %v6180 = vpop.permute.xlu0 %6179
  %6181 = vrot.lane.b32.xlu0 %v5816, 120
  %v6182 = vpop.permute.xlu0 %6181
  %6183 = vrot.lane.b32.xlu0 %v5821, 120
  %v6184 = vpop.permute.xlu0 %6183
  %6185 = vrot.lane.b32.xlu0 %v5826, 120
  %v6186 = vpop.permute.xlu0 %6185
  %6187 = vrot.lane.b32.xlu0 %v5801, 88
  %v6188 = vpop.permute.xlu0 %6187
  %6189 = vrot.lane.b32.xlu0 %v5806, 88
  %v6190 = vpop.permute.xlu0 %6189
  %6191 = vrot.lane.b32.xlu0 %v5811, 88
  %v6192 = vpop.permute.xlu0 %6191
  %6193 = vrot.lane.b32.xlu0 %v5816, 88
  %v6194 = vpop.permute.xlu0 %6193
  %6195 = vrot.lane.b32.xlu0 %v5821, 88
  %v6196 = vpop.permute.xlu0 %6195
  %6197 = vrot.lane.b32.xlu0 %v5826, 88
  %v6198 = vpop.permute.xlu0 %6197
  %v6199 = vsel %vm317, %v6176, 0
  %v6201 = vsel %vm317, %v6178, 0
  %v6203 = vsel %vm317, %v6180, 0
  %v6205 = vsel %vm317, %v6182, 0
  %v6207 = vsel %vm317, %v6184, 0
  %v6209 = vsel %vm317, %v6186, 0
  %v6211 = vsel %vm317, %v6188, 0
  %v6213 = vsel %vm317, %v6190, 0
  %v6215 = vsel %vm317, %v6192, 0
  %v6217 = vsel %vm317, %v6194, 0
  %v6219 = vsel %vm317, %v6196, 0
  %v6221 = vsel %vm317, %v6198, 0
  %6223 = vmatprep.subr.mxu0 0.0
  %6224 = vmatpush1.xpose.msra.mxu0 0.0
  %6225 = vmatprep.subr.mxu0 0.0
  %6226 = vmatpush1.xpose.msra.mxu0 0.0
  %6227 = vmatprep.subr.mxu0 0.0
  %6228 = vmatpush1.xpose.msra.mxu0 0.0
  %6229 = vmatprep.subr.mxu0 0.0
  %6230 = vmatpush1.xpose.msra.mxu0 0.0
  %6231 = vmatprep.subr.mxu0 0.0
  %6232 = vmatpush1.xpose.msra.mxu0 0.0
  %6233 = vmatprep.subr.mxu0 0.0
  %6234 = vmatpush1.xpose.msra.mxu0 0.0
  %6235 = vmatprep.subr.mxu0 0.0
  %6236 = vmatpush1.xpose.msra.mxu0 0.0
  %6237 = vmatprep.subr.mxu0 0.0
  %6238 = vmatpush1.xpose.msra.mxu0 0.0
  %6239 = vmatprep.subr.mxu0 0.0
  %6240 = vmatpush1.xpose.msra.mxu0 0.0
  %6241 = vmatprep.subr.mxu0 0.0
  %6242 = vmatpush1.xpose.msra.mxu0 0.0
  %6243 = vmatprep.subr.mxu0 0.0
  %6244 = vmatpush1.xpose.msra.mxu0 %v6221
  %6245 = vmatprep.subr.mxu0 0.0
  %6246 = vmatpush1.xpose.msra.mxu0 %v6219
  %6247 = vmatprep.subr.mxu0 0.0
  %6248 = vmatpush1.xpose.msra.mxu0 %v6217
  %6249 = vmatprep.subr.mxu0 0.0
  %6250 = vmatpush1.xpose.msra.mxu0 %v6215
  %6251 = vmatprep.subr.mxu0 0.0
  %6252 = vmatpush1.xpose.msra.mxu0 %v6213
  %6253 = vmatprep.subr.mxu0 0.0
  %6254 = vmatpush1.xpose.msra.mxu0 %v6211
  %6255 = vmatprep.subr.mxu0 0.0
  %6256 = vmatpush2.xpose.msra.mxu0 0.0
  %6257 = vmatprep.subr.mxu0 0.0
  %6258 = vmatpush2.xpose.msra.mxu0 0.0
  %6259 = vmatprep.subr.mxu0 0.0
  %6260 = vmatpush2.xpose.msra.mxu0 0.0
  %6261 = vmatprep.subr.mxu0 0.0
  %6262 = vmatpush2.xpose.msra.mxu0 0.0
  %6263 = vmatprep.subr.mxu0 0.0
  %6264 = vmatpush2.xpose.msra.mxu0 0.0
  %6265 = vmatprep.subr.mxu0 0.0
  %6266 = vmatpush2.xpose.msra.mxu0 0.0
  %6267 = vmatprep.subr.mxu0 0.0
  %6268 = vmatpush2.xpose.msra.mxu0 0.0
  %6269 = vmatprep.subr.mxu0 0.0
  %6270 = vmatpush2.xpose.msra.mxu0 0.0
  %6271 = vmatprep.subr.mxu0 0.0
  %6272 = vmatpush2.xpose.msra.mxu0 0.0
  %6273 = vmatprep.subr.mxu0 0.0
  %6274 = vmatpush2.xpose.msra.mxu0 0.0
  %6275 = vmatprep.subr.mxu0 0.0
  %6276 = vmatpush2.xpose.msra.mxu0 0.0
  %6277 = vmatprep.subr.mxu0 0.0
  %6278 = vmatpush2.xpose.msra.mxu0 0.0
  %6279 = vmatprep.subr.mxu0 0.0
  %6280 = vmatpush2.xpose.msra.mxu0 0.0
  %6281 = vmatprep.subr.mxu0 0.0
  %6282 = vmatpush2.xpose.msra.mxu0 0.0
  %6283 = vmatprep.subr.mxu0 0.0
  %6284 = vmatpush2.xpose.msra.mxu0 0.0
  %6285 = vmatprep.subr.mxu0 0.0
  %6286 = vmatpush2.xpose.msra.mxu0 0.0
  %6287 = vmatprep.mubr.f32.mxu0 0.0
  %6288 = vmatmul.mubr.f32.gmra.mxu0 %v6199
  %v6289 = vpop.f32.mrf.mxu0
  %v6290 = vadd.f32 0.0, %v6289
  %v6291 = vpop.f32.mrf.mxu0
  %6292 = vmatprep.mubr.f32.mxu0 0.0
  %6293 = vmatmul.mubr.f32.gmra.mxu0 %v6201
  %v6294 = vpop.f32.mrf.mxu0
  %v6295 = vadd.f32 0.0, %v6294
  %v6296 = vpop.f32.mrf.mxu0
  %6297 = vmatprep.mubr.f32.mxu0 0.0
  %6298 = vmatmul.mubr.f32.gmra.mxu0 %v6203
  %v6299 = vpop.f32.mrf.mxu0
  %v6300 = vadd.f32 0.0, %v6299
  %v6301 = vpop.f32.mrf.mxu0
  %6302 = vmatprep.mubr.f32.mxu0 0.0
  %6303 = vmatmul.mubr.f32.gmra.mxu0 %v6205
  %v6304 = vpop.f32.mrf.mxu0
  %v6305 = vadd.f32 0.0, %v6304
  %v6306 = vpop.f32.mrf.mxu0
  %6307 = vmatprep.mubr.f32.mxu0 0.0
  %6308 = vmatmul.mubr.f32.gmra.mxu0 %v6207
  %v6309 = vpop.f32.mrf.mxu0
  %v6310 = vadd.f32 0.0, %v6309
  %v6311 = vpop.f32.mrf.mxu0
  %6312 = vmatprep.mubr.f32.mxu0 0.0
  %6313 = vmatmul.mubr.f32.gmra.mxu0 %v6209
  %v6314 = vpop.f32.mrf.mxu0
  %v6315 = vadd.f32 0.0, %v6314
  %v6316 = vpop.f32.mrf.mxu0
  %6317 = vdwg.mxu0
  %v6318 = vmul.f32 %v6290, 0.35355338
  %v6319 = vmul.f32 %v6295, 0.35355338
  %v6320 = vmul.f32 %v6300, 0.35355338
  %v6321 = vmul.f32 %v6305, 0.35355338
  %v6322 = vmul.f32 %v6310, 0.35355338
  %v6323 = vmul.f32 %v6315, 0.35355338
  %v6324 = vadd.f32 %v6318, %v3227
  %v6325 = vadd.f32 %v6319, %v3228
  %v6326 = vadd.f32 %v6320, %v3229
  %v6327 = vadd.f32 %v6321, %v3230
  %v6328 = vadd.f32 %v6322, %v3231
  %v6329 = vadd.f32 %v6323, %v3232
  %v6330 = vsel %vm3619, %v6324, -inf
  %6331 = vmax.xlane.f32.xlu0 %v6330
  %v6332 = vpop.xlane.xlu0 %6331
  %v6333 = vsel %vm3619, %v6325, -inf
  %6334 = vmax.xlane.f32.xlu0 %v6333
  %v6335 = vpop.xlane.xlu0 %6334
  %v6336 = vsel %vm3619, %v6326, -inf
  %6337 = vmax.xlane.f32.xlu0 %v6336
  %v6338 = vpop.xlane.xlu0 %6337
  %v6339 = vsel %vm3619, %v6327, -inf
  %6340 = vmax.xlane.f32.xlu0 %v6339
  %v6341 = vpop.xlane.xlu0 %6340
  %v6342 = vsel %vm3619, %v6328, -inf
  %6343 = vmax.xlane.f32.xlu0 %v6342
  %v6344 = vpop.xlane.xlu0 %6343
  %v6345 = vsel %vm3619, %v6329, -inf
  %6346 = vmax.xlane.f32.xlu0 %v6345
  %v6347 = vpop.xlane.xlu0 %6346
  %v6348 = vsub.f32 %v6324, %v6332
  %v6349 = vsub.f32 %v6325, %v6335
  %v6350 = vsub.f32 %v6326, %v6338
  %v6351 = vsub.f32 %v6327, %v6341
  %v6352 = vsub.f32 %v6328, %v6344
  %v6353 = vsub.f32 %v6329, %v6347
  %v6354 = vmul.f32 %v6348, 1.442695
  %v6355 = vpow.pop %v6354
  %v6356 = vmul.f32 %v6349, 1.442695
  %v6357 = vpow.pop %v6356
  %v6358 = vmul.f32 %v6350, 1.442695
  %v6359 = vpow.pop %v6358
  %v6360 = vmul.f32 %v6351, 1.442695
  %v6361 = vpow.pop %v6360
  %v6362 = vmul.f32 %v6352, 1.442695
  %v6363 = vpow.pop %v6362
  %v6364 = vmul.f32 %v6353, 1.442695
  %v6365 = vpow.pop %v6364
  %v6366 = vsel %vm3619, %v6355, 0.0
  %6367 = vadd.xlane.f32.xlu0 %v6366
  %v6368 = vpop.xlane.xlu0 %6367
  %v6369 = vsel %vm3619, %v6357, 0.0
  %6370 = vadd.xlane.f32.xlu0 %v6369
  %v6371 = vpop.xlane.xlu0 %6370
  %v6372 = vsel %vm3619, %v6359, 0.0
  %6373 = vadd.xlane.f32.xlu0 %v6372
  %v6374 = vpop.xlane.xlu0 %6373
  %v6375 = vsel %vm3619, %v6361, 0.0
  %6376 = vadd.xlane.f32.xlu0 %v6375
  %v6377 = vpop.xlane.xlu0 %6376
  %v6378 = vsel %vm3619, %v6363, 0.0
  %6379 = vadd.xlane.f32.xlu0 %v6378
  %v6380 = vpop.xlane.xlu0 %6379
  %v6381 = vsel %vm3619, %v6365, 0.0
  %6382 = vadd.xlane.f32.xlu0 %v6381
  %v6383 = vpop.xlane.xlu0 %6382
  %v6384 = vrcp.pop %v6368
  %v6385 = vrcp.pop %v6371
  %v6386 = vrcp.pop %v6374
  %v6387 = vrcp.pop %v6377
  %v6388 = vrcp.pop %v6380
  %v6389 = vrcp.pop %v6383
  %v6390 = vmul.f32 %v6355, %v6384
  %v6391 = vmul.f32 %v6357, %v6385
  %v6392 = vmul.f32 %v6359, %v6386
  %v6393 = vmul.f32 %v6361, %v6387
  %v6394 = vmul.f32 %v6363, %v6388
  %v6395 = vmul.f32 %v6365, %v6389
  %6396 = vrot.lane.b32.xlu0 %v5801, 56
  %v6397 = vpop.permute.xlu0 %6396
  %6398 = vrot.lane.b32.xlu0 %v5806, 56
  %v6399 = vpop.permute.xlu0 %6398
  %6400 = vrot.lane.b32.xlu0 %v5811, 56
  %v6401 = vpop.permute.xlu0 %6400
  %6402 = vrot.lane.b32.xlu0 %v5816, 56
  %v6403 = vpop.permute.xlu0 %6402
  %6404 = vrot.lane.b32.xlu0 %v5821, 56
  %v6405 = vpop.permute.xlu0 %6404
  %6406 = vrot.lane.b32.xlu0 %v5826, 56
  %v6407 = vpop.permute.xlu0 %6406
  %v6415 = vsel %vm3619, %v6390, 0
  %v6418 = vsel %vm3619, %v6391, 0
  %v6421 = vsel %vm3619, %v6392, 0
  %v6424 = vsel %vm3619, %v6393, 0
  %v6427 = vsel %vm3619, %v6394, 0
  %v6430 = vsel %vm3619, %v6395, 0
  %6432 = vmatprep.subr.mxu0 0.0
  %6433 = vmatpush1.msra.mxu0 0.0
  %6434 = vmatprep.subr.mxu0 0.0
  %6435 = vmatpush1.msra.mxu0 0.0
  %6436 = vmatprep.subr.mxu0 0.0
  %6437 = vmatpush1.msra.mxu0 0.0
  %6438 = vmatprep.subr.mxu0 0.0
  %6439 = vmatpush1.msra.mxu0 0.0
  %6440 = vmatprep.subr.mxu0 0.0
  %6441 = vmatpush1.msra.mxu0 0.0
  %6442 = vmatprep.subr.mxu0 0.0
  %6443 = vmatpush1.msra.mxu0 0.0
  %6444 = vmatprep.subr.mxu0 0.0
  %6445 = vmatpush1.msra.mxu0 0.0
  %6446 = vmatprep.subr.mxu0 0.0
  %6447 = vmatpush1.msra.mxu0 0.0
  %6448 = vmatprep.subr.mxu0 0.0
  %6449 = vmatpush1.msra.mxu0 0.0
  %6450 = vmatprep.subr.mxu0 0.0
  %6451 = vmatpush1.msra.mxu0 0.0
  %6452 = vmatprep.subr.mxu0 0.0
  %6453 = vmatpush1.msra.mxu0 %v6407
  %6454 = vmatprep.subr.mxu0 0.0
  %6455 = vmatpush1.msra.mxu0 %v6405
  %6456 = vmatprep.subr.mxu0 0.0
  %6457 = vmatpush1.msra.mxu0 %v6403
  %6458 = vmatprep.subr.mxu0 0.0
  %6459 = vmatpush1.msra.mxu0 %v6401
  %6460 = vmatprep.subr.mxu0 0.0
  %6461 = vmatpush1.msra.mxu0 %v6399
  %6462 = vmatprep.subr.mxu0 0.0
  %6463 = vmatpush1.msra.mxu0 %v6397
  %6464 = vmatprep.subr.mxu0 0.0
  %6465 = vmatpush2.msra.mxu0 0.0
  %6466 = vmatprep.subr.mxu0 0.0
  %6467 = vmatpush2.msra.mxu0 0.0
  %6468 = vmatprep.subr.mxu0 0.0
  %6469 = vmatpush2.msra.mxu0 0.0
  %6470 = vmatprep.subr.mxu0 0.0
  %6471 = vmatpush2.msra.mxu0 0.0
  %6472 = vmatprep.subr.mxu0 0.0
  %6473 = vmatpush2.msra.mxu0 0.0
  %6474 = vmatprep.subr.mxu0 0.0
  %6475 = vmatpush2.msra.mxu0 0.0
  %6476 = vmatprep.subr.mxu0 0.0
  %6477 = vmatpush2.msra.mxu0 0.0
  %6478 = vmatprep.subr.mxu0 0.0
  %6479 = vmatpush2.msra.mxu0 0.0
  %6480 = vmatprep.subr.mxu0 0.0
  %6481 = vmatpush2.msra.mxu0 0.0
  %6482 = vmatprep.subr.mxu0 0.0
  %6483 = vmatpush2.msra.mxu0 0.0
  %6484 = vmatprep.subr.mxu0 0.0
  %6485 = vmatpush2.msra.mxu0 0.0
  %6486 = vmatprep.subr.mxu0 0.0
  %6487 = vmatpush2.msra.mxu0 0.0
  %6488 = vmatprep.subr.mxu0 0.0
  %6489 = vmatpush2.msra.mxu0 0.0
  %6490 = vmatprep.subr.mxu0 0.0
  %6491 = vmatpush2.msra.mxu0 0.0
  %6492 = vmatprep.subr.mxu0 0.0
  %6493 = vmatpush2.msra.mxu0 0.0
  %6494 = vmatprep.subr.mxu0 0.0
  %6495 = vmatpush2.msra.mxu0 0.0
  %6496 = vmatprep.mubr.f32.mxu0 0.0
  %6497 = vmatmul.mubr.f32.gmra.mxu0 %v6415
  %v6498 = vpop.f32.mrf.mxu0
  %v6499 = vadd.f32 0.0, %v6498
  %v6500 = vpop.f32.mrf.mxu0
  %6501 = vmatprep.mubr.f32.mxu0 0.0
  %6502 = vmatmul.mubr.f32.gmra.mxu0 %v6418
  %v6503 = vpop.f32.mrf.mxu0
  %v6504 = vadd.f32 0.0, %v6503
  %v6505 = vpop.f32.mrf.mxu0
  %6506 = vmatprep.mubr.f32.mxu0 0.0
  %6507 = vmatmul.mubr.f32.gmra.mxu0 %v6421
  %v6508 = vpop.f32.mrf.mxu0
  %v6509 = vadd.f32 0.0, %v6508
  %v6510 = vpop.f32.mrf.mxu0
  %6511 = vmatprep.mubr.f32.mxu0 0.0
  %6512 = vmatmul.mubr.f32.gmra.mxu0 %v6424
  %v6513 = vpop.f32.mrf.mxu0
  %v6514 = vadd.f32 0.0, %v6513
  %v6515 = vpop.f32.mrf.mxu0
  %6516 = vmatprep.mubr.f32.mxu0 0.0
  %6517 = vmatmul.mubr.f32.gmra.mxu0 %v6427
  %v6518 = vpop.f32.mrf.mxu0
  %v6519 = vadd.f32 0.0, %v6518
  %v6520 = vpop.f32.mrf.mxu0
  %6521 = vmatprep.mubr.f32.mxu0 0.0
  %6522 = vmatmul.mubr.f32.gmra.mxu0 %v6430
  %v6523 = vpop.f32.mrf.mxu0
  %v6524 = vadd.f32 0.0, %v6523
  %v6525 = vpop.f32.mrf.mxu0
  %6526 = vdwg.mxu0
  %6527 = vrot.lane.b32.xlu0 %v5801, 112
  %v6528 = vpop.permute.xlu0 %6527
  %6529 = vrot.lane.b32.xlu0 %v5806, 112
  %v6530 = vpop.permute.xlu0 %6529
  %6531 = vrot.lane.b32.xlu0 %v5811, 112
  %v6532 = vpop.permute.xlu0 %6531
  %6533 = vrot.lane.b32.xlu0 %v5816, 112
  %v6534 = vpop.permute.xlu0 %6533
  %6535 = vrot.lane.b32.xlu0 %v5821, 112
  %v6536 = vpop.permute.xlu0 %6535
  %6537 = vrot.lane.b32.xlu0 %v5826, 112
  %v6538 = vpop.permute.xlu0 %6537
  %6539 = vrot.lane.b32.xlu0 %v5801, 80
  %v6540 = vpop.permute.xlu0 %6539
  %6541 = vrot.lane.b32.xlu0 %v5806, 80
  %v6542 = vpop.permute.xlu0 %6541
  %6543 = vrot.lane.b32.xlu0 %v5811, 80
  %v6544 = vpop.permute.xlu0 %6543
  %6545 = vrot.lane.b32.xlu0 %v5816, 80
  %v6546 = vpop.permute.xlu0 %6545
  %6547 = vrot.lane.b32.xlu0 %v5821, 80
  %v6548 = vpop.permute.xlu0 %6547
  %6549 = vrot.lane.b32.xlu0 %v5826, 80
  %v6550 = vpop.permute.xlu0 %6549
  %v6551 = vsel %vm317, %v6528, 0
  %v6553 = vsel %vm317, %v6530, 0
  %v6555 = vsel %vm317, %v6532, 0
  %v6557 = vsel %vm317, %v6534, 0
  %v6559 = vsel %vm317, %v6536, 0
  %v6561 = vsel %vm317, %v6538, 0
  %v6563 = vsel %vm317, %v6540, 0
  %v6565 = vsel %vm317, %v6542, 0
  %v6567 = vsel %vm317, %v6544, 0
  %v6569 = vsel %vm317, %v6546, 0
  %v6571 = vsel %vm317, %v6548, 0
  %v6573 = vsel %vm317, %v6550, 0
  %6575 = vmatprep.subr.mxu0 0.0
  %6576 = vmatpush1.xpose.msra.mxu0 0.0
  %6577 = vmatprep.subr.mxu0 0.0
  %6578 = vmatpush1.xpose.msra.mxu0 0.0
  %6579 = vmatprep.subr.mxu0 0.0
  %6580 = vmatpush1.xpose.msra.mxu0 0.0
  %6581 = vmatprep.subr.mxu0 0.0
  %6582 = vmatpush1.xpose.msra.mxu0 0.0
  %6583 = vmatprep.subr.mxu0 0.0
  %6584 = vmatpush1.xpose.msra.mxu0 0.0
  %6585 = vmatprep.subr.mxu0 0.0
  %6586 = vmatpush1.xpose.msra.mxu0 0.0
  %6587 = vmatprep.subr.mxu0 0.0
  %6588 = vmatpush1.xpose.msra.mxu0 0.0
  %6589 = vmatprep.subr.mxu0 0.0
  %6590 = vmatpush1.xpose.msra.mxu0 0.0
  %6591 = vmatprep.subr.mxu0 0.0
  %6592 = vmatpush1.xpose.msra.mxu0 0.0
  %6593 = vmatprep.subr.mxu0 0.0
  %6594 = vmatpush1.xpose.msra.mxu0 0.0
  %6595 = vmatprep.subr.mxu0 0.0
  %6596 = vmatpush1.xpose.msra.mxu0 %v6573
  %6597 = vmatprep.subr.mxu0 0.0
  %6598 = vmatpush1.xpose.msra.mxu0 %v6571
  %6599 = vmatprep.subr.mxu0 0.0
  %6600 = vmatpush1.xpose.msra.mxu0 %v6569
  %6601 = vmatprep.subr.mxu0 0.0
  %6602 = vmatpush1.xpose.msra.mxu0 %v6567
  %6603 = vmatprep.subr.mxu0 0.0
  %6604 = vmatpush1.xpose.msra.mxu0 %v6565
  %6605 = vmatprep.subr.mxu0 0.0
  %6606 = vmatpush1.xpose.msra.mxu0 %v6563
  %6607 = vmatprep.subr.mxu0 0.0
  %6608 = vmatpush2.xpose.msra.mxu0 0.0
  %6609 = vmatprep.subr.mxu0 0.0
  %6610 = vmatpush2.xpose.msra.mxu0 0.0
  %6611 = vmatprep.subr.mxu0 0.0
  %6612 = vmatpush2.xpose.msra.mxu0 0.0
  %6613 = vmatprep.subr.mxu0 0.0
  %6614 = vmatpush2.xpose.msra.mxu0 0.0
  %6615 = vmatprep.subr.mxu0 0.0
  %6616 = vmatpush2.xpose.msra.mxu0 0.0
  %6617 = vmatprep.subr.mxu0 0.0
  %6618 = vmatpush2.xpose.msra.mxu0 0.0
  %6619 = vmatprep.subr.mxu0 0.0
  %6620 = vmatpush2.xpose.msra.mxu0 0.0
  %6621 = vmatprep.subr.mxu0 0.0
  %6622 = vmatpush2.xpose.msra.mxu0 0.0
  %6623 = vmatprep.subr.mxu0 0.0
  %6624 = vmatpush2.xpose.msra.mxu0 0.0
  %6625 = vmatprep.subr.mxu0 0.0
  %6626 = vmatpush2.xpose.msra.mxu0 0.0
  %6627 = vmatprep.subr.mxu0 0.0
  %6628 = vmatpush2.xpose.msra.mxu0 0.0
  %6629 = vmatprep.subr.mxu0 0.0
  %6630 = vmatpush2.xpose.msra.mxu0 0.0
  %6631 = vmatprep.subr.mxu0 0.0
  %6632 = vmatpush2.xpose.msra.mxu0 0.0
  %6633 = vmatprep.subr.mxu0 0.0
  %6634 = vmatpush2.xpose.msra.mxu0 0.0
  %6635 = vmatprep.subr.mxu0 0.0
  %6636 = vmatpush2.xpose.msra.mxu0 0.0
  %6637 = vmatprep.subr.mxu0 0.0
  %6638 = vmatpush2.xpose.msra.mxu0 0.0
  %6639 = vmatprep.mubr.f32.mxu0 0.0
  %6640 = vmatmul.mubr.f32.gmra.mxu0 %v6551
  %v6641 = vpop.f32.mrf.mxu0
  %v6642 = vadd.f32 0.0, %v6641
  %v6643 = vpop.f32.mrf.mxu0
  %6644 = vmatprep.mubr.f32.mxu0 0.0
  %6645 = vmatmul.mubr.f32.gmra.mxu0 %v6553
  %v6646 = vpop.f32.mrf.mxu0
  %v6647 = vadd.f32 0.0, %v6646
  %v6648 = vpop.f32.mrf.mxu0
  %6649 = vmatprep.mubr.f32.mxu0 0.0
  %6650 = vmatmul.mubr.f32.gmra.mxu0 %v6555
  %v6651 = vpop.f32.mrf.mxu0
  %v6652 = vadd.f32 0.0, %v6651
  %v6653 = vpop.f32.mrf.mxu0
  %6654 = vmatprep.mubr.f32.mxu0 0.0
  %6655 = vmatmul.mubr.f32.gmra.mxu0 %v6557
  %v6656 = vpop.f32.mrf.mxu0
  %v6657 = vadd.f32 0.0, %v6656
  %v6658 = vpop.f32.mrf.mxu0
  %6659 = vmatprep.mubr.f32.mxu0 0.0
  %6660 = vmatmul.mubr.f32.gmra.mxu0 %v6559
  %v6661 = vpop.f32.mrf.mxu0
  %v6662 = vadd.f32 0.0, %v6661
  %v6663 = vpop.f32.mrf.mxu0
  %6664 = vmatprep.mubr.f32.mxu0 0.0
  %6665 = vmatmul.mubr.f32.gmra.mxu0 %v6561
  %v6666 = vpop.f32.mrf.mxu0
  %v6667 = vadd.f32 0.0, %v6666
  %v6668 = vpop.f32.mrf.mxu0
  %6669 = vdwg.mxu0
  %v6670 = vmul.f32 %v6642, 0.35355338
  %v6671 = vmul.f32 %v6647, 0.35355338
  %v6672 = vmul.f32 %v6652, 0.35355338
  %v6673 = vmul.f32 %v6657, 0.35355338
  %v6674 = vmul.f32 %v6662, 0.35355338
  %v6675 = vmul.f32 %v6667, 0.35355338
  %v6676 = vadd.f32 %v6670, %v3227
  %v6677 = vadd.f32 %v6671, %v3228
  %v6678 = vadd.f32 %v6672, %v3229
  %v6679 = vadd.f32 %v6673, %v3230
  %v6680 = vadd.f32 %v6674, %v3231
  %v6681 = vadd.f32 %v6675, %v3232
  %v6682 = vsel %vm3619, %v6676, -inf
  %6683 = vmax.xlane.f32.xlu0 %v6682
  %v6684 = vpop.xlane.xlu0 %6683
  %v6685 = vsel %vm3619, %v6677, -inf
  %6686 = vmax.xlane.f32.xlu0 %v6685
  %v6687 = vpop.xlane.xlu0 %6686
  %v6688 = vsel %vm3619, %v6678, -inf
  %6689 = vmax.xlane.f32.xlu0 %v6688
  %v6690 = vpop.xlane.xlu0 %6689
  %v6691 = vsel %vm3619, %v6679, -inf
  %6692 = vmax.xlane.f32.xlu0 %v6691
  %v6693 = vpop.xlane.xlu0 %6692
  %v6694 = vsel %vm3619, %v6680, -inf
  %6695 = vmax.xlane.f32.xlu0 %v6694
  %v6696 = vpop.xlane.xlu0 %6695
  %v6697 = vsel %vm3619, %v6681, -inf
  %6698 = vmax.xlane.f32.xlu0 %v6697
  %v6699 = vpop.xlane.xlu0 %6698
  %v6700 = vsub.f32 %v6676, %v6684
  %v6701 = vsub.f32 %v6677, %v6687
  %v6702 = vsub.f32 %v6678, %v6690
  %v6703 = vsub.f32 %v6679, %v6693
  %v6704 = vsub.f32 %v6680, %v6696
  %v6705 = vsub.f32 %v6681, %v6699
  %v6706 = vmul.f32 %v6700, 1.442695
  %v6707 = vpow.pop %v6706
  %v6708 = vmul.f32 %v6701, 1.442695
  %v6709 = vpow.pop %v6708
  %v6710 = vmul.f32 %v6702, 1.442695
  %v6711 = vpow.pop %v6710
  %v6712 = vmul.f32 %v6703, 1.442695
  %v6713 = vpow.pop %v6712
  %v6714 = vmul.f32 %v6704, 1.442695
  %v6715 = vpow.pop %v6714
  %v6716 = vmul.f32 %v6705, 1.442695
  %v6717 = vpow.pop %v6716
  %v6718 = vsel %vm3619, %v6707, 0.0
  %6719 = vadd.xlane.f32.xlu0 %v6718
  %v6720 = vpop.xlane.xlu0 %6719
  %v6721 = vsel %vm3619, %v6709, 0.0
  %6722 = vadd.xlane.f32.xlu0 %v6721
  %v6723 = vpop.xlane.xlu0 %6722
  %v6724 = vsel %vm3619, %v6711, 0.0
  %6725 = vadd.xlane.f32.xlu0 %v6724
  %v6726 = vpop.xlane.xlu0 %6725
  %v6727 = vsel %vm3619, %v6713, 0.0
  %6728 = vadd.xlane.f32.xlu0 %v6727
  %v6729 = vpop.xlane.xlu0 %6728
  %v6730 = vsel %vm3619, %v6715, 0.0
  %6731 = vadd.xlane.f32.xlu0 %v6730
  %v6732 = vpop.xlane.xlu0 %6731
  %v6733 = vsel %vm3619, %v6717, 0.0
  %6734 = vadd.xlane.f32.xlu0 %v6733
  %v6735 = vpop.xlane.xlu0 %6734
  %v6736 = vrcp.pop %v6720
  %v6737 = vrcp.pop %v6723
  %v6738 = vrcp.pop %v6726
  %v6739 = vrcp.pop %v6729
  %v6740 = vrcp.pop %v6732
  %v6741 = vrcp.pop %v6735
  %v6742 = vmul.f32 %v6707, %v6736
  %v6743 = vmul.f32 %v6709, %v6737
  %v6744 = vmul.f32 %v6711, %v6738
  %v6745 = vmul.f32 %v6713, %v6739
  %v6746 = vmul.f32 %v6715, %v6740
  %v6747 = vmul.f32 %v6717, %v6741
  %6748 = vrot.lane.b32.xlu0 %v5801, 48
  %v6749 = vpop.permute.xlu0 %6748
  %6750 = vrot.lane.b32.xlu0 %v5806, 48
  %v6751 = vpop.permute.xlu0 %6750
  %6752 = vrot.lane.b32.xlu0 %v5811, 48
  %v6753 = vpop.permute.xlu0 %6752
  %6754 = vrot.lane.b32.xlu0 %v5816, 48
  %v6755 = vpop.permute.xlu0 %6754
  %6756 = vrot.lane.b32.xlu0 %v5821, 48
  %v6757 = vpop.permute.xlu0 %6756
  %6758 = vrot.lane.b32.xlu0 %v5826, 48
  %v6759 = vpop.permute.xlu0 %6758
  %v6767 = vsel %vm3619, %v6742, 0
  %v6770 = vsel %vm3619, %v6743, 0
  %v6773 = vsel %vm3619, %v6744, 0
  %v6776 = vsel %vm3619, %v6745, 0
  %v6779 = vsel %vm3619, %v6746, 0
  %v6782 = vsel %vm3619, %v6747, 0
  %6784 = vmatprep.subr.mxu0 0.0
  %6785 = vmatpush1.msra.mxu0 0.0
  %6786 = vmatprep.subr.mxu0 0.0
  %6787 = vmatpush1.msra.mxu0 0.0
  %6788 = vmatprep.subr.mxu0 0.0
  %6789 = vmatpush1.msra.mxu0 0.0
  %6790 = vmatprep.subr.mxu0 0.0
  %6791 = vmatpush1.msra.mxu0 0.0
  %6792 = vmatprep.subr.mxu0 0.0
  %6793 = vmatpush1.msra.mxu0 0.0
  %6794 = vmatprep.subr.mxu0 0.0
  %6795 = vmatpush1.msra.mxu0 0.0
  %6796 = vmatprep.subr.mxu0 0.0
  %6797 = vmatpush1.msra.mxu0 0.0
  %6798 = vmatprep.subr.mxu0 0.0
  %6799 = vmatpush1.msra.mxu0 0.0
  %6800 = vmatprep.subr.mxu0 0.0
  %6801 = vmatpush1.msra.mxu0 0.0
  %6802 = vmatprep.subr.mxu0 0.0
  %6803 = vmatpush1.msra.mxu0 0.0
  %6804 = vmatprep.subr.mxu0 0.0
  %6805 = vmatpush1.msra.mxu0 %v6759
  %6806 = vmatprep.subr.mxu0 0.0
  %6807 = vmatpush1.msra.mxu0 %v6757
  %6808 = vmatprep.subr.mxu0 0.0
  %6809 = vmatpush1.msra.mxu0 %v6755
  %6810 = vmatprep.subr.mxu0 0.0
  %6811 = vmatpush1.msra.mxu0 %v6753
  %6812 = vmatprep.subr.mxu0 0.0
  %6813 = vmatpush1.msra.mxu0 %v6751
  %6814 = vmatprep.subr.mxu0 0.0
  %6815 = vmatpush1.msra.mxu0 %v6749
  %6816 = vmatprep.subr.mxu0 0.0
  %6817 = vmatpush2.msra.mxu0 0.0
  %6818 = vmatprep.subr.mxu0 0.0
  %6819 = vmatpush2.msra.mxu0 0.0
  %6820 = vmatprep.subr.mxu0 0.0
  %6821 = vmatpush2.msra.mxu0 0.0
  %6822 = vmatprep.subr.mxu0 0.0
  %6823 = vmatpush2.msra.mxu0 0.0
  %6824 = vmatprep.subr.mxu0 0.0
  %6825 = vmatpush2.msra.mxu0 0.0
  %6826 = vmatprep.subr.mxu0 0.0
  %6827 = vmatpush2.msra.mxu0 0.0
  %6828 = vmatprep.subr.mxu0 0.0
  %6829 = vmatpush2.msra.mxu0 0.0
  %6830 = vmatprep.subr.mxu0 0.0
  %6831 = vmatpush2.msra.mxu0 0.0
  %6832 = vmatprep.subr.mxu0 0.0
  %6833 = vmatpush2.msra.mxu0 0.0
  %6834 = vmatprep.subr.mxu0 0.0
  %6835 = vmatpush2.msra.mxu0 0.0
  %6836 = vmatprep.subr.mxu0 0.0
  %6837 = vmatpush2.msra.mxu0 0.0
  %6838 = vmatprep.subr.mxu0 0.0
  %6839 = vmatpush2.msra.mxu0 0.0
  %6840 = vmatprep.subr.mxu0 0.0
  %6841 = vmatpush2.msra.mxu0 0.0
  %6842 = vmatprep.subr.mxu0 0.0
  %6843 = vmatpush2.msra.mxu0 0.0
  %6844 = vmatprep.subr.mxu0 0.0
  %6845 = vmatpush2.msra.mxu0 0.0
  %6846 = vmatprep.subr.mxu0 0.0
  %6847 = vmatpush2.msra.mxu0 0.0
  %6848 = vmatprep.mubr.f32.mxu0 0.0
  %6849 = vmatmul.mubr.f32.gmra.mxu0 %v6767
  %v6850 = vpop.f32.mrf.mxu0
  %v6851 = vadd.f32 0.0, %v6850
  %v6852 = vpop.f32.mrf.mxu0
  %6853 = vmatprep.mubr.f32.mxu0 0.0
  %6854 = vmatmul.mubr.f32.gmra.mxu0 %v6770
  %v6855 = vpop.f32.mrf.mxu0
  %v6856 = vadd.f32 0.0, %v6855
  %v6857 = vpop.f32.mrf.mxu0
  %6858 = vmatprep.mubr.f32.mxu0 0.0
  %6859 = vmatmul.mubr.f32.gmra.mxu0 %v6773
  %v6860 = vpop.f32.mrf.mxu0
  %v6861 = vadd.f32 0.0, %v6860
  %v6862 = vpop.f32.mrf.mxu0
  %6863 = vmatprep.mubr.f32.mxu0 0.0
  %6864 = vmatmul.mubr.f32.gmra.mxu0 %v6776
  %v6865 = vpop.f32.mrf.mxu0
  %v6866 = vadd.f32 0.0, %v6865
  %v6867 = vpop.f32.mrf.mxu0
  %6868 = vmatprep.mubr.f32.mxu0 0.0
  %6869 = vmatmul.mubr.f32.gmra.mxu0 %v6779
  %v6870 = vpop.f32.mrf.mxu0
  %v6871 = vadd.f32 0.0, %v6870
  %v6872 = vpop.f32.mrf.mxu0
  %6873 = vmatprep.mubr.f32.mxu0 0.0
  %6874 = vmatmul.mubr.f32.gmra.mxu0 %v6782
  %v6875 = vpop.f32.mrf.mxu0
  %v6876 = vadd.f32 0.0, %v6875
  %v6877 = vpop.f32.mrf.mxu0
  %6878 = vdwg.mxu0
  %6879 = vrot.lane.b32.xlu0 %v5801, 104
  %v6880 = vpop.permute.xlu0 %6879
  %6881 = vrot.lane.b32.xlu0 %v5806, 104
  %v6882 = vpop.permute.xlu0 %6881
  %6883 = vrot.lane.b32.xlu0 %v5811, 104
  %v6884 = vpop.permute.xlu0 %6883
  %6885 = vrot.lane.b32.xlu0 %v5816, 104
  %v6886 = vpop.permute.xlu0 %6885
  %6887 = vrot.lane.b32.xlu0 %v5821, 104
  %v6888 = vpop.permute.xlu0 %6887
  %6889 = vrot.lane.b32.xlu0 %v5826, 104
  %v6890 = vpop.permute.xlu0 %6889
  %6891 = vrot.lane.b32.xlu0 %v5801, 72
  %v6892 = vpop.permute.xlu0 %6891
  %6893 = vrot.lane.b32.xlu0 %v5806, 72
  %v6894 = vpop.permute.xlu0 %6893
  %6895 = vrot.lane.b32.xlu0 %v5811, 72
  %v6896 = vpop.permute.xlu0 %6895
  %6897 = vrot.lane.b32.xlu0 %v5816, 72
  %v6898 = vpop.permute.xlu0 %6897
  %6899 = vrot.lane.b32.xlu0 %v5821, 72
  %v6900 = vpop.permute.xlu0 %6899
  %6901 = vrot.lane.b32.xlu0 %v5826, 72
  %v6902 = vpop.permute.xlu0 %6901
  %v6903 = vsel %vm317, %v6880, 0
  %v6905 = vsel %vm317, %v6882, 0
  %v6907 = vsel %vm317, %v6884, 0
  %v6909 = vsel %vm317, %v6886, 0
  %v6911 = vsel %vm317, %v6888, 0
  %v6913 = vsel %vm317, %v6890, 0
  %v6915 = vsel %vm317, %v6892, 0
  %v6917 = vsel %vm317, %v6894, 0
  %v6919 = vsel %vm317, %v6896, 0
  %v6921 = vsel %vm317, %v6898, 0
  %v6923 = vsel %vm317, %v6900, 0
  %v6925 = vsel %vm317, %v6902, 0
  %6927 = vmatprep.subr.mxu0 0.0
  %6928 = vmatpush1.xpose.msra.mxu0 0.0
  %6929 = vmatprep.subr.mxu0 0.0
  %6930 = vmatpush1.xpose.msra.mxu0 0.0
  %6931 = vmatprep.subr.mxu0 0.0
  %6932 = vmatpush1.xpose.msra.mxu0 0.0
  %6933 = vmatprep.subr.mxu0 0.0
  %6934 = vmatpush1.xpose.msra.mxu0 0.0
  %6935 = vmatprep.subr.mxu0 0.0
  %6936 = vmatpush1.xpose.msra.mxu0 0.0
  %6937 = vmatprep.subr.mxu0 0.0
  %6938 = vmatpush1.xpose.msra.mxu0 0.0
  %6939 = vmatprep.subr.mxu0 0.0
  %6940 = vmatpush1.xpose.msra.mxu0 0.0
  %6941 = vmatprep.subr.mxu0 0.0
  %6942 = vmatpush1.xpose.msra.mxu0 0.0
  %6943 = vmatprep.subr.mxu0 0.0
  %6944 = vmatpush1.xpose.msra.mxu0 0.0
  %6945 = vmatprep.subr.mxu0 0.0
  %6946 = vmatpush1.xpose.msra.mxu0 0.0
  %6947 = vmatprep.subr.mxu0 0.0
  %6948 = vmatpush1.xpose.msra.mxu0 %v6925
  %6949 = vmatprep.subr.mxu0 0.0
  %6950 = vmatpush1.xpose.msra.mxu0 %v6923
  %6951 = vmatprep.subr.mxu0 0.0
  %6952 = vmatpush1.xpose.msra.mxu0 %v6921
  %6953 = vmatprep.subr.mxu0 0.0
  %6954 = vmatpush1.xpose.msra.mxu0 %v6919
  %6955 = vmatprep.subr.mxu0 0.0
  %6956 = vmatpush1.xpose.msra.mxu0 %v6917
  %6957 = vmatprep.subr.mxu0 0.0
  %6958 = vmatpush1.xpose.msra.mxu0 %v6915
  %6959 = vmatprep.subr.mxu0 0.0
  %6960 = vmatpush2.xpose.msra.mxu0 0.0
  %6961 = vmatprep.subr.mxu0 0.0
  %6962 = vmatpush2.xpose.msra.mxu0 0.0
  %6963 = vmatprep.subr.mxu0 0.0
  %6964 = vmatpush2.xpose.msra.mxu0 0.0
  %6965 = vmatprep.subr.mxu0 0.0
  %6966 = vmatpush2.xpose.msra.mxu0 0.0
  %6967 = vmatprep.subr.mxu0 0.0
  %6968 = vmatpush2.xpose.msra.mxu0 0.0
  %6969 = vmatprep.subr.mxu0 0.0
  %6970 = vmatpush2.xpose.msra.mxu0 0.0
  %6971 = vmatprep.subr.mxu0 0.0
  %6972 = vmatpush2.xpose.msra.mxu0 0.0
  %6973 = vmatprep.subr.mxu0 0.0
  %6974 = vmatpush2.xpose.msra.mxu0 0.0
  %6975 = vmatprep.subr.mxu0 0.0
  %6976 = vmatpush2.xpose.msra.mxu0 0.0
  %6977 = vmatprep.subr.mxu0 0.0
  %6978 = vmatpush2.xpose.msra.mxu0 0.0
  %6979 = vmatprep.subr.mxu0 0.0
  %6980 = vmatpush2.xpose.msra.mxu0 0.0
  %6981 = vmatprep.subr.mxu0 0.0
  %6982 = vmatpush2.xpose.msra.mxu0 0.0
  %6983 = vmatprep.subr.mxu0 0.0
  %6984 = vmatpush2.xpose.msra.mxu0 0.0
  %6985 = vmatprep.subr.mxu0 0.0
  %6986 = vmatpush2.xpose.msra.mxu0 0.0
  %6987 = vmatprep.subr.mxu0 0.0
  %6988 = vmatpush2.xpose.msra.mxu0 0.0
  %6989 = vmatprep.subr.mxu0 0.0
  %6990 = vmatpush2.xpose.msra.mxu0 0.0
  %6991 = vmatprep.mubr.f32.mxu0 0.0
  %6992 = vmatmul.mubr.f32.gmra.mxu0 %v6903
  %v6993 = vpop.f32.mrf.mxu0
  %v6994 = vadd.f32 0.0, %v6993
  %v6995 = vpop.f32.mrf.mxu0
  %6996 = vmatprep.mubr.f32.mxu0 0.0
  %6997 = vmatmul.mubr.f32.gmra.mxu0 %v6905
  %v6998 = vpop.f32.mrf.mxu0
  %v6999 = vadd.f32 0.0, %v6998
  %v7000 = vpop.f32.mrf.mxu0
  %7001 = vmatprep.mubr.f32.mxu0 0.0
  %7002 = vmatmul.mubr.f32.gmra.mxu0 %v6907
  %v7003 = vpop.f32.mrf.mxu0
  %v7004 = vadd.f32 0.0, %v7003
  %v7005 = vpop.f32.mrf.mxu0
  %7006 = vmatprep.mubr.f32.mxu0 0.0
  %7007 = vmatmul.mubr.f32.gmra.mxu0 %v6909
  %v7008 = vpop.f32.mrf.mxu0
  %v7009 = vadd.f32 0.0, %v7008
  %v7010 = vpop.f32.mrf.mxu0
  %7011 = vmatprep.mubr.f32.mxu0 0.0
  %7012 = vmatmul.mubr.f32.gmra.mxu0 %v6911
  %v7013 = vpop.f32.mrf.mxu0
  %v7014 = vadd.f32 0.0, %v7013
  %v7015 = vpop.f32.mrf.mxu0
  %7016 = vmatprep.mubr.f32.mxu0 0.0
  %7017 = vmatmul.mubr.f32.gmra.mxu0 %v6913
  %v7018 = vpop.f32.mrf.mxu0
  %v7019 = vadd.f32 0.0, %v7018
  %v7020 = vpop.f32.mrf.mxu0
  %7021 = vdwg.mxu0
  %v7022 = vmul.f32 %v6994, 0.35355338
  %v7023 = vmul.f32 %v6999, 0.35355338
  %v7024 = vmul.f32 %v7004, 0.35355338
  %v7025 = vmul.f32 %v7009, 0.35355338
  %v7026 = vmul.f32 %v7014, 0.35355338
  %v7027 = vmul.f32 %v7019, 0.35355338
  %v7028 = vadd.f32 %v7022, %v3227
  %v7029 = vadd.f32 %v7023, %v3228
  %v7030 = vadd.f32 %v7024, %v3229
  %v7031 = vadd.f32 %v7025, %v3230
  %v7032 = vadd.f32 %v7026, %v3231
  %v7033 = vadd.f32 %v7027, %v3232
  %v7034 = vsel %vm3619, %v7028, -inf
  %7035 = vmax.xlane.f32.xlu0 %v7034
  %v7036 = vpop.xlane.xlu0 %7035
  %v7037 = vsel %vm3619, %v7029, -inf
  %7038 = vmax.xlane.f32.xlu0 %v7037
  %v7039 = vpop.xlane.xlu0 %7038
  %v7040 = vsel %vm3619, %v7030, -inf
  %7041 = vmax.xlane.f32.xlu0 %v7040
  %v7042 = vpop.xlane.xlu0 %7041
  %v7043 = vsel %vm3619, %v7031, -inf
  %7044 = vmax.xlane.f32.xlu0 %v7043
  %v7045 = vpop.xlane.xlu0 %7044
  %v7046 = vsel %vm3619, %v7032, -inf
  %7047 = vmax.xlane.f32.xlu0 %v7046
  %v7048 = vpop.xlane.xlu0 %7047
  %v7049 = vsel %vm3619, %v7033, -inf
  %7050 = vmax.xlane.f32.xlu0 %v7049
  %v7051 = vpop.xlane.xlu0 %7050
  %v7052 = vsub.f32 %v7028, %v7036
  %v7053 = vsub.f32 %v7029, %v7039
  %v7054 = vsub.f32 %v7030, %v7042
  %v7055 = vsub.f32 %v7031, %v7045
  %v7056 = vsub.f32 %v7032, %v7048
  %v7057 = vsub.f32 %v7033, %v7051
  %v7058 = vmul.f32 %v7052, 1.442695
  %v7059 = vpow.pop %v7058
  %v7060 = vmul.f32 %v7053, 1.442695
  %v7061 = vpow.pop %v7060
  %v7062 = vmul.f32 %v7054, 1.442695
  %v7063 = vpow.pop %v7062
  %v7064 = vmul.f32 %v7055, 1.442695
  %v7065 = vpow.pop %v7064
  %v7066 = vmul.f32 %v7056, 1.442695
  %v7067 = vpow.pop %v7066
  %v7068 = vmul.f32 %v7057, 1.442695
  %v7069 = vpow.pop %v7068
  %v7070 = vsel %vm3619, %v7059, 0.0
  %7071 = vadd.xlane.f32.xlu0 %v7070
  %v7072 = vpop.xlane.xlu0 %7071
  %v7073 = vsel %vm3619, %v7061, 0.0
  %7074 = vadd.xlane.f32.xlu0 %v7073
  %v7075 = vpop.xlane.xlu0 %7074
  %v7076 = vsel %vm3619, %v7063, 0.0
  %7077 = vadd.xlane.f32.xlu0 %v7076
  %v7078 = vpop.xlane.xlu0 %7077
  %v7079 = vsel %vm3619, %v7065, 0.0
  %7080 = vadd.xlane.f32.xlu0 %v7079
  %v7081 = vpop.xlane.xlu0 %7080
  %v7082 = vsel %vm3619, %v7067, 0.0
  %7083 = vadd.xlane.f32.xlu0 %v7082
  %v7084 = vpop.xlane.xlu0 %7083
  %v7085 = vsel %vm3619, %v7069, 0.0
  %7086 = vadd.xlane.f32.xlu0 %v7085
  %v7087 = vpop.xlane.xlu0 %7086
  %v7088 = vrcp.pop %v7072
  %v7089 = vrcp.pop %v7075
  %v7090 = vrcp.pop %v7078
  %v7091 = vrcp.pop %v7081
  %v7092 = vrcp.pop %v7084
  %v7093 = vrcp.pop %v7087
  %v7094 = vmul.f32 %v7059, %v7088
  %v7095 = vmul.f32 %v7061, %v7089
  %v7096 = vmul.f32 %v7063, %v7090
  %v7097 = vmul.f32 %v7065, %v7091
  %v7098 = vmul.f32 %v7067, %v7092
  %v7099 = vmul.f32 %v7069, %v7093
  %7100 = vrot.lane.b32.xlu0 %v5801, 40
  %v7101 = vpop.permute.xlu0 %7100
  %7102 = vrot.lane.b32.xlu0 %v5806, 40
  %v7103 = vpop.permute.xlu0 %7102
  %7104 = vrot.lane.b32.xlu0 %v5811, 40
  %v7105 = vpop.permute.xlu0 %7104
  %7106 = vrot.lane.b32.xlu0 %v5816, 40
  %v7107 = vpop.permute.xlu0 %7106
  %7108 = vrot.lane.b32.xlu0 %v5821, 40
  %v7109 = vpop.permute.xlu0 %7108
  %7110 = vrot.lane.b32.xlu0 %v5826, 40
  %v7111 = vpop.permute.xlu0 %7110
  %v7119 = vsel %vm3619, %v7094, 0
  %v7122 = vsel %vm3619, %v7095, 0
  %v7125 = vsel %vm3619, %v7096, 0
  %v7128 = vsel %vm3619, %v7097, 0
  %v7131 = vsel %vm3619, %v7098, 0
  %v7134 = vsel %vm3619, %v7099, 0
  %7136 = vmatprep.subr.mxu0 0.0
  %7137 = vmatpush1.msra.mxu0 0.0
  %7138 = vmatprep.subr.mxu0 0.0
  %7139 = vmatpush1.msra.mxu0 0.0
  %7140 = vmatprep.subr.mxu0 0.0
  %7141 = vmatpush1.msra.mxu0 0.0
  %7142 = vmatprep.subr.mxu0 0.0
  %7143 = vmatpush1.msra.mxu0 0.0
  %7144 = vmatprep.subr.mxu0 0.0
  %7145 = vmatpush1.msra.mxu0 0.0
  %7146 = vmatprep.subr.mxu0 0.0
  %7147 = vmatpush1.msra.mxu0 0.0
  %7148 = vmatprep.subr.mxu0 0.0
  %7149 = vmatpush1.msra.mxu0 0.0
  %7150 = vmatprep.subr.mxu0 0.0
  %7151 = vmatpush1.msra.mxu0 0.0
  %7152 = vmatprep.subr.mxu0 0.0
  %7153 = vmatpush1.msra.mxu0 0.0
  %7154 = vmatprep.subr.mxu0 0.0
  %7155 = vmatpush1.msra.mxu0 0.0
  %7156 = vmatprep.subr.mxu0 0.0
  %7157 = vmatpush1.msra.mxu0 %v7111
  %7158 = vmatprep.subr.mxu0 0.0
  %7159 = vmatpush1.msra.mxu0 %v7109
  %7160 = vmatprep.subr.mxu0 0.0
  %7161 = vmatpush1.msra.mxu0 %v7107
  %7162 = vmatprep.subr.mxu0 0.0
  %7163 = vmatpush1.msra.mxu0 %v7105
  %7164 = vmatprep.subr.mxu0 0.0
  %7165 = vmatpush1.msra.mxu0 %v7103
  %7166 = vmatprep.subr.mxu0 0.0
  %7167 = vmatpush1.msra.mxu0 %v7101
  %7168 = vmatprep.subr.mxu0 0.0
  %7169 = vmatpush2.msra.mxu0 0.0
  %7170 = vmatprep.subr.mxu0 0.0
  %7171 = vmatpush2.msra.mxu0 0.0
  %7172 = vmatprep.subr.mxu0 0.0
  %7173 = vmatpush2.msra.mxu0 0.0
  %7174 = vmatprep.subr.mxu0 0.0
  %7175 = vmatpush2.msra.mxu0 0.0
  %7176 = vmatprep.subr.mxu0 0.0
  %7177 = vmatpush2.msra.mxu0 0.0
  %7178 = vmatprep.subr.mxu0 0.0
  %7179 = vmatpush2.msra.mxu0 0.0
  %7180 = vmatprep.subr.mxu0 0.0
  %7181 = vmatpush2.msra.mxu0 0.0
  %7182 = vmatprep.subr.mxu0 0.0
  %7183 = vmatpush2.msra.mxu0 0.0
  %7184 = vmatprep.subr.mxu0 0.0
  %7185 = vmatpush2.msra.mxu0 0.0
  %7186 = vmatprep.subr.mxu0 0.0
  %7187 = vmatpush2.msra.mxu0 0.0
  %7188 = vmatprep.subr.mxu0 0.0
  %7189 = vmatpush2.msra.mxu0 0.0
  %7190 = vmatprep.subr.mxu0 0.0
  %7191 = vmatpush2.msra.mxu0 0.0
  %7192 = vmatprep.subr.mxu0 0.0
  %7193 = vmatpush2.msra.mxu0 0.0
  %7194 = vmatprep.subr.mxu0 0.0
  %7195 = vmatpush2.msra.mxu0 0.0
  %7196 = vmatprep.subr.mxu0 0.0
  %7197 = vmatpush2.msra.mxu0 0.0
  %7198 = vmatprep.subr.mxu0 0.0
  %7199 = vmatpush2.msra.mxu0 0.0
  %7200 = vmatprep.mubr.f32.mxu0 0.0
  %7201 = vmatmul.mubr.f32.gmra.mxu0 %v7119
  %v7202 = vpop.f32.mrf.mxu0
  %v7203 = vadd.f32 0.0, %v7202
  %v7204 = vpop.f32.mrf.mxu0
  %7205 = vmatprep.mubr.f32.mxu0 0.0
  %7206 = vmatmul.mubr.f32.gmra.mxu0 %v7122
  %v7207 = vpop.f32.mrf.mxu0
  %v7208 = vadd.f32 0.0, %v7207
  %v7209 = vpop.f32.mrf.mxu0
  %7210 = vmatprep.mubr.f32.mxu0 0.0
  %7211 = vmatmul.mubr.f32.gmra.mxu0 %v7125
  %v7212 = vpop.f32.mrf.mxu0
  %v7213 = vadd.f32 0.0, %v7212
  %v7214 = vpop.f32.mrf.mxu0
  %7215 = vmatprep.mubr.f32.mxu0 0.0
  %7216 = vmatmul.mubr.f32.gmra.mxu0 %v7128
  %v7217 = vpop.f32.mrf.mxu0
  %v7218 = vadd.f32 0.0, %v7217
  %v7219 = vpop.f32.mrf.mxu0
  %7220 = vmatprep.mubr.f32.mxu0 0.0
  %7221 = vmatmul.mubr.f32.gmra.mxu0 %v7131
  %v7222 = vpop.f32.mrf.mxu0
  %v7223 = vadd.f32 0.0, %v7222
  %v7224 = vpop.f32.mrf.mxu0
  %7225 = vmatprep.mubr.f32.mxu0 0.0
  %7226 = vmatmul.mubr.f32.gmra.mxu0 %v7134
  %v7227 = vpop.f32.mrf.mxu0
  %v7228 = vadd.f32 0.0, %v7227
  %v7229 = vpop.f32.mrf.mxu0
  %7230 = vdwg.mxu0
  %7237 = vrot.lane.b32.xlu0 %v6499, 8
  %v7238 = vpop.permute.xlu0 %7237
  %7239 = vrot.lane.b32.xlu0 %v6504, 8
  %v7240 = vpop.permute.xlu0 %7239
  %7241 = vrot.lane.b32.xlu0 %v6509, 8
  %v7242 = vpop.permute.xlu0 %7241
  %7243 = vrot.lane.b32.xlu0 %v6514, 8
  %v7244 = vpop.permute.xlu0 %7243
  %7245 = vrot.lane.b32.xlu0 %v6519, 8
  %v7246 = vpop.permute.xlu0 %7245
  %7247 = vrot.lane.b32.xlu0 %v6524, 8
  %v7248 = vpop.permute.xlu0 %7247
  %7261 = vrot.lane.b32.xlu0 %v6851, 16
  %v7262 = vpop.permute.xlu0 %7261
  %7263 = vrot.lane.b32.xlu0 %v6856, 16
  %v7264 = vpop.permute.xlu0 %7263
  %7265 = vrot.lane.b32.xlu0 %v6861, 16
  %v7266 = vpop.permute.xlu0 %7265
  %7267 = vrot.lane.b32.xlu0 %v6866, 16
  %v7268 = vpop.permute.xlu0 %7267
  %7269 = vrot.lane.b32.xlu0 %v6871, 16
  %v7270 = vpop.permute.xlu0 %7269
  %7271 = vrot.lane.b32.xlu0 %v6876, 16
  %v7272 = vpop.permute.xlu0 %7271
  %7285 = vrot.lane.b32.xlu0 %v7203, 24
  %v7286 = vpop.permute.xlu0 %7285
  %7287 = vrot.lane.b32.xlu0 %v7208, 24
  %v7288 = vpop.permute.xlu0 %7287
  %7289 = vrot.lane.b32.xlu0 %v7213, 24
  %v7290 = vpop.permute.xlu0 %7289
  %7291 = vrot.lane.b32.xlu0 %v7218, 24
  %v7292 = vpop.permute.xlu0 %7291
  %7293 = vrot.lane.b32.xlu0 %v7223, 24
  %v7294 = vpop.permute.xlu0 %7293
  %7295 = vrot.lane.b32.xlu0 %v7228, 24
  %v7296 = vpop.permute.xlu0 %7295
  %v7303 = vsel %vm317, %v6147, %v7238
  %v7304 = vsel %vm317, %v6152, %v7240
  %v7305 = vsel %vm317, %v6157, %v7242
  %v7306 = vsel %vm317, %v6162, %v7244
  %v7307 = vsel %vm317, %v6167, %v7246
  %v7308 = vsel %vm317, %v6172, %v7248
  %v7309 = vsel %vm405, %v7303, %v7262
  %v7310 = vsel %vm405, %v7304, %v7264
  %v7311 = vsel %vm405, %v7305, %v7266
  %v7312 = vsel %vm405, %v7306, %v7268
  %v7313 = vsel %vm405, %v7307, %v7270
  %v7314 = vsel %vm405, %v7308, %v7272
  %v7315 = vsel %vm1155, %v7309, %v7286
  %v7316 = vsel %vm1155, %v7310, %v7288
  %v7317 = vsel %vm1155, %v7311, %v7290
  %v7318 = vsel %vm1155, %v7312, %v7292
  %v7319 = vsel %vm1155, %v7313, %v7294
  %v7320 = vsel %vm1155, %v7314, %v7296
  %v7321 = vlaneseq
  %v7322 = vshrl.u32 %v7321, 7
  %v7323 = vsub.s32 2, %v7322
  %v7324 = vrot.slane %v5593, %v7323
  %v7326 = vsel %vm57, %v7315, 0
  %v7329 = vsel %vm57, %v7316, 0
  %v7332 = vsel %vm57, %v7317, 0
  %v7335 = vsel %vm57, %v7318, 0
  %v7338 = vsel %vm57, %v7319, 0
  %v7341 = vsel %vm57, %v7320, 0
  %7343 = vmatprep.subr.mxu0 0.0
  %7344 = vmatpush1.msra.mxu0 0.0
  %7345 = vmatprep.subr.mxu0 0.0
  %7346 = vmatpush1.msra.mxu0 0.0
  %7347 = vmatprep.subr.mxu0 0.0
  %7348 = vmatpush1.msra.mxu0 0.0
  %7349 = vmatprep.subr.mxu0 0.0
  %7350 = vmatpush1.msra.mxu0 0.0
  %7351 = vmatprep.subr.mxu0 0.0
  %7352 = vmatpush1.msra.mxu0 0.0
  %7353 = vmatprep.subr.mxu0 0.0
  %7354 = vmatpush1.msra.mxu0 0.0
  %7355 = vmatprep.subr.mxu0 0.0
  %7356 = vmatpush1.msra.mxu0 0.0
  %7357 = vmatprep.subr.mxu0 0.0
  %7358 = vmatpush1.msra.mxu0 0.0
  %7359 = vmatprep.subr.mxu0 0.0
  %7360 = vmatpush1.msra.mxu0 0.0
  %7361 = vmatprep.subr.mxu0 0.0
  %7362 = vmatpush1.msra.mxu0 0.0
  %7363 = vmatprep.subr.mxu0 0.0
  %7364 = vmatpush1.msra.mxu0 0.0
  %7365 = vmatprep.subr.mxu0 0.0
  %7366 = vmatpush1.msra.mxu0 0.0
  %7367 = vmatprep.subr.mxu0 0.0
  %7368 = vmatpush1.msra.mxu0 %v5603
  %7369 = vmatprep.subr.mxu0 0.0
  %7370 = vmatpush1.msra.mxu0 %v5602
  %7371 = vmatprep.subr.mxu0 0.0
  %7372 = vmatpush1.msra.mxu0 %v5601
  %7373 = vmatprep.subr.mxu0 0.0
  %7374 = vmatpush1.msra.mxu0 %v5600
  %7375 = vmatprep.subr.mxu0 0.0
  %7376 = vmatpush2.msra.mxu0 0.0
  %7377 = vmatprep.subr.mxu0 0.0
  %7378 = vmatpush2.msra.mxu0 0.0
  %7379 = vmatprep.subr.mxu0 0.0
  %7380 = vmatpush2.msra.mxu0 0.0
  %7381 = vmatprep.subr.mxu0 0.0
  %7382 = vmatpush2.msra.mxu0 0.0
  %7383 = vmatprep.subr.mxu0 0.0
  %7384 = vmatpush2.msra.mxu0 0.0
  %7385 = vmatprep.subr.mxu0 0.0
  %7386 = vmatpush2.msra.mxu0 0.0
  %7387 = vmatprep.subr.mxu0 0.0
  %7388 = vmatpush2.msra.mxu0 0.0
  %7389 = vmatprep.subr.mxu0 0.0
  %7390 = vmatpush2.msra.mxu0 0.0
  %7391 = vmatprep.subr.mxu0 0.0
  %7392 = vmatpush2.msra.mxu0 0.0
  %7393 = vmatprep.subr.mxu0 0.0
  %7394 = vmatpush2.msra.mxu0 0.0
  %7395 = vmatprep.subr.mxu0 0.0
  %7396 = vmatpush2.msra.mxu0 0.0
  %7397 = vmatprep.subr.mxu0 0.0
  %7398 = vmatpush2.msra.mxu0 0.0
  %7399 = vmatprep.subr.mxu0 0.0
  %7400 = vmatpush2.msra.mxu0 0.0
  %7401 = vmatprep.subr.mxu0 0.0
  %7402 = vmatpush2.msra.mxu0 0.0
  %7403 = vmatprep.subr.mxu0 0.0
  %7404 = vmatpush2.msra.mxu0 0.0
  %7405 = vmatprep.subr.mxu0 0.0
  %7406 = vmatpush2.msra.mxu0 0.0
  %7407 = vmatprep.mubr.f32.mxu0 0.0
  %7408 = vmatmul.mubr.f32.gmra.mxu0 %v7326
  %v7409 = vpop.f32.mrf.mxu0
  %v7410 = vadd.f32 %v7324, %v7409
  %v7411 = vpop.f32.mrf.mxu0
  %7412 = vmatprep.mubr.f32.mxu0 0.0
  %7413 = vmatmul.mubr.f32.gmra.mxu0 %v7329
  %v7414 = vpop.f32.mrf.mxu0
  %v7415 = vadd.f32 %v7324, %v7414
  %v7416 = vpop.f32.mrf.mxu0
  %7417 = vmatprep.mubr.f32.mxu0 0.0
  %7418 = vmatmul.mubr.f32.gmra.mxu0 %v7332
  %v7419 = vpop.f32.mrf.mxu0
  %v7420 = vadd.f32 %v7324, %v7419
  %v7421 = vpop.f32.mrf.mxu0
  %7422 = vmatprep.mubr.f32.mxu0 0.0
  %7423 = vmatmul.mubr.f32.gmra.mxu0 %v7335
  %v7424 = vpop.f32.mrf.mxu0
  %v7425 = vadd.f32 %v7324, %v7424
  %v7426 = vpop.f32.mrf.mxu0
  %7427 = vmatprep.mubr.f32.mxu0 0.0
  %7428 = vmatmul.mubr.f32.gmra.mxu0 %v7338
  %v7429 = vpop.f32.mrf.mxu0
  %v7430 = vadd.f32 %v7324, %v7429
  %v7431 = vpop.f32.mrf.mxu0
  %7432 = vmatprep.mubr.f32.mxu0 0.0
  %7433 = vmatmul.mubr.f32.gmra.mxu0 %v7341
  %v7434 = vpop.f32.mrf.mxu0
  %v7435 = vadd.f32 %v7324, %v7434
  %v7436 = vpop.f32.mrf.mxu0
  %7437 = vdwg.mxu0
  %v7438 = vadd.f32 %v5586, %v7410
  %v7439 = vadd.f32 %v5587, %v7415
  %v7440 = vadd.f32 %v5588, %v7420
  %v7441 = vadd.f32 %v5589, %v7425
  %v7442 = vadd.f32 %v5590, %v7430
  %v7443 = vadd.f32 %v5591, %v7435
  %v7444 = vsel %vm57, %v7438, 0.0
  %7445 = vadd.xlane.f32.xlu0 %v7444
  %v7446 = vpop.xlane.xlu0 %7445
  %v7447 = vsel %vm57, %v7439, 0.0
  %7448 = vadd.xlane.f32.xlu0 %v7447
  %v7449 = vpop.xlane.xlu0 %7448
  %v7450 = vsel %vm57, %v7440, 0.0
  %7451 = vadd.xlane.f32.xlu0 %v7450
  %v7452 = vpop.xlane.xlu0 %7451
  %v7453 = vsel %vm57, %v7441, 0.0
  %7454 = vadd.xlane.f32.xlu0 %v7453
  %v7455 = vpop.xlane.xlu0 %7454
  %v7456 = vsel %vm57, %v7442, 0.0
  %7457 = vadd.xlane.f32.xlu0 %v7456
  %v7458 = vpop.xlane.xlu0 %7457
  %v7459 = vsel %vm57, %v7443, 0.0
  %7460 = vadd.xlane.f32.xlu0 %v7459
  %v7461 = vpop.xlane.xlu0 %7460
  %v7462 = vmul.f32 %v7446, %v197
  %v7463 = vmul.f32 %v7449, %v197
  %v7464 = vmul.f32 %v7452, %v197
  %v7465 = vmul.f32 %v7455, %v197
  %v7466 = vmul.f32 %v7458, %v197
  %v7467 = vmul.f32 %v7461, %v197
  %v7468 = vsub.f32 %v7438, %v7462
  %v7469 = vsub.f32 %v7439, %v7463
  %v7470 = vsub.f32 %v7440, %v7464
  %v7471 = vsub.f32 %v7441, %v7465
  %v7472 = vsub.f32 %v7442, %v7466
  %v7473 = vsub.f32 %v7443, %v7467
  %v7474 = vmul.f32 %v7468, %v7468
  %v7475 = vmul.f32 %v7469, %v7469
  %v7476 = vmul.f32 %v7470, %v7470
  %v7477 = vmul.f32 %v7471, %v7471
  %v7478 = vmul.f32 %v7472, %v7472
  %v7479 = vmul.f32 %v7473, %v7473
  %v7480 = vsel %vm57, %v7474, 0.0
  %7481 = vadd.xlane.f32.xlu0 %v7480
  %v7482 = vpop.xlane.xlu0 %7481
  %v7483 = vsel %vm57, %v7475, 0.0
  %7484 = vadd.xlane.f32.xlu0 %v7483
  %v7485 = vpop.xlane.xlu0 %7484
  %v7486 = vsel %vm57, %v7476, 0.0
  %7487 = vadd.xlane.f32.xlu0 %v7486
  %v7488 = vpop.xlane.xlu0 %7487
  %v7489 = vsel %vm57, %v7477, 0.0
  %7490 = vadd.xlane.f32.xlu0 %v7489
  %v7491 = vpop.xlane.xlu0 %7490
  %v7492 = vsel %vm57, %v7478, 0.0
  %7493 = vadd.xlane.f32.xlu0 %v7492
  %v7494 = vpop.xlane.xlu0 %7493
  %v7495 = vsel %vm57, %v7479, 0.0
  %7496 = vadd.xlane.f32.xlu0 %v7495
  %v7497 = vpop.xlane.xlu0 %7496
  %v7498 = vmul.f32 %v7482, %v197
  %v7499 = vmul.f32 %v7485, %v197
  %v7500 = vmul.f32 %v7488, %v197
  %v7501 = vmul.f32 %v7491, %v197
  %v7502 = vmul.f32 %v7494, %v197
  %v7503 = vmul.f32 %v7497, %v197
  %v7504 = vadd.f32 %v7498, 1e-05
  %v7505 = vadd.f32 %v7499, 1e-05
  %v7506 = vadd.f32 %v7500, 1e-05
  %v7507 = vadd.f32 %v7501, 1e-05
  %v7508 = vadd.f32 %v7502, 1e-05
  %v7509 = vadd.f32 %v7503, 1e-05
  %v7510 = vrsqrt.pop %v7504
  %v7511 = vrsqrt.pop %v7505
  %v7512 = vrsqrt.pop %v7506
  %v7513 = vrsqrt.pop %v7507
  %v7514 = vrsqrt.pop %v7508
  %v7515 = vrsqrt.pop %v7509
  %v7516 = vmul.f32 %v7468, %v7510
  %v7517 = vmul.f32 %v7469, %v7511
  %v7518 = vmul.f32 %v7470, %v7512
  %v7519 = vmul.f32 %v7471, %v7513
  %v7520 = vmul.f32 %v7472, %v7514
  %v7521 = vmul.f32 %v7473, %v7515
  %v7522 = vlaneseq
  %v7523 = vshrl.u32 %v7522, 7
  %v7524 = vsub.s32 3, %v7523
  %v7525 = vrot.slane %v5593, %v7524
  %v7526 = vmul.f32 %v7516, %v7525
  %v7527 = vmul.f32 %v7517, %v7525
  %v7528 = vmul.f32 %v7518, %v7525
  %v7529 = vmul.f32 %v7519, %v7525
  %v7530 = vmul.f32 %v7520, %v7525
  %v7531 = vmul.f32 %v7521, %v7525
  %v7532 = vlaneseq
  %v7533 = vshrl.u32 %v7532, 7
  %v7534 = vsub.s32 4, %v7533
  %v7535 = vrot.slane %v5593, %v7534
  %v7536 = vadd.f32 %v7526, %v7535
  %v7537 = vadd.f32 %v7527, %v7535
  %v7538 = vadd.f32 %v7528, %v7535
  %v7539 = vadd.f32 %v7529, %v7535
  %v7540 = vadd.f32 %v7530, %v7535
  %v7541 = vadd.f32 %v7531, %v7535
  %v7542 = vlaneseq
  %v7543 = vshrl.u32 %v7542, 7
  %v7544 = vsub.s32 6, %v7543
  %v7545 = vrot.slane %v5593, %v7544
  %v7547 = vsel %vm57, %v7536, 0
  %v7550 = vsel %vm57, %v7537, 0
  %v7553 = vsel %vm57, %v7538, 0
  %v7556 = vsel %vm57, %v7539, 0
  %v7559 = vsel %vm57, %v7540, 0
  %v7562 = vsel %vm57, %v7541, 0
  %7564 = vmatprep.subr.mxu0 0.0
  %7565 = vmatpush1.msra.mxu0 0.0
  %7566 = vmatprep.subr.mxu0 0.0
  %7567 = vmatpush1.msra.mxu0 0.0
  %7568 = vmatprep.subr.mxu0 0.0
  %7569 = vmatpush1.msra.mxu0 0.0
  %7570 = vmatprep.subr.mxu0 0.0
  %7571 = vmatpush1.msra.mxu0 0.0
  %7572 = vmatprep.subr.mxu0 0.0
  %7573 = vmatpush1.msra.mxu0 0.0
  %7574 = vmatprep.subr.mxu0 0.0
  %7575 = vmatpush1.msra.mxu0 0.0
  %7576 = vmatprep.subr.mxu0 0.0
  %7577 = vmatpush1.msra.mxu0 0.0
  %7578 = vmatprep.subr.mxu0 0.0
  %7579 = vmatpush1.msra.mxu0 0.0
  %7580 = vmatprep.subr.mxu0 0.0
  %7581 = vmatpush1.msra.mxu0 0.0
  %7582 = vmatprep.subr.mxu0 0.0
  %7583 = vmatpush1.msra.mxu0 0.0
  %7584 = vmatprep.subr.mxu0 0.0
  %7585 = vmatpush1.msra.mxu0 0.0
  %7586 = vmatprep.subr.mxu0 0.0
  %7587 = vmatpush1.msra.mxu0 0.0
  %7588 = vmatprep.subr.mxu0 0.0
  %7589 = vmatpush1.msra.mxu0 %v5608
  %7590 = vmatprep.subr.mxu0 0.0
  %7591 = vmatpush1.msra.mxu0 %v5607
  %7592 = vmatprep.subr.mxu0 0.0
  %7593 = vmatpush1.msra.mxu0 %v5606
  %7594 = vmatprep.subr.mxu0 0.0
  %7595 = vmatpush1.msra.mxu0 %v5605
  %7596 = vmatprep.subr.mxu0 0.0
  %7597 = vmatpush2.msra.mxu0 0.0
  %7598 = vmatprep.subr.mxu0 0.0
  %7599 = vmatpush2.msra.mxu0 0.0
  %7600 = vmatprep.subr.mxu0 0.0
  %7601 = vmatpush2.msra.mxu0 0.0
  %7602 = vmatprep.subr.mxu0 0.0
  %7603 = vmatpush2.msra.mxu0 0.0
  %7604 = vmatprep.subr.mxu0 0.0
  %7605 = vmatpush2.msra.mxu0 0.0
  %7606 = vmatprep.subr.mxu0 0.0
  %7607 = vmatpush2.msra.mxu0 0.0
  %7608 = vmatprep.subr.mxu0 0.0
  %7609 = vmatpush2.msra.mxu0 0.0
  %7610 = vmatprep.subr.mxu0 0.0
  %7611 = vmatpush2.msra.mxu0 0.0
  %7612 = vmatprep.subr.mxu0 0.0
  %7613 = vmatpush2.msra.mxu0 0.0
  %7614 = vmatprep.subr.mxu0 0.0
  %7615 = vmatpush2.msra.mxu0 0.0
  %7616 = vmatprep.subr.mxu0 0.0
  %7617 = vmatpush2.msra.mxu0 0.0
  %7618 = vmatprep.subr.mxu0 0.0
  %7619 = vmatpush2.msra.mxu0 0.0
  %7620 = vmatprep.subr.mxu0 0.0
  %7621 = vmatpush2.msra.mxu0 0.0
  %7622 = vmatprep.subr.mxu0 0.0
  %7623 = vmatpush2.msra.mxu0 0.0
  %7624 = vmatprep.subr.mxu0 0.0
  %7625 = vmatpush2.msra.mxu0 0.0
  %7626 = vmatprep.subr.mxu0 0.0
  %7627 = vmatpush2.msra.mxu0 0.0
  %7628 = vmatprep.mubr.f32.mxu0 0.0
  %7629 = vmatmul.mubr.f32.gmra.mxu0 %v7547
  %v7630 = vpop.f32.mrf.mxu0
  %v7631 = vadd.f32 %v7545, %v7630
  %v7632 = vpop.f32.mrf.mxu0
  %7633 = vmatprep.mubr.f32.mxu0 0.0
  %7634 = vmatmul.mubr.f32.gmra.mxu0 %v7550
  %v7635 = vpop.f32.mrf.mxu0
  %v7636 = vadd.f32 %v7545, %v7635
  %v7637 = vpop.f32.mrf.mxu0
  %7638 = vmatprep.mubr.f32.mxu0 0.0
  %7639 = vmatmul.mubr.f32.gmra.mxu0 %v7553
  %v7640 = vpop.f32.mrf.mxu0
  %v7641 = vadd.f32 %v7545, %v7640
  %v7642 = vpop.f32.mrf.mxu0
  %7643 = vmatprep.mubr.f32.mxu0 0.0
  %7644 = vmatmul.mubr.f32.gmra.mxu0 %v7556
  %v7645 = vpop.f32.mrf.mxu0
  %v7646 = vadd.f32 %v7545, %v7645
  %v7647 = vpop.f32.mrf.mxu0
  %7648 = vmatprep.mubr.f32.mxu0 0.0
  %7649 = vmatmul.mubr.f32.gmra.mxu0 %v7559
  %v7650 = vpop.f32.mrf.mxu0
  %v7651 = vadd.f32 %v7545, %v7650
  %v7652 = vpop.f32.mrf.mxu0
  %7653 = vmatprep.mubr.f32.mxu0 0.0
  %7654 = vmatmul.mubr.f32.gmra.mxu0 %v7562
  %v7655 = vpop.f32.mrf.mxu0
  %v7656 = vadd.f32 %v7545, %v7655
  %v7657 = vpop.f32.mrf.mxu0
  %7658 = vdwg.mxu0
  %v7659 = vmul.f32 %v7631, 0.5
  %v7660 = vmul.f32 %v7636, 0.5
  %v7661 = vmul.f32 %v7641, 0.5
  %v7662 = vmul.f32 %v7646, 0.5
  %v7663 = vmul.f32 %v7651, 0.5
  %v7664 = vmul.f32 %v7656, 0.5
  %v7665 = vmul.f32 %v7631, 0.70710677
  %v7666 = vmul.f32 %v7636, 0.70710677
  %v7667 = vmul.f32 %v7641, 0.70710677
  %v7668 = vmul.f32 %v7646, 0.70710677
  %v7669 = vmul.f32 %v7651, 0.70710677
  %v7670 = vmul.f32 %v7656, 0.70710677
  %vm7671 = vcmp.ge.f32.partialorder %v7665, 0.0
  %vm7672 = vcmp.ge.f32.partialorder %v7666, 0.0
  %vm7673 = vcmp.ge.f32.partialorder %v7667, 0.0
  %vm7674 = vcmp.ge.f32.partialorder %v7668, 0.0
  %vm7675 = vcmp.ge.f32.partialorder %v7669, 0.0
  %vm7676 = vcmp.ge.f32.partialorder %v7670, 0.0
  %v7677 = vsel %vm7671, 1.0, -1.0
  %v7678 = vsel %vm7672, 1.0, -1.0
  %v7679 = vsel %vm7673, 1.0, -1.0
  %v7680 = vsel %vm7674, 1.0, -1.0
  %v7681 = vsel %vm7675, 1.0, -1.0
  %v7682 = vsel %vm7676, 1.0, -1.0
  %v7683 = vand.u32 2147483647, %v7665
  %v7684 = vand.u32 2147483647, %v7666
  %v7685 = vand.u32 2147483647, %v7667
  %v7686 = vand.u32 2147483647, %v7668
  %v7687 = vand.u32 2147483647, %v7669
  %v7688 = vand.u32 2147483647, %v7670
  %v7689 = vmul.f32 %v7683, 0.3275911
  %v7690 = vmul.f32 %v7684, 0.3275911
  %v7691 = vmul.f32 %v7685, 0.3275911
  %v7692 = vmul.f32 %v7686, 0.3275911
  %v7693 = vmul.f32 %v7687, 0.3275911
  %v7694 = vmul.f32 %v7688, 0.3275911
  %v7695 = vadd.f32 %v7689, 1.0
  %v7696 = vadd.f32 %v7690, 1.0
  %v7697 = vadd.f32 %v7691, 1.0
  %v7698 = vadd.f32 %v7692, 1.0
  %v7699 = vadd.f32 %v7693, 1.0
  %v7700 = vadd.f32 %v7694, 1.0
  %v7701 = vrcp.pop %v7695
  %v7702 = vmul.f32 1.0, %v7701
  %v7703 = vrcp.pop %v7696
  %v7704 = vmul.f32 1.0, %v7703
  %v7705 = vrcp.pop %v7697
  %v7706 = vmul.f32 1.0, %v7705
  %v7707 = vrcp.pop %v7698
  %v7708 = vmul.f32 1.0, %v7707
  %v7709 = vrcp.pop %v7699
  %v7710 = vmul.f32 1.0, %v7709
  %v7711 = vrcp.pop %v7700
  %v7712 = vmul.f32 1.0, %v7711
  %v7713 = vmul.f32 %v7702, 1.0614054
  %v7714 = vmul.f32 %v7704, 1.0614054
  %v7715 = vmul.f32 %v7706, 1.0614054
  %v7716 = vmul.f32 %v7708, 1.0614054
  %v7717 = vmul.f32 %v7710, 1.0614054
  %v7718 = vmul.f32 %v7712, 1.0614054
  %v7719 = vadd.f32 %v7713, -1.4531521
  %v7720 = vadd.f32 %v7714, -1.4531521
  %v7721 = vadd.f32 %v7715, -1.4531521
  %v7722 = vadd.f32 %v7716, -1.4531521
  %v7723 = vadd.f32 %v7717, -1.4531521
  %v7724 = vadd.f32 %v7718, -1.4531521
  %v7725 = vmul.f32 %v7719, %v7702
  %v7726 = vmul.f32 %v7720, %v7704
  %v7727 = vmul.f32 %v7721, %v7706
  %v7728 = vmul.f32 %v7722, %v7708
  %v7729 = vmul.f32 %v7723, %v7710
  %v7730 = vmul.f32 %v7724, %v7712
  %v7731 = vadd.f32 %v7725, 1.4214138
  %v7732 = vadd.f32 %v7726, 1.4214138
  %v7733 = vadd.f32 %v7727, 1.4214138
  %v7734 = vadd.f32 %v7728, 1.4214138
  %v7735 = vadd.f32 %v7729, 1.4214138
  %v7736 = vadd.f32 %v7730, 1.4214138
  %v7737 = vmul.f32 %v7731, %v7702
  %v7738 = vmul.f32 %v7732, %v7704
  %v7739 = vmul.f32 %v7733, %v7706
  %v7740 = vmul.f32 %v7734, %v7708
  %v7741 = vmul.f32 %v7735, %v7710
  %v7742 = vmul.f32 %v7736, %v7712
  %v7743 = vadd.f32 %v7737, -0.28449672
  %v7744 = vadd.f32 %v7738, -0.28449672
  %v7745 = vadd.f32 %v7739, -0.28449672
  %v7746 = vadd.f32 %v7740, -0.28449672
  %v7747 = vadd.f32 %v7741, -0.28449672
  %v7748 = vadd.f32 %v7742, -0.28449672
  %v7749 = vmul.f32 %v7743, %v7702
  %v7750 = vmul.f32 %v7744, %v7704
  %v7751 = vmul.f32 %v7745, %v7706
  %v7752 = vmul.f32 %v7746, %v7708
  %v7753 = vmul.f32 %v7747, %v7710
  %v7754 = vmul.f32 %v7748, %v7712
  %v7755 = vadd.f32 %v7749, 0.2548296
  %v7756 = vadd.f32 %v7750, 0.2548296
  %v7757 = vadd.f32 %v7751, 0.2548296
  %v7758 = vadd.f32 %v7752, 0.2548296
  %v7759 = vadd.f32 %v7753, 0.2548296
  %v7760 = vadd.f32 %v7754, 0.2548296
  %v7761 = vmul.f32 %v7755, %v7702
  %v7762 = vmul.f32 %v7756, %v7704
  %v7763 = vmul.f32 %v7757, %v7706
  %v7764 = vmul.f32 %v7758, %v7708
  %v7765 = vmul.f32 %v7759, %v7710
  %v7766 = vmul.f32 %v7760, %v7712
  %v7767 = vsub.f32 0.0, %v7683
  %v7768 = vsub.f32 0.0, %v7684
  %v7769 = vsub.f32 0.0, %v7685
  %v7770 = vsub.f32 0.0, %v7686
  %v7771 = vsub.f32 0.0, %v7687
  %v7772 = vsub.f32 0.0, %v7688
  %v7773 = vmul.f32 %v7767, %v7683
  %v7774 = vmul.f32 %v7768, %v7684
  %v7775 = vmul.f32 %v7769, %v7685
  %v7776 = vmul.f32 %v7770, %v7686
  %v7777 = vmul.f32 %v7771, %v7687
  %v7778 = vmul.f32 %v7772, %v7688
  %v7779 = vmul.f32 %v7773, 1.442695
  %v7780 = vpow.pop %v7779
  %v7781 = vmul.f32 %v7774, 1.442695
  %v7782 = vpow.pop %v7781
  %v7783 = vmul.f32 %v7775, 1.442695
  %v7784 = vpow.pop %v7783
  %v7785 = vmul.f32 %v7776, 1.442695
  %v7786 = vpow.pop %v7785
  %v7787 = vmul.f32 %v7777, 1.442695
  %v7788 = vpow.pop %v7787
  %v7789 = vmul.f32 %v7778, 1.442695
  %v7790 = vpow.pop %v7789
  %v7791 = vmul.f32 %v7761, %v7780
  %v7792 = vmul.f32 %v7762, %v7782
  %v7793 = vmul.f32 %v7763, %v7784
  %v7794 = vmul.f32 %v7764, %v7786
  %v7795 = vmul.f32 %v7765, %v7788
  %v7796 = vmul.f32 %v7766, %v7790
  %v7797 = vsub.f32 1.0, %v7791
  %v7798 = vsub.f32 1.0, %v7792
  %v7799 = vsub.f32 1.0, %v7793
  %v7800 = vsub.f32 1.0, %v7794
  %v7801 = vsub.f32 1.0, %v7795
  %v7802 = vsub.f32 1.0, %v7796
  %v7803 = vmul.f32 %v7677, %v7797
  %v7804 = vmul.f32 %v7678, %v7798
  %v7805 = vmul.f32 %v7679, %v7799
  %v7806 = vmul.f32 %v7680, %v7800
  %v7807 = vmul.f32 %v7681, %v7801
  %v7808 = vmul.f32 %v7682, %v7802
  %v7809 = vadd.f32 %v7803, 1.0
  %v7810 = vadd.f32 %v7804, 1.0
  %v7811 = vadd.f32 %v7805, 1.0
  %v7812 = vadd.f32 %v7806, 1.0
  %v7813 = vadd.f32 %v7807, 1.0
  %v7814 = vadd.f32 %v7808, 1.0
  %v7815 = vmul.f32 %v7659, %v7809
  %v7816 = vmul.f32 %v7660, %v7810
  %v7817 = vmul.f32 %v7661, %v7811
  %v7818 = vmul.f32 %v7662, %v7812
  %v7819 = vmul.f32 %v7663, %v7813
  %v7820 = vmul.f32 %v7664, %v7814
  %v7822 = vsel %vm1422, %v7815, 0
  %v7825 = vsel %vm1422, %v7816, 0
  %v7828 = vsel %vm1422, %v7817, 0
  %v7831 = vsel %vm1422, %v7818, 0
  %v7834 = vsel %vm1422, %v7819, 0
  %v7837 = vsel %vm1422, %v7820, 0
  %7839 = vmatprep.subr.mxu0 0.0
  %7840 = vmatpush1.msra.mxu0 0.0
  %7841 = vmatprep.subr.mxu0 0.0
  %7842 = vmatpush1.msra.mxu0 0.0
  %7843 = vmatprep.subr.mxu0 0.0
  %7844 = vmatpush1.msra.mxu0 0.0
  %7845 = vmatprep.subr.mxu0 0.0
  %7846 = vmatpush1.msra.mxu0 0.0
  %7847 = vmatprep.subr.mxu0 0.0
  %7848 = vmatpush1.msra.mxu0 0.0
  %7849 = vmatprep.subr.mxu0 0.0
  %7850 = vmatpush1.msra.mxu0 0.0
  %7851 = vmatprep.subr.mxu0 0.0
  %7852 = vmatpush1.msra.mxu0 0.0
  %7853 = vmatprep.subr.mxu0 0.0
  %7854 = vmatpush1.msra.mxu0 0.0
  %7855 = vmatprep.subr.mxu0 0.0
  %7856 = vmatpush1.msra.mxu0 %v5617
  %7857 = vmatprep.subr.mxu0 0.0
  %7858 = vmatpush1.msra.mxu0 %v5616
  %7859 = vmatprep.subr.mxu0 0.0
  %7860 = vmatpush1.msra.mxu0 %v5615
  %7861 = vmatprep.subr.mxu0 0.0
  %7862 = vmatpush1.msra.mxu0 %v5614
  %7863 = vmatprep.subr.mxu0 0.0
  %7864 = vmatpush1.msra.mxu0 %v5613
  %7865 = vmatprep.subr.mxu0 0.0
  %7866 = vmatpush1.msra.mxu0 %v5612
  %7867 = vmatprep.subr.mxu0 0.0
  %7868 = vmatpush1.msra.mxu0 %v5611
  %7869 = vmatprep.subr.mxu0 0.0
  %7870 = vmatpush1.msra.mxu0 %v5610
  %7871 = vmatprep.subr.mxu0 0.0
  %7872 = vmatpush2.msra.mxu0 0.0
  %7873 = vmatprep.subr.mxu0 0.0
  %7874 = vmatpush2.msra.mxu0 0.0
  %7875 = vmatprep.subr.mxu0 0.0
  %7876 = vmatpush2.msra.mxu0 0.0
  %7877 = vmatprep.subr.mxu0 0.0
  %7878 = vmatpush2.msra.mxu0 0.0
  %7879 = vmatprep.subr.mxu0 0.0
  %7880 = vmatpush2.msra.mxu0 0.0
  %7881 = vmatprep.subr.mxu0 0.0
  %7882 = vmatpush2.msra.mxu0 0.0
  %7883 = vmatprep.subr.mxu0 0.0
  %7884 = vmatpush2.msra.mxu0 0.0
  %7885 = vmatprep.subr.mxu0 0.0
  %7886 = vmatpush2.msra.mxu0 0.0
  %7887 = vmatprep.subr.mxu0 0.0
  %7888 = vmatpush2.msra.mxu0 0.0
  %7889 = vmatprep.subr.mxu0 0.0
  %7890 = vmatpush2.msra.mxu0 0.0
  %7891 = vmatprep.subr.mxu0 0.0
  %7892 = vmatpush2.msra.mxu0 0.0
  %7893 = vmatprep.subr.mxu0 0.0
  %7894 = vmatpush2.msra.mxu0 0.0
  %7895 = vmatprep.subr.mxu0 0.0
  %7896 = vmatpush2.msra.mxu0 0.0
  %7897 = vmatprep.subr.mxu0 0.0
  %7898 = vmatpush2.msra.mxu0 0.0
  %7899 = vmatprep.subr.mxu0 0.0
  %7900 = vmatpush2.msra.mxu0 0.0
  %7901 = vmatprep.subr.mxu0 0.0
  %7902 = vmatpush2.msra.mxu0 0.0
  %7903 = vmatprep.mubr.f32.mxu0 0.0
  %7904 = vmatmul.mubr.f32.gmra.mxu0 %v7822
  %v7905 = vpop.f32.mrf.mxu0
  %v7906 = vadd.f32 0.0, %v7905
  %v7907 = vpop.f32.mrf.mxu0
  %7908 = vmatprep.mubr.f32.mxu0 0.0
  %7909 = vmatmul.mubr.f32.gmra.mxu0 %v7825
  %v7910 = vpop.f32.mrf.mxu0
  %v7911 = vadd.f32 0.0, %v7910
  %v7912 = vpop.f32.mrf.mxu0
  %7913 = vmatprep.mubr.f32.mxu0 0.0
  %7914 = vmatmul.mubr.f32.gmra.mxu0 %v7828
  %v7915 = vpop.f32.mrf.mxu0
  %v7916 = vadd.f32 0.0, %v7915
  %v7917 = vpop.f32.mrf.mxu0
  %7918 = vmatprep.mubr.f32.mxu0 0.0
  %7919 = vmatmul.mubr.f32.gmra.mxu0 %v7831
  %v7920 = vpop.f32.mrf.mxu0
  %v7921 = vadd.f32 0.0, %v7920
  %v7922 = vpop.f32.mrf.mxu0
  %7923 = vmatprep.mubr.f32.mxu0 0.0
  %7924 = vmatmul.mubr.f32.gmra.mxu0 %v7834
  %v7925 = vpop.f32.mrf.mxu0
  %v7926 = vadd.f32 0.0, %v7925
  %v7927 = vpop.f32.mrf.mxu0
  %7928 = vmatprep.mubr.f32.mxu0 0.0
  %7929 = vmatmul.mubr.f32.gmra.mxu0 %v7837
  %v7930 = vpop.f32.mrf.mxu0
  %v7931 = vadd.f32 0.0, %v7930
  %v7932 = vpop.f32.mrf.mxu0
  %7933 = vdwg.mxu0
  %v7934 = vadd.f32 %v7438, %v7906
  %v7935 = vadd.f32 %v7439, %v7911
  %v7936 = vadd.f32 %v7440, %v7916
  %v7937 = vadd.f32 %v7441, %v7921
  %v7938 = vadd.f32 %v7442, %v7926
  %v7939 = vadd.f32 %v7443, %v7931
  %v7940 = vlaneseq
  %v7941 = vshrl.u32 %v7940, 7
  %v7942 = vsub.s32 5, %v7941
  %v7943 = vrot.slane %v5593, %v7942
  %v7944 = vadd.f32 %v7934, %v7943
  %v7945 = vadd.f32 %v7935, %v7943
  %v7946 = vadd.f32 %v7936, %v7943
  %v7947 = vadd.f32 %v7937, %v7943
  %v7948 = vadd.f32 %v7938, %v7943
  %v7949 = vadd.f32 %v7939, %v7943
  %v7950 = vsel %vm57, %v7944, 0.0
  %7951 = vadd.xlane.f32.xlu0 %v7950
  %v7952 = vpop.xlane.xlu0 %7951
  %v7953 = vsel %vm57, %v7945, 0.0
  %7954 = vadd.xlane.f32.xlu0 %v7953
  %v7955 = vpop.xlane.xlu0 %7954
  %v7956 = vsel %vm57, %v7946, 0.0
  %7957 = vadd.xlane.f32.xlu0 %v7956
  %v7958 = vpop.xlane.xlu0 %7957
  %v7959 = vsel %vm57, %v7947, 0.0
  %7960 = vadd.xlane.f32.xlu0 %v7959
  %v7961 = vpop.xlane.xlu0 %7960
  %v7962 = vsel %vm57, %v7948, 0.0
  %7963 = vadd.xlane.f32.xlu0 %v7962
  %v7964 = vpop.xlane.xlu0 %7963
  %v7965 = vsel %vm57, %v7949, 0.0
  %7966 = vadd.xlane.f32.xlu0 %v7965
  %v7967 = vpop.xlane.xlu0 %7966
  %v7968 = vmul.f32 %v7952, %v197
  %v7969 = vmul.f32 %v7955, %v197
  %v7970 = vmul.f32 %v7958, %v197
  %v7971 = vmul.f32 %v7961, %v197
  %v7972 = vmul.f32 %v7964, %v197
  %v7973 = vmul.f32 %v7967, %v197
  %v7974 = vsub.f32 %v7944, %v7968
  %v7975 = vsub.f32 %v7945, %v7969
  %v7976 = vsub.f32 %v7946, %v7970
  %v7977 = vsub.f32 %v7947, %v7971
  %v7978 = vsub.f32 %v7948, %v7972
  %v7979 = vsub.f32 %v7949, %v7973
  %v7980 = vmul.f32 %v7974, %v7974
  %v7981 = vmul.f32 %v7975, %v7975
  %v7982 = vmul.f32 %v7976, %v7976
  %v7983 = vmul.f32 %v7977, %v7977
  %v7984 = vmul.f32 %v7978, %v7978
  %v7985 = vmul.f32 %v7979, %v7979
  %v7986 = vsel %vm57, %v7980, 0.0
  %7987 = vadd.xlane.f32.xlu0 %v7986
  %v7988 = vpop.xlane.xlu0 %7987
  %v7989 = vsel %vm57, %v7981, 0.0
  %7990 = vadd.xlane.f32.xlu0 %v7989
  %v7991 = vpop.xlane.xlu0 %7990
  %v7992 = vsel %vm57, %v7982, 0.0
  %7993 = vadd.xlane.f32.xlu0 %v7992
  %v7994 = vpop.xlane.xlu0 %7993
  %v7995 = vsel %vm57, %v7983, 0.0
  %7996 = vadd.xlane.f32.xlu0 %v7995
  %v7997 = vpop.xlane.xlu0 %7996
  %v7998 = vsel %vm57, %v7984, 0.0
  %7999 = vadd.xlane.f32.xlu0 %v7998
  %v8000 = vpop.xlane.xlu0 %7999
  %v8001 = vsel %vm57, %v7985, 0.0
  %8002 = vadd.xlane.f32.xlu0 %v8001
  %v8003 = vpop.xlane.xlu0 %8002
  %v8004 = vmul.f32 %v7988, %v197
  %v8005 = vmul.f32 %v7991, %v197
  %v8006 = vmul.f32 %v7994, %v197
  %v8007 = vmul.f32 %v7997, %v197
  %v8008 = vmul.f32 %v8000, %v197
  %v8009 = vmul.f32 %v8003, %v197
  %v8010 = vadd.f32 %v8004, 1e-05
  %v8011 = vadd.f32 %v8005, 1e-05
  %v8012 = vadd.f32 %v8006, 1e-05
  %v8013 = vadd.f32 %v8007, 1e-05
  %v8014 = vadd.f32 %v8008, 1e-05
  %v8015 = vadd.f32 %v8009, 1e-05
  %v8016 = vrsqrt.pop %v8010
  %v8017 = vrsqrt.pop %v8011
  %v8018 = vrsqrt.pop %v8012
  %v8019 = vrsqrt.pop %v8013
  %v8020 = vrsqrt.pop %v8014
  %v8021 = vrsqrt.pop %v8015
  %v8022 = vmul.f32 %v7974, %v8016
  %v8023 = vmul.f32 %v7975, %v8017
  %v8024 = vmul.f32 %v7976, %v8018
  %v8025 = vmul.f32 %v7977, %v8019
  %v8026 = vmul.f32 %v7978, %v8020
  %v8027 = vmul.f32 %v7979, %v8021
  %v8028 = vlaneseq
  %v8029 = vshrl.u32 %v8028, 7
  %v8030 = vsub.s32 3, %v8029
  %v8031 = vrot.slane %v42, %v8030
  %v8032 = vmul.f32 %v8022, %v8031
  %v8033 = vmul.f32 %v8023, %v8031
  %v8034 = vmul.f32 %v8024, %v8031
  %v8035 = vmul.f32 %v8025, %v8031
  %v8036 = vmul.f32 %v8026, %v8031
  %v8037 = vmul.f32 %v8027, %v8031
  %v8038 = vlaneseq
  %v8039 = vshrl.u32 %v8038, 7
  %v8040 = vsub.s32 4, %v8039
  %v8041 = vrot.slane %v42, %v8040
  %v8042 = vadd.f32 %v8032, %v8041
  %v8043 = vadd.f32 %v8033, %v8041
  %v8044 = vadd.f32 %v8034, %v8041
  %v8045 = vadd.f32 %v8035, %v8041
  %v8046 = vadd.f32 %v8036, %v8041
  %v8047 = vadd.f32 %v8037, %v8041
  %s8048 = scalar_lea.vmem %s8, 32
  %v8049 = vld [vmem:[%s8048] sm:$0xff]
  %v8050 = vld [vmem:[%s8048 + $0x8] sm:$0xff]
  %v8051 = vld [vmem:[%s8048 + $0x10] sm:$0xff]
  %v8052 = vld [vmem:[%s8048 + $0x18] sm:$0xff]
  %v8053 = vlaneseq
  %v8054 = vshrl.u32 %v8053, 7
  %v8055 = vsub.s32 5, %v8054
  %v8056 = vrot.slane %v42, %v8055
  %v8058 = vsel %vm57, %v8042, 0
  %v8061 = vsel %vm57, %v8043, 0
  %v8064 = vsel %vm57, %v8044, 0
  %v8067 = vsel %vm57, %v8045, 0
  %v8070 = vsel %vm57, %v8046, 0
  %v8073 = vsel %vm57, %v8047, 0
  %8075 = vmatprep.subr.mxu0 0.0
  %8076 = vmatpush1.msra.mxu0 0.0
  %8077 = vmatprep.subr.mxu0 0.0
  %8078 = vmatpush1.msra.mxu0 0.0
  %8079 = vmatprep.subr.mxu0 0.0
  %8080 = vmatpush1.msra.mxu0 0.0
  %8081 = vmatprep.subr.mxu0 0.0
  %8082 = vmatpush1.msra.mxu0 0.0
  %8083 = vmatprep.subr.mxu0 0.0
  %8084 = vmatpush1.msra.mxu0 0.0
  %8085 = vmatprep.subr.mxu0 0.0
  %8086 = vmatpush1.msra.mxu0 0.0
  %8087 = vmatprep.subr.mxu0 0.0
  %8088 = vmatpush1.msra.mxu0 0.0
  %8089 = vmatprep.subr.mxu0 0.0
  %8090 = vmatpush1.msra.mxu0 0.0
  %8091 = vmatprep.subr.mxu0 0.0
  %8092 = vmatpush1.msra.mxu0 0.0
  %8093 = vmatprep.subr.mxu0 0.0
  %8094 = vmatpush1.msra.mxu0 0.0
  %8095 = vmatprep.subr.mxu0 0.0
  %8096 = vmatpush1.msra.mxu0 0.0
  %8097 = vmatprep.subr.mxu0 0.0
  %8098 = vmatpush1.msra.mxu0 0.0
  %8099 = vmatprep.subr.mxu0 0.0
  %8100 = vmatpush1.msra.mxu0 %v8052
  %8101 = vmatprep.subr.mxu0 0.0
  %8102 = vmatpush1.msra.mxu0 %v8051
  %8103 = vmatprep.subr.mxu0 0.0
  %8104 = vmatpush1.msra.mxu0 %v8050
  %8105 = vmatprep.subr.mxu0 0.0
  %8106 = vmatpush1.msra.mxu0 %v8049
  %8107 = vmatprep.subr.mxu0 0.0
  %8108 = vmatpush2.msra.mxu0 0.0
  %8109 = vmatprep.subr.mxu0 0.0
  %8110 = vmatpush2.msra.mxu0 0.0
  %8111 = vmatprep.subr.mxu0 0.0
  %8112 = vmatpush2.msra.mxu0 0.0
  %8113 = vmatprep.subr.mxu0 0.0
  %8114 = vmatpush2.msra.mxu0 0.0
  %8115 = vmatprep.subr.mxu0 0.0
  %8116 = vmatpush2.msra.mxu0 0.0
  %8117 = vmatprep.subr.mxu0 0.0
  %8118 = vmatpush2.msra.mxu0 0.0
  %8119 = vmatprep.subr.mxu0 0.0
  %8120 = vmatpush2.msra.mxu0 0.0
  %8121 = vmatprep.subr.mxu0 0.0
  %8122 = vmatpush2.msra.mxu0 0.0
  %8123 = vmatprep.subr.mxu0 0.0
  %8124 = vmatpush2.msra.mxu0 0.0
  %8125 = vmatprep.subr.mxu0 0.0
  %8126 = vmatpush2.msra.mxu0 0.0
  %8127 = vmatprep.subr.mxu0 0.0
  %8128 = vmatpush2.msra.mxu0 0.0
  %8129 = vmatprep.subr.mxu0 0.0
  %8130 = vmatpush2.msra.mxu0 0.0
  %8131 = vmatprep.subr.mxu0 0.0
  %8132 = vmatpush2.msra.mxu0 0.0
  %8133 = vmatprep.subr.mxu0 0.0
  %8134 = vmatpush2.msra.mxu0 0.0
  %8135 = vmatprep.subr.mxu0 0.0
  %8136 = vmatpush2.msra.mxu0 0.0
  %8137 = vmatprep.subr.mxu0 0.0
  %8138 = vmatpush2.msra.mxu0 0.0
  %8139 = vmatprep.mubr.f32.mxu0 0.0
  %8140 = vmatmul.mubr.f32.gmra.mxu0 %v8058
  %v8141 = vpop.f32.mrf.mxu0
  %v8142 = vadd.f32 %v8056, %v8141
  %v8143 = vpop.f32.mrf.mxu0
  %8144 = vmatprep.mubr.f32.mxu0 0.0
  %8145 = vmatmul.mubr.f32.gmra.mxu0 %v8061
  %v8146 = vpop.f32.mrf.mxu0
  %v8147 = vadd.f32 %v8056, %v8146
  %v8148 = vpop.f32.mrf.mxu0
  %8149 = vmatprep.mubr.f32.mxu0 0.0
  %8150 = vmatmul.mubr.f32.gmra.mxu0 %v8064
  %v8151 = vpop.f32.mrf.mxu0
  %v8152 = vadd.f32 %v8056, %v8151
  %v8153 = vpop.f32.mrf.mxu0
  %8154 = vmatprep.mubr.f32.mxu0 0.0
  %8155 = vmatmul.mubr.f32.gmra.mxu0 %v8067
  %v8156 = vpop.f32.mrf.mxu0
  %v8157 = vadd.f32 %v8056, %v8156
  %v8158 = vpop.f32.mrf.mxu0
  %8159 = vmatprep.mubr.f32.mxu0 0.0
  %8160 = vmatmul.mubr.f32.gmra.mxu0 %v8070
  %v8161 = vpop.f32.mrf.mxu0
  %v8162 = vadd.f32 %v8056, %v8161
  %v8163 = vpop.f32.mrf.mxu0
  %8164 = vmatprep.mubr.f32.mxu0 0.0
  %8165 = vmatmul.mubr.f32.gmra.mxu0 %v8073
  %v8166 = vpop.f32.mrf.mxu0
  %v8167 = vadd.f32 %v8056, %v8166
  %v8168 = vpop.f32.mrf.mxu0
  %8169 = vdwg.mxu0
  %8170 = vst [vmem:[%s11] sm:$0xff] %v8142
  %8171 = vst [vmem:[%s11 + $0x8] sm:$0xff] %v8147
  %8172 = vst [vmem:[%s11 + $0x10] sm:$0xff] %v8152
  %8173 = vst [vmem:[%s11 + $0x18] sm:$0xff] %v8157
  %8174 = vst [vmem:[%s11 + $0x20] sm:$0xff] %v8162
  %8175 = vst [vmem:[%s11 + $0x28] sm:$0xff] %v8167
  // Predicated region
  $region42: #{mae_vit_forward.1} parent=0 // pred_check
    _
  $region43: #{mae_vit_forward.1} parent=0 // pred_check_branch
    %8177 = sbr.rel (0) target = $region45
  $region44: #{mae_vit_forward.1} parent=0 // pred_region
    _
  $region45: #{mae_vit_forward.1} parent=0 // pred_fallthru
    _
  // Predicated region
  $region46: #{mae_vit_forward.1} parent=0 // pred_check
    _
  $region47: #{mae_vit_forward.1} parent=0 // pred_check_branch
    %8179 = sbr.rel (0) target = $region49
  $region48: #{mae_vit_forward.1} parent=0 // pred_region
    _
  $region49: #{mae_vit_forward.1} parent=0 // pred_fallthru
    _

</llo_original>
